<compile_context>
chip_gen: v6e
topology: v6e:2x2x1
jax: 0.10.0
libtpu: 0.0.40
codegen_flags: <defaults>
</compile_context>

<pallas_src>
import functools

import jax
import jax.numpy as jnp
import numpy as np
from jax import lax
from jax.experimental import pallas as pl
from jax.experimental.pallas import tpu as pltpu

D_MODEL = 8       # = channel count C of x (fixed by LayerNorm([d_model, 128, 128]))
NHEAD = 2
H = W = 128       # hard-coded by nn.LayerNorm([d_model, 128, 128])
S_KV = 4          # number of "cond" tokens (key/value sequence length)
EPS = 1e-5
LANES = 128


# ----------------------------------------------------------------------------
# Fused kernel: packed-score attention + out-projection + residual + LayerNorm.
# One grid step == one full sample.  Everything is (R, 128) lane-dense.
# ----------------------------------------------------------------------------
def _fused_attn_ln_kernel(x_ref, stw_ref, stb_ref, cmw_ref, ob_ref,
                          sel_ref, grp_ref, lnw_ref, lnb_ref, o_ref,
                          *, s_kv, eps):
    x = x_ref[0]                                            # (R, 128)  lane-dense

    # Packed scores: lanes [t*nS : (t+1)*nS] hold the nhead*S scores of the t-th
    # token of this row, ordered head-major (h*S + s).
    s = jnp.dot(x, stw_ref[0], preferred_element_type=jnp.float32) + stb_ref[0]

    # Per-(token, head) max: window-max over S lanes via XLU rolls, then broadcast
    # the group-end lane to the whole group with a 0/1 selector matmul (MXU).
    # (Any per-group-uniform shift keeps the softmax exact; this one is the max.)
    m = s
    shift = 1
    while shift < s_kv:
        m = jnp.maximum(m, pltpu.roll(m, shift=shift, axis=1))
        shift *= 2
    gmax = jnp.dot(m, sel_ref[...], preferred_element_type=jnp.float32)

    e = jnp.exp(s - gmax)
    denom = jnp.dot(e, grp_ref[...], preferred_element_type=jnp.float32)  # group sums
    p = e / denom                                           # normalized attention

    # Combine with V and out-projection (block-diag), add out-proj bias, residual.
    attn = jnp.dot(p, cmw_ref[0], preferred_element_type=jnp.float32) + ob_ref[...]
    y = x + attn                                            # (R, 128)

    # LayerNorm over the whole (C, H, W) sample, biased variance (PyTorch semantics).
    mean = jnp.mean(y)
    centered = y - mean
    var = jnp.mean(centered * centered)
    inv = lax.rsqrt(var + eps)
    o_ref[0] = centered * inv * lnw_ref[...] + lnb_ref[...]


# ----------------------------------------------------------------------------
# Wrapper-side precomputation of the tiny per-batch score / combine matrices.
# ----------------------------------------------------------------------------
def _precompute(cond, p, nhead):
    B, S, E = cond.shape
    hd = E // nhead
    T = LANES // E                      # tokens per 128-lane row
    nS = nhead * S
    scale = 1.0 / np.sqrt(hd)

    k = cond @ p["wk"].T + p["bk"]      # (B, S, E)
    v = cond @ p["wv"].T + p["bv"]      # (B, S, E)

    A_parts, c_parts, C_parts = [], [], []
    for h in range(nhead):
        sl = slice(h * hd, (h + 1) * hd)
        wq_h = p["wq"][sl, :]           # (hd, E)
        k_h = k[:, :, sl]               # (B, S, hd)
        v_h = v[:, :, sl]               # (B, S, hd)
        # scores_h = x @ A_h + c_h  with  A_h = Wq_h^T K_h^T * scale
        A_parts.append(jnp.einsum("ae,bsa->bes", wq_h, k_h) * scale)       # (B, E, S)
        c_parts.append(jnp.einsum("a,bsa->bs", p["bq"][sl], k_h) * scale)  # (B, S)
        # out = sum_h p_h @ (V_h Wo[:, sl]^T)
        C_parts.append(jnp.einsum("bsa,ea->bse", v_h, p["wo"][:, sl]))     # (B, S, E)

    A = jnp.concatenate(A_parts, axis=2)      # (B, E, nS)
    c = jnp.concatenate(c_parts, axis=1)      # (B, nS)
    Cm = jnp.concatenate(C_parts, axis=1)     # (B, nS, E)

    eye_t = jnp.eye(T, dtype=jnp.float32)
    st_w = jnp.einsum("ij,bes->biejs", eye_t, A).reshape(B, T * E, T * nS)   # block-diag
    cm_w = jnp.einsum("ij,bse->bisje", eye_t, Cm).reshape(B, T * nS, T * E)  # block-diag
    st_b = jnp.tile(c, (1, T))[:, None, :]                    # (B, 1, T*nS)
    out_b = jnp.tile(p["bo"], (T,))[None, :]                  # (1, T*E) == (1, 128)

    # Constant 0/1 matrices for the grouped softmax (group = S adjacent lanes).
    j = np.arange(T * nS)
    sel_np = np.zeros((T * nS, T * nS), np.float32)
    sel_np[(j // S) * S + (S - 1), j] = 1.0                   # pick group-end lane
    grp_np = (j[:, None] // S == j[None, :] // S).astype(np.float32)  # group sum

    return st_w, st_b, cm_w, out_b, jnp.asarray(sel_np), jnp.asarray(grp_np)


# ----------------------------------------------------------------------------
# Forward wrapper
# ----------------------------------------------------------------------------
def attention_block_forward(x, cond, params, *, nhead=NHEAD):
    B, C, Hh, Ww = x.shape
    E = params["wq"].shape[0]
    S = cond.shape[1]
    assert LANES % E == 0 and (C * Hh * Ww) % LANES == 0
    assert S & (S - 1) == 0, "roll-based group max assumes power-of-two S"

    R = (C * Hh * Ww) // LANES          # rows of the lane-dense flatten
    T = LANES // E                      # tokens per row
    nS = nhead * S                      # packed score width per token
    nscore = T * nS                     # packed score width per row

    x_flat = x.reshape(B, R, LANES)     # same bytes as x.view(B, -1, d_model)
    st_w, st_b, cm_w, out_b, sel, grp = _precompute(cond, params, nhead)
    ln_w = params["ln_w"].reshape(R, LANES)
    ln_b = params["ln_b"].reshape(R, LANES)

    kern = functools.partial(_fused_attn_ln_kernel, s_kv=S, eps=EPS)

    mm_flops = 2 * R * nscore * (LANES + nscore + nscore + LANES)
    cost = pl.CostEstimate(
        flops=int(B * (mm_flops + 12 * R * LANES)),
        transcendentals=int(B * (R * nscore + 1)),
        bytes_accessed=int(4 * (2 * B * R * LANES + 2 * R * LANES
                                + B * (2 * LANES * nscore + nscore + LANES)
                                + 2 * nscore * nscore)),
    )

    out_flat = pl.pallas_call(
        kern,
        out_shape=jax.ShapeDtypeStruct((B, R, LANES), jnp.float32),
        grid_spec=pltpu.PrefetchScalarGridSpec(
            num_scalar_prefetch=0,
            grid=(B,),
            in_specs=[
                pl.BlockSpec((1, R, LANES), lambda b: (b, 0, 0)),        # x (lane-dense)
                pl.BlockSpec((1, LANES, nscore), lambda b: (b, 0, 0)),   # score transform
                pl.BlockSpec((1, 1, nscore), lambda b: (b, 0, 0)),       # score bias
                pl.BlockSpec((1, nscore, LANES), lambda b: (b, 0, 0)),   # combine matrix
                pl.BlockSpec((1, LANES), lambda b: (0, 0)),              # out-proj bias (tiled)
                pl.BlockSpec((nscore, nscore), lambda b: (0, 0)),        # group-max selector
                pl.BlockSpec((nscore, nscore), lambda b: (0, 0)),        # group-sum matrix
                pl.BlockSpec((R, LANES), lambda b: (0, 0)),              # LN weight
                pl.BlockSpec((R, LANES), lambda b: (0, 0)),              # LN bias
            ],
            out_specs=pl.BlockSpec((1, R, LANES), lambda b: (b, 0, 0)),
        ),
        compiler_params=pltpu.CompilerParams(
            dimension_semantics=("parallel",)),
        cost_estimate=cost,
    )(x_flat, st_w, st_b, cm_w, out_b, sel, grp, ln_w, ln_b)

    return out_flat.reshape(B, C, Hh, Ww)


# ----------------------------------------------------------------------------
# Pure-JAX reference (same math as nn.MultiheadAttention + nn.LayerNorm)
# ----------------------------------------------------------------------------
def reference_forward(x, cond, p, *, nhead=NHEAD):
    B, C, Hh, Ww = x.shape
    E = p["wq"].shape[0]
    hd = E // nhead
    L = (C * Hh * Ww) // E
    S = cond.shape[1]

    r = x.reshape(B, L, E)
    q = r @ p["wq"].T + p["bq"]
    k = cond @ p["wk"].T + p["bk"]
    v = cond @ p["wv"].T + p["bv"]
    qh = q.reshape(B, L, nhead, hd).transpose(0, 2, 1, 3)
    kh = k.reshape(B, S, nhead, hd).transpose(0, 2, 1, 3)
    vh = v.reshape(B, S, nhead, hd).transpose(0, 2, 1, 3)
    s = jnp.einsum("bhld,bhsd->bhls", qh, kh) / jnp.sqrt(float(hd))
    a = jax.nn.softmax(s, axis=-1)
    o = jnp.einsum("bhls,bhsd->bhld", a, vh).transpose(0, 2, 1, 3).reshape(B, L, E)
    o = o @ p["wo"].T + p["bo"]
    y = x + o.reshape(x.shape)

    yf = y.reshape(B, -1)
    mean = yf.mean(-1).reshape(B, 1, 1, 1)
    var = ((y - mean) ** 2).reshape(B, -1).mean(-1).reshape(B, 1, 1, 1)
    return (y - mean) / jnp.sqrt(var + EPS) * p["ln_w"] + p["ln_b"]


def init_params(key, d_model):
    ks = jax.random.split(key, 10)
    lim = 1.0 / np.sqrt(d_model)
    u = lambda k, shape: jax.random.uniform(k, shape, jnp.float32, -lim, lim)
    return {
        "wq": u(ks[0], (d_model, d_model)),
        "wk": u(ks[1], (d_model, d_model)),
        "wv": u(ks[2], (d_model, d_model)),
        "bq": u(ks[3], (d_model,)),
        "bk": u(ks[4], (d_model,)),
        "bv": u(ks[5], (d_model,)),
        "wo": u(ks[6], (d_model, d_model)),
        "bo": u(ks[7], (d_model,)),
        # LayerNorm affine params (shape = normalized_shape = (C, 128, 128))
        "ln_w": 1.0 + 0.1 * jax.random.normal(ks[8], (d_model, H, W), jnp.float32),
        "ln_b": 0.1 * jax.random.normal(ks[9], (d_model, H, W), jnp.float32),
    }


if __name__ == "__main__":
    key = jax.random.PRNGKey(0)
    kx, kc, kp = jax.random.split(key, 3)

    B = 2
    x = jax.random.normal(kx, (B, D_MODEL, H, W), jnp.float32)      # NCHW
    cond = jax.random.normal(kc, (B, S_KV, D_MODEL), jnp.float32)   # (B, S, E)
    params = init_params(kp, D_MODEL)

    out = jax.jit(attention_block_forward)(x, cond, params)
    out = jax.block_until_ready(out)

    ref = reference_forward(x, cond, params)
    np.testing.assert_allclose(np.asarray(out), np.asarray(ref), rtol=1e-4, atol=1e-4)

    print("KERNEL_OK")
</pallas_src>

<mosaic_0001>
module attributes {stable_mosaic.version = 11 : i64} {
  func.func @_fused_attn_ln_kernel(%arg0: i32, %arg1: memref<1x1024x128xf32, #tpu.memory_space<vmem>>, %arg2: memref<1x128x128xf32, #tpu.memory_space<vmem>>, %arg3: memref<1x1x128xf32, #tpu.memory_space<vmem>>, %arg4: memref<1x128x128xf32, #tpu.memory_space<vmem>>, %arg5: memref<1x128xf32, #tpu.memory_space<vmem>>, %arg6: memref<128x128xf32, #tpu.memory_space<vmem>>, %arg7: memref<128x128xf32, #tpu.memory_space<vmem>>, %arg8: memref<1024x128xf32, #tpu.memory_space<vmem>>, %arg9: memref<1024x128xf32, #tpu.memory_space<vmem>>, %arg10: memref<1x1024x128xf32, #tpu.memory_space<vmem>>) attributes {dimension_semantics = [#tpu.dimension_semantics<parallel>], iteration_bounds = array<i64: 2>, scalar_prefetch = 0 : i64, scratch_operands = 0 : i64, tpu.core_type = #tpu.core_type<tc>, window_params = [{transform_indices = @transform_0, window_bounds = array<i64: 1, 1024, 128>}, {transform_indices = @transform_1, window_bounds = array<i64: 1, 128, 128>}, {transform_indices = @transform_2, window_bounds = array<i64: 1, 1, 128>}, {transform_indices = @transform_3, window_bounds = array<i64: 1, 128, 128>}, {pipeline_mode = #tpu.pipeline_mode<synchronous>, transform_indices = @transform_4, window_bounds = array<i64: 1, 128>}, {pipeline_mode = #tpu.pipeline_mode<synchronous>, transform_indices = @transform_5, window_bounds = array<i64: 128, 128>}, {pipeline_mode = #tpu.pipeline_mode<synchronous>, transform_indices = @transform_6, window_bounds = array<i64: 128, 128>}, {pipeline_mode = #tpu.pipeline_mode<synchronous>, transform_indices = @transform_7, window_bounds = array<i64: 1024, 128>}, {pipeline_mode = #tpu.pipeline_mode<synchronous>, transform_indices = @transform_8, window_bounds = array<i64: 1024, 128>}, {transform_indices = @transform_9, window_bounds = array<i64: 1, 1024, 128>}]} {
    %c0 = arith.constant 0 : index
    %c0_0 = arith.constant 0 : index
    %c0_1 = arith.constant 0 : index
    %0 = vector.load %arg1[%c0, %c0_0, %c0_1] : memref<1x1024x128xf32, #tpu.memory_space<vmem>>, vector<1x1024x128xf32>
    %1 = vector.shape_cast %0 : vector<1x1024x128xf32> to vector<1024x128xf32>
    %c0_2 = arith.constant 0 : index
    %c0_3 = arith.constant 0 : index
    %c0_4 = arith.constant 0 : index
    %2 = vector.load %arg2[%c0_2, %c0_3, %c0_4] : memref<1x128x128xf32, #tpu.memory_space<vmem>>, vector<1x128x128xf32>
    %3 = vector.shape_cast %2 : vector<1x128x128xf32> to vector<128x128xf32>
    %cst = arith.constant dense<0.000000e+00> : vector<1024x128xf32>
    %4 = tpu.matmul %1, %3, %cst {dimension_numbers = #tpu.dot_dimension_numbers<[1], [0], [0], [1], [0, 0, 1, 1], [], []>} : vector<1024x128xf32>, vector<128x128xf32>, vector<1024x128xf32> -> vector<1024x128xf32>
    %c0_5 = arith.constant 0 : index
    %c0_6 = arith.constant 0 : index
    %c0_7 = arith.constant 0 : index
    %5 = vector.load %arg3[%c0_5, %c0_6, %c0_7] : memref<1x1x128xf32, #tpu.memory_space<vmem>>, vector<1x1x128xf32>
    %6 = vector.shape_cast %5 : vector<1x1x128xf32> to vector<1x128xf32>
    %7 = vector.broadcast %6 : vector<1x128xf32> to vector<1024x128xf32>
    %8 = arith.addf %4, %7 : vector<1024x128xf32>
    %c1_i32 = arith.constant 1 : i32
    %9 = tpu.dynamic_rotate %8 by %c1_i32 dim 1 : vector<1024x128xf32>, i32 -> vector<1024x128xf32>
    %10 = arith.maximumf %8, %9 : vector<1024x128xf32>
    %c2_i32 = arith.constant 2 : i32
    %11 = tpu.dynamic_rotate %10 by %c2_i32 dim 1 : vector<1024x128xf32>, i32 -> vector<1024x128xf32>
    %12 = arith.maximumf %10, %11 : vector<1024x128xf32>
    %c0_8 = arith.constant 0 : index
    %c0_9 = arith.constant 0 : index
    %13 = vector.load %arg6[%c0_8, %c0_9] : memref<128x128xf32, #tpu.memory_space<vmem>>, vector<128x128xf32>
    %cst_10 = arith.constant dense<0.000000e+00> : vector<1024x128xf32>
    %14 = tpu.matmul %12, %13, %cst_10 {dimension_numbers = #tpu.dot_dimension_numbers<[1], [0], [0], [1], [0, 0, 1, 1], [], []>} : vector<1024x128xf32>, vector<128x128xf32>, vector<1024x128xf32> -> vector<1024x128xf32>
    %15 = arith.subf %8, %14 : vector<1024x128xf32>
    %16 = math.exp %15 : vector<1024x128xf32>
    %c0_11 = arith.constant 0 : index
    %c0_12 = arith.constant 0 : index
    %17 = vector.load %arg7[%c0_11, %c0_12] : memref<128x128xf32, #tpu.memory_space<vmem>>, vector<128x128xf32>
    %cst_13 = arith.constant dense<0.000000e+00> : vector<1024x128xf32>
    %18 = tpu.matmul %16, %17, %cst_13 {dimension_numbers = #tpu.dot_dimension_numbers<[1], [0], [0], [1], [0, 0, 1, 1], [], []>} : vector<1024x128xf32>, vector<128x128xf32>, vector<1024x128xf32> -> vector<1024x128xf32>
    %19 = arith.divf %16, %18 : vector<1024x128xf32>
    %c0_14 = arith.constant 0 : index
    %c0_15 = arith.constant 0 : index
    %c0_16 = arith.constant 0 : index
    %20 = vector.load %arg4[%c0_14, %c0_15, %c0_16] : memref<1x128x128xf32, #tpu.memory_space<vmem>>, vector<1x128x128xf32>
    %21 = vector.shape_cast %20 : vector<1x128x128xf32> to vector<128x128xf32>
    %cst_17 = arith.constant dense<0.000000e+00> : vector<1024x128xf32>
    %22 = tpu.matmul %19, %21, %cst_17 {dimension_numbers = #tpu.dot_dimension_numbers<[1], [0], [0], [1], [0, 0, 1, 1], [], []>} : vector<1024x128xf32>, vector<128x128xf32>, vector<1024x128xf32> -> vector<1024x128xf32>
    %c0_18 = arith.constant 0 : index
    %c0_19 = arith.constant 0 : index
    %23 = vector.load %arg5[%c0_18, %c0_19] : memref<1x128xf32, #tpu.memory_space<vmem>>, vector<1x128xf32>
    %24 = vector.broadcast %23 : vector<1x128xf32> to vector<1024x128xf32>
    %25 = arith.addf %22, %24 : vector<1024x128xf32>
    %26 = arith.addf %1, %25 : vector<1024x128xf32>
    %27 = vector.shape_cast %26 : vector<1024x128xf32> to vector<1x1024x128xf32>
    %cst_20 = arith.constant dense<0.000000e+00> : vector<1xf32>
    %28 = vector.multi_reduction <add>, %27, %cst_20 [1, 2] : vector<1x1024x128xf32> to vector<1xf32>
    %29 = vector.shape_cast %28 : vector<1xf32> to vector<1x1x1xf32>
    %30 = vector.extract %29[0, 0, 0] : f32 from vector<1x1x1xf32>
    %cst_21 = arith.constant 1.310720e+05 : f32
    %31 = arith.divf %30, %cst_21 : f32
    %32 = vector.broadcast %31 : f32 to vector<1024x128xf32>
    %33 = arith.subf %26, %32 : vector<1024x128xf32>
    %34 = arith.mulf %33, %33 : vector<1024x128xf32>
    %35 = vector.shape_cast %34 : vector<1024x128xf32> to vector<1x1024x128xf32>
    %cst_22 = arith.constant dense<0.000000e+00> : vector<1xf32>
    %36 = vector.multi_reduction <add>, %35, %cst_22 [1, 2] : vector<1x1024x128xf32> to vector<1xf32>
    %37 = vector.shape_cast %36 : vector<1xf32> to vector<1x1x1xf32>
    %38 = vector.extract %37[0, 0, 0] : f32 from vector<1x1x1xf32>
    %cst_23 = arith.constant 1.310720e+05 : f32
    %39 = arith.divf %38, %cst_23 : f32
    %cst_24 = arith.constant 9.99999974E-6 : f32
    %40 = arith.addf %39, %cst_24 : f32
    %41 = math.rsqrt %40 : f32
    %42 = vector.broadcast %41 : f32 to vector<1024x128xf32>
    %43 = arith.mulf %33, %42 : vector<1024x128xf32>
    %c0_25 = arith.constant 0 : index
    %c0_26 = arith.constant 0 : index
    %44 = vector.load %arg8[%c0_25, %c0_26] : memref<1024x128xf32, #tpu.memory_space<vmem>>, vector<1024x128xf32>
    %45 = arith.mulf %43, %44 : vector<1024x128xf32>
    %c0_27 = arith.constant 0 : index
    %c0_28 = arith.constant 0 : index
    %46 = vector.load %arg9[%c0_27, %c0_28] : memref<1024x128xf32, #tpu.memory_space<vmem>>, vector<1024x128xf32>
    %47 = arith.addf %45, %46 : vector<1024x128xf32>
    %c0_29 = arith.constant 0 : index
    %c0_30 = arith.constant 0 : index
    %c0_31 = arith.constant 0 : index
    %48 = vector.load %arg10[%c0_29, %c0_30, %c0_31] : memref<1x1024x128xf32, #tpu.memory_space<vmem>>, vector<1x1024x128xf32>
    %49 = vector.shape_cast %48 : vector<1x1024x128xf32> to vector<1024x128xf32>
    %50 = vector.shape_cast %47 : vector<1024x128xf32> to vector<1x1024x128xf32>
    tpu.vector_store %arg10[%c0_29, %c0_30, %c0_31], %50 {strides = array<i32>} : memref<1x1024x128xf32, #tpu.memory_space<vmem>>, vector<1x1024x128xf32>,
    return
  }
  func.func @transform_0(%arg0: i32) -> (i32, i32, i32) {
    %c0_i32 = arith.constant 0 : i32
    %c0_i32_0 = arith.constant 0 : i32
    %c0_i32_1 = arith.constant 0 : i32
    return %arg0, %c0_i32, %c0_i32_0 : i32, i32, i32
  }
  func.func @transform_1(%arg0: i32) -> (i32, i32, i32) {
    %c0_i32 = arith.constant 0 : i32
    %c0_i32_0 = arith.constant 0 : i32
    %c0_i32_1 = arith.constant 0 : i32
    return %arg0, %c0_i32, %c0_i32_0 : i32, i32, i32
  }
  func.func @transform_2(%arg0: i32) -> (i32, i32, i32) {
    %c0_i32 = arith.constant 0 : i32
    %c0_i32_0 = arith.constant 0 : i32
    %c0_i32_1 = arith.constant 0 : i32
    return %arg0, %c0_i32, %c0_i32_0 : i32, i32, i32
  }
  func.func @transform_3(%arg0: i32) -> (i32, i32, i32) {
    %c0_i32 = arith.constant 0 : i32
    %c0_i32_0 = arith.constant 0 : i32
    %c0_i32_1 = arith.constant 0 : i32
    return %arg0, %c0_i32, %c0_i32_0 : i32, i32, i32
  }
  func.func @transform_4(%arg0: i32) -> (i32, i32) {
    %c0_i32 = arith.constant 0 : i32
    %c0_i32_0 = arith.constant 0 : i32
    %c0_i32_1 = arith.constant 0 : i32
    return %c0_i32, %c0_i32_0 : i32, i32
  }
  func.func @transform_5(%arg0: i32) -> (i32, i32) {
    %c0_i32 = arith.constant 0 : i32
    %c0_i32_0 = arith.constant 0 : i32
    %c0_i32_1 = arith.constant 0 : i32
    return %c0_i32, %c0_i32_0 : i32, i32
  }
  func.func @transform_6(%arg0: i32) -> (i32, i32) {
    %c0_i32 = arith.constant 0 : i32
    %c0_i32_0 = arith.constant 0 : i32
    %c0_i32_1 = arith.constant 0 : i32
    return %c0_i32, %c0_i32_0 : i32, i32
  }
  func.func @transform_7(%arg0: i32) -> (i32, i32) {
    %c0_i32 = arith.constant 0 : i32
    %c0_i32_0 = arith.constant 0 : i32
    %c0_i32_1 = arith.constant 0 : i32
    return %c0_i32, %c0_i32_0 : i32, i32
  }
  func.func @transform_8(%arg0: i32) -> (i32, i32) {
    %c0_i32 = arith.constant 0 : i32
    %c0_i32_0 = arith.constant 0 : i32
    %c0_i32_1 = arith.constant 0 : i32
    return %c0_i32, %c0_i32_0 : i32, i32
  }
  func.func @transform_9(%arg0: i32) -> (i32, i32, i32) {
    %c0_i32 = arith.constant 0 : i32
    %c0_i32_0 = arith.constant 0 : i32
    %c0_i32_1 = arith.constant 0 : i32
    return %arg0, %c0_i32, %c0_i32_0 : i32, i32, i32
  }
}

</mosaic_0001>

<llo_original>
// kernel: tile.18
$region0: #{tile.18}
  #allocation0 [shape = 's32[1]{0}', space=sflag, size = 0x4, scoped, tag = 'scoped memory for tile.18']
  %s0 = inlined_call_operand.vmem [shape: f32[8], index: 0, kind: input, shape index: {}]
  %s1 = inlined_call_operand.vmem [shape: f32[16,8], index: 1, kind: output, shape index: {}]
  // Predicated region
  $region2: #{tile.18} parent=0 // pred_check
    _
  $region3: #{tile.18} parent=0 // pred_check_branch
    %3 = sbr.rel (0) target = $region5
  $region4: #{tile.18} parent=0 // pred_region
    _
  $region5: #{tile.18} parent=0 // pred_fallthru
    _
  %v4 = vld [vmem:[%s0] ss:$0 sm:$0xff]
  %5 = vst [vmem:[%s1] sm:$0xff] %v4
  %s6 = scalar_lea.vmem %s1, 8
  %7 = vst [vmem:[%s6] sm:$0xff] %v4

// kernel: tile.19
$region0: #{tile.19}
  %s0 = inlined_call_operand.vmem [shape: f32[16,8], index: 0, kind: input, shape index: {}]
  %s1 = inlined_call_operand.vmem [shape: f32[1,128], index: 1, kind: output, shape index: {}]
  $region1: #{tile.19} parent=0
    #allocation0 [shape = 'u8[4096]{0}', space=vmem, size = 0x1000, scoped, tag = 'scoped mem for output reshape']
    %v2 = vld [vmem:[%s0] sm:$0x1]
    %vm3 = vcmask 64512
    %4 = vst.msk [vmem:[#allocation0] sm:$0x1] %vm3, %v2
    %s5 = scalar_lea.vmem %s0, 15
    %v6 = vld [vmem:[%s5] sm:$0x1]
    %7 = vrot.lane.b32.xlu0 %v6, 120
    %v8 = vpop.permute.xlu0 %7
    %vm9 = vcmask 1048512
    %10 = vst.msk [vmem:[#allocation0] sm:$0x1] %vm9, %v8
    %s11 = scalar_lea.vmem %s0, 14
    %v12 = vld [vmem:[%s11] sm:$0x1]
    %13 = vrot.lane.b32.xlu0 %v12, 112
    %v14 = vpop.permute.xlu0 %13
    %vm15 = vcmask 982912
    %16 = vst.msk [vmem:[#allocation0] sm:$0x1] %vm15, %v14
    %s17 = scalar_lea.vmem %s0, 13
    %v18 = vld [vmem:[%s17] sm:$0x1]
    %19 = vrot.lane.b32.xlu0 %v18, 104
    %v20 = vpop.permute.xlu0 %19
    %vm21 = vcmask 917312
    %22 = vst.msk [vmem:[#allocation0] sm:$0x1] %vm21, %v20
    %s23 = scalar_lea.vmem %s0, 12
    %v24 = vld [vmem:[%s23] sm:$0x1]
    %25 = vrot.lane.b32.xlu0 %v24, 96
    %v26 = vpop.permute.xlu0 %25
    %vm27 = vcmask 851712
    %28 = vst.msk [vmem:[#allocation0] sm:$0x1] %vm27, %v26
    %s29 = scalar_lea.vmem %s0, 11
    %v30 = vld [vmem:[%s29] sm:$0x1]
    %31 = vrot.lane.b32.xlu0 %v30, 88
    %v32 = vpop.permute.xlu0 %31
    %vm33 = vcmask 786112
    %34 = vst.msk [vmem:[#allocation0] sm:$0x1] %vm33, %v32
    %s35 = scalar_lea.vmem %s0, 10
    %v36 = vld [vmem:[%s35] sm:$0x1]
    %37 = vrot.lane.b32.xlu0 %v36, 80
    %v38 = vpop.permute.xlu0 %37
    %vm39 = vcmask 720512
    %40 = vst.msk [vmem:[#allocation0] sm:$0x1] %vm39, %v38
    %s41 = scalar_lea.vmem %s0, 9
    %v42 = vld [vmem:[%s41] sm:$0x1]
    %43 = vrot.lane.b32.xlu0 %v42, 72
    %v44 = vpop.permute.xlu0 %43
    %vm45 = vcmask 654912
    %46 = vst.msk [vmem:[#allocation0] sm:$0x1] %vm45, %v44
    %s47 = scalar_lea.vmem %s0, 8
    %v48 = vld [vmem:[%s47] sm:$0x1]
    %49 = vrot.lane.b32.xlu0 %v48, 64
    %v50 = vpop.permute.xlu0 %49
    %vm51 = vcmask 589312
    %52 = vst.msk [vmem:[#allocation0] sm:$0x1] %vm51, %v50
    %s53 = scalar_lea.vmem %s0, 7
    %v54 = vld [vmem:[%s53] sm:$0x1]
    %55 = vrot.lane.b32.xlu0 %v54, 56
    %v56 = vpop.permute.xlu0 %55
    %vm57 = vcmask 523712
    %58 = vst.msk [vmem:[#allocation0] sm:$0x1] %vm57, %v56
    %s59 = scalar_lea.vmem %s0, 6
    %v60 = vld [vmem:[%s59] sm:$0x1]
    %61 = vrot.lane.b32.xlu0 %v60, 48
    %v62 = vpop.permute.xlu0 %61
    %vm63 = vcmask 458112
    %64 = vst.msk [vmem:[#allocation0] sm:$0x1] %vm63, %v62
    %s65 = scalar_lea.vmem %s0, 5
    %v66 = vld [vmem:[%s65] sm:$0x1]
    %67 = vrot.lane.b32.xlu0 %v66, 40
    %v68 = vpop.permute.xlu0 %67
    %vm69 = vcmask 392512
    %70 = vst.msk [vmem:[#allocation0] sm:$0x1] %vm69, %v68
    %s71 = scalar_lea.vmem %s0, 4
    %v72 = vld [vmem:[%s71] sm:$0x1]
    %73 = vrot.lane.b32.xlu0 %v72, 32
    %v74 = vpop.permute.xlu0 %73
    %vm75 = vcmask 326912
    %76 = vst.msk [vmem:[#allocation0] sm:$0x1] %vm75, %v74
    %s77 = scalar_lea.vmem %s0, 3
    %v78 = vld [vmem:[%s77] sm:$0x1]
    %79 = vrot.lane.b32.xlu0 %v78, 24
    %v80 = vpop.permute.xlu0 %79
    %vm81 = vcmask 261312
    %82 = vst.msk [vmem:[#allocation0] sm:$0x1] %vm81, %v80
    %s83 = scalar_lea.vmem %s0, 2
    %v84 = vld [vmem:[%s83] sm:$0x1]
    %85 = vrot.lane.b32.xlu0 %v84, 16
    %v86 = vpop.permute.xlu0 %85
    %vm87 = vcmask 195712
    %88 = vst.msk [vmem:[#allocation0] sm:$0x1] %vm87, %v86
    %s89 = scalar_lea.vmem %s0, 1
    %v90 = vld [vmem:[%s89] sm:$0x1]
    %91 = vrot.lane.b32.xlu0 %v90, 8
    %v92 = vpop.permute.xlu0 %91
    %vm93 = vcmask 130112
    %94 = vst.msk [vmem:[#allocation0] sm:$0x1] %vm93, %v92
    %s96 = sshll.u32 1, 1
    %s97 = ssub.s32 %s96, 1
    %v99 = vld [vmem:[#allocation0] sm:%s97]
    %s100 = sshll.u32 1, 1
    %s101 = ssub.s32 %s100, 1
    %102 = vst [vmem:[%s1] sm:%s101] %v99

// kernel: attention_block_forward.1
$region0: #{attention_block_forward.1}
  #allocation0 [shape = 'u32[]', space=smem, size = 0x4, offset = 0x4, fixed_abs, tag = 'smem constant byte address 0x4 - core index']
  #allocation1 [shape = 'u32[144,128]{1,0:T(1,128)}', space=vmem, size = 0x12000, scoped, tag = 'internal scratch']
  %s0 = inlined_call_operand.vmem [shape: f32[2,1024,128], index: 0, kind: input, shape index: {}]
  %s1 = inlined_call_operand.vmem [shape: f32[2,128,128], index: 1, kind: input, shape index: {}]
  %s2 = inlined_call_operand.vmem [shape: f32[2,1,128], index: 2, kind: input, shape index: {}]
  %s3 = inlined_call_operand.vmem [shape: f32[2,128,128], index: 3, kind: input, shape index: {}]
  %s4 = inlined_call_operand.vmem [shape: f32[1,128], index: 4, kind: input, shape index: {}]
  %s5 = inlined_call_operand.vmem [shape: f32[128,128], index: 5, kind: input, shape index: {}]
  %s6 = inlined_call_operand.vmem [shape: f32[128,128], index: 6, kind: input, shape index: {}]
  %s7 = inlined_call_operand.vmem [shape: f32[1024,128], index: 7, kind: input, shape index: {}]
  %s8 = inlined_call_operand.vmem [shape: f32[1024,128], index: 8, kind: input, shape index: {}]
  %s9 = inlined_call_operand.hbm [shape: f32[2,1024,128], index: 9, kind: output, shape index: {}]
  %s10 = sld [smem:[#allocation0]]
  $region69: #{attention_block_forward.1} parent=0
    _
  %s12 = ssub.s32 1, %s10
  %s13 = scalar_select 0, %s12, %s10
  $region1: #{attention_block_forward.1} parent=0
    #allocation2 [shape = 'u8[1048576]{0}', space=vmem, size = 0x100000, scoped, tag = 'output window, operand 0']
    #allocation3 [shape = 's32[2]{0}', space=sflag, size = 0x8, scoped, tag = 'scoped memory for attention_block_forward.1']
    %14 = vsyncpa [#allocation3], 0
    %s15 = scalar_lea.sflag [#allocation3], 1
    %16 = vsyncpa %s15, 0
    loop: start=0, step=1, limit=4
    $region2: #{attention_block_forward.1} parent=1 // loop_pre_header
      _
    $region3: #{attention_block_forward.1} parent=1 // loop_header
      %s18 = sphi 0, %s22
      %p19 = scmp.ge.s32.totalorder %s18, 4
      %s28 = sphi 0, %s30
      %s31 = sphi 0, %s28
      %s32 = sphi 0, %s31
      %s48 = sphi 0, %s32
      %s54 = sphi 0, %s56
      %s57 = sphi 0, %s54
      %s58 = sphi 0, %s57
      %s74 = sphi 0, %s58
      %s80 = sphi 0, %s82
      %s83 = sphi 0, %s80
      %s84 = sphi 0, %s83
      %s100 = sphi 0, %s84
      %s106 = sphi 0, %s108
      %s109 = sphi 0, %s106
      %s110 = sphi 0, %s109
      %s126 = sphi 0, %s110
      %s130 = sphi 0, %s130
      %s132 = sphi 0, %s130
      %s133 = sphi 0, %s132
      %s147 = sphi 0, %s133
      %s151 = sphi 0, %s151
      %s153 = sphi 0, %s151
      %s154 = sphi 0, %s153
      %s168 = sphi 0, %s154
      %s172 = sphi 0, %s172
      %s174 = sphi 0, %s172
      %s175 = sphi 0, %s174
      %s189 = sphi 0, %s175
      %s193 = sphi 0, %s193
      %s195 = sphi 0, %s193
      %s196 = sphi 0, %s195
      %s210 = sphi 0, %s196
      %s214 = sphi 0, %s214
      %s216 = sphi 0, %s214
      %s217 = sphi 0, %s216
      %s231 = sphi 0, %s217
      %s237 = sphi 0, %s239
      %s240 = sphi 0, %s237
      %s241 = sphi 0, %s240
      %s257 = sphi 0, %s241
    $region4: #{attention_block_forward.1} parent=1 // loop_header_branch
      %21 = sbr.rel (%p19) target = $region8
    $region5: #{attention_block_forward.1} parent=1 // loop_body
      %s23 = ssub.s32 %s18, 1
      %s24 = ssub.s32 %s18, 2
      %s25 = sadd.s32 %s18, 1
      %s26 = ssub.s32 %s18, %s25
      %p27 = scmp.eq.s32.totalorder %s26, 0
      %s29 = sadd.s32 %s28, 1
      %s30 = scalar_select %p27, %s28, %s29
      %p33 = pneg %p27
      %p34 = scmp.eq.s32.totalorder %s18, 1
      %p35 = por %p33, %p34
      %p36 = scmp.ne.s32.totalorder %s28, %s31
      %p37 = scmp.eq.s32.totalorder %s18, 0
      %p38 = por %p36, %p37
      %p39 = scmp.ne.s32.totalorder %s28, %s31
      %p40 = scmp.eq.s32.totalorder %s23, 1
      %p41 = por %p39, %p40
      %p42 = scmp.ne.s32.totalorder %s31, %s32
      %p43 = scmp.eq.s32.totalorder %s23, 0
      %p44 = por %p42, %p43
      %p45 = scmp.ne.s32.totalorder %s31, %s32
      %p46 = scmp.eq.s32.totalorder %s24, 1
      %p47 = por %p45, %p46
      %p49 = scmp.ne.s32.totalorder %s32, %s48
      %p50 = scmp.eq.s32.totalorder %s24, 0
      %p51 = por %p49, %p50
      %s52 = ssub.s32 %s18, %s25
      %p53 = scmp.eq.s32.totalorder %s52, 0
      %s55 = sadd.s32 %s54, 1
      %s56 = scalar_select %p53, %s54, %s55
      %p59 = pneg %p53
      %p60 = scmp.eq.s32.totalorder %s18, 1
      %p61 = por %p59, %p60
      %p62 = scmp.ne.s32.totalorder %s54, %s57
      %p63 = scmp.eq.s32.totalorder %s18, 0
      %p64 = por %p62, %p63
      %p65 = scmp.ne.s32.totalorder %s54, %s57
      %p66 = scmp.eq.s32.totalorder %s23, 1
      %p67 = por %p65, %p66
      %p68 = scmp.ne.s32.totalorder %s57, %s58
      %p69 = scmp.eq.s32.totalorder %s23, 0
      %p70 = por %p68, %p69
      %p71 = scmp.ne.s32.totalorder %s57, %s58
      %p72 = scmp.eq.s32.totalorder %s24, 1
      %p73 = por %p71, %p72
      %p75 = scmp.ne.s32.totalorder %s58, %s74
      %p76 = scmp.eq.s32.totalorder %s24, 0
      %p77 = por %p75, %p76
      %s78 = ssub.s32 %s18, %s25
      %p79 = scmp.eq.s32.totalorder %s78, 0
      %s81 = sadd.s32 %s80, 1
      %s82 = scalar_select %p79, %s80, %s81
      %p85 = pneg %p79
      %p86 = scmp.eq.s32.totalorder %s18, 1
      %p87 = por %p85, %p86
      %p88 = scmp.ne.s32.totalorder %s80, %s83
      %p89 = scmp.eq.s32.totalorder %s18, 0
      %p90 = por %p88, %p89
      %p91 = scmp.ne.s32.totalorder %s80, %s83
      %p92 = scmp.eq.s32.totalorder %s23, 1
      %p93 = por %p91, %p92
      %p94 = scmp.ne.s32.totalorder %s83, %s84
      %p95 = scmp.eq.s32.totalorder %s23, 0
      %p96 = por %p94, %p95
      %p97 = scmp.ne.s32.totalorder %s83, %s84
      %p98 = scmp.eq.s32.totalorder %s24, 1
      %p99 = por %p97, %p98
      %p101 = scmp.ne.s32.totalorder %s84, %s100
      %p102 = scmp.eq.s32.totalorder %s24, 0
      %p103 = por %p101, %p102
      %s104 = ssub.s32 %s18, %s25
      %p105 = scmp.eq.s32.totalorder %s104, 0
      %s107 = sadd.s32 %s106, 1
      %s108 = scalar_select %p105, %s106, %s107
      %p111 = pneg %p105
      %p112 = scmp.eq.s32.totalorder %s18, 1
      %p113 = por %p111, %p112
      %p114 = scmp.ne.s32.totalorder %s106, %s109
      %p115 = scmp.eq.s32.totalorder %s18, 0
      %p116 = por %p114, %p115
      %p117 = scmp.ne.s32.totalorder %s106, %s109
      %p118 = scmp.eq.s32.totalorder %s23, 1
      %p119 = por %p117, %p118
      %p120 = scmp.ne.s32.totalorder %s109, %s110
      %p121 = scmp.eq.s32.totalorder %s23, 0
      %p122 = por %p120, %p121
      %p123 = scmp.ne.s32.totalorder %s109, %s110
      %p124 = scmp.eq.s32.totalorder %s24, 1
      %p125 = por %p123, %p124
      %p127 = scmp.ne.s32.totalorder %s110, %s126
      %p128 = scmp.eq.s32.totalorder %s24, 0
      %p129 = por %p127, %p128
      %s131 = sadd.s32 %s130, 1
      %p134 = scmp.eq.s32.totalorder %s18, 1
      %p135 = scmp.ne.s32.totalorder %s130, %s132
      %p136 = scmp.eq.s32.totalorder %s18, 0
      %p137 = por %p135, %p136
      %p138 = scmp.ne.s32.totalorder %s130, %s132
      %p139 = scmp.eq.s32.totalorder %s23, 1
      %p140 = por %p138, %p139
      %p141 = scmp.ne.s32.totalorder %s132, %s133
      %p142 = scmp.eq.s32.totalorder %s23, 0
      %p143 = por %p141, %p142
      %p144 = scmp.ne.s32.totalorder %s132, %s133
      %p145 = scmp.eq.s32.totalorder %s24, 1
      %p146 = por %p144, %p145
      %p148 = scmp.ne.s32.totalorder %s133, %s147
      %p149 = scmp.eq.s32.totalorder %s24, 0
      %p150 = por %p148, %p149
      %s152 = sadd.s32 %s151, 1
      %p155 = scmp.eq.s32.totalorder %s18, 1
      %p156 = scmp.ne.s32.totalorder %s151, %s153
      %p157 = scmp.eq.s32.totalorder %s18, 0
      %p158 = por %p156, %p157
      %p159 = scmp.ne.s32.totalorder %s151, %s153
      %p160 = scmp.eq.s32.totalorder %s23, 1
      %p161 = por %p159, %p160
      %p162 = scmp.ne.s32.totalorder %s153, %s154
      %p163 = scmp.eq.s32.totalorder %s23, 0
      %p164 = por %p162, %p163
      %p165 = scmp.ne.s32.totalorder %s153, %s154
      %p166 = scmp.eq.s32.totalorder %s24, 1
      %p167 = por %p165, %p166
      %p169 = scmp.ne.s32.totalorder %s154, %s168
      %p170 = scmp.eq.s32.totalorder %s24, 0
      %p171 = por %p169, %p170
      %s173 = sadd.s32 %s172, 1
      %p176 = scmp.eq.s32.totalorder %s18, 1
      %p177 = scmp.ne.s32.totalorder %s172, %s174
      %p178 = scmp.eq.s32.totalorder %s18, 0
      %p179 = por %p177, %p178
      %p180 = scmp.ne.s32.totalorder %s172, %s174
      %p181 = scmp.eq.s32.totalorder %s23, 1
      %p182 = por %p180, %p181
      %p183 = scmp.ne.s32.totalorder %s174, %s175
      %p184 = scmp.eq.s32.totalorder %s23, 0
      %p185 = por %p183, %p184
      %p186 = scmp.ne.s32.totalorder %s174, %s175
      %p187 = scmp.eq.s32.totalorder %s24, 1
      %p188 = por %p186, %p187
      %p190 = scmp.ne.s32.totalorder %s175, %s189
      %p191 = scmp.eq.s32.totalorder %s24, 0
      %p192 = por %p190, %p191
      %s194 = sadd.s32 %s193, 1
      %p197 = scmp.eq.s32.totalorder %s18, 1
      %p198 = scmp.ne.s32.totalorder %s193, %s195
      %p199 = scmp.eq.s32.totalorder %s18, 0
      %p200 = por %p198, %p199
      %p201 = scmp.ne.s32.totalorder %s193, %s195
      %p202 = scmp.eq.s32.totalorder %s23, 1
      %p203 = por %p201, %p202
      %p204 = scmp.ne.s32.totalorder %s195, %s196
      %p205 = scmp.eq.s32.totalorder %s23, 0
      %p206 = por %p204, %p205
      %p207 = scmp.ne.s32.totalorder %s195, %s196
      %p208 = scmp.eq.s32.totalorder %s24, 1
      %p209 = por %p207, %p208
      %p211 = scmp.ne.s32.totalorder %s196, %s210
      %p212 = scmp.eq.s32.totalorder %s24, 0
      %p213 = por %p211, %p212
      %s215 = sadd.s32 %s214, 1
      %p218 = scmp.eq.s32.totalorder %s18, 1
      %p219 = scmp.ne.s32.totalorder %s214, %s216
      %p220 = scmp.eq.s32.totalorder %s18, 0
      %p221 = por %p219, %p220
      %p222 = scmp.ne.s32.totalorder %s214, %s216
      %p223 = scmp.eq.s32.totalorder %s23, 1
      %p224 = por %p222, %p223
      %p225 = scmp.ne.s32.totalorder %s216, %s217
      %p226 = scmp.eq.s32.totalorder %s23, 0
      %p227 = por %p225, %p226
      %p228 = scmp.ne.s32.totalorder %s216, %s217
      %p229 = scmp.eq.s32.totalorder %s24, 1
      %p230 = por %p228, %p229
      %p232 = scmp.ne.s32.totalorder %s217, %s231
      %p233 = scmp.eq.s32.totalorder %s24, 0
      %p234 = por %p232, %p233
      %s235 = ssub.s32 %s18, %s25
      %p236 = scmp.eq.s32.totalorder %s235, 0
      %s238 = sadd.s32 %s237, 1
      %s239 = scalar_select %p236, %s237, %s238
      %p242 = pneg %p236
      %p243 = scmp.eq.s32.totalorder %s18, 1
      %p244 = por %p242, %p243
      %p245 = scmp.ne.s32.totalorder %s237, %s240
      %p246 = scmp.eq.s32.totalorder %s18, 0
      %p247 = por %p245, %p246
      %p248 = scmp.ne.s32.totalorder %s237, %s240
      %p249 = scmp.eq.s32.totalorder %s23, 1
      %p250 = por %p248, %p249
      %p251 = scmp.ne.s32.totalorder %s240, %s241
      %p252 = scmp.eq.s32.totalorder %s23, 0
      %p253 = por %p251, %p252
      %p254 = scmp.ne.s32.totalorder %s240, %s241
      %p255 = scmp.eq.s32.totalorder %s24, 1
      %p256 = por %p254, %p255
      %p258 = scmp.ne.s32.totalorder %s241, %s257
      %p259 = scmp.eq.s32.totalorder %s24, 0
      %p260 = por %p258, %p259
      %p261 = scmp.le.s32.totalorder 1, %s18
      %p262 = scmp.lt.s32.totalorder %s18, 3
      %p263 = pnand %p261, %p262
      %p264 = pneg %p263
      // Predicated region
      $region9: #{attention_block_forward.1} parent=5 // pred_check
        _
      $region10: #{attention_block_forward.1} parent=5 // pred_check_branch
        %266 = sbr.rel (%p263) target = $region12
      $region11: #{attention_block_forward.1} parent=5 // pred_region
        %s267 = ssub.s32 %s18, 1
        // Predicated region
        $region13: #{attention_block_forward.1} parent=11 // pred_check
          %p268 = pneg %p143
        $region14: #{attention_block_forward.1} parent=11 // pred_check_branch
          %270 = sbr.rel (%p268) target = $region16
        $region15: #{attention_block_forward.1} parent=11 // pred_region
          _
        $region16: #{attention_block_forward.1} parent=11 // pred_fallthru
          _
        // Predicated region
        $region17: #{attention_block_forward.1} parent=11 // pred_check
          %p271 = pneg %p164
        $region18: #{attention_block_forward.1} parent=11 // pred_check_branch
          %273 = sbr.rel (%p271) target = $region20
        $region19: #{attention_block_forward.1} parent=11 // pred_region
          _
        $region20: #{attention_block_forward.1} parent=11 // pred_fallthru
          _
        // Predicated region
        $region21: #{attention_block_forward.1} parent=11 // pred_check
          %p274 = pneg %p185
        $region22: #{attention_block_forward.1} parent=11 // pred_check_branch
          %276 = sbr.rel (%p274) target = $region24
        $region23: #{attention_block_forward.1} parent=11 // pred_region
          _
        $region24: #{attention_block_forward.1} parent=11 // pred_fallthru
          _
        // Predicated region
        $region25: #{attention_block_forward.1} parent=11 // pred_check
          %p277 = pneg %p206
        $region26: #{attention_block_forward.1} parent=11 // pred_check_branch
          %279 = sbr.rel (%p277) target = $region28
        $region27: #{attention_block_forward.1} parent=11 // pred_region
          _
        $region28: #{attention_block_forward.1} parent=11 // pred_fallthru
          _
        // Predicated region
        $region29: #{attention_block_forward.1} parent=11 // pred_check
          %p280 = pneg %p227
        $region30: #{attention_block_forward.1} parent=11 // pred_check_branch
          %282 = sbr.rel (%p280) target = $region32
        $region31: #{attention_block_forward.1} parent=11 // pred_region
          _
        $region32: #{attention_block_forward.1} parent=11 // pred_fallthru
          _
      $region12: #{attention_block_forward.1} parent=5 // pred_fallthru
        _
      %p283 = scmp.lt.s32.totalorder %s18, 2
      // Predicated region
      $region33: #{attention_block_forward.1} parent=5 // pred_check
        %p284 = pneg %p283
      $region34: #{attention_block_forward.1} parent=5 // pred_check_branch
        %286 = sbr.rel (%p284) target = $region36
      $region35: #{attention_block_forward.1} parent=5 // pred_region
        // Predicated region
        $region37: #{attention_block_forward.1} parent=35 // pred_check
          %p287 = pneg %p38
        $region38: #{attention_block_forward.1} parent=35 // pred_check_branch
          %289 = sbr.rel (%p287) target = $region40
        $region39: #{attention_block_forward.1} parent=35 // pred_region
          %p290 = scmp.lt.s32.totalorder %s18, 1
          %s291 = scalar_select %p290, %s18, 1
          %s292 = smul.addr %s291, 128
          %s293 = smul.addr %s292, 8
          %s294 = scalar_lea.vmem %s0, %s293
        $region40: #{attention_block_forward.1} parent=35 // pred_fallthru
          _
        // Predicated region
        $region41: #{attention_block_forward.1} parent=35 // pred_check
          %p295 = pneg %p64
        $region42: #{attention_block_forward.1} parent=35 // pred_check_branch
          %297 = sbr.rel (%p295) target = $region44
        $region43: #{attention_block_forward.1} parent=35 // pred_region
          %p298 = scmp.lt.s32.totalorder %s18, 1
          %s299 = scalar_select %p298, %s18, 1
          %s300 = smul.addr %s299, 16
          %s301 = smul.addr %s300, 8
          %s302 = scalar_lea.vmem %s1, %s301
        $region44: #{attention_block_forward.1} parent=35 // pred_fallthru
          _
        // Predicated region
        $region45: #{attention_block_forward.1} parent=35 // pred_check
          %p303 = pneg %p90
        $region46: #{attention_block_forward.1} parent=35 // pred_check_branch
          %305 = sbr.rel (%p303) target = $region48
        $region47: #{attention_block_forward.1} parent=35 // pred_region
          %p306 = scmp.lt.s32.totalorder %s18, 1
          %s307 = scalar_select %p306, %s18, 1
          %s308 = scalar_lea.vmem %s2, %s307
        $region48: #{attention_block_forward.1} parent=35 // pred_fallthru
          _
        // Predicated region
        $region49: #{attention_block_forward.1} parent=35 // pred_check
          %p309 = pneg %p116
        $region50: #{attention_block_forward.1} parent=35 // pred_check_branch
          %311 = sbr.rel (%p309) target = $region52
        $region51: #{attention_block_forward.1} parent=35 // pred_region
          %p312 = scmp.lt.s32.totalorder %s18, 1
          %s313 = scalar_select %p312, %s18, 1
          %s314 = smul.addr %s313, 16
          %s315 = smul.addr %s314, 8
          %s316 = scalar_lea.vmem %s3, %s315
        $region52: #{attention_block_forward.1} parent=35 // pred_fallthru
          _
      $region36: #{attention_block_forward.1} parent=5 // pred_fallthru
        _
      %p317 = scmp.le.s32.totalorder 1, %s18
      %p318 = scmp.lt.s32.totalorder %s18, 3
      %p319 = pnand %p317, %p318
      %p320 = pneg %p319
      // Predicated region
      $region53: #{attention_block_forward.1} parent=5 // pred_check
        _
      $region54: #{attention_block_forward.1} parent=5 // pred_check_branch
        %322 = sbr.rel (%p319) target = $region56
      $region55: #{attention_block_forward.1} parent=5 // pred_region
        %s323 = ssub.s32 %s18, 1
        %p324 = scmp.lt.s32.totalorder %s23, 1
        %s325 = scalar_select %p324, %s23, 1
        %s326 = smul.addr %s325, 128
        %s327 = smul.addr %s326, 8
        %s328 = scalar_lea.vmem %s0, %s327
        %p329 = pneg %p44
        %p330 = pneg %p41
        %p331 = scmp.lt.s32.totalorder %s23, 1
        %s332 = scalar_select %p331, %s23, 1
        %s333 = smul.addr %s332, 16
        %s334 = smul.addr %s333, 8
        %s335 = scalar_lea.vmem %s1, %s334
        %p336 = pneg %p70
        %p337 = pneg %p67
        %p338 = scmp.lt.s32.totalorder %s23, 1
        %s339 = scalar_select %p338, %s23, 1
        %s340 = scalar_lea.vmem %s2, %s339
        %p341 = pneg %p96
        %p342 = pneg %p93
        %p343 = scmp.lt.s32.totalorder %s23, 1
        %s344 = scalar_select %p343, %s23, 1
        %s345 = smul.addr %s344, 16
        %s346 = smul.addr %s345, 8
        %s347 = scalar_lea.vmem %s3, %s346
        %p348 = pneg %p122
        %p349 = pneg %p119
        %p350 = pneg %p143
        %p351 = pneg %p140
        %p352 = pneg %p164
        %p353 = pneg %p161
        %p354 = pneg %p185
        %p355 = pneg %p182
        %p356 = pneg %p206
        %p357 = pneg %p203
        %p358 = pneg %p227
        %p359 = pneg %p224
        %p360 = pneg %p253
        %p361 = pneg %p250
        %s362 = sand.u32 %s240, 1
        %s363 = scalar_lea.sflag [#allocation3], %s362
        %s364 = sand.u32 %s240, 1
        %s365 = smul.addr %s364, 1024
        %s366 = scalar_lea.vmem [#allocation2], %s365
        %p367 = scmp.lt.s32.totalorder %s23, 1
        %s368 = scalar_select %p367, %s23, 1
        %s369 = smul.addr %s368, 128
        %s370 = smul.addr %s369, 8
        %s371 = scalar_lea.vmem %s0, %s370
        %p372 = scmp.lt.s32.totalorder %s23, 1
        %s373 = scalar_select %p372, %s23, 1
        %s374 = smul.addr %s373, 16
        %s375 = smul.addr %s374, 8
        %s376 = scalar_lea.vmem %s1, %s375
        %p377 = scmp.lt.s32.totalorder %s23, 1
        %s378 = scalar_select %p377, %s23, 1
        %s379 = scalar_lea.vmem %s2, %s378
        %p380 = scmp.lt.s32.totalorder %s23, 1
        %s381 = scalar_select %p380, %s23, 1
        %s382 = smul.addr %s381, 16
        %s383 = smul.addr %s382, 8
        %s384 = scalar_lea.vmem %s3, %s383
        %v385 = vld [vmem:[%s371] sm:$0xff]
        %v386 = vld [vmem:[%s371 + $0x8] sm:$0xff]
        %v387 = vld [vmem:[%s371 + $0x10] sm:$0xff]
        %v388 = vld [vmem:[%s371 + $0x18] sm:$0xff]
        %v389 = vld [vmem:[%s371 + $0x20] sm:$0xff]
        %v390 = vld [vmem:[%s371 + $0x28] sm:$0xff]
        %v391 = vld [vmem:[%s371 + $0x30] sm:$0xff]
        %v392 = vld [vmem:[%s371 + $0x38] sm:$0xff]
        %v393 = vld [vmem:[%s371 + $0x40] sm:$0xff]
        %v394 = vld [vmem:[%s371 + $0x48] sm:$0xff]
        %v395 = vld [vmem:[%s371 + $0x50] sm:$0xff]
        %v396 = vld [vmem:[%s371 + $0x58] sm:$0xff]
        %v397 = vld [vmem:[%s371 + $0x60] sm:$0xff]
        %v398 = vld [vmem:[%s371 + $0x68] sm:$0xff]
        %v399 = vld [vmem:[%s371 + $0x70] sm:$0xff]
        %v400 = vld [vmem:[%s371 + $0x78] sm:$0xff]
        %v401 = vld [vmem:[%s371 + $0x80] sm:$0xff]
        %v402 = vld [vmem:[%s371 + $0x88] sm:$0xff]
        %v403 = vld [vmem:[%s371 + $0x90] sm:$0xff]
        %v404 = vld [vmem:[%s371 + $0x98] sm:$0xff]
        %v405 = vld [vmem:[%s371 + $0xa0] sm:$0xff]
        %v406 = vld [vmem:[%s371 + $0xa8] sm:$0xff]
        %v407 = vld [vmem:[%s371 + $0xb0] sm:$0xff]
        %v408 = vld [vmem:[%s371 + $0xb8] sm:$0xff]
        %v409 = vld [vmem:[%s371 + $0xc0] sm:$0xff]
        %v410 = vld [vmem:[%s371 + $0xc8] sm:$0xff]
        %v411 = vld [vmem:[%s371 + $0xd0] sm:$0xff]
        %v412 = vld [vmem:[%s371 + $0xd8] sm:$0xff]
        %v413 = vld [vmem:[%s371 + $0xe0] sm:$0xff]
        %v414 = vld [vmem:[%s371 + $0xe8] sm:$0xff]
        %v415 = vld [vmem:[%s371 + $0xf0] sm:$0xff]
        %v416 = vld [vmem:[%s371 + $0xf8] sm:$0xff]
        %v417 = vld [vmem:[%s371 + $0x100] sm:$0xff]
        %v418 = vld [vmem:[%s371 + $0x108] sm:$0xff]
        %v419 = vld [vmem:[%s371 + $0x110] sm:$0xff]
        %v420 = vld [vmem:[%s371 + $0x118] sm:$0xff]
        %v421 = vld [vmem:[%s371 + $0x120] sm:$0xff]
        %v422 = vld [vmem:[%s371 + $0x128] sm:$0xff]
        %v423 = vld [vmem:[%s371 + $0x130] sm:$0xff]
        %v424 = vld [vmem:[%s371 + $0x138] sm:$0xff]
        %v425 = vld [vmem:[%s371 + $0x140] sm:$0xff]
        %v426 = vld [vmem:[%s371 + $0x148] sm:$0xff]
        %v427 = vld [vmem:[%s371 + $0x150] sm:$0xff]
        %v428 = vld [vmem:[%s371 + $0x158] sm:$0xff]
        %v429 = vld [vmem:[%s371 + $0x160] sm:$0xff]
        %v430 = vld [vmem:[%s371 + $0x168] sm:$0xff]
        %v431 = vld [vmem:[%s371 + $0x170] sm:$0xff]
        %v432 = vld [vmem:[%s371 + $0x178] sm:$0xff]
        %v433 = vld [vmem:[%s371 + $0x180] sm:$0xff]
        %v434 = vld [vmem:[%s371 + $0x188] sm:$0xff]
        %v435 = vld [vmem:[%s371 + $0x190] sm:$0xff]
        %v436 = vld [vmem:[%s371 + $0x198] sm:$0xff]
        %v437 = vld [vmem:[%s371 + $0x1a0] sm:$0xff]
        %v438 = vld [vmem:[%s371 + $0x1a8] sm:$0xff]
        %v439 = vld [vmem:[%s371 + $0x1b0] sm:$0xff]
        %v440 = vld [vmem:[%s371 + $0x1b8] sm:$0xff]
        %v441 = vld [vmem:[%s371 + $0x1c0] sm:$0xff]
        %v442 = vld [vmem:[%s371 + $0x1c8] sm:$0xff]
        %v443 = vld [vmem:[%s371 + $0x1d0] sm:$0xff]
        %v444 = vld [vmem:[%s371 + $0x1d8] sm:$0xff]
        %v445 = vld [vmem:[%s371 + $0x1e0] sm:$0xff]
        %v446 = vld [vmem:[%s371 + $0x1e8] sm:$0xff]
        %v447 = vld [vmem:[%s371 + $0x1f0] sm:$0xff]
        %v448 = vld [vmem:[%s371 + $0x1f8] sm:$0xff]
        %v449 = vld [vmem:[%s371 + $0x200] sm:$0xff]
        %v450 = vld [vmem:[%s371 + $0x208] sm:$0xff]
        %v451 = vld [vmem:[%s371 + $0x210] sm:$0xff]
        %v452 = vld [vmem:[%s371 + $0x218] sm:$0xff]
        %v453 = vld [vmem:[%s371 + $0x220] sm:$0xff]
        %v454 = vld [vmem:[%s371 + $0x228] sm:$0xff]
        %v455 = vld [vmem:[%s371 + $0x230] sm:$0xff]
        %v456 = vld [vmem:[%s371 + $0x238] sm:$0xff]
        %v457 = vld [vmem:[%s371 + $0x240] sm:$0xff]
        %v458 = vld [vmem:[%s371 + $0x248] sm:$0xff]
        %v459 = vld [vmem:[%s371 + $0x250] sm:$0xff]
        %v460 = vld [vmem:[%s371 + $0x258] sm:$0xff]
        %v461 = vld [vmem:[%s371 + $0x260] sm:$0xff]
        %v462 = vld [vmem:[%s371 + $0x268] sm:$0xff]
        %v463 = vld [vmem:[%s371 + $0x270] sm:$0xff]
        %v464 = vld [vmem:[%s371 + $0x278] sm:$0xff]
        %v465 = vld [vmem:[%s371 + $0x280] sm:$0xff]
        %v466 = vld [vmem:[%s371 + $0x288] sm:$0xff]
        %v467 = vld [vmem:[%s371 + $0x290] sm:$0xff]
        %v468 = vld [vmem:[%s371 + $0x298] sm:$0xff]
        %v469 = vld [vmem:[%s371 + $0x2a0] sm:$0xff]
        %v470 = vld [vmem:[%s371 + $0x2a8] sm:$0xff]
        %v471 = vld [vmem:[%s371 + $0x2b0] sm:$0xff]
        %v472 = vld [vmem:[%s371 + $0x2b8] sm:$0xff]
        %v473 = vld [vmem:[%s371 + $0x2c0] sm:$0xff]
        %v474 = vld [vmem:[%s371 + $0x2c8] sm:$0xff]
        %v475 = vld [vmem:[%s371 + $0x2d0] sm:$0xff]
        %v476 = vld [vmem:[%s371 + $0x2d8] sm:$0xff]
        %v477 = vld [vmem:[%s371 + $0x2e0] sm:$0xff]
        %v478 = vld [vmem:[%s371 + $0x2e8] sm:$0xff]
        %v479 = vld [vmem:[%s371 + $0x2f0] sm:$0xff]
        %v480 = vld [vmem:[%s371 + $0x2f8] sm:$0xff]
        %v481 = vld [vmem:[%s371 + $0x300] sm:$0xff]
        %v482 = vld [vmem:[%s371 + $0x308] sm:$0xff]
        %v483 = vld [vmem:[%s371 + $0x310] sm:$0xff]
        %v484 = vld [vmem:[%s371 + $0x318] sm:$0xff]
        %v485 = vld [vmem:[%s371 + $0x320] sm:$0xff]
        %v486 = vld [vmem:[%s371 + $0x328] sm:$0xff]
        %v487 = vld [vmem:[%s371 + $0x330] sm:$0xff]
        %v488 = vld [vmem:[%s371 + $0x338] sm:$0xff]
        %v489 = vld [vmem:[%s371 + $0x340] sm:$0xff]
        %v490 = vld [vmem:[%s371 + $0x348] sm:$0xff]
        %v491 = vld [vmem:[%s371 + $0x350] sm:$0xff]
        %v492 = vld [vmem:[%s371 + $0x358] sm:$0xff]
        %v493 = vld [vmem:[%s371 + $0x360] sm:$0xff]
        %v494 = vld [vmem:[%s371 + $0x368] sm:$0xff]
        %v495 = vld [vmem:[%s371 + $0x370] sm:$0xff]
        %v496 = vld [vmem:[%s371 + $0x378] sm:$0xff]
        %v497 = vld [vmem:[%s371 + $0x380] sm:$0xff]
        %v498 = vld [vmem:[%s371 + $0x388] sm:$0xff]
        %v499 = vld [vmem:[%s371 + $0x390] sm:$0xff]
        %v500 = vld [vmem:[%s371 + $0x398] sm:$0xff]
        %v501 = vld [vmem:[%s371 + $0x3a0] sm:$0xff]
        %v502 = vld [vmem:[%s371 + $0x3a8] sm:$0xff]
        %v503 = vld [vmem:[%s371 + $0x3b0] sm:$0xff]
        %v504 = vld [vmem:[%s371 + $0x3b8] sm:$0xff]
        %v505 = vld [vmem:[%s371 + $0x3c0] sm:$0xff]
        %v506 = vld [vmem:[%s371 + $0x3c8] sm:$0xff]
        %v507 = vld [vmem:[%s371 + $0x3d0] sm:$0xff]
        %v508 = vld [vmem:[%s371 + $0x3d8] sm:$0xff]
        %v509 = vld [vmem:[%s371 + $0x3e0] sm:$0xff]
        %v510 = vld [vmem:[%s371 + $0x3e8] sm:$0xff]
        %v511 = vld [vmem:[%s371 + $0x3f0] sm:$0xff]
        %v512 = vld [vmem:[%s371 + $0x3f8] sm:$0xff]
        %v513 = vld [vmem:[%s376] sm:$0xff]
        %v514 = vld [vmem:[%s376 + $0x8] sm:$0xff]
        %v515 = vld [vmem:[%s376 + $0x10] sm:$0xff]
        %v516 = vld [vmem:[%s376 + $0x18] sm:$0xff]
        %v517 = vld [vmem:[%s376 + $0x20] sm:$0xff]
        %v518 = vld [vmem:[%s376 + $0x28] sm:$0xff]
        %v519 = vld [vmem:[%s376 + $0x30] sm:$0xff]
        %v520 = vld [vmem:[%s376 + $0x38] sm:$0xff]
        %v521 = vld [vmem:[%s376 + $0x40] sm:$0xff]
        %v522 = vld [vmem:[%s376 + $0x48] sm:$0xff]
        %v523 = vld [vmem:[%s376 + $0x50] sm:$0xff]
        %v524 = vld [vmem:[%s376 + $0x58] sm:$0xff]
        %v525 = vld [vmem:[%s376 + $0x60] sm:$0xff]
        %v526 = vld [vmem:[%s376 + $0x68] sm:$0xff]
        %v527 = vld [vmem:[%s376 + $0x70] sm:$0xff]
        %v528 = vld [vmem:[%s376 + $0x78] sm:$0xff]
        %v529 = vld [vmem:[%s379] sm:$0x1]
        %v531 = vlaneseq
        %v532 = vshrl.u32 %v531, 7
        %v533 = vsub.s32 0, %v532
        %v534 = vrot.slane %v529, %v533
        %536 = vmatprep.subr.mxu0 0.0
        %537 = vmatpush1.msra.mxu0 %v528
        %538 = vmatprep.subr.mxu0 0.0
        %539 = vmatpush1.msra.mxu0 %v527
        %540 = vmatprep.subr.mxu0 0.0
        %541 = vmatpush1.msra.mxu0 %v526
        %542 = vmatprep.subr.mxu0 0.0
        %543 = vmatpush1.msra.mxu0 %v525
        %544 = vmatprep.subr.mxu0 0.0
        %545 = vmatpush1.msra.mxu0 %v524
        %546 = vmatprep.subr.mxu0 0.0
        %547 = vmatpush1.msra.mxu0 %v523
        %548 = vmatprep.subr.mxu0 0.0
        %549 = vmatpush1.msra.mxu0 %v522
        %550 = vmatprep.subr.mxu0 0.0
        %551 = vmatpush1.msra.mxu0 %v521
        %552 = vmatprep.subr.mxu0 0.0
        %553 = vmatpush1.msra.mxu0 %v520
        %554 = vmatprep.subr.mxu0 0.0
        %555 = vmatpush1.msra.mxu0 %v519
        %556 = vmatprep.subr.mxu0 0.0
        %557 = vmatpush1.msra.mxu0 %v518
        %558 = vmatprep.subr.mxu0 0.0
        %559 = vmatpush1.msra.mxu0 %v517
        %560 = vmatprep.subr.mxu0 0.0
        %561 = vmatpush1.msra.mxu0 %v516
        %562 = vmatprep.subr.mxu0 0.0
        %563 = vmatpush1.msra.mxu0 %v515
        %564 = vmatprep.subr.mxu0 0.0
        %565 = vmatpush1.msra.mxu0 %v514
        %566 = vmatprep.subr.mxu0 0.0
        %567 = vmatpush1.msra.mxu0 %v513
        %568 = vmatprep.subr.mxu0 0.0
        %569 = vmatpush2.msra.mxu0 0.0
        %570 = vmatprep.subr.mxu0 0.0
        %571 = vmatpush2.msra.mxu0 0.0
        %572 = vmatprep.subr.mxu0 0.0
        %573 = vmatpush2.msra.mxu0 0.0
        %574 = vmatprep.subr.mxu0 0.0
        %575 = vmatpush2.msra.mxu0 0.0
        %576 = vmatprep.subr.mxu0 0.0
        %577 = vmatpush2.msra.mxu0 0.0
        %578 = vmatprep.subr.mxu0 0.0
        %579 = vmatpush2.msra.mxu0 0.0
        %580 = vmatprep.subr.mxu0 0.0
        %581 = vmatpush2.msra.mxu0 0.0
        %582 = vmatprep.subr.mxu0 0.0
        %583 = vmatpush2.msra.mxu0 0.0
        %584 = vmatprep.subr.mxu0 0.0
        %585 = vmatpush2.msra.mxu0 0.0
        %586 = vmatprep.subr.mxu0 0.0
        %587 = vmatpush2.msra.mxu0 0.0
        %588 = vmatprep.subr.mxu0 0.0
        %589 = vmatpush2.msra.mxu0 0.0
        %590 = vmatprep.subr.mxu0 0.0
        %591 = vmatpush2.msra.mxu0 0.0
        %592 = vmatprep.subr.mxu0 0.0
        %593 = vmatpush2.msra.mxu0 0.0
        %594 = vmatprep.subr.mxu0 0.0
        %595 = vmatpush2.msra.mxu0 0.0
        %596 = vmatprep.subr.mxu0 0.0
        %597 = vmatpush2.msra.mxu0 0.0
        %598 = vmatprep.subr.mxu0 0.0
        %599 = vmatpush2.msra.mxu0 0.0
        %600 = vmatprep.mubr.f32.mxu0 0.0
        %601 = vmatmul.mubr.f32.gmra.mxu0 %v385
        %v602 = vpop.f32.mrf.mxu0
        %v603 = vadd.f32 %v534, %v602
        %v604 = vpop.f32.mrf.mxu0
        %605 = vmatprep.mubr.f32.mxu0 0.0
        %606 = vmatmul.mubr.f32.gmra.mxu0 %v386
        %v607 = vpop.f32.mrf.mxu0
        %v608 = vadd.f32 %v534, %v607
        %v609 = vpop.f32.mrf.mxu0
        %610 = vmatprep.mubr.f32.mxu0 0.0
        %611 = vmatmul.mubr.f32.gmra.mxu0 %v387
        %v612 = vpop.f32.mrf.mxu0
        %v613 = vadd.f32 %v534, %v612
        %v614 = vpop.f32.mrf.mxu0
        %615 = vmatprep.mubr.f32.mxu0 0.0
        %616 = vmatmul.mubr.f32.gmra.mxu0 %v388
        %v617 = vpop.f32.mrf.mxu0
        %v618 = vadd.f32 %v534, %v617
        %v619 = vpop.f32.mrf.mxu0
        %620 = vmatprep.mubr.f32.mxu0 0.0
        %621 = vmatmul.mubr.f32.gmra.mxu0 %v389
        %v622 = vpop.f32.mrf.mxu0
        %v623 = vadd.f32 %v534, %v622
        %v624 = vpop.f32.mrf.mxu0
        %625 = vmatprep.mubr.f32.mxu0 0.0
        %626 = vmatmul.mubr.f32.gmra.mxu0 %v390
        %v627 = vpop.f32.mrf.mxu0
        %v628 = vadd.f32 %v534, %v627
        %v629 = vpop.f32.mrf.mxu0
        %630 = vmatprep.mubr.f32.mxu0 0.0
        %631 = vmatmul.mubr.f32.gmra.mxu0 %v391
        %v632 = vpop.f32.mrf.mxu0
        %v633 = vadd.f32 %v534, %v632
        %v634 = vpop.f32.mrf.mxu0
        %635 = vmatprep.mubr.f32.mxu0 0.0
        %636 = vmatmul.mubr.f32.gmra.mxu0 %v392
        %v637 = vpop.f32.mrf.mxu0
        %v638 = vadd.f32 %v534, %v637
        %v639 = vpop.f32.mrf.mxu0
        %640 = vmatprep.mubr.f32.mxu0 0.0
        %641 = vmatmul.mubr.f32.gmra.mxu0 %v393
        %v642 = vpop.f32.mrf.mxu0
        %v643 = vadd.f32 %v534, %v642
        %v644 = vpop.f32.mrf.mxu0
        %645 = vmatprep.mubr.f32.mxu0 0.0
        %646 = vmatmul.mubr.f32.gmra.mxu0 %v394
        %v647 = vpop.f32.mrf.mxu0
        %v648 = vadd.f32 %v534, %v647
        %v649 = vpop.f32.mrf.mxu0
        %650 = vmatprep.mubr.f32.mxu0 0.0
        %651 = vmatmul.mubr.f32.gmra.mxu0 %v395
        %v652 = vpop.f32.mrf.mxu0
        %v653 = vadd.f32 %v534, %v652
        %v654 = vpop.f32.mrf.mxu0
        %655 = vmatprep.mubr.f32.mxu0 0.0
        %656 = vmatmul.mubr.f32.gmra.mxu0 %v396
        %v657 = vpop.f32.mrf.mxu0
        %v658 = vadd.f32 %v534, %v657
        %v659 = vpop.f32.mrf.mxu0
        %660 = vmatprep.mubr.f32.mxu0 0.0
        %661 = vmatmul.mubr.f32.gmra.mxu0 %v397
        %v662 = vpop.f32.mrf.mxu0
        %v663 = vadd.f32 %v534, %v662
        %v664 = vpop.f32.mrf.mxu0
        %665 = vmatprep.mubr.f32.mxu0 0.0
        %666 = vmatmul.mubr.f32.gmra.mxu0 %v398
        %v667 = vpop.f32.mrf.mxu0
        %v668 = vadd.f32 %v534, %v667
        %v669 = vpop.f32.mrf.mxu0
        %670 = vmatprep.mubr.f32.mxu0 0.0
        %671 = vmatmul.mubr.f32.gmra.mxu0 %v399
        %v672 = vpop.f32.mrf.mxu0
        %v673 = vadd.f32 %v534, %v672
        %v674 = vpop.f32.mrf.mxu0
        %675 = vmatprep.mubr.f32.mxu0 0.0
        %676 = vmatmul.mubr.f32.gmra.mxu0 %v400
        %v677 = vpop.f32.mrf.mxu0
        %v678 = vadd.f32 %v534, %v677
        %v679 = vpop.f32.mrf.mxu0
        %680 = vmatprep.mubr.f32.mxu0 0.0
        %681 = vmatmul.mubr.f32.gmra.mxu0 %v401
        %v682 = vpop.f32.mrf.mxu0
        %v683 = vadd.f32 %v534, %v682
        %v684 = vpop.f32.mrf.mxu0
        %685 = vmatprep.mubr.f32.mxu0 0.0
        %686 = vmatmul.mubr.f32.gmra.mxu0 %v402
        %v687 = vpop.f32.mrf.mxu0
        %v688 = vadd.f32 %v534, %v687
        %v689 = vpop.f32.mrf.mxu0
        %690 = vmatprep.mubr.f32.mxu0 0.0
        %691 = vmatmul.mubr.f32.gmra.mxu0 %v403
        %v692 = vpop.f32.mrf.mxu0
        %v693 = vadd.f32 %v534, %v692
        %v694 = vpop.f32.mrf.mxu0
        %695 = vmatprep.mubr.f32.mxu0 0.0
        %696 = vmatmul.mubr.f32.gmra.mxu0 %v404
        %v697 = vpop.f32.mrf.mxu0
        %v698 = vadd.f32 %v534, %v697
        %v699 = vpop.f32.mrf.mxu0
        %700 = vmatprep.mubr.f32.mxu0 0.0
        %701 = vmatmul.mubr.f32.gmra.mxu0 %v405
        %v702 = vpop.f32.mrf.mxu0
        %v703 = vadd.f32 %v534, %v702
        %v704 = vpop.f32.mrf.mxu0
        %705 = vmatprep.mubr.f32.mxu0 0.0
        %706 = vmatmul.mubr.f32.gmra.mxu0 %v406
        %v707 = vpop.f32.mrf.mxu0
        %v708 = vadd.f32 %v534, %v707
        %v709 = vpop.f32.mrf.mxu0
        %710 = vmatprep.mubr.f32.mxu0 0.0
        %711 = vmatmul.mubr.f32.gmra.mxu0 %v407
        %v712 = vpop.f32.mrf.mxu0
        %v713 = vadd.f32 %v534, %v712
        %v714 = vpop.f32.mrf.mxu0
        %715 = vmatprep.mubr.f32.mxu0 0.0
        %716 = vmatmul.mubr.f32.gmra.mxu0 %v408
        %v717 = vpop.f32.mrf.mxu0
        %v718 = vadd.f32 %v534, %v717
        %v719 = vpop.f32.mrf.mxu0
        %720 = vmatprep.mubr.f32.mxu0 0.0
        %721 = vmatmul.mubr.f32.gmra.mxu0 %v409
        %v722 = vpop.f32.mrf.mxu0
        %v723 = vadd.f32 %v534, %v722
        %v724 = vpop.f32.mrf.mxu0
        %725 = vmatprep.mubr.f32.mxu0 0.0
        %726 = vmatmul.mubr.f32.gmra.mxu0 %v410
        %v727 = vpop.f32.mrf.mxu0
        %v728 = vadd.f32 %v534, %v727
        %v729 = vpop.f32.mrf.mxu0
        %730 = vmatprep.mubr.f32.mxu0 0.0
        %731 = vmatmul.mubr.f32.gmra.mxu0 %v411
        %v732 = vpop.f32.mrf.mxu0
        %v733 = vadd.f32 %v534, %v732
        %v734 = vpop.f32.mrf.mxu0
        %735 = vmatprep.mubr.f32.mxu0 0.0
        %736 = vmatmul.mubr.f32.gmra.mxu0 %v412
        %v737 = vpop.f32.mrf.mxu0
        %v738 = vadd.f32 %v534, %v737
        %v739 = vpop.f32.mrf.mxu0
        %740 = vmatprep.mubr.f32.mxu0 0.0
        %741 = vmatmul.mubr.f32.gmra.mxu0 %v413
        %v742 = vpop.f32.mrf.mxu0
        %v743 = vadd.f32 %v534, %v742
        %v744 = vpop.f32.mrf.mxu0
        %745 = vmatprep.mubr.f32.mxu0 0.0
        %746 = vmatmul.mubr.f32.gmra.mxu0 %v414
        %v747 = vpop.f32.mrf.mxu0
        %v748 = vadd.f32 %v534, %v747
        %v749 = vpop.f32.mrf.mxu0
        %750 = vmatprep.mubr.f32.mxu0 0.0
        %751 = vmatmul.mubr.f32.gmra.mxu0 %v415
        %v752 = vpop.f32.mrf.mxu0
        %v753 = vadd.f32 %v534, %v752
        %v754 = vpop.f32.mrf.mxu0
        %755 = vmatprep.mubr.f32.mxu0 0.0
        %756 = vmatmul.mubr.f32.gmra.mxu0 %v416
        %v757 = vpop.f32.mrf.mxu0
        %v758 = vadd.f32 %v534, %v757
        %v759 = vpop.f32.mrf.mxu0
        %760 = vmatprep.mubr.f32.mxu0 0.0
        %761 = vmatmul.mubr.f32.gmra.mxu0 %v417
        %v762 = vpop.f32.mrf.mxu0
        %v763 = vadd.f32 %v534, %v762
        %v764 = vpop.f32.mrf.mxu0
        %765 = vmatprep.mubr.f32.mxu0 0.0
        %766 = vmatmul.mubr.f32.gmra.mxu0 %v418
        %v767 = vpop.f32.mrf.mxu0
        %v768 = vadd.f32 %v534, %v767
        %v769 = vpop.f32.mrf.mxu0
        %770 = vmatprep.mubr.f32.mxu0 0.0
        %771 = vmatmul.mubr.f32.gmra.mxu0 %v419
        %v772 = vpop.f32.mrf.mxu0
        %v773 = vadd.f32 %v534, %v772
        %v774 = vpop.f32.mrf.mxu0
        %775 = vmatprep.mubr.f32.mxu0 0.0
        %776 = vmatmul.mubr.f32.gmra.mxu0 %v420
        %v777 = vpop.f32.mrf.mxu0
        %v778 = vadd.f32 %v534, %v777
        %v779 = vpop.f32.mrf.mxu0
        %780 = vmatprep.mubr.f32.mxu0 0.0
        %781 = vmatmul.mubr.f32.gmra.mxu0 %v421
        %v782 = vpop.f32.mrf.mxu0
        %v783 = vadd.f32 %v534, %v782
        %v784 = vpop.f32.mrf.mxu0
        %785 = vmatprep.mubr.f32.mxu0 0.0
        %786 = vmatmul.mubr.f32.gmra.mxu0 %v422
        %v787 = vpop.f32.mrf.mxu0
        %v788 = vadd.f32 %v534, %v787
        %v789 = vpop.f32.mrf.mxu0
        %790 = vmatprep.mubr.f32.mxu0 0.0
        %791 = vmatmul.mubr.f32.gmra.mxu0 %v423
        %v792 = vpop.f32.mrf.mxu0
        %v793 = vadd.f32 %v534, %v792
        %v794 = vpop.f32.mrf.mxu0
        %795 = vmatprep.mubr.f32.mxu0 0.0
        %796 = vmatmul.mubr.f32.gmra.mxu0 %v424
        %v797 = vpop.f32.mrf.mxu0
        %v798 = vadd.f32 %v534, %v797
        %v799 = vpop.f32.mrf.mxu0
        %800 = vmatprep.mubr.f32.mxu0 0.0
        %801 = vmatmul.mubr.f32.gmra.mxu0 %v425
        %v802 = vpop.f32.mrf.mxu0
        %v803 = vadd.f32 %v534, %v802
        %v804 = vpop.f32.mrf.mxu0
        %805 = vmatprep.mubr.f32.mxu0 0.0
        %806 = vmatmul.mubr.f32.gmra.mxu0 %v426
        %v807 = vpop.f32.mrf.mxu0
        %v808 = vadd.f32 %v534, %v807
        %v809 = vpop.f32.mrf.mxu0
        %810 = vmatprep.mubr.f32.mxu0 0.0
        %811 = vmatmul.mubr.f32.gmra.mxu0 %v427
        %v812 = vpop.f32.mrf.mxu0
        %v813 = vadd.f32 %v534, %v812
        %v814 = vpop.f32.mrf.mxu0
        %815 = vmatprep.mubr.f32.mxu0 0.0
        %816 = vmatmul.mubr.f32.gmra.mxu0 %v428
        %v817 = vpop.f32.mrf.mxu0
        %v818 = vadd.f32 %v534, %v817
        %v819 = vpop.f32.mrf.mxu0
        %820 = vmatprep.mubr.f32.mxu0 0.0
        %821 = vmatmul.mubr.f32.gmra.mxu0 %v429
        %v822 = vpop.f32.mrf.mxu0
        %v823 = vadd.f32 %v534, %v822
        %v824 = vpop.f32.mrf.mxu0
        %825 = vmatprep.mubr.f32.mxu0 0.0
        %826 = vmatmul.mubr.f32.gmra.mxu0 %v430
        %v827 = vpop.f32.mrf.mxu0
        %v828 = vadd.f32 %v534, %v827
        %v829 = vpop.f32.mrf.mxu0
        %830 = vmatprep.mubr.f32.mxu0 0.0
        %831 = vmatmul.mubr.f32.gmra.mxu0 %v431
        %v832 = vpop.f32.mrf.mxu0
        %v833 = vadd.f32 %v534, %v832
        %v834 = vpop.f32.mrf.mxu0
        %835 = vmatprep.mubr.f32.mxu0 0.0
        %836 = vmatmul.mubr.f32.gmra.mxu0 %v432
        %v837 = vpop.f32.mrf.mxu0
        %v838 = vadd.f32 %v534, %v837
        %v839 = vpop.f32.mrf.mxu0
        %840 = vmatprep.mubr.f32.mxu0 0.0
        %841 = vmatmul.mubr.f32.gmra.mxu0 %v433
        %v842 = vpop.f32.mrf.mxu0
        %v843 = vadd.f32 %v534, %v842
        %v844 = vpop.f32.mrf.mxu0
        %845 = vmatprep.mubr.f32.mxu0 0.0
        %846 = vmatmul.mubr.f32.gmra.mxu0 %v434
        %v847 = vpop.f32.mrf.mxu0
        %v848 = vadd.f32 %v534, %v847
        %v849 = vpop.f32.mrf.mxu0
        %850 = vmatprep.mubr.f32.mxu0 0.0
        %851 = vmatmul.mubr.f32.gmra.mxu0 %v435
        %v852 = vpop.f32.mrf.mxu0
        %v853 = vadd.f32 %v534, %v852
        %v854 = vpop.f32.mrf.mxu0
        %855 = vmatprep.mubr.f32.mxu0 0.0
        %856 = vmatmul.mubr.f32.gmra.mxu0 %v436
        %v857 = vpop.f32.mrf.mxu0
        %v858 = vadd.f32 %v534, %v857
        %v859 = vpop.f32.mrf.mxu0
        %860 = vmatprep.mubr.f32.mxu0 0.0
        %861 = vmatmul.mubr.f32.gmra.mxu0 %v437
        %v862 = vpop.f32.mrf.mxu0
        %v863 = vadd.f32 %v534, %v862
        %v864 = vpop.f32.mrf.mxu0
        %865 = vmatprep.mubr.f32.mxu0 0.0
        %866 = vmatmul.mubr.f32.gmra.mxu0 %v438
        %v867 = vpop.f32.mrf.mxu0
        %v868 = vadd.f32 %v534, %v867
        %v869 = vpop.f32.mrf.mxu0
        %870 = vmatprep.mubr.f32.mxu0 0.0
        %871 = vmatmul.mubr.f32.gmra.mxu0 %v439
        %v872 = vpop.f32.mrf.mxu0
        %v873 = vadd.f32 %v534, %v872
        %v874 = vpop.f32.mrf.mxu0
        %875 = vmatprep.mubr.f32.mxu0 0.0
        %876 = vmatmul.mubr.f32.gmra.mxu0 %v440
        %v877 = vpop.f32.mrf.mxu0
        %v878 = vadd.f32 %v534, %v877
        %v879 = vpop.f32.mrf.mxu0
        %880 = vmatprep.mubr.f32.mxu0 0.0
        %881 = vmatmul.mubr.f32.gmra.mxu0 %v441
        %v882 = vpop.f32.mrf.mxu0
        %v883 = vadd.f32 %v534, %v882
        %v884 = vpop.f32.mrf.mxu0
        %885 = vmatprep.mubr.f32.mxu0 0.0
        %886 = vmatmul.mubr.f32.gmra.mxu0 %v442
        %v887 = vpop.f32.mrf.mxu0
        %v888 = vadd.f32 %v534, %v887
        %v889 = vpop.f32.mrf.mxu0
        %890 = vmatprep.mubr.f32.mxu0 0.0
        %891 = vmatmul.mubr.f32.gmra.mxu0 %v443
        %v892 = vpop.f32.mrf.mxu0
        %v893 = vadd.f32 %v534, %v892
        %v894 = vpop.f32.mrf.mxu0
        %895 = vmatprep.mubr.f32.mxu0 0.0
        %896 = vmatmul.mubr.f32.gmra.mxu0 %v444
        %v897 = vpop.f32.mrf.mxu0
        %v898 = vadd.f32 %v534, %v897
        %v899 = vpop.f32.mrf.mxu0
        %900 = vmatprep.mubr.f32.mxu0 0.0
        %901 = vmatmul.mubr.f32.gmra.mxu0 %v445
        %v902 = vpop.f32.mrf.mxu0
        %v903 = vadd.f32 %v534, %v902
        %v904 = vpop.f32.mrf.mxu0
        %905 = vmatprep.mubr.f32.mxu0 0.0
        %906 = vmatmul.mubr.f32.gmra.mxu0 %v446
        %v907 = vpop.f32.mrf.mxu0
        %v908 = vadd.f32 %v534, %v907
        %v909 = vpop.f32.mrf.mxu0
        %910 = vmatprep.mubr.f32.mxu0 0.0
        %911 = vmatmul.mubr.f32.gmra.mxu0 %v447
        %v912 = vpop.f32.mrf.mxu0
        %v913 = vadd.f32 %v534, %v912
        %v914 = vpop.f32.mrf.mxu0
        %915 = vmatprep.mubr.f32.mxu0 0.0
        %916 = vmatmul.mubr.f32.gmra.mxu0 %v448
        %v917 = vpop.f32.mrf.mxu0
        %v918 = vadd.f32 %v534, %v917
        %v919 = vpop.f32.mrf.mxu0
        %920 = vmatprep.mubr.f32.mxu0 0.0
        %921 = vmatmul.mubr.f32.gmra.mxu0 %v449
        %v922 = vpop.f32.mrf.mxu0
        %v923 = vadd.f32 %v534, %v922
        %v924 = vpop.f32.mrf.mxu0
        %925 = vmatprep.mubr.f32.mxu0 0.0
        %926 = vmatmul.mubr.f32.gmra.mxu0 %v450
        %v927 = vpop.f32.mrf.mxu0
        %v928 = vadd.f32 %v534, %v927
        %v929 = vpop.f32.mrf.mxu0
        %930 = vmatprep.mubr.f32.mxu0 0.0
        %931 = vmatmul.mubr.f32.gmra.mxu0 %v451
        %v932 = vpop.f32.mrf.mxu0
        %v933 = vadd.f32 %v534, %v932
        %v934 = vpop.f32.mrf.mxu0
        %935 = vmatprep.mubr.f32.mxu0 0.0
        %936 = vmatmul.mubr.f32.gmra.mxu0 %v452
        %v937 = vpop.f32.mrf.mxu0
        %v938 = vadd.f32 %v534, %v937
        %v939 = vpop.f32.mrf.mxu0
        %940 = vmatprep.mubr.f32.mxu0 0.0
        %941 = vmatmul.mubr.f32.gmra.mxu0 %v453
        %v942 = vpop.f32.mrf.mxu0
        %v943 = vadd.f32 %v534, %v942
        %v944 = vpop.f32.mrf.mxu0
        %945 = vmatprep.mubr.f32.mxu0 0.0
        %946 = vmatmul.mubr.f32.gmra.mxu0 %v454
        %v947 = vpop.f32.mrf.mxu0
        %v948 = vadd.f32 %v534, %v947
        %v949 = vpop.f32.mrf.mxu0
        %950 = vmatprep.mubr.f32.mxu0 0.0
        %951 = vmatmul.mubr.f32.gmra.mxu0 %v455
        %v952 = vpop.f32.mrf.mxu0
        %v953 = vadd.f32 %v534, %v952
        %v954 = vpop.f32.mrf.mxu0
        %955 = vmatprep.mubr.f32.mxu0 0.0
        %956 = vmatmul.mubr.f32.gmra.mxu0 %v456
        %v957 = vpop.f32.mrf.mxu0
        %v958 = vadd.f32 %v534, %v957
        %v959 = vpop.f32.mrf.mxu0
        %960 = vmatprep.mubr.f32.mxu0 0.0
        %961 = vmatmul.mubr.f32.gmra.mxu0 %v457
        %v962 = vpop.f32.mrf.mxu0
        %v963 = vadd.f32 %v534, %v962
        %v964 = vpop.f32.mrf.mxu0
        %965 = vmatprep.mubr.f32.mxu0 0.0
        %966 = vmatmul.mubr.f32.gmra.mxu0 %v458
        %v967 = vpop.f32.mrf.mxu0
        %v968 = vadd.f32 %v534, %v967
        %v969 = vpop.f32.mrf.mxu0
        %970 = vmatprep.mubr.f32.mxu0 0.0
        %971 = vmatmul.mubr.f32.gmra.mxu0 %v459
        %v972 = vpop.f32.mrf.mxu0
        %v973 = vadd.f32 %v534, %v972
        %v974 = vpop.f32.mrf.mxu0
        %975 = vmatprep.mubr.f32.mxu0 0.0
        %976 = vmatmul.mubr.f32.gmra.mxu0 %v460
        %v977 = vpop.f32.mrf.mxu0
        %v978 = vadd.f32 %v534, %v977
        %v979 = vpop.f32.mrf.mxu0
        %980 = vmatprep.mubr.f32.mxu0 0.0
        %981 = vmatmul.mubr.f32.gmra.mxu0 %v461
        %v982 = vpop.f32.mrf.mxu0
        %v983 = vadd.f32 %v534, %v982
        %v984 = vpop.f32.mrf.mxu0
        %985 = vmatprep.mubr.f32.mxu0 0.0
        %986 = vmatmul.mubr.f32.gmra.mxu0 %v462
        %v987 = vpop.f32.mrf.mxu0
        %v988 = vadd.f32 %v534, %v987
        %v989 = vpop.f32.mrf.mxu0
        %990 = vmatprep.mubr.f32.mxu0 0.0
        %991 = vmatmul.mubr.f32.gmra.mxu0 %v463
        %v992 = vpop.f32.mrf.mxu0
        %v993 = vadd.f32 %v534, %v992
        %v994 = vpop.f32.mrf.mxu0
        %995 = vmatprep.mubr.f32.mxu0 0.0
        %996 = vmatmul.mubr.f32.gmra.mxu0 %v464
        %v997 = vpop.f32.mrf.mxu0
        %v998 = vadd.f32 %v534, %v997
        %v999 = vpop.f32.mrf.mxu0
        %1000 = vmatprep.mubr.f32.mxu0 0.0
        %1001 = vmatmul.mubr.f32.gmra.mxu0 %v465
        %v1002 = vpop.f32.mrf.mxu0
        %v1003 = vadd.f32 %v534, %v1002
        %v1004 = vpop.f32.mrf.mxu0
        %1005 = vmatprep.mubr.f32.mxu0 0.0
        %1006 = vmatmul.mubr.f32.gmra.mxu0 %v466
        %v1007 = vpop.f32.mrf.mxu0
        %v1008 = vadd.f32 %v534, %v1007
        %v1009 = vpop.f32.mrf.mxu0
        %1010 = vmatprep.mubr.f32.mxu0 0.0
        %1011 = vmatmul.mubr.f32.gmra.mxu0 %v467
        %v1012 = vpop.f32.mrf.mxu0
        %v1013 = vadd.f32 %v534, %v1012
        %v1014 = vpop.f32.mrf.mxu0
        %1015 = vmatprep.mubr.f32.mxu0 0.0
        %1016 = vmatmul.mubr.f32.gmra.mxu0 %v468
        %v1017 = vpop.f32.mrf.mxu0
        %v1018 = vadd.f32 %v534, %v1017
        %v1019 = vpop.f32.mrf.mxu0
        %1020 = vmatprep.mubr.f32.mxu0 0.0
        %1021 = vmatmul.mubr.f32.gmra.mxu0 %v469
        %v1022 = vpop.f32.mrf.mxu0
        %v1023 = vadd.f32 %v534, %v1022
        %v1024 = vpop.f32.mrf.mxu0
        %1025 = vmatprep.mubr.f32.mxu0 0.0
        %1026 = vmatmul.mubr.f32.gmra.mxu0 %v470
        %v1027 = vpop.f32.mrf.mxu0
        %v1028 = vadd.f32 %v534, %v1027
        %v1029 = vpop.f32.mrf.mxu0
        %1030 = vmatprep.mubr.f32.mxu0 0.0
        %1031 = vmatmul.mubr.f32.gmra.mxu0 %v471
        %v1032 = vpop.f32.mrf.mxu0
        %v1033 = vadd.f32 %v534, %v1032
        %v1034 = vpop.f32.mrf.mxu0
        %1035 = vmatprep.mubr.f32.mxu0 0.0
        %1036 = vmatmul.mubr.f32.gmra.mxu0 %v472
        %v1037 = vpop.f32.mrf.mxu0
        %v1038 = vadd.f32 %v534, %v1037
        %v1039 = vpop.f32.mrf.mxu0
        %1040 = vmatprep.mubr.f32.mxu0 0.0
        %1041 = vmatmul.mubr.f32.gmra.mxu0 %v473
        %v1042 = vpop.f32.mrf.mxu0
        %v1043 = vadd.f32 %v534, %v1042
        %v1044 = vpop.f32.mrf.mxu0
        %1045 = vmatprep.mubr.f32.mxu0 0.0
        %1046 = vmatmul.mubr.f32.gmra.mxu0 %v474
        %v1047 = vpop.f32.mrf.mxu0
        %v1048 = vadd.f32 %v534, %v1047
        %v1049 = vpop.f32.mrf.mxu0
        %1050 = vmatprep.mubr.f32.mxu0 0.0
        %1051 = vmatmul.mubr.f32.gmra.mxu0 %v475
        %v1052 = vpop.f32.mrf.mxu0
        %v1053 = vadd.f32 %v534, %v1052
        %v1054 = vpop.f32.mrf.mxu0
        %1055 = vmatprep.mubr.f32.mxu0 0.0
        %1056 = vmatmul.mubr.f32.gmra.mxu0 %v476
        %v1057 = vpop.f32.mrf.mxu0
        %v1058 = vadd.f32 %v534, %v1057
        %v1059 = vpop.f32.mrf.mxu0
        %1060 = vmatprep.mubr.f32.mxu0 0.0
        %1061 = vmatmul.mubr.f32.gmra.mxu0 %v477
        %v1062 = vpop.f32.mrf.mxu0
        %v1063 = vadd.f32 %v534, %v1062
        %v1064 = vpop.f32.mrf.mxu0
        %1065 = vmatprep.mubr.f32.mxu0 0.0
        %1066 = vmatmul.mubr.f32.gmra.mxu0 %v478
        %v1067 = vpop.f32.mrf.mxu0
        %v1068 = vadd.f32 %v534, %v1067
        %v1069 = vpop.f32.mrf.mxu0
        %1070 = vmatprep.mubr.f32.mxu0 0.0
        %1071 = vmatmul.mubr.f32.gmra.mxu0 %v479
        %v1072 = vpop.f32.mrf.mxu0
        %v1073 = vadd.f32 %v534, %v1072
        %v1074 = vpop.f32.mrf.mxu0
        %1075 = vmatprep.mubr.f32.mxu0 0.0
        %1076 = vmatmul.mubr.f32.gmra.mxu0 %v480
        %v1077 = vpop.f32.mrf.mxu0
        %v1078 = vadd.f32 %v534, %v1077
        %v1079 = vpop.f32.mrf.mxu0
        %1080 = vmatprep.mubr.f32.mxu0 0.0
        %1081 = vmatmul.mubr.f32.gmra.mxu0 %v481
        %v1082 = vpop.f32.mrf.mxu0
        %v1083 = vadd.f32 %v534, %v1082
        %v1084 = vpop.f32.mrf.mxu0
        %1085 = vmatprep.mubr.f32.mxu0 0.0
        %1086 = vmatmul.mubr.f32.gmra.mxu0 %v482
        %v1087 = vpop.f32.mrf.mxu0
        %v1088 = vadd.f32 %v534, %v1087
        %v1089 = vpop.f32.mrf.mxu0
        %1090 = vmatprep.mubr.f32.mxu0 0.0
        %1091 = vmatmul.mubr.f32.gmra.mxu0 %v483
        %v1092 = vpop.f32.mrf.mxu0
        %v1093 = vadd.f32 %v534, %v1092
        %v1094 = vpop.f32.mrf.mxu0
        %1095 = vmatprep.mubr.f32.mxu0 0.0
        %1096 = vmatmul.mubr.f32.gmra.mxu0 %v484
        %v1097 = vpop.f32.mrf.mxu0
        %v1098 = vadd.f32 %v534, %v1097
        %v1099 = vpop.f32.mrf.mxu0
        %1100 = vmatprep.mubr.f32.mxu0 0.0
        %1101 = vmatmul.mubr.f32.gmra.mxu0 %v485
        %v1102 = vpop.f32.mrf.mxu0
        %v1103 = vadd.f32 %v534, %v1102
        %v1104 = vpop.f32.mrf.mxu0
        %1105 = vmatprep.mubr.f32.mxu0 0.0
        %1106 = vmatmul.mubr.f32.gmra.mxu0 %v486
        %v1107 = vpop.f32.mrf.mxu0
        %v1108 = vadd.f32 %v534, %v1107
        %v1109 = vpop.f32.mrf.mxu0
        %1110 = vmatprep.mubr.f32.mxu0 0.0
        %1111 = vmatmul.mubr.f32.gmra.mxu0 %v487
        %v1112 = vpop.f32.mrf.mxu0
        %v1113 = vadd.f32 %v534, %v1112
        %v1114 = vpop.f32.mrf.mxu0
        %1115 = vmatprep.mubr.f32.mxu0 0.0
        %1116 = vmatmul.mubr.f32.gmra.mxu0 %v488
        %v1117 = vpop.f32.mrf.mxu0
        %v1118 = vadd.f32 %v534, %v1117
        %v1119 = vpop.f32.mrf.mxu0
        %1120 = vmatprep.mubr.f32.mxu0 0.0
        %1121 = vmatmul.mubr.f32.gmra.mxu0 %v489
        %v1122 = vpop.f32.mrf.mxu0
        %v1123 = vadd.f32 %v534, %v1122
        %v1124 = vpop.f32.mrf.mxu0
        %1125 = vmatprep.mubr.f32.mxu0 0.0
        %1126 = vmatmul.mubr.f32.gmra.mxu0 %v490
        %v1127 = vpop.f32.mrf.mxu0
        %v1128 = vadd.f32 %v534, %v1127
        %v1129 = vpop.f32.mrf.mxu0
        %1130 = vmatprep.mubr.f32.mxu0 0.0
        %1131 = vmatmul.mubr.f32.gmra.mxu0 %v491
        %v1132 = vpop.f32.mrf.mxu0
        %v1133 = vadd.f32 %v534, %v1132
        %v1134 = vpop.f32.mrf.mxu0
        %1135 = vmatprep.mubr.f32.mxu0 0.0
        %1136 = vmatmul.mubr.f32.gmra.mxu0 %v492
        %v1137 = vpop.f32.mrf.mxu0
        %v1138 = vadd.f32 %v534, %v1137
        %v1139 = vpop.f32.mrf.mxu0
        %1140 = vmatprep.mubr.f32.mxu0 0.0
        %1141 = vmatmul.mubr.f32.gmra.mxu0 %v493
        %v1142 = vpop.f32.mrf.mxu0
        %v1143 = vadd.f32 %v534, %v1142
        %v1144 = vpop.f32.mrf.mxu0
        %1145 = vmatprep.mubr.f32.mxu0 0.0
        %1146 = vmatmul.mubr.f32.gmra.mxu0 %v494
        %v1147 = vpop.f32.mrf.mxu0
        %v1148 = vadd.f32 %v534, %v1147
        %v1149 = vpop.f32.mrf.mxu0
        %1150 = vmatprep.mubr.f32.mxu0 0.0
        %1151 = vmatmul.mubr.f32.gmra.mxu0 %v495
        %v1152 = vpop.f32.mrf.mxu0
        %v1153 = vadd.f32 %v534, %v1152
        %v1154 = vpop.f32.mrf.mxu0
        %1155 = vmatprep.mubr.f32.mxu0 0.0
        %1156 = vmatmul.mubr.f32.gmra.mxu0 %v496
        %v1157 = vpop.f32.mrf.mxu0
        %v1158 = vadd.f32 %v534, %v1157
        %v1159 = vpop.f32.mrf.mxu0
        %1160 = vmatprep.mubr.f32.mxu0 0.0
        %1161 = vmatmul.mubr.f32.gmra.mxu0 %v497
        %v1162 = vpop.f32.mrf.mxu0
        %v1163 = vadd.f32 %v534, %v1162
        %v1164 = vpop.f32.mrf.mxu0
        %1165 = vmatprep.mubr.f32.mxu0 0.0
        %1166 = vmatmul.mubr.f32.gmra.mxu0 %v498
        %v1167 = vpop.f32.mrf.mxu0
        %v1168 = vadd.f32 %v534, %v1167
        %v1169 = vpop.f32.mrf.mxu0
        %1170 = vmatprep.mubr.f32.mxu0 0.0
        %1171 = vmatmul.mubr.f32.gmra.mxu0 %v499
        %v1172 = vpop.f32.mrf.mxu0
        %v1173 = vadd.f32 %v534, %v1172
        %v1174 = vpop.f32.mrf.mxu0
        %1175 = vmatprep.mubr.f32.mxu0 0.0
        %1176 = vmatmul.mubr.f32.gmra.mxu0 %v500
        %v1177 = vpop.f32.mrf.mxu0
        %v1178 = vadd.f32 %v534, %v1177
        %v1179 = vpop.f32.mrf.mxu0
        %1180 = vmatprep.mubr.f32.mxu0 0.0
        %1181 = vmatmul.mubr.f32.gmra.mxu0 %v501
        %v1182 = vpop.f32.mrf.mxu0
        %v1183 = vadd.f32 %v534, %v1182
        %v1184 = vpop.f32.mrf.mxu0
        %1185 = vmatprep.mubr.f32.mxu0 0.0
        %1186 = vmatmul.mubr.f32.gmra.mxu0 %v502
        %v1187 = vpop.f32.mrf.mxu0
        %v1188 = vadd.f32 %v534, %v1187
        %v1189 = vpop.f32.mrf.mxu0
        %1190 = vmatprep.mubr.f32.mxu0 0.0
        %1191 = vmatmul.mubr.f32.gmra.mxu0 %v503
        %v1192 = vpop.f32.mrf.mxu0
        %v1193 = vadd.f32 %v534, %v1192
        %v1194 = vpop.f32.mrf.mxu0
        %1195 = vmatprep.mubr.f32.mxu0 0.0
        %1196 = vmatmul.mubr.f32.gmra.mxu0 %v504
        %v1197 = vpop.f32.mrf.mxu0
        %v1198 = vadd.f32 %v534, %v1197
        %v1199 = vpop.f32.mrf.mxu0
        %1200 = vmatprep.mubr.f32.mxu0 0.0
        %1201 = vmatmul.mubr.f32.gmra.mxu0 %v505
        %v1202 = vpop.f32.mrf.mxu0
        %v1203 = vadd.f32 %v534, %v1202
        %v1204 = vpop.f32.mrf.mxu0
        %1205 = vmatprep.mubr.f32.mxu0 0.0
        %1206 = vmatmul.mubr.f32.gmra.mxu0 %v506
        %v1207 = vpop.f32.mrf.mxu0
        %v1208 = vadd.f32 %v534, %v1207
        %v1209 = vpop.f32.mrf.mxu0
        %1210 = vmatprep.mubr.f32.mxu0 0.0
        %1211 = vmatmul.mubr.f32.gmra.mxu0 %v507
        %v1212 = vpop.f32.mrf.mxu0
        %v1213 = vadd.f32 %v534, %v1212
        %v1214 = vpop.f32.mrf.mxu0
        %1215 = vmatprep.mubr.f32.mxu0 0.0
        %1216 = vmatmul.mubr.f32.gmra.mxu0 %v508
        %v1217 = vpop.f32.mrf.mxu0
        %v1218 = vadd.f32 %v534, %v1217
        %v1219 = vpop.f32.mrf.mxu0
        %1220 = vmatprep.mubr.f32.mxu0 0.0
        %1221 = vmatmul.mubr.f32.gmra.mxu0 %v509
        %v1222 = vpop.f32.mrf.mxu0
        %v1223 = vadd.f32 %v534, %v1222
        %v1224 = vpop.f32.mrf.mxu0
        %1225 = vmatprep.mubr.f32.mxu0 0.0
        %1226 = vmatmul.mubr.f32.gmra.mxu0 %v510
        %v1227 = vpop.f32.mrf.mxu0
        %v1228 = vadd.f32 %v534, %v1227
        %v1229 = vpop.f32.mrf.mxu0
        %1230 = vmatprep.mubr.f32.mxu0 0.0
        %1231 = vmatmul.mubr.f32.gmra.mxu0 %v511
        %v1232 = vpop.f32.mrf.mxu0
        %v1233 = vadd.f32 %v534, %v1232
        %v1234 = vpop.f32.mrf.mxu0
        %1235 = vmatprep.mubr.f32.mxu0 0.0
        %1236 = vmatmul.mubr.f32.gmra.mxu0 %v512
        %v1237 = vpop.f32.mrf.mxu0
        %v1238 = vadd.f32 %v534, %v1237
        %v1239 = vpop.f32.mrf.mxu0
        %1240 = vdwg.mxu0
        %1241 = vrot.lane.b32.xlu0 %v603, 1
        %v1242 = vpop.permute.xlu0 %1241
        %1243 = vrot.lane.b32.xlu0 %v608, 1
        %v1244 = vpop.permute.xlu0 %1243
        %1245 = vrot.lane.b32.xlu0 %v613, 1
        %v1246 = vpop.permute.xlu0 %1245
        %1247 = vrot.lane.b32.xlu0 %v618, 1
        %v1248 = vpop.permute.xlu0 %1247
        %1249 = vrot.lane.b32.xlu0 %v623, 1
        %v1250 = vpop.permute.xlu0 %1249
        %1251 = vrot.lane.b32.xlu0 %v628, 1
        %v1252 = vpop.permute.xlu0 %1251
        %1253 = vrot.lane.b32.xlu0 %v633, 1
        %v1254 = vpop.permute.xlu0 %1253
        %1255 = vrot.lane.b32.xlu0 %v638, 1
        %v1256 = vpop.permute.xlu0 %1255
        %1257 = vrot.lane.b32.xlu0 %v643, 1
        %v1258 = vpop.permute.xlu0 %1257
        %1259 = vrot.lane.b32.xlu0 %v648, 1
        %v1260 = vpop.permute.xlu0 %1259
        %1261 = vrot.lane.b32.xlu0 %v653, 1
        %v1262 = vpop.permute.xlu0 %1261
        %1263 = vrot.lane.b32.xlu0 %v658, 1
        %v1264 = vpop.permute.xlu0 %1263
        %1265 = vrot.lane.b32.xlu0 %v663, 1
        %v1266 = vpop.permute.xlu0 %1265
        %1267 = vrot.lane.b32.xlu0 %v668, 1
        %v1268 = vpop.permute.xlu0 %1267
        %1269 = vrot.lane.b32.xlu0 %v673, 1
        %v1270 = vpop.permute.xlu0 %1269
        %1271 = vrot.lane.b32.xlu0 %v678, 1
        %v1272 = vpop.permute.xlu0 %1271
        %1273 = vrot.lane.b32.xlu0 %v683, 1
        %v1274 = vpop.permute.xlu0 %1273
        %1275 = vrot.lane.b32.xlu0 %v688, 1
        %v1276 = vpop.permute.xlu0 %1275
        %1277 = vrot.lane.b32.xlu0 %v693, 1
        %v1278 = vpop.permute.xlu0 %1277
        %1279 = vrot.lane.b32.xlu0 %v698, 1
        %v1280 = vpop.permute.xlu0 %1279
        %1281 = vrot.lane.b32.xlu0 %v703, 1
        %v1282 = vpop.permute.xlu0 %1281
        %1283 = vrot.lane.b32.xlu0 %v708, 1
        %v1284 = vpop.permute.xlu0 %1283
        %1285 = vrot.lane.b32.xlu0 %v713, 1
        %v1286 = vpop.permute.xlu0 %1285
        %1287 = vrot.lane.b32.xlu0 %v718, 1
        %v1288 = vpop.permute.xlu0 %1287
        %1289 = vrot.lane.b32.xlu0 %v723, 1
        %v1290 = vpop.permute.xlu0 %1289
        %1291 = vrot.lane.b32.xlu0 %v728, 1
        %v1292 = vpop.permute.xlu0 %1291
        %1293 = vrot.lane.b32.xlu0 %v733, 1
        %v1294 = vpop.permute.xlu0 %1293
        %1295 = vrot.lane.b32.xlu0 %v738, 1
        %v1296 = vpop.permute.xlu0 %1295
        %1297 = vrot.lane.b32.xlu0 %v743, 1
        %v1298 = vpop.permute.xlu0 %1297
        %1299 = vrot.lane.b32.xlu0 %v748, 1
        %v1300 = vpop.permute.xlu0 %1299
        %1301 = vrot.lane.b32.xlu0 %v753, 1
        %v1302 = vpop.permute.xlu0 %1301
        %1303 = vrot.lane.b32.xlu0 %v758, 1
        %v1304 = vpop.permute.xlu0 %1303
        %1305 = vrot.lane.b32.xlu0 %v763, 1
        %v1306 = vpop.permute.xlu0 %1305
        %1307 = vrot.lane.b32.xlu0 %v768, 1
        %v1308 = vpop.permute.xlu0 %1307
        %1309 = vrot.lane.b32.xlu0 %v773, 1
        %v1310 = vpop.permute.xlu0 %1309
        %1311 = vrot.lane.b32.xlu0 %v778, 1
        %v1312 = vpop.permute.xlu0 %1311
        %1313 = vrot.lane.b32.xlu0 %v783, 1
        %v1314 = vpop.permute.xlu0 %1313
        %1315 = vrot.lane.b32.xlu0 %v788, 1
        %v1316 = vpop.permute.xlu0 %1315
        %1317 = vrot.lane.b32.xlu0 %v793, 1
        %v1318 = vpop.permute.xlu0 %1317
        %1319 = vrot.lane.b32.xlu0 %v798, 1
        %v1320 = vpop.permute.xlu0 %1319
        %1321 = vrot.lane.b32.xlu0 %v803, 1
        %v1322 = vpop.permute.xlu0 %1321
        %1323 = vrot.lane.b32.xlu0 %v808, 1
        %v1324 = vpop.permute.xlu0 %1323
        %1325 = vrot.lane.b32.xlu0 %v813, 1
        %v1326 = vpop.permute.xlu0 %1325
        %1327 = vrot.lane.b32.xlu0 %v818, 1
        %v1328 = vpop.permute.xlu0 %1327
        %1329 = vrot.lane.b32.xlu0 %v823, 1
        %v1330 = vpop.permute.xlu0 %1329
        %1331 = vrot.lane.b32.xlu0 %v828, 1
        %v1332 = vpop.permute.xlu0 %1331
        %1333 = vrot.lane.b32.xlu0 %v833, 1
        %v1334 = vpop.permute.xlu0 %1333
        %1335 = vrot.lane.b32.xlu0 %v838, 1
        %v1336 = vpop.permute.xlu0 %1335
        %1337 = vrot.lane.b32.xlu0 %v843, 1
        %v1338 = vpop.permute.xlu0 %1337
        %1339 = vrot.lane.b32.xlu0 %v848, 1
        %v1340 = vpop.permute.xlu0 %1339
        %1341 = vrot.lane.b32.xlu0 %v853, 1
        %v1342 = vpop.permute.xlu0 %1341
        %1343 = vrot.lane.b32.xlu0 %v858, 1
        %v1344 = vpop.permute.xlu0 %1343
        %1345 = vrot.lane.b32.xlu0 %v863, 1
        %v1346 = vpop.permute.xlu0 %1345
        %1347 = vrot.lane.b32.xlu0 %v868, 1
        %v1348 = vpop.permute.xlu0 %1347
        %1349 = vrot.lane.b32.xlu0 %v873, 1
        %v1350 = vpop.permute.xlu0 %1349
        %1351 = vrot.lane.b32.xlu0 %v878, 1
        %v1352 = vpop.permute.xlu0 %1351
        %1353 = vrot.lane.b32.xlu0 %v883, 1
        %v1354 = vpop.permute.xlu0 %1353
        %1355 = vrot.lane.b32.xlu0 %v888, 1
        %v1356 = vpop.permute.xlu0 %1355
        %1357 = vrot.lane.b32.xlu0 %v893, 1
        %v1358 = vpop.permute.xlu0 %1357
        %1359 = vrot.lane.b32.xlu0 %v898, 1
        %v1360 = vpop.permute.xlu0 %1359
        %1361 = vrot.lane.b32.xlu0 %v903, 1
        %v1362 = vpop.permute.xlu0 %1361
        %1363 = vrot.lane.b32.xlu0 %v908, 1
        %v1364 = vpop.permute.xlu0 %1363
        %1365 = vrot.lane.b32.xlu0 %v913, 1
        %v1366 = vpop.permute.xlu0 %1365
        %1367 = vrot.lane.b32.xlu0 %v918, 1
        %v1368 = vpop.permute.xlu0 %1367
        %1369 = vrot.lane.b32.xlu0 %v923, 1
        %v1370 = vpop.permute.xlu0 %1369
        %1371 = vrot.lane.b32.xlu0 %v928, 1
        %v1372 = vpop.permute.xlu0 %1371
        %1373 = vrot.lane.b32.xlu0 %v933, 1
        %v1374 = vpop.permute.xlu0 %1373
        %1375 = vrot.lane.b32.xlu0 %v938, 1
        %v1376 = vpop.permute.xlu0 %1375
        %1377 = vrot.lane.b32.xlu0 %v943, 1
        %v1378 = vpop.permute.xlu0 %1377
        %1379 = vrot.lane.b32.xlu0 %v948, 1
        %v1380 = vpop.permute.xlu0 %1379
        %1381 = vrot.lane.b32.xlu0 %v953, 1
        %v1382 = vpop.permute.xlu0 %1381
        %1383 = vrot.lane.b32.xlu0 %v958, 1
        %v1384 = vpop.permute.xlu0 %1383
        %1385 = vrot.lane.b32.xlu0 %v963, 1
        %v1386 = vpop.permute.xlu0 %1385
        %1387 = vrot.lane.b32.xlu0 %v968, 1
        %v1388 = vpop.permute.xlu0 %1387
        %1389 = vrot.lane.b32.xlu0 %v973, 1
        %v1390 = vpop.permute.xlu0 %1389
        %1391 = vrot.lane.b32.xlu0 %v978, 1
        %v1392 = vpop.permute.xlu0 %1391
        %1393 = vrot.lane.b32.xlu0 %v983, 1
        %v1394 = vpop.permute.xlu0 %1393
        %1395 = vrot.lane.b32.xlu0 %v988, 1
        %v1396 = vpop.permute.xlu0 %1395
        %1397 = vrot.lane.b32.xlu0 %v993, 1
        %v1398 = vpop.permute.xlu0 %1397
        %1399 = vrot.lane.b32.xlu0 %v998, 1
        %v1400 = vpop.permute.xlu0 %1399
        %1401 = vrot.lane.b32.xlu0 %v1003, 1
        %v1402 = vpop.permute.xlu0 %1401
        %1403 = vrot.lane.b32.xlu0 %v1008, 1
        %v1404 = vpop.permute.xlu0 %1403
        %1405 = vrot.lane.b32.xlu0 %v1013, 1
        %v1406 = vpop.permute.xlu0 %1405
        %1407 = vrot.lane.b32.xlu0 %v1018, 1
        %v1408 = vpop.permute.xlu0 %1407
        %1409 = vrot.lane.b32.xlu0 %v1023, 1
        %v1410 = vpop.permute.xlu0 %1409
        %1411 = vrot.lane.b32.xlu0 %v1028, 1
        %v1412 = vpop.permute.xlu0 %1411
        %1413 = vrot.lane.b32.xlu0 %v1033, 1
        %v1414 = vpop.permute.xlu0 %1413
        %1415 = vrot.lane.b32.xlu0 %v1038, 1
        %v1416 = vpop.permute.xlu0 %1415
        %1417 = vrot.lane.b32.xlu0 %v1043, 1
        %v1418 = vpop.permute.xlu0 %1417
        %1419 = vrot.lane.b32.xlu0 %v1048, 1
        %v1420 = vpop.permute.xlu0 %1419
        %1421 = vrot.lane.b32.xlu0 %v1053, 1
        %v1422 = vpop.permute.xlu0 %1421
        %1423 = vrot.lane.b32.xlu0 %v1058, 1
        %v1424 = vpop.permute.xlu0 %1423
        %1425 = vrot.lane.b32.xlu0 %v1063, 1
        %v1426 = vpop.permute.xlu0 %1425
        %1427 = vrot.lane.b32.xlu0 %v1068, 1
        %v1428 = vpop.permute.xlu0 %1427
        %1429 = vrot.lane.b32.xlu0 %v1073, 1
        %v1430 = vpop.permute.xlu0 %1429
        %1431 = vrot.lane.b32.xlu0 %v1078, 1
        %v1432 = vpop.permute.xlu0 %1431
        %1433 = vrot.lane.b32.xlu0 %v1083, 1
        %v1434 = vpop.permute.xlu0 %1433
        %1435 = vrot.lane.b32.xlu0 %v1088, 1
        %v1436 = vpop.permute.xlu0 %1435
        %1437 = vrot.lane.b32.xlu0 %v1093, 1
        %v1438 = vpop.permute.xlu0 %1437
        %1439 = vrot.lane.b32.xlu0 %v1098, 1
        %v1440 = vpop.permute.xlu0 %1439
        %1441 = vrot.lane.b32.xlu0 %v1103, 1
        %v1442 = vpop.permute.xlu0 %1441
        %1443 = vrot.lane.b32.xlu0 %v1108, 1
        %v1444 = vpop.permute.xlu0 %1443
        %1445 = vrot.lane.b32.xlu0 %v1113, 1
        %v1446 = vpop.permute.xlu0 %1445
        %1447 = vrot.lane.b32.xlu0 %v1118, 1
        %v1448 = vpop.permute.xlu0 %1447
        %1449 = vrot.lane.b32.xlu0 %v1123, 1
        %v1450 = vpop.permute.xlu0 %1449
        %1451 = vrot.lane.b32.xlu0 %v1128, 1
        %v1452 = vpop.permute.xlu0 %1451
        %1453 = vrot.lane.b32.xlu0 %v1133, 1
        %v1454 = vpop.permute.xlu0 %1453
        %1455 = vrot.lane.b32.xlu0 %v1138, 1
        %v1456 = vpop.permute.xlu0 %1455
        %1457 = vrot.lane.b32.xlu0 %v1143, 1
        %v1458 = vpop.permute.xlu0 %1457
        %1459 = vrot.lane.b32.xlu0 %v1148, 1
        %v1460 = vpop.permute.xlu0 %1459
        %1461 = vrot.lane.b32.xlu0 %v1153, 1
        %v1462 = vpop.permute.xlu0 %1461
        %1463 = vrot.lane.b32.xlu0 %v1158, 1
        %v1464 = vpop.permute.xlu0 %1463
        %1465 = vrot.lane.b32.xlu0 %v1163, 1
        %v1466 = vpop.permute.xlu0 %1465
        %1467 = vrot.lane.b32.xlu0 %v1168, 1
        %v1468 = vpop.permute.xlu0 %1467
        %1469 = vrot.lane.b32.xlu0 %v1173, 1
        %v1470 = vpop.permute.xlu0 %1469
        %1471 = vrot.lane.b32.xlu0 %v1178, 1
        %v1472 = vpop.permute.xlu0 %1471
        %1473 = vrot.lane.b32.xlu0 %v1183, 1
        %v1474 = vpop.permute.xlu0 %1473
        %1475 = vrot.lane.b32.xlu0 %v1188, 1
        %v1476 = vpop.permute.xlu0 %1475
        %1477 = vrot.lane.b32.xlu0 %v1193, 1
        %v1478 = vpop.permute.xlu0 %1477
        %1479 = vrot.lane.b32.xlu0 %v1198, 1
        %v1480 = vpop.permute.xlu0 %1479
        %1481 = vrot.lane.b32.xlu0 %v1203, 1
        %v1482 = vpop.permute.xlu0 %1481
        %1483 = vrot.lane.b32.xlu0 %v1208, 1
        %v1484 = vpop.permute.xlu0 %1483
        %1485 = vrot.lane.b32.xlu0 %v1213, 1
        %v1486 = vpop.permute.xlu0 %1485
        %1487 = vrot.lane.b32.xlu0 %v1218, 1
        %v1488 = vpop.permute.xlu0 %1487
        %1489 = vrot.lane.b32.xlu0 %v1223, 1
        %v1490 = vpop.permute.xlu0 %1489
        %1491 = vrot.lane.b32.xlu0 %v1228, 1
        %v1492 = vpop.permute.xlu0 %1491
        %1493 = vrot.lane.b32.xlu0 %v1233, 1
        %v1494 = vpop.permute.xlu0 %1493
        %1495 = vrot.lane.b32.xlu0 %v1238, 1
        %v1496 = vpop.permute.xlu0 %1495
        %v1497 = vmax.f32 %v603, %v1242
        %v1498 = vmax.f32 %v608, %v1244
        %v1499 = vmax.f32 %v613, %v1246
        %v1500 = vmax.f32 %v618, %v1248
        %v1501 = vmax.f32 %v623, %v1250
        %v1502 = vmax.f32 %v628, %v1252
        %v1503 = vmax.f32 %v633, %v1254
        %v1504 = vmax.f32 %v638, %v1256
        %v1505 = vmax.f32 %v643, %v1258
        %v1506 = vmax.f32 %v648, %v1260
        %v1507 = vmax.f32 %v653, %v1262
        %v1508 = vmax.f32 %v658, %v1264
        %v1509 = vmax.f32 %v663, %v1266
        %v1510 = vmax.f32 %v668, %v1268
        %v1511 = vmax.f32 %v673, %v1270
        %v1512 = vmax.f32 %v678, %v1272
        %v1513 = vmax.f32 %v683, %v1274
        %v1514 = vmax.f32 %v688, %v1276
        %v1515 = vmax.f32 %v693, %v1278
        %v1516 = vmax.f32 %v698, %v1280
        %v1517 = vmax.f32 %v703, %v1282
        %v1518 = vmax.f32 %v708, %v1284
        %v1519 = vmax.f32 %v713, %v1286
        %v1520 = vmax.f32 %v718, %v1288
        %v1521 = vmax.f32 %v723, %v1290
        %v1522 = vmax.f32 %v728, %v1292
        %v1523 = vmax.f32 %v733, %v1294
        %v1524 = vmax.f32 %v738, %v1296
        %v1525 = vmax.f32 %v743, %v1298
        %v1526 = vmax.f32 %v748, %v1300
        %v1527 = vmax.f32 %v753, %v1302
        %v1528 = vmax.f32 %v758, %v1304
        %v1529 = vmax.f32 %v763, %v1306
        %v1530 = vmax.f32 %v768, %v1308
        %v1531 = vmax.f32 %v773, %v1310
        %v1532 = vmax.f32 %v778, %v1312
        %v1533 = vmax.f32 %v783, %v1314
        %v1534 = vmax.f32 %v788, %v1316
        %v1535 = vmax.f32 %v793, %v1318
        %v1536 = vmax.f32 %v798, %v1320
        %v1537 = vmax.f32 %v803, %v1322
        %v1538 = vmax.f32 %v808, %v1324
        %v1539 = vmax.f32 %v813, %v1326
        %v1540 = vmax.f32 %v818, %v1328
        %v1541 = vmax.f32 %v823, %v1330
        %v1542 = vmax.f32 %v828, %v1332
        %v1543 = vmax.f32 %v833, %v1334
        %v1544 = vmax.f32 %v838, %v1336
        %v1545 = vmax.f32 %v843, %v1338
        %v1546 = vmax.f32 %v848, %v1340
        %v1547 = vmax.f32 %v853, %v1342
        %v1548 = vmax.f32 %v858, %v1344
        %v1549 = vmax.f32 %v863, %v1346
        %v1550 = vmax.f32 %v868, %v1348
        %v1551 = vmax.f32 %v873, %v1350
        %v1552 = vmax.f32 %v878, %v1352
        %v1553 = vmax.f32 %v883, %v1354
        %v1554 = vmax.f32 %v888, %v1356
        %v1555 = vmax.f32 %v893, %v1358
        %v1556 = vmax.f32 %v898, %v1360
        %v1557 = vmax.f32 %v903, %v1362
        %v1558 = vmax.f32 %v908, %v1364
        %v1559 = vmax.f32 %v913, %v1366
        %v1560 = vmax.f32 %v918, %v1368
        %v1561 = vmax.f32 %v923, %v1370
        %v1562 = vmax.f32 %v928, %v1372
        %v1563 = vmax.f32 %v933, %v1374
        %v1564 = vmax.f32 %v938, %v1376
        %v1565 = vmax.f32 %v943, %v1378
        %v1566 = vmax.f32 %v948, %v1380
        %v1567 = vmax.f32 %v953, %v1382
        %v1568 = vmax.f32 %v958, %v1384
        %v1569 = vmax.f32 %v963, %v1386
        %v1570 = vmax.f32 %v968, %v1388
        %v1571 = vmax.f32 %v973, %v1390
        %v1572 = vmax.f32 %v978, %v1392
        %v1573 = vmax.f32 %v983, %v1394
        %v1574 = vmax.f32 %v988, %v1396
        %v1575 = vmax.f32 %v993, %v1398
        %v1576 = vmax.f32 %v998, %v1400
        %v1577 = vmax.f32 %v1003, %v1402
        %v1578 = vmax.f32 %v1008, %v1404
        %v1579 = vmax.f32 %v1013, %v1406
        %v1580 = vmax.f32 %v1018, %v1408
        %v1581 = vmax.f32 %v1023, %v1410
        %v1582 = vmax.f32 %v1028, %v1412
        %v1583 = vmax.f32 %v1033, %v1414
        %v1584 = vmax.f32 %v1038, %v1416
        %v1585 = vmax.f32 %v1043, %v1418
        %v1586 = vmax.f32 %v1048, %v1420
        %v1587 = vmax.f32 %v1053, %v1422
        %v1588 = vmax.f32 %v1058, %v1424
        %v1589 = vmax.f32 %v1063, %v1426
        %v1590 = vmax.f32 %v1068, %v1428
        %v1591 = vmax.f32 %v1073, %v1430
        %v1592 = vmax.f32 %v1078, %v1432
        %v1593 = vmax.f32 %v1083, %v1434
        %v1594 = vmax.f32 %v1088, %v1436
        %v1595 = vmax.f32 %v1093, %v1438
        %v1596 = vmax.f32 %v1098, %v1440
        %v1597 = vmax.f32 %v1103, %v1442
        %v1598 = vmax.f32 %v1108, %v1444
        %v1599 = vmax.f32 %v1113, %v1446
        %v1600 = vmax.f32 %v1118, %v1448
        %v1601 = vmax.f32 %v1123, %v1450
        %v1602 = vmax.f32 %v1128, %v1452
        %v1603 = vmax.f32 %v1133, %v1454
        %v1604 = vmax.f32 %v1138, %v1456
        %v1605 = vmax.f32 %v1143, %v1458
        %v1606 = vmax.f32 %v1148, %v1460
        %v1607 = vmax.f32 %v1153, %v1462
        %v1608 = vmax.f32 %v1158, %v1464
        %v1609 = vmax.f32 %v1163, %v1466
        %v1610 = vmax.f32 %v1168, %v1468
        %v1611 = vmax.f32 %v1173, %v1470
        %v1612 = vmax.f32 %v1178, %v1472
        %v1613 = vmax.f32 %v1183, %v1474
        %v1614 = vmax.f32 %v1188, %v1476
        %v1615 = vmax.f32 %v1193, %v1478
        %v1616 = vmax.f32 %v1198, %v1480
        %v1617 = vmax.f32 %v1203, %v1482
        %v1618 = vmax.f32 %v1208, %v1484
        %v1619 = vmax.f32 %v1213, %v1486
        %v1620 = vmax.f32 %v1218, %v1488
        %v1621 = vmax.f32 %v1223, %v1490
        %v1622 = vmax.f32 %v1228, %v1492
        %v1623 = vmax.f32 %v1233, %v1494
        %v1624 = vmax.f32 %v1238, %v1496
        %1625 = vrot.lane.b32.xlu0 %v1497, 2
        %v1626 = vpop.permute.xlu0 %1625
        %1627 = vrot.lane.b32.xlu0 %v1498, 2
        %v1628 = vpop.permute.xlu0 %1627
        %1629 = vrot.lane.b32.xlu0 %v1499, 2
        %v1630 = vpop.permute.xlu0 %1629
        %1631 = vrot.lane.b32.xlu0 %v1500, 2
        %v1632 = vpop.permute.xlu0 %1631
        %1633 = vrot.lane.b32.xlu0 %v1501, 2
        %v1634 = vpop.permute.xlu0 %1633
        %1635 = vrot.lane.b32.xlu0 %v1502, 2
        %v1636 = vpop.permute.xlu0 %1635
        %1637 = vrot.lane.b32.xlu0 %v1503, 2
        %v1638 = vpop.permute.xlu0 %1637
        %1639 = vrot.lane.b32.xlu0 %v1504, 2
        %v1640 = vpop.permute.xlu0 %1639
        %1641 = vrot.lane.b32.xlu0 %v1505, 2
        %v1642 = vpop.permute.xlu0 %1641
        %1643 = vrot.lane.b32.xlu0 %v1506, 2
        %v1644 = vpop.permute.xlu0 %1643
        %1645 = vrot.lane.b32.xlu0 %v1507, 2
        %v1646 = vpop.permute.xlu0 %1645
        %1647 = vrot.lane.b32.xlu0 %v1508, 2
        %v1648 = vpop.permute.xlu0 %1647
        %1649 = vrot.lane.b32.xlu0 %v1509, 2
        %v1650 = vpop.permute.xlu0 %1649
        %1651 = vrot.lane.b32.xlu0 %v1510, 2
        %v1652 = vpop.permute.xlu0 %1651
        %1653 = vrot.lane.b32.xlu0 %v1511, 2
        %v1654 = vpop.permute.xlu0 %1653
        %1655 = vrot.lane.b32.xlu0 %v1512, 2
        %v1656 = vpop.permute.xlu0 %1655
        %1657 = vrot.lane.b32.xlu0 %v1513, 2
        %v1658 = vpop.permute.xlu0 %1657
        %1659 = vrot.lane.b32.xlu0 %v1514, 2
        %v1660 = vpop.permute.xlu0 %1659
        %1661 = vrot.lane.b32.xlu0 %v1515, 2
        %v1662 = vpop.permute.xlu0 %1661
        %1663 = vrot.lane.b32.xlu0 %v1516, 2
        %v1664 = vpop.permute.xlu0 %1663
        %1665 = vrot.lane.b32.xlu0 %v1517, 2
        %v1666 = vpop.permute.xlu0 %1665
        %1667 = vrot.lane.b32.xlu0 %v1518, 2
        %v1668 = vpop.permute.xlu0 %1667
        %1669 = vrot.lane.b32.xlu0 %v1519, 2
        %v1670 = vpop.permute.xlu0 %1669
        %1671 = vrot.lane.b32.xlu0 %v1520, 2
        %v1672 = vpop.permute.xlu0 %1671
        %1673 = vrot.lane.b32.xlu0 %v1521, 2
        %v1674 = vpop.permute.xlu0 %1673
        %1675 = vrot.lane.b32.xlu0 %v1522, 2
        %v1676 = vpop.permute.xlu0 %1675
        %1677 = vrot.lane.b32.xlu0 %v1523, 2
        %v1678 = vpop.permute.xlu0 %1677
        %1679 = vrot.lane.b32.xlu0 %v1524, 2
        %v1680 = vpop.permute.xlu0 %1679
        %1681 = vrot.lane.b32.xlu0 %v1525, 2
        %v1682 = vpop.permute.xlu0 %1681
        %1683 = vrot.lane.b32.xlu0 %v1526, 2
        %v1684 = vpop.permute.xlu0 %1683
        %1685 = vrot.lane.b32.xlu0 %v1527, 2
        %v1686 = vpop.permute.xlu0 %1685
        %1687 = vrot.lane.b32.xlu0 %v1528, 2
        %v1688 = vpop.permute.xlu0 %1687
        %1689 = vrot.lane.b32.xlu0 %v1529, 2
        %v1690 = vpop.permute.xlu0 %1689
        %1691 = vrot.lane.b32.xlu0 %v1530, 2
        %v1692 = vpop.permute.xlu0 %1691
        %1693 = vrot.lane.b32.xlu0 %v1531, 2
        %v1694 = vpop.permute.xlu0 %1693
        %1695 = vrot.lane.b32.xlu0 %v1532, 2
        %v1696 = vpop.permute.xlu0 %1695
        %1697 = vrot.lane.b32.xlu0 %v1533, 2
        %v1698 = vpop.permute.xlu0 %1697
        %1699 = vrot.lane.b32.xlu0 %v1534, 2
        %v1700 = vpop.permute.xlu0 %1699
        %1701 = vrot.lane.b32.xlu0 %v1535, 2
        %v1702 = vpop.permute.xlu0 %1701
        %1703 = vrot.lane.b32.xlu0 %v1536, 2
        %v1704 = vpop.permute.xlu0 %1703
        %1705 = vrot.lane.b32.xlu0 %v1537, 2
        %v1706 = vpop.permute.xlu0 %1705
        %1707 = vrot.lane.b32.xlu0 %v1538, 2
        %v1708 = vpop.permute.xlu0 %1707
        %1709 = vrot.lane.b32.xlu0 %v1539, 2
        %v1710 = vpop.permute.xlu0 %1709
        %1711 = vrot.lane.b32.xlu0 %v1540, 2
        %v1712 = vpop.permute.xlu0 %1711
        %1713 = vrot.lane.b32.xlu0 %v1541, 2
        %v1714 = vpop.permute.xlu0 %1713
        %1715 = vrot.lane.b32.xlu0 %v1542, 2
        %v1716 = vpop.permute.xlu0 %1715
        %1717 = vrot.lane.b32.xlu0 %v1543, 2
        %v1718 = vpop.permute.xlu0 %1717
        %1719 = vrot.lane.b32.xlu0 %v1544, 2
        %v1720 = vpop.permute.xlu0 %1719
        %1721 = vrot.lane.b32.xlu0 %v1545, 2
        %v1722 = vpop.permute.xlu0 %1721
        %1723 = vrot.lane.b32.xlu0 %v1546, 2
        %v1724 = vpop.permute.xlu0 %1723
        %1725 = vrot.lane.b32.xlu0 %v1547, 2
        %v1726 = vpop.permute.xlu0 %1725
        %1727 = vrot.lane.b32.xlu0 %v1548, 2
        %v1728 = vpop.permute.xlu0 %1727
        %1729 = vrot.lane.b32.xlu0 %v1549, 2
        %v1730 = vpop.permute.xlu0 %1729
        %1731 = vrot.lane.b32.xlu0 %v1550, 2
        %v1732 = vpop.permute.xlu0 %1731
        %1733 = vrot.lane.b32.xlu0 %v1551, 2
        %v1734 = vpop.permute.xlu0 %1733
        %1735 = vrot.lane.b32.xlu0 %v1552, 2
        %v1736 = vpop.permute.xlu0 %1735
        %1737 = vrot.lane.b32.xlu0 %v1553, 2
        %v1738 = vpop.permute.xlu0 %1737
        %1739 = vrot.lane.b32.xlu0 %v1554, 2
        %v1740 = vpop.permute.xlu0 %1739
        %1741 = vrot.lane.b32.xlu0 %v1555, 2
        %v1742 = vpop.permute.xlu0 %1741
        %1743 = vrot.lane.b32.xlu0 %v1556, 2
        %v1744 = vpop.permute.xlu0 %1743
        %1745 = vrot.lane.b32.xlu0 %v1557, 2
        %v1746 = vpop.permute.xlu0 %1745
        %1747 = vrot.lane.b32.xlu0 %v1558, 2
        %v1748 = vpop.permute.xlu0 %1747
        %1749 = vrot.lane.b32.xlu0 %v1559, 2
        %v1750 = vpop.permute.xlu0 %1749
        %1751 = vrot.lane.b32.xlu0 %v1560, 2
        %v1752 = vpop.permute.xlu0 %1751
        %1753 = vrot.lane.b32.xlu0 %v1561, 2
        %v1754 = vpop.permute.xlu0 %1753
        %1755 = vrot.lane.b32.xlu0 %v1562, 2
        %v1756 = vpop.permute.xlu0 %1755
        %1757 = vrot.lane.b32.xlu0 %v1563, 2
        %v1758 = vpop.permute.xlu0 %1757
        %1759 = vrot.lane.b32.xlu0 %v1564, 2
        %v1760 = vpop.permute.xlu0 %1759
        %1761 = vrot.lane.b32.xlu0 %v1565, 2
        %v1762 = vpop.permute.xlu0 %1761
        %1763 = vrot.lane.b32.xlu0 %v1566, 2
        %v1764 = vpop.permute.xlu0 %1763
        %1765 = vrot.lane.b32.xlu0 %v1567, 2
        %v1766 = vpop.permute.xlu0 %1765
        %1767 = vrot.lane.b32.xlu0 %v1568, 2
        %v1768 = vpop.permute.xlu0 %1767
        %1769 = vrot.lane.b32.xlu0 %v1569, 2
        %v1770 = vpop.permute.xlu0 %1769
        %1771 = vrot.lane.b32.xlu0 %v1570, 2
        %v1772 = vpop.permute.xlu0 %1771
        %1773 = vrot.lane.b32.xlu0 %v1571, 2
        %v1774 = vpop.permute.xlu0 %1773
        %1775 = vrot.lane.b32.xlu0 %v1572, 2
        %v1776 = vpop.permute.xlu0 %1775
        %1777 = vrot.lane.b32.xlu0 %v1573, 2
        %v1778 = vpop.permute.xlu0 %1777
        %1779 = vrot.lane.b32.xlu0 %v1574, 2
        %v1780 = vpop.permute.xlu0 %1779
        %1781 = vrot.lane.b32.xlu0 %v1575, 2
        %v1782 = vpop.permute.xlu0 %1781
        %1783 = vrot.lane.b32.xlu0 %v1576, 2
        %v1784 = vpop.permute.xlu0 %1783
        %1785 = vrot.lane.b32.xlu0 %v1577, 2
        %v1786 = vpop.permute.xlu0 %1785
        %1787 = vrot.lane.b32.xlu0 %v1578, 2
        %v1788 = vpop.permute.xlu0 %1787
        %1789 = vrot.lane.b32.xlu0 %v1579, 2
        %v1790 = vpop.permute.xlu0 %1789
        %1791 = vrot.lane.b32.xlu0 %v1580, 2
        %v1792 = vpop.permute.xlu0 %1791
        %1793 = vrot.lane.b32.xlu0 %v1581, 2
        %v1794 = vpop.permute.xlu0 %1793
        %1795 = vrot.lane.b32.xlu0 %v1582, 2
        %v1796 = vpop.permute.xlu0 %1795
        %1797 = vrot.lane.b32.xlu0 %v1583, 2
        %v1798 = vpop.permute.xlu0 %1797
        %1799 = vrot.lane.b32.xlu0 %v1584, 2
        %v1800 = vpop.permute.xlu0 %1799
        %1801 = vrot.lane.b32.xlu0 %v1585, 2
        %v1802 = vpop.permute.xlu0 %1801
        %1803 = vrot.lane.b32.xlu0 %v1586, 2
        %v1804 = vpop.permute.xlu0 %1803
        %1805 = vrot.lane.b32.xlu0 %v1587, 2
        %v1806 = vpop.permute.xlu0 %1805
        %1807 = vrot.lane.b32.xlu0 %v1588, 2
        %v1808 = vpop.permute.xlu0 %1807
        %1809 = vrot.lane.b32.xlu0 %v1589, 2
        %v1810 = vpop.permute.xlu0 %1809
        %1811 = vrot.lane.b32.xlu0 %v1590, 2
        %v1812 = vpop.permute.xlu0 %1811
        %1813 = vrot.lane.b32.xlu0 %v1591, 2
        %v1814 = vpop.permute.xlu0 %1813
        %1815 = vrot.lane.b32.xlu0 %v1592, 2
        %v1816 = vpop.permute.xlu0 %1815
        %1817 = vrot.lane.b32.xlu0 %v1593, 2
        %v1818 = vpop.permute.xlu0 %1817
        %1819 = vrot.lane.b32.xlu0 %v1594, 2
        %v1820 = vpop.permute.xlu0 %1819
        %1821 = vrot.lane.b32.xlu0 %v1595, 2
        %v1822 = vpop.permute.xlu0 %1821
        %1823 = vrot.lane.b32.xlu0 %v1596, 2
        %v1824 = vpop.permute.xlu0 %1823
        %1825 = vrot.lane.b32.xlu0 %v1597, 2
        %v1826 = vpop.permute.xlu0 %1825
        %1827 = vrot.lane.b32.xlu0 %v1598, 2
        %v1828 = vpop.permute.xlu0 %1827
        %1829 = vrot.lane.b32.xlu0 %v1599, 2
        %v1830 = vpop.permute.xlu0 %1829
        %1831 = vrot.lane.b32.xlu0 %v1600, 2
        %v1832 = vpop.permute.xlu0 %1831
        %1833 = vrot.lane.b32.xlu0 %v1601, 2
        %v1834 = vpop.permute.xlu0 %1833
        %1835 = vrot.lane.b32.xlu0 %v1602, 2
        %v1836 = vpop.permute.xlu0 %1835
        %1837 = vrot.lane.b32.xlu0 %v1603, 2
        %v1838 = vpop.permute.xlu0 %1837
        %1839 = vrot.lane.b32.xlu0 %v1604, 2
        %v1840 = vpop.permute.xlu0 %1839
        %1841 = vrot.lane.b32.xlu0 %v1605, 2
        %v1842 = vpop.permute.xlu0 %1841
        %1843 = vrot.lane.b32.xlu0 %v1606, 2
        %v1844 = vpop.permute.xlu0 %1843
        %1845 = vrot.lane.b32.xlu0 %v1607, 2
        %v1846 = vpop.permute.xlu0 %1845
        %1847 = vrot.lane.b32.xlu0 %v1608, 2
        %v1848 = vpop.permute.xlu0 %1847
        %1849 = vrot.lane.b32.xlu0 %v1609, 2
        %v1850 = vpop.permute.xlu0 %1849
        %1851 = vrot.lane.b32.xlu0 %v1610, 2
        %v1852 = vpop.permute.xlu0 %1851
        %1853 = vrot.lane.b32.xlu0 %v1611, 2
        %v1854 = vpop.permute.xlu0 %1853
        %1855 = vrot.lane.b32.xlu0 %v1612, 2
        %v1856 = vpop.permute.xlu0 %1855
        %1857 = vrot.lane.b32.xlu0 %v1613, 2
        %v1858 = vpop.permute.xlu0 %1857
        %1859 = vrot.lane.b32.xlu0 %v1614, 2
        %v1860 = vpop.permute.xlu0 %1859
        %1861 = vrot.lane.b32.xlu0 %v1615, 2
        %v1862 = vpop.permute.xlu0 %1861
        %1863 = vrot.lane.b32.xlu0 %v1616, 2
        %v1864 = vpop.permute.xlu0 %1863
        %1865 = vrot.lane.b32.xlu0 %v1617, 2
        %v1866 = vpop.permute.xlu0 %1865
        %1867 = vrot.lane.b32.xlu0 %v1618, 2
        %v1868 = vpop.permute.xlu0 %1867
        %1869 = vrot.lane.b32.xlu0 %v1619, 2
        %v1870 = vpop.permute.xlu0 %1869
        %1871 = vrot.lane.b32.xlu0 %v1620, 2
        %v1872 = vpop.permute.xlu0 %1871
        %1873 = vrot.lane.b32.xlu0 %v1621, 2
        %v1874 = vpop.permute.xlu0 %1873
        %1875 = vrot.lane.b32.xlu0 %v1622, 2
        %v1876 = vpop.permute.xlu0 %1875
        %1877 = vrot.lane.b32.xlu0 %v1623, 2
        %v1878 = vpop.permute.xlu0 %1877
        %1879 = vrot.lane.b32.xlu0 %v1624, 2
        %v1880 = vpop.permute.xlu0 %1879
        %v1881 = vmax.f32 %v1497, %v1626
        %v1882 = vmax.f32 %v1498, %v1628
        %v1883 = vmax.f32 %v1499, %v1630
        %v1884 = vmax.f32 %v1500, %v1632
        %v1885 = vmax.f32 %v1501, %v1634
        %v1886 = vmax.f32 %v1502, %v1636
        %v1887 = vmax.f32 %v1503, %v1638
        %v1888 = vmax.f32 %v1504, %v1640
        %v1889 = vmax.f32 %v1505, %v1642
        %v1890 = vmax.f32 %v1506, %v1644
        %v1891 = vmax.f32 %v1507, %v1646
        %v1892 = vmax.f32 %v1508, %v1648
        %v1893 = vmax.f32 %v1509, %v1650
        %v1894 = vmax.f32 %v1510, %v1652
        %v1895 = vmax.f32 %v1511, %v1654
        %v1896 = vmax.f32 %v1512, %v1656
        %v1897 = vmax.f32 %v1513, %v1658
        %v1898 = vmax.f32 %v1514, %v1660
        %v1899 = vmax.f32 %v1515, %v1662
        %v1900 = vmax.f32 %v1516, %v1664
        %v1901 = vmax.f32 %v1517, %v1666
        %v1902 = vmax.f32 %v1518, %v1668
        %v1903 = vmax.f32 %v1519, %v1670
        %v1904 = vmax.f32 %v1520, %v1672
        %v1905 = vmax.f32 %v1521, %v1674
        %v1906 = vmax.f32 %v1522, %v1676
        %v1907 = vmax.f32 %v1523, %v1678
        %v1908 = vmax.f32 %v1524, %v1680
        %v1909 = vmax.f32 %v1525, %v1682
        %v1910 = vmax.f32 %v1526, %v1684
        %v1911 = vmax.f32 %v1527, %v1686
        %v1912 = vmax.f32 %v1528, %v1688
        %v1913 = vmax.f32 %v1529, %v1690
        %v1914 = vmax.f32 %v1530, %v1692
        %v1915 = vmax.f32 %v1531, %v1694
        %v1916 = vmax.f32 %v1532, %v1696
        %v1917 = vmax.f32 %v1533, %v1698
        %v1918 = vmax.f32 %v1534, %v1700
        %v1919 = vmax.f32 %v1535, %v1702
        %v1920 = vmax.f32 %v1536, %v1704
        %v1921 = vmax.f32 %v1537, %v1706
        %v1922 = vmax.f32 %v1538, %v1708
        %v1923 = vmax.f32 %v1539, %v1710
        %v1924 = vmax.f32 %v1540, %v1712
        %v1925 = vmax.f32 %v1541, %v1714
        %v1926 = vmax.f32 %v1542, %v1716
        %v1927 = vmax.f32 %v1543, %v1718
        %v1928 = vmax.f32 %v1544, %v1720
        %v1929 = vmax.f32 %v1545, %v1722
        %v1930 = vmax.f32 %v1546, %v1724
        %v1931 = vmax.f32 %v1547, %v1726
        %v1932 = vmax.f32 %v1548, %v1728
        %v1933 = vmax.f32 %v1549, %v1730
        %v1934 = vmax.f32 %v1550, %v1732
        %v1935 = vmax.f32 %v1551, %v1734
        %v1936 = vmax.f32 %v1552, %v1736
        %v1937 = vmax.f32 %v1553, %v1738
        %v1938 = vmax.f32 %v1554, %v1740
        %v1939 = vmax.f32 %v1555, %v1742
        %v1940 = vmax.f32 %v1556, %v1744
        %v1941 = vmax.f32 %v1557, %v1746
        %v1942 = vmax.f32 %v1558, %v1748
        %v1943 = vmax.f32 %v1559, %v1750
        %v1944 = vmax.f32 %v1560, %v1752
        %v1945 = vmax.f32 %v1561, %v1754
        %v1946 = vmax.f32 %v1562, %v1756
        %v1947 = vmax.f32 %v1563, %v1758
        %v1948 = vmax.f32 %v1564, %v1760
        %v1949 = vmax.f32 %v1565, %v1762
        %v1950 = vmax.f32 %v1566, %v1764
        %v1951 = vmax.f32 %v1567, %v1766
        %v1952 = vmax.f32 %v1568, %v1768
        %v1953 = vmax.f32 %v1569, %v1770
        %v1954 = vmax.f32 %v1570, %v1772
        %v1955 = vmax.f32 %v1571, %v1774
        %v1956 = vmax.f32 %v1572, %v1776
        %v1957 = vmax.f32 %v1573, %v1778
        %v1958 = vmax.f32 %v1574, %v1780
        %v1959 = vmax.f32 %v1575, %v1782
        %v1960 = vmax.f32 %v1576, %v1784
        %v1961 = vmax.f32 %v1577, %v1786
        %v1962 = vmax.f32 %v1578, %v1788
        %v1963 = vmax.f32 %v1579, %v1790
        %v1964 = vmax.f32 %v1580, %v1792
        %v1965 = vmax.f32 %v1581, %v1794
        %v1966 = vmax.f32 %v1582, %v1796
        %v1967 = vmax.f32 %v1583, %v1798
        %v1968 = vmax.f32 %v1584, %v1800
        %v1969 = vmax.f32 %v1585, %v1802
        %v1970 = vmax.f32 %v1586, %v1804
        %v1971 = vmax.f32 %v1587, %v1806
        %v1972 = vmax.f32 %v1588, %v1808
        %v1973 = vmax.f32 %v1589, %v1810
        %v1974 = vmax.f32 %v1590, %v1812
        %v1975 = vmax.f32 %v1591, %v1814
        %v1976 = vmax.f32 %v1592, %v1816
        %v1977 = vmax.f32 %v1593, %v1818
        %v1978 = vmax.f32 %v1594, %v1820
        %v1979 = vmax.f32 %v1595, %v1822
        %v1980 = vmax.f32 %v1596, %v1824
        %v1981 = vmax.f32 %v1597, %v1826
        %v1982 = vmax.f32 %v1598, %v1828
        %v1983 = vmax.f32 %v1599, %v1830
        %v1984 = vmax.f32 %v1600, %v1832
        %v1985 = vmax.f32 %v1601, %v1834
        %v1986 = vmax.f32 %v1602, %v1836
        %v1987 = vmax.f32 %v1603, %v1838
        %v1988 = vmax.f32 %v1604, %v1840
        %v1989 = vmax.f32 %v1605, %v1842
        %v1990 = vmax.f32 %v1606, %v1844
        %v1991 = vmax.f32 %v1607, %v1846
        %v1992 = vmax.f32 %v1608, %v1848
        %v1993 = vmax.f32 %v1609, %v1850
        %v1994 = vmax.f32 %v1610, %v1852
        %v1995 = vmax.f32 %v1611, %v1854
        %v1996 = vmax.f32 %v1612, %v1856
        %v1997 = vmax.f32 %v1613, %v1858
        %v1998 = vmax.f32 %v1614, %v1860
        %v1999 = vmax.f32 %v1615, %v1862
        %v2000 = vmax.f32 %v1616, %v1864
        %v2001 = vmax.f32 %v1617, %v1866
        %v2002 = vmax.f32 %v1618, %v1868
        %v2003 = vmax.f32 %v1619, %v1870
        %v2004 = vmax.f32 %v1620, %v1872
        %v2005 = vmax.f32 %v1621, %v1874
        %v2006 = vmax.f32 %v1622, %v1876
        %v2007 = vmax.f32 %v1623, %v1878
        %v2008 = vmax.f32 %v1624, %v1880
        %v2009 = vld [vmem:[%s5] sm:$0xff]
        %v2010 = vld [vmem:[%s5 + $0x8] sm:$0xff]
        %v2011 = vld [vmem:[%s5 + $0x10] sm:$0xff]
        %v2012 = vld [vmem:[%s5 + $0x18] sm:$0xff]
        %v2013 = vld [vmem:[%s5 + $0x20] sm:$0xff]
        %v2014 = vld [vmem:[%s5 + $0x28] sm:$0xff]
        %v2015 = vld [vmem:[%s5 + $0x30] sm:$0xff]
        %v2016 = vld [vmem:[%s5 + $0x38] sm:$0xff]
        %v2017 = vld [vmem:[%s5 + $0x40] sm:$0xff]
        %v2018 = vld [vmem:[%s5 + $0x48] sm:$0xff]
        %v2019 = vld [vmem:[%s5 + $0x50] sm:$0xff]
        %v2020 = vld [vmem:[%s5 + $0x58] sm:$0xff]
        %v2021 = vld [vmem:[%s5 + $0x60] sm:$0xff]
        %v2022 = vld [vmem:[%s5 + $0x68] sm:$0xff]
        %v2023 = vld [vmem:[%s5 + $0x70] sm:$0xff]
        %v2024 = vld [vmem:[%s5 + $0x78] sm:$0xff]
        %2025 = vmatprep.subr.mxu0 0.0
        %2026 = vmatpush1.msra.mxu0 %v2024
        %2027 = vmatprep.subr.mxu0 0.0
        %2028 = vmatpush1.msra.mxu0 %v2023
        %2029 = vmatprep.subr.mxu0 0.0
        %2030 = vmatpush1.msra.mxu0 %v2022
        %2031 = vmatprep.subr.mxu0 0.0
        %2032 = vmatpush1.msra.mxu0 %v2021
        %2033 = vmatprep.subr.mxu0 0.0
        %2034 = vmatpush1.msra.mxu0 %v2020
        %2035 = vmatprep.subr.mxu0 0.0
        %2036 = vmatpush1.msra.mxu0 %v2019
        %2037 = vmatprep.subr.mxu0 0.0
        %2038 = vmatpush1.msra.mxu0 %v2018
        %2039 = vmatprep.subr.mxu0 0.0
        %2040 = vmatpush1.msra.mxu0 %v2017
        %2041 = vmatprep.subr.mxu0 0.0
        %2042 = vmatpush1.msra.mxu0 %v2016
        %2043 = vmatprep.subr.mxu0 0.0
        %2044 = vmatpush1.msra.mxu0 %v2015
        %2045 = vmatprep.subr.mxu0 0.0
        %2046 = vmatpush1.msra.mxu0 %v2014
        %2047 = vmatprep.subr.mxu0 0.0
        %2048 = vmatpush1.msra.mxu0 %v2013
        %2049 = vmatprep.subr.mxu0 0.0
        %2050 = vmatpush1.msra.mxu0 %v2012
        %2051 = vmatprep.subr.mxu0 0.0
        %2052 = vmatpush1.msra.mxu0 %v2011
        %2053 = vmatprep.subr.mxu0 0.0
        %2054 = vmatpush1.msra.mxu0 %v2010
        %2055 = vmatprep.subr.mxu0 0.0
        %2056 = vmatpush1.msra.mxu0 %v2009
        %2057 = vmatprep.subr.mxu0 0.0
        %2058 = vmatpush2.msra.mxu0 0.0
        %2059 = vmatprep.subr.mxu0 0.0
        %2060 = vmatpush2.msra.mxu0 0.0
        %2061 = vmatprep.subr.mxu0 0.0
        %2062 = vmatpush2.msra.mxu0 0.0
        %2063 = vmatprep.subr.mxu0 0.0
        %2064 = vmatpush2.msra.mxu0 0.0
        %2065 = vmatprep.subr.mxu0 0.0
        %2066 = vmatpush2.msra.mxu0 0.0
        %2067 = vmatprep.subr.mxu0 0.0
        %2068 = vmatpush2.msra.mxu0 0.0
        %2069 = vmatprep.subr.mxu0 0.0
        %2070 = vmatpush2.msra.mxu0 0.0
        %2071 = vmatprep.subr.mxu0 0.0
        %2072 = vmatpush2.msra.mxu0 0.0
        %2073 = vmatprep.subr.mxu0 0.0
        %2074 = vmatpush2.msra.mxu0 0.0
        %2075 = vmatprep.subr.mxu0 0.0
        %2076 = vmatpush2.msra.mxu0 0.0
        %2077 = vmatprep.subr.mxu0 0.0
        %2078 = vmatpush2.msra.mxu0 0.0
        %2079 = vmatprep.subr.mxu0 0.0
        %2080 = vmatpush2.msra.mxu0 0.0
        %2081 = vmatprep.subr.mxu0 0.0
        %2082 = vmatpush2.msra.mxu0 0.0
        %2083 = vmatprep.subr.mxu0 0.0
        %2084 = vmatpush2.msra.mxu0 0.0
        %2085 = vmatprep.subr.mxu0 0.0
        %2086 = vmatpush2.msra.mxu0 0.0
        %2087 = vmatprep.subr.mxu0 0.0
        %2088 = vmatpush2.msra.mxu0 0.0
        %2089 = vmatprep.mubr.f32.mxu0 0.0
        %2090 = vmatmul.mubr.f32.gmra.mxu0 %v1881
        %v2091 = vpop.f32.mrf.mxu0
        %v2092 = vadd.f32 0.0, %v2091
        %v2093 = vpop.f32.mrf.mxu0
        %2094 = vmatprep.mubr.f32.mxu0 0.0
        %2095 = vmatmul.mubr.f32.gmra.mxu0 %v1882
        %v2096 = vpop.f32.mrf.mxu0
        %v2097 = vadd.f32 0.0, %v2096
        %v2098 = vpop.f32.mrf.mxu0
        %2099 = vmatprep.mubr.f32.mxu0 0.0
        %2100 = vmatmul.mubr.f32.gmra.mxu0 %v1883
        %v2101 = vpop.f32.mrf.mxu0
        %v2102 = vadd.f32 0.0, %v2101
        %v2103 = vpop.f32.mrf.mxu0
        %2104 = vmatprep.mubr.f32.mxu0 0.0
        %2105 = vmatmul.mubr.f32.gmra.mxu0 %v1884
        %v2106 = vpop.f32.mrf.mxu0
        %v2107 = vadd.f32 0.0, %v2106
        %v2108 = vpop.f32.mrf.mxu0
        %2109 = vmatprep.mubr.f32.mxu0 0.0
        %2110 = vmatmul.mubr.f32.gmra.mxu0 %v1885
        %v2111 = vpop.f32.mrf.mxu0
        %v2112 = vadd.f32 0.0, %v2111
        %v2113 = vpop.f32.mrf.mxu0
        %2114 = vmatprep.mubr.f32.mxu0 0.0
        %2115 = vmatmul.mubr.f32.gmra.mxu0 %v1886
        %v2116 = vpop.f32.mrf.mxu0
        %v2117 = vadd.f32 0.0, %v2116
        %v2118 = vpop.f32.mrf.mxu0
        %2119 = vmatprep.mubr.f32.mxu0 0.0
        %2120 = vmatmul.mubr.f32.gmra.mxu0 %v1887
        %v2121 = vpop.f32.mrf.mxu0
        %v2122 = vadd.f32 0.0, %v2121
        %v2123 = vpop.f32.mrf.mxu0
        %2124 = vmatprep.mubr.f32.mxu0 0.0
        %2125 = vmatmul.mubr.f32.gmra.mxu0 %v1888
        %v2126 = vpop.f32.mrf.mxu0
        %v2127 = vadd.f32 0.0, %v2126
        %v2128 = vpop.f32.mrf.mxu0
        %2129 = vmatprep.mubr.f32.mxu0 0.0
        %2130 = vmatmul.mubr.f32.gmra.mxu0 %v1889
        %v2131 = vpop.f32.mrf.mxu0
        %v2132 = vadd.f32 0.0, %v2131
        %v2133 = vpop.f32.mrf.mxu0
        %2134 = vmatprep.mubr.f32.mxu0 0.0
        %2135 = vmatmul.mubr.f32.gmra.mxu0 %v1890
        %v2136 = vpop.f32.mrf.mxu0
        %v2137 = vadd.f32 0.0, %v2136
        %v2138 = vpop.f32.mrf.mxu0
        %2139 = vmatprep.mubr.f32.mxu0 0.0
        %2140 = vmatmul.mubr.f32.gmra.mxu0 %v1891
        %v2141 = vpop.f32.mrf.mxu0
        %v2142 = vadd.f32 0.0, %v2141
        %v2143 = vpop.f32.mrf.mxu0
        %2144 = vmatprep.mubr.f32.mxu0 0.0
        %2145 = vmatmul.mubr.f32.gmra.mxu0 %v1892
        %v2146 = vpop.f32.mrf.mxu0
        %v2147 = vadd.f32 0.0, %v2146
        %v2148 = vpop.f32.mrf.mxu0
        %2149 = vmatprep.mubr.f32.mxu0 0.0
        %2150 = vmatmul.mubr.f32.gmra.mxu0 %v1893
        %v2151 = vpop.f32.mrf.mxu0
        %v2152 = vadd.f32 0.0, %v2151
        %v2153 = vpop.f32.mrf.mxu0
        %2154 = vmatprep.mubr.f32.mxu0 0.0
        %2155 = vmatmul.mubr.f32.gmra.mxu0 %v1894
        %v2156 = vpop.f32.mrf.mxu0
        %v2157 = vadd.f32 0.0, %v2156
        %v2158 = vpop.f32.mrf.mxu0
        %2159 = vmatprep.mubr.f32.mxu0 0.0
        %2160 = vmatmul.mubr.f32.gmra.mxu0 %v1895
        %v2161 = vpop.f32.mrf.mxu0
        %v2162 = vadd.f32 0.0, %v2161
        %v2163 = vpop.f32.mrf.mxu0
        %2164 = vmatprep.mubr.f32.mxu0 0.0
        %2165 = vmatmul.mubr.f32.gmra.mxu0 %v1896
        %v2166 = vpop.f32.mrf.mxu0
        %v2167 = vadd.f32 0.0, %v2166
        %v2168 = vpop.f32.mrf.mxu0
        %2169 = vmatprep.mubr.f32.mxu0 0.0
        %2170 = vmatmul.mubr.f32.gmra.mxu0 %v1897
        %v2171 = vpop.f32.mrf.mxu0
        %v2172 = vadd.f32 0.0, %v2171
        %v2173 = vpop.f32.mrf.mxu0
        %2174 = vmatprep.mubr.f32.mxu0 0.0
        %2175 = vmatmul.mubr.f32.gmra.mxu0 %v1898
        %v2176 = vpop.f32.mrf.mxu0
        %v2177 = vadd.f32 0.0, %v2176
        %v2178 = vpop.f32.mrf.mxu0
        %2179 = vmatprep.mubr.f32.mxu0 0.0
        %2180 = vmatmul.mubr.f32.gmra.mxu0 %v1899
        %v2181 = vpop.f32.mrf.mxu0
        %v2182 = vadd.f32 0.0, %v2181
        %v2183 = vpop.f32.mrf.mxu0
        %2184 = vmatprep.mubr.f32.mxu0 0.0
        %2185 = vmatmul.mubr.f32.gmra.mxu0 %v1900
        %v2186 = vpop.f32.mrf.mxu0
        %v2187 = vadd.f32 0.0, %v2186
        %v2188 = vpop.f32.mrf.mxu0
        %2189 = vmatprep.mubr.f32.mxu0 0.0
        %2190 = vmatmul.mubr.f32.gmra.mxu0 %v1901
        %v2191 = vpop.f32.mrf.mxu0
        %v2192 = vadd.f32 0.0, %v2191
        %v2193 = vpop.f32.mrf.mxu0
        %2194 = vmatprep.mubr.f32.mxu0 0.0
        %2195 = vmatmul.mubr.f32.gmra.mxu0 %v1902
        %v2196 = vpop.f32.mrf.mxu0
        %v2197 = vadd.f32 0.0, %v2196
        %v2198 = vpop.f32.mrf.mxu0
        %2199 = vmatprep.mubr.f32.mxu0 0.0
        %2200 = vmatmul.mubr.f32.gmra.mxu0 %v1903
        %v2201 = vpop.f32.mrf.mxu0
        %v2202 = vadd.f32 0.0, %v2201
        %v2203 = vpop.f32.mrf.mxu0
        %2204 = vmatprep.mubr.f32.mxu0 0.0
        %2205 = vmatmul.mubr.f32.gmra.mxu0 %v1904
        %v2206 = vpop.f32.mrf.mxu0
        %v2207 = vadd.f32 0.0, %v2206
        %v2208 = vpop.f32.mrf.mxu0
        %2209 = vmatprep.mubr.f32.mxu0 0.0
        %2210 = vmatmul.mubr.f32.gmra.mxu0 %v1905
        %v2211 = vpop.f32.mrf.mxu0
        %v2212 = vadd.f32 0.0, %v2211
        %v2213 = vpop.f32.mrf.mxu0
        %2214 = vmatprep.mubr.f32.mxu0 0.0
        %2215 = vmatmul.mubr.f32.gmra.mxu0 %v1906
        %v2216 = vpop.f32.mrf.mxu0
        %v2217 = vadd.f32 0.0, %v2216
        %v2218 = vpop.f32.mrf.mxu0
        %2219 = vmatprep.mubr.f32.mxu0 0.0
        %2220 = vmatmul.mubr.f32.gmra.mxu0 %v1907
        %v2221 = vpop.f32.mrf.mxu0
        %v2222 = vadd.f32 0.0, %v2221
        %v2223 = vpop.f32.mrf.mxu0
        %2224 = vmatprep.mubr.f32.mxu0 0.0
        %2225 = vmatmul.mubr.f32.gmra.mxu0 %v1908
        %v2226 = vpop.f32.mrf.mxu0
        %v2227 = vadd.f32 0.0, %v2226
        %v2228 = vpop.f32.mrf.mxu0
        %2229 = vmatprep.mubr.f32.mxu0 0.0
        %2230 = vmatmul.mubr.f32.gmra.mxu0 %v1909
        %v2231 = vpop.f32.mrf.mxu0
        %v2232 = vadd.f32 0.0, %v2231
        %v2233 = vpop.f32.mrf.mxu0
        %2234 = vmatprep.mubr.f32.mxu0 0.0
        %2235 = vmatmul.mubr.f32.gmra.mxu0 %v1910
        %v2236 = vpop.f32.mrf.mxu0
        %v2237 = vadd.f32 0.0, %v2236
        %v2238 = vpop.f32.mrf.mxu0
        %2239 = vmatprep.mubr.f32.mxu0 0.0
        %2240 = vmatmul.mubr.f32.gmra.mxu0 %v1911
        %v2241 = vpop.f32.mrf.mxu0
        %v2242 = vadd.f32 0.0, %v2241
        %v2243 = vpop.f32.mrf.mxu0
        %2244 = vmatprep.mubr.f32.mxu0 0.0
        %2245 = vmatmul.mubr.f32.gmra.mxu0 %v1912
        %v2246 = vpop.f32.mrf.mxu0
        %v2247 = vadd.f32 0.0, %v2246
        %v2248 = vpop.f32.mrf.mxu0
        %2249 = vmatprep.mubr.f32.mxu0 0.0
        %2250 = vmatmul.mubr.f32.gmra.mxu0 %v1913
        %v2251 = vpop.f32.mrf.mxu0
        %v2252 = vadd.f32 0.0, %v2251
        %v2253 = vpop.f32.mrf.mxu0
        %2254 = vmatprep.mubr.f32.mxu0 0.0
        %2255 = vmatmul.mubr.f32.gmra.mxu0 %v1914
        %v2256 = vpop.f32.mrf.mxu0
        %v2257 = vadd.f32 0.0, %v2256
        %v2258 = vpop.f32.mrf.mxu0
        %2259 = vmatprep.mubr.f32.mxu0 0.0
        %2260 = vmatmul.mubr.f32.gmra.mxu0 %v1915
        %v2261 = vpop.f32.mrf.mxu0
        %v2262 = vadd.f32 0.0, %v2261
        %v2263 = vpop.f32.mrf.mxu0
        %2264 = vmatprep.mubr.f32.mxu0 0.0
        %2265 = vmatmul.mubr.f32.gmra.mxu0 %v1916
        %v2266 = vpop.f32.mrf.mxu0
        %v2267 = vadd.f32 0.0, %v2266
        %v2268 = vpop.f32.mrf.mxu0
        %2269 = vmatprep.mubr.f32.mxu0 0.0
        %2270 = vmatmul.mubr.f32.gmra.mxu0 %v1917
        %v2271 = vpop.f32.mrf.mxu0
        %v2272 = vadd.f32 0.0, %v2271
        %v2273 = vpop.f32.mrf.mxu0
        %2274 = vmatprep.mubr.f32.mxu0 0.0
        %2275 = vmatmul.mubr.f32.gmra.mxu0 %v1918
        %v2276 = vpop.f32.mrf.mxu0
        %v2277 = vadd.f32 0.0, %v2276
        %v2278 = vpop.f32.mrf.mxu0
        %2279 = vmatprep.mubr.f32.mxu0 0.0
        %2280 = vmatmul.mubr.f32.gmra.mxu0 %v1919
        %v2281 = vpop.f32.mrf.mxu0
        %v2282 = vadd.f32 0.0, %v2281
        %v2283 = vpop.f32.mrf.mxu0
        %2284 = vmatprep.mubr.f32.mxu0 0.0
        %2285 = vmatmul.mubr.f32.gmra.mxu0 %v1920
        %v2286 = vpop.f32.mrf.mxu0
        %v2287 = vadd.f32 0.0, %v2286
        %v2288 = vpop.f32.mrf.mxu0
        %2289 = vmatprep.mubr.f32.mxu0 0.0
        %2290 = vmatmul.mubr.f32.gmra.mxu0 %v1921
        %v2291 = vpop.f32.mrf.mxu0
        %v2292 = vadd.f32 0.0, %v2291
        %v2293 = vpop.f32.mrf.mxu0
        %2294 = vmatprep.mubr.f32.mxu0 0.0
        %2295 = vmatmul.mubr.f32.gmra.mxu0 %v1922
        %v2296 = vpop.f32.mrf.mxu0
        %v2297 = vadd.f32 0.0, %v2296
        %v2298 = vpop.f32.mrf.mxu0
        %2299 = vmatprep.mubr.f32.mxu0 0.0
        %2300 = vmatmul.mubr.f32.gmra.mxu0 %v1923
        %v2301 = vpop.f32.mrf.mxu0
        %v2302 = vadd.f32 0.0, %v2301
        %v2303 = vpop.f32.mrf.mxu0
        %2304 = vmatprep.mubr.f32.mxu0 0.0
        %2305 = vmatmul.mubr.f32.gmra.mxu0 %v1924
        %v2306 = vpop.f32.mrf.mxu0
        %v2307 = vadd.f32 0.0, %v2306
        %v2308 = vpop.f32.mrf.mxu0
        %2309 = vmatprep.mubr.f32.mxu0 0.0
        %2310 = vmatmul.mubr.f32.gmra.mxu0 %v1925
        %v2311 = vpop.f32.mrf.mxu0
        %v2312 = vadd.f32 0.0, %v2311
        %v2313 = vpop.f32.mrf.mxu0
        %2314 = vmatprep.mubr.f32.mxu0 0.0
        %2315 = vmatmul.mubr.f32.gmra.mxu0 %v1926
        %v2316 = vpop.f32.mrf.mxu0
        %v2317 = vadd.f32 0.0, %v2316
        %v2318 = vpop.f32.mrf.mxu0
        %2319 = vmatprep.mubr.f32.mxu0 0.0
        %2320 = vmatmul.mubr.f32.gmra.mxu0 %v1927
        %v2321 = vpop.f32.mrf.mxu0
        %v2322 = vadd.f32 0.0, %v2321
        %v2323 = vpop.f32.mrf.mxu0
        %2324 = vmatprep.mubr.f32.mxu0 0.0
        %2325 = vmatmul.mubr.f32.gmra.mxu0 %v1928
        %v2326 = vpop.f32.mrf.mxu0
        %v2327 = vadd.f32 0.0, %v2326
        %v2328 = vpop.f32.mrf.mxu0
        %2329 = vmatprep.mubr.f32.mxu0 0.0
        %2330 = vmatmul.mubr.f32.gmra.mxu0 %v1929
        %v2331 = vpop.f32.mrf.mxu0
        %v2332 = vadd.f32 0.0, %v2331
        %v2333 = vpop.f32.mrf.mxu0
        %2334 = vmatprep.mubr.f32.mxu0 0.0
        %2335 = vmatmul.mubr.f32.gmra.mxu0 %v1930
        %v2336 = vpop.f32.mrf.mxu0
        %v2337 = vadd.f32 0.0, %v2336
        %v2338 = vpop.f32.mrf.mxu0
        %2339 = vmatprep.mubr.f32.mxu0 0.0
        %2340 = vmatmul.mubr.f32.gmra.mxu0 %v1931
        %v2341 = vpop.f32.mrf.mxu0
        %v2342 = vadd.f32 0.0, %v2341
        %v2343 = vpop.f32.mrf.mxu0
        %2344 = vmatprep.mubr.f32.mxu0 0.0
        %2345 = vmatmul.mubr.f32.gmra.mxu0 %v1932
        %v2346 = vpop.f32.mrf.mxu0
        %v2347 = vadd.f32 0.0, %v2346
        %v2348 = vpop.f32.mrf.mxu0
        %2349 = vmatprep.mubr.f32.mxu0 0.0
        %2350 = vmatmul.mubr.f32.gmra.mxu0 %v1933
        %v2351 = vpop.f32.mrf.mxu0
        %v2352 = vadd.f32 0.0, %v2351
        %v2353 = vpop.f32.mrf.mxu0
        %2354 = vmatprep.mubr.f32.mxu0 0.0
        %2355 = vmatmul.mubr.f32.gmra.mxu0 %v1934
        %v2356 = vpop.f32.mrf.mxu0
        %v2357 = vadd.f32 0.0, %v2356
        %v2358 = vpop.f32.mrf.mxu0
        %2359 = vmatprep.mubr.f32.mxu0 0.0
        %2360 = vmatmul.mubr.f32.gmra.mxu0 %v1935
        %v2361 = vpop.f32.mrf.mxu0
        %v2362 = vadd.f32 0.0, %v2361
        %v2363 = vpop.f32.mrf.mxu0
        %2364 = vmatprep.mubr.f32.mxu0 0.0
        %2365 = vmatmul.mubr.f32.gmra.mxu0 %v1936
        %v2366 = vpop.f32.mrf.mxu0
        %v2367 = vadd.f32 0.0, %v2366
        %v2368 = vpop.f32.mrf.mxu0
        %2369 = vmatprep.mubr.f32.mxu0 0.0
        %2370 = vmatmul.mubr.f32.gmra.mxu0 %v1937
        %v2371 = vpop.f32.mrf.mxu0
        %v2372 = vadd.f32 0.0, %v2371
        %v2373 = vpop.f32.mrf.mxu0
        %2374 = vmatprep.mubr.f32.mxu0 0.0
        %2375 = vmatmul.mubr.f32.gmra.mxu0 %v1938
        %v2376 = vpop.f32.mrf.mxu0
        %v2377 = vadd.f32 0.0, %v2376
        %v2378 = vpop.f32.mrf.mxu0
        %2379 = vmatprep.mubr.f32.mxu0 0.0
        %2380 = vmatmul.mubr.f32.gmra.mxu0 %v1939
        %v2381 = vpop.f32.mrf.mxu0
        %v2382 = vadd.f32 0.0, %v2381
        %v2383 = vpop.f32.mrf.mxu0
        %2384 = vmatprep.mubr.f32.mxu0 0.0
        %2385 = vmatmul.mubr.f32.gmra.mxu0 %v1940
        %v2386 = vpop.f32.mrf.mxu0
        %v2387 = vadd.f32 0.0, %v2386
        %v2388 = vpop.f32.mrf.mxu0
        %2389 = vmatprep.mubr.f32.mxu0 0.0
        %2390 = vmatmul.mubr.f32.gmra.mxu0 %v1941
        %v2391 = vpop.f32.mrf.mxu0
        %v2392 = vadd.f32 0.0, %v2391
        %v2393 = vpop.f32.mrf.mxu0
        %2394 = vmatprep.mubr.f32.mxu0 0.0
        %2395 = vmatmul.mubr.f32.gmra.mxu0 %v1942
        %v2396 = vpop.f32.mrf.mxu0
        %v2397 = vadd.f32 0.0, %v2396
        %v2398 = vpop.f32.mrf.mxu0
        %2399 = vmatprep.mubr.f32.mxu0 0.0
        %2400 = vmatmul.mubr.f32.gmra.mxu0 %v1943
        %v2401 = vpop.f32.mrf.mxu0
        %v2402 = vadd.f32 0.0, %v2401
        %v2403 = vpop.f32.mrf.mxu0
        %2404 = vmatprep.mubr.f32.mxu0 0.0
        %2405 = vmatmul.mubr.f32.gmra.mxu0 %v1944
        %v2406 = vpop.f32.mrf.mxu0
        %v2407 = vadd.f32 0.0, %v2406
        %v2408 = vpop.f32.mrf.mxu0
        %2409 = vmatprep.mubr.f32.mxu0 0.0
        %2410 = vmatmul.mubr.f32.gmra.mxu0 %v1945
        %v2411 = vpop.f32.mrf.mxu0
        %v2412 = vadd.f32 0.0, %v2411
        %v2413 = vpop.f32.mrf.mxu0
        %2414 = vmatprep.mubr.f32.mxu0 0.0
        %2415 = vmatmul.mubr.f32.gmra.mxu0 %v1946
        %v2416 = vpop.f32.mrf.mxu0
        %v2417 = vadd.f32 0.0, %v2416
        %v2418 = vpop.f32.mrf.mxu0
        %2419 = vmatprep.mubr.f32.mxu0 0.0
        %2420 = vmatmul.mubr.f32.gmra.mxu0 %v1947
        %v2421 = vpop.f32.mrf.mxu0
        %v2422 = vadd.f32 0.0, %v2421
        %v2423 = vpop.f32.mrf.mxu0
        %2424 = vmatprep.mubr.f32.mxu0 0.0
        %2425 = vmatmul.mubr.f32.gmra.mxu0 %v1948
        %v2426 = vpop.f32.mrf.mxu0
        %v2427 = vadd.f32 0.0, %v2426
        %v2428 = vpop.f32.mrf.mxu0
        %2429 = vmatprep.mubr.f32.mxu0 0.0
        %2430 = vmatmul.mubr.f32.gmra.mxu0 %v1949
        %v2431 = vpop.f32.mrf.mxu0
        %v2432 = vadd.f32 0.0, %v2431
        %v2433 = vpop.f32.mrf.mxu0
        %2434 = vmatprep.mubr.f32.mxu0 0.0
        %2435 = vmatmul.mubr.f32.gmra.mxu0 %v1950
        %v2436 = vpop.f32.mrf.mxu0
        %v2437 = vadd.f32 0.0, %v2436
        %v2438 = vpop.f32.mrf.mxu0
        %2439 = vmatprep.mubr.f32.mxu0 0.0
        %2440 = vmatmul.mubr.f32.gmra.mxu0 %v1951
        %v2441 = vpop.f32.mrf.mxu0
        %v2442 = vadd.f32 0.0, %v2441
        %v2443 = vpop.f32.mrf.mxu0
        %2444 = vmatprep.mubr.f32.mxu0 0.0
        %2445 = vmatmul.mubr.f32.gmra.mxu0 %v1952
        %v2446 = vpop.f32.mrf.mxu0
        %v2447 = vadd.f32 0.0, %v2446
        %v2448 = vpop.f32.mrf.mxu0
        %2449 = vmatprep.mubr.f32.mxu0 0.0
        %2450 = vmatmul.mubr.f32.gmra.mxu0 %v1953
        %v2451 = vpop.f32.mrf.mxu0
        %v2452 = vadd.f32 0.0, %v2451
        %v2453 = vpop.f32.mrf.mxu0
        %2454 = vmatprep.mubr.f32.mxu0 0.0
        %2455 = vmatmul.mubr.f32.gmra.mxu0 %v1954
        %v2456 = vpop.f32.mrf.mxu0
        %v2457 = vadd.f32 0.0, %v2456
        %v2458 = vpop.f32.mrf.mxu0
        %2459 = vmatprep.mubr.f32.mxu0 0.0
        %2460 = vmatmul.mubr.f32.gmra.mxu0 %v1955
        %v2461 = vpop.f32.mrf.mxu0
        %v2462 = vadd.f32 0.0, %v2461
        %v2463 = vpop.f32.mrf.mxu0
        %2464 = vmatprep.mubr.f32.mxu0 0.0
        %2465 = vmatmul.mubr.f32.gmra.mxu0 %v1956
        %v2466 = vpop.f32.mrf.mxu0
        %v2467 = vadd.f32 0.0, %v2466
        %v2468 = vpop.f32.mrf.mxu0
        %2469 = vmatprep.mubr.f32.mxu0 0.0
        %2470 = vmatmul.mubr.f32.gmra.mxu0 %v1957
        %v2471 = vpop.f32.mrf.mxu0
        %v2472 = vadd.f32 0.0, %v2471
        %v2473 = vpop.f32.mrf.mxu0
        %2474 = vmatprep.mubr.f32.mxu0 0.0
        %2475 = vmatmul.mubr.f32.gmra.mxu0 %v1958
        %v2476 = vpop.f32.mrf.mxu0
        %v2477 = vadd.f32 0.0, %v2476
        %v2478 = vpop.f32.mrf.mxu0
        %2479 = vmatprep.mubr.f32.mxu0 0.0
        %2480 = vmatmul.mubr.f32.gmra.mxu0 %v1959
        %v2481 = vpop.f32.mrf.mxu0
        %v2482 = vadd.f32 0.0, %v2481
        %v2483 = vpop.f32.mrf.mxu0
        %2484 = vmatprep.mubr.f32.mxu0 0.0
        %2485 = vmatmul.mubr.f32.gmra.mxu0 %v1960
        %v2486 = vpop.f32.mrf.mxu0
        %v2487 = vadd.f32 0.0, %v2486
        %v2488 = vpop.f32.mrf.mxu0
        %2489 = vmatprep.mubr.f32.mxu0 0.0
        %2490 = vmatmul.mubr.f32.gmra.mxu0 %v1961
        %v2491 = vpop.f32.mrf.mxu0
        %v2492 = vadd.f32 0.0, %v2491
        %v2493 = vpop.f32.mrf.mxu0
        %2494 = vmatprep.mubr.f32.mxu0 0.0
        %2495 = vmatmul.mubr.f32.gmra.mxu0 %v1962
        %v2496 = vpop.f32.mrf.mxu0
        %v2497 = vadd.f32 0.0, %v2496
        %v2498 = vpop.f32.mrf.mxu0
        %2499 = vmatprep.mubr.f32.mxu0 0.0
        %2500 = vmatmul.mubr.f32.gmra.mxu0 %v1963
        %v2501 = vpop.f32.mrf.mxu0
        %v2502 = vadd.f32 0.0, %v2501
        %v2503 = vpop.f32.mrf.mxu0
        %2504 = vmatprep.mubr.f32.mxu0 0.0
        %2505 = vmatmul.mubr.f32.gmra.mxu0 %v1964
        %v2506 = vpop.f32.mrf.mxu0
        %v2507 = vadd.f32 0.0, %v2506
        %v2508 = vpop.f32.mrf.mxu0
        %2509 = vmatprep.mubr.f32.mxu0 0.0
        %2510 = vmatmul.mubr.f32.gmra.mxu0 %v1965
        %v2511 = vpop.f32.mrf.mxu0
        %v2512 = vadd.f32 0.0, %v2511
        %v2513 = vpop.f32.mrf.mxu0
        %2514 = vmatprep.mubr.f32.mxu0 0.0
        %2515 = vmatmul.mubr.f32.gmra.mxu0 %v1966
        %v2516 = vpop.f32.mrf.mxu0
        %v2517 = vadd.f32 0.0, %v2516
        %v2518 = vpop.f32.mrf.mxu0
        %2519 = vmatprep.mubr.f32.mxu0 0.0
        %2520 = vmatmul.mubr.f32.gmra.mxu0 %v1967
        %v2521 = vpop.f32.mrf.mxu0
        %v2522 = vadd.f32 0.0, %v2521
        %v2523 = vpop.f32.mrf.mxu0
        %2524 = vmatprep.mubr.f32.mxu0 0.0
        %2525 = vmatmul.mubr.f32.gmra.mxu0 %v1968
        %v2526 = vpop.f32.mrf.mxu0
        %v2527 = vadd.f32 0.0, %v2526
        %v2528 = vpop.f32.mrf.mxu0
        %2529 = vmatprep.mubr.f32.mxu0 0.0
        %2530 = vmatmul.mubr.f32.gmra.mxu0 %v1969
        %v2531 = vpop.f32.mrf.mxu0
        %v2532 = vadd.f32 0.0, %v2531
        %v2533 = vpop.f32.mrf.mxu0
        %2534 = vmatprep.mubr.f32.mxu0 0.0
        %2535 = vmatmul.mubr.f32.gmra.mxu0 %v1970
        %v2536 = vpop.f32.mrf.mxu0
        %v2537 = vadd.f32 0.0, %v2536
        %v2538 = vpop.f32.mrf.mxu0
        %2539 = vmatprep.mubr.f32.mxu0 0.0
        %2540 = vmatmul.mubr.f32.gmra.mxu0 %v1971
        %v2541 = vpop.f32.mrf.mxu0
        %v2542 = vadd.f32 0.0, %v2541
        %v2543 = vpop.f32.mrf.mxu0
        %2544 = vmatprep.mubr.f32.mxu0 0.0
        %2545 = vmatmul.mubr.f32.gmra.mxu0 %v1972
        %v2546 = vpop.f32.mrf.mxu0
        %v2547 = vadd.f32 0.0, %v2546
        %v2548 = vpop.f32.mrf.mxu0
        %2549 = vmatprep.mubr.f32.mxu0 0.0
        %2550 = vmatmul.mubr.f32.gmra.mxu0 %v1973
        %v2551 = vpop.f32.mrf.mxu0
        %v2552 = vadd.f32 0.0, %v2551
        %v2553 = vpop.f32.mrf.mxu0
        %2554 = vmatprep.mubr.f32.mxu0 0.0
        %2555 = vmatmul.mubr.f32.gmra.mxu0 %v1974
        %v2556 = vpop.f32.mrf.mxu0
        %v2557 = vadd.f32 0.0, %v2556
        %v2558 = vpop.f32.mrf.mxu0
        %2559 = vmatprep.mubr.f32.mxu0 0.0
        %2560 = vmatmul.mubr.f32.gmra.mxu0 %v1975
        %v2561 = vpop.f32.mrf.mxu0
        %v2562 = vadd.f32 0.0, %v2561
        %v2563 = vpop.f32.mrf.mxu0
        %2564 = vmatprep.mubr.f32.mxu0 0.0
        %2565 = vmatmul.mubr.f32.gmra.mxu0 %v1976
        %v2566 = vpop.f32.mrf.mxu0
        %v2567 = vadd.f32 0.0, %v2566
        %v2568 = vpop.f32.mrf.mxu0
        %2569 = vmatprep.mubr.f32.mxu0 0.0
        %2570 = vmatmul.mubr.f32.gmra.mxu0 %v1977
        %v2571 = vpop.f32.mrf.mxu0
        %v2572 = vadd.f32 0.0, %v2571
        %v2573 = vpop.f32.mrf.mxu0
        %2574 = vmatprep.mubr.f32.mxu0 0.0
        %2575 = vmatmul.mubr.f32.gmra.mxu0 %v1978
        %v2576 = vpop.f32.mrf.mxu0
        %v2577 = vadd.f32 0.0, %v2576
        %v2578 = vpop.f32.mrf.mxu0
        %2579 = vmatprep.mubr.f32.mxu0 0.0
        %2580 = vmatmul.mubr.f32.gmra.mxu0 %v1979
        %v2581 = vpop.f32.mrf.mxu0
        %v2582 = vadd.f32 0.0, %v2581
        %v2583 = vpop.f32.mrf.mxu0
        %2584 = vmatprep.mubr.f32.mxu0 0.0
        %2585 = vmatmul.mubr.f32.gmra.mxu0 %v1980
        %v2586 = vpop.f32.mrf.mxu0
        %v2587 = vadd.f32 0.0, %v2586
        %v2588 = vpop.f32.mrf.mxu0
        %2589 = vmatprep.mubr.f32.mxu0 0.0
        %2590 = vmatmul.mubr.f32.gmra.mxu0 %v1981
        %v2591 = vpop.f32.mrf.mxu0
        %v2592 = vadd.f32 0.0, %v2591
        %v2593 = vpop.f32.mrf.mxu0
        %2594 = vmatprep.mubr.f32.mxu0 0.0
        %2595 = vmatmul.mubr.f32.gmra.mxu0 %v1982
        %v2596 = vpop.f32.mrf.mxu0
        %v2597 = vadd.f32 0.0, %v2596
        %v2598 = vpop.f32.mrf.mxu0
        %2599 = vmatprep.mubr.f32.mxu0 0.0
        %2600 = vmatmul.mubr.f32.gmra.mxu0 %v1983
        %v2601 = vpop.f32.mrf.mxu0
        %v2602 = vadd.f32 0.0, %v2601
        %v2603 = vpop.f32.mrf.mxu0
        %2604 = vmatprep.mubr.f32.mxu0 0.0
        %2605 = vmatmul.mubr.f32.gmra.mxu0 %v1984
        %v2606 = vpop.f32.mrf.mxu0
        %v2607 = vadd.f32 0.0, %v2606
        %v2608 = vpop.f32.mrf.mxu0
        %2609 = vmatprep.mubr.f32.mxu0 0.0
        %2610 = vmatmul.mubr.f32.gmra.mxu0 %v1985
        %v2611 = vpop.f32.mrf.mxu0
        %v2612 = vadd.f32 0.0, %v2611
        %v2613 = vpop.f32.mrf.mxu0
        %2614 = vmatprep.mubr.f32.mxu0 0.0
        %2615 = vmatmul.mubr.f32.gmra.mxu0 %v1986
        %v2616 = vpop.f32.mrf.mxu0
        %v2617 = vadd.f32 0.0, %v2616
        %v2618 = vpop.f32.mrf.mxu0
        %2619 = vmatprep.mubr.f32.mxu0 0.0
        %2620 = vmatmul.mubr.f32.gmra.mxu0 %v1987
        %v2621 = vpop.f32.mrf.mxu0
        %v2622 = vadd.f32 0.0, %v2621
        %v2623 = vpop.f32.mrf.mxu0
        %2624 = vmatprep.mubr.f32.mxu0 0.0
        %2625 = vmatmul.mubr.f32.gmra.mxu0 %v1988
        %v2626 = vpop.f32.mrf.mxu0
        %v2627 = vadd.f32 0.0, %v2626
        %v2628 = vpop.f32.mrf.mxu0
        %2629 = vmatprep.mubr.f32.mxu0 0.0
        %2630 = vmatmul.mubr.f32.gmra.mxu0 %v1989
        %v2631 = vpop.f32.mrf.mxu0
        %v2632 = vadd.f32 0.0, %v2631
        %v2633 = vpop.f32.mrf.mxu0
        %2634 = vmatprep.mubr.f32.mxu0 0.0
        %2635 = vmatmul.mubr.f32.gmra.mxu0 %v1990
        %v2636 = vpop.f32.mrf.mxu0
        %v2637 = vadd.f32 0.0, %v2636
        %v2638 = vpop.f32.mrf.mxu0
        %2639 = vmatprep.mubr.f32.mxu0 0.0
        %2640 = vmatmul.mubr.f32.gmra.mxu0 %v1991
        %v2641 = vpop.f32.mrf.mxu0
        %v2642 = vadd.f32 0.0, %v2641
        %v2643 = vpop.f32.mrf.mxu0
        %2644 = vmatprep.mubr.f32.mxu0 0.0
        %2645 = vmatmul.mubr.f32.gmra.mxu0 %v1992
        %v2646 = vpop.f32.mrf.mxu0
        %v2647 = vadd.f32 0.0, %v2646
        %v2648 = vpop.f32.mrf.mxu0
        %2649 = vmatprep.mubr.f32.mxu0 0.0
        %2650 = vmatmul.mubr.f32.gmra.mxu0 %v1993
        %v2651 = vpop.f32.mrf.mxu0
        %v2652 = vadd.f32 0.0, %v2651
        %v2653 = vpop.f32.mrf.mxu0
        %2654 = vmatprep.mubr.f32.mxu0 0.0
        %2655 = vmatmul.mubr.f32.gmra.mxu0 %v1994
        %v2656 = vpop.f32.mrf.mxu0
        %v2657 = vadd.f32 0.0, %v2656
        %v2658 = vpop.f32.mrf.mxu0
        %2659 = vmatprep.mubr.f32.mxu0 0.0
        %2660 = vmatmul.mubr.f32.gmra.mxu0 %v1995
        %v2661 = vpop.f32.mrf.mxu0
        %v2662 = vadd.f32 0.0, %v2661
        %v2663 = vpop.f32.mrf.mxu0
        %2664 = vmatprep.mubr.f32.mxu0 0.0
        %2665 = vmatmul.mubr.f32.gmra.mxu0 %v1996
        %v2666 = vpop.f32.mrf.mxu0
        %v2667 = vadd.f32 0.0, %v2666
        %v2668 = vpop.f32.mrf.mxu0
        %2669 = vmatprep.mubr.f32.mxu0 0.0
        %2670 = vmatmul.mubr.f32.gmra.mxu0 %v1997
        %v2671 = vpop.f32.mrf.mxu0
        %v2672 = vadd.f32 0.0, %v2671
        %v2673 = vpop.f32.mrf.mxu0
        %2674 = vmatprep.mubr.f32.mxu0 0.0
        %2675 = vmatmul.mubr.f32.gmra.mxu0 %v1998
        %v2676 = vpop.f32.mrf.mxu0
        %v2677 = vadd.f32 0.0, %v2676
        %v2678 = vpop.f32.mrf.mxu0
        %2679 = vmatprep.mubr.f32.mxu0 0.0
        %2680 = vmatmul.mubr.f32.gmra.mxu0 %v1999
        %v2681 = vpop.f32.mrf.mxu0
        %v2682 = vadd.f32 0.0, %v2681
        %v2683 = vpop.f32.mrf.mxu0
        %2684 = vmatprep.mubr.f32.mxu0 0.0
        %2685 = vmatmul.mubr.f32.gmra.mxu0 %v2000
        %v2686 = vpop.f32.mrf.mxu0
        %v2687 = vadd.f32 0.0, %v2686
        %v2688 = vpop.f32.mrf.mxu0
        %2689 = vmatprep.mubr.f32.mxu0 0.0
        %2690 = vmatmul.mubr.f32.gmra.mxu0 %v2001
        %v2691 = vpop.f32.mrf.mxu0
        %v2692 = vadd.f32 0.0, %v2691
        %v2693 = vpop.f32.mrf.mxu0
        %2694 = vmatprep.mubr.f32.mxu0 0.0
        %2695 = vmatmul.mubr.f32.gmra.mxu0 %v2002
        %v2696 = vpop.f32.mrf.mxu0
        %v2697 = vadd.f32 0.0, %v2696
        %v2698 = vpop.f32.mrf.mxu0
        %2699 = vmatprep.mubr.f32.mxu0 0.0
        %2700 = vmatmul.mubr.f32.gmra.mxu0 %v2003
        %v2701 = vpop.f32.mrf.mxu0
        %v2702 = vadd.f32 0.0, %v2701
        %v2703 = vpop.f32.mrf.mxu0
        %2704 = vmatprep.mubr.f32.mxu0 0.0
        %2705 = vmatmul.mubr.f32.gmra.mxu0 %v2004
        %v2706 = vpop.f32.mrf.mxu0
        %v2707 = vadd.f32 0.0, %v2706
        %v2708 = vpop.f32.mrf.mxu0
        %2709 = vmatprep.mubr.f32.mxu0 0.0
        %2710 = vmatmul.mubr.f32.gmra.mxu0 %v2005
        %v2711 = vpop.f32.mrf.mxu0
        %v2712 = vadd.f32 0.0, %v2711
        %v2713 = vpop.f32.mrf.mxu0
        %2714 = vmatprep.mubr.f32.mxu0 0.0
        %2715 = vmatmul.mubr.f32.gmra.mxu0 %v2006
        %v2716 = vpop.f32.mrf.mxu0
        %v2717 = vadd.f32 0.0, %v2716
        %v2718 = vpop.f32.mrf.mxu0
        %2719 = vmatprep.mubr.f32.mxu0 0.0
        %2720 = vmatmul.mubr.f32.gmra.mxu0 %v2007
        %v2721 = vpop.f32.mrf.mxu0
        %v2722 = vadd.f32 0.0, %v2721
        %v2723 = vpop.f32.mrf.mxu0
        %2724 = vmatprep.mubr.f32.mxu0 0.0
        %2725 = vmatmul.mubr.f32.gmra.mxu0 %v2008
        %v2726 = vpop.f32.mrf.mxu0
        %v2727 = vadd.f32 0.0, %v2726
        %v2728 = vpop.f32.mrf.mxu0
        %2729 = vdwg.mxu0
        %v2730 = vsub.f32 %v603, %v2092
        %v2731 = vsub.f32 %v608, %v2097
        %v2732 = vsub.f32 %v613, %v2102
        %v2733 = vsub.f32 %v618, %v2107
        %v2734 = vsub.f32 %v623, %v2112
        %v2735 = vsub.f32 %v628, %v2117
        %v2736 = vsub.f32 %v633, %v2122
        %v2737 = vsub.f32 %v638, %v2127
        %v2738 = vsub.f32 %v643, %v2132
        %v2739 = vsub.f32 %v648, %v2137
        %v2740 = vsub.f32 %v653, %v2142
        %v2741 = vsub.f32 %v658, %v2147
        %v2742 = vsub.f32 %v663, %v2152
        %v2743 = vsub.f32 %v668, %v2157
        %v2744 = vsub.f32 %v673, %v2162
        %v2745 = vsub.f32 %v678, %v2167
        %v2746 = vsub.f32 %v683, %v2172
        %v2747 = vsub.f32 %v688, %v2177
        %v2748 = vsub.f32 %v693, %v2182
        %v2749 = vsub.f32 %v698, %v2187
        %v2750 = vsub.f32 %v703, %v2192
        %v2751 = vsub.f32 %v708, %v2197
        %v2752 = vsub.f32 %v713, %v2202
        %v2753 = vsub.f32 %v718, %v2207
        %v2754 = vsub.f32 %v723, %v2212
        %v2755 = vsub.f32 %v728, %v2217
        %v2756 = vsub.f32 %v733, %v2222
        %v2757 = vsub.f32 %v738, %v2227
        %v2758 = vsub.f32 %v743, %v2232
        %v2759 = vsub.f32 %v748, %v2237
        %v2760 = vsub.f32 %v753, %v2242
        %v2761 = vsub.f32 %v758, %v2247
        %v2762 = vsub.f32 %v763, %v2252
        %v2763 = vsub.f32 %v768, %v2257
        %v2764 = vsub.f32 %v773, %v2262
        %v2765 = vsub.f32 %v778, %v2267
        %v2766 = vsub.f32 %v783, %v2272
        %v2767 = vsub.f32 %v788, %v2277
        %v2768 = vsub.f32 %v793, %v2282
        %v2769 = vsub.f32 %v798, %v2287
        %v2770 = vsub.f32 %v803, %v2292
        %v2771 = vsub.f32 %v808, %v2297
        %v2772 = vsub.f32 %v813, %v2302
        %v2773 = vsub.f32 %v818, %v2307
        %v2774 = vsub.f32 %v823, %v2312
        %v2775 = vsub.f32 %v828, %v2317
        %v2776 = vsub.f32 %v833, %v2322
        %v2777 = vsub.f32 %v838, %v2327
        %v2778 = vsub.f32 %v843, %v2332
        %v2779 = vsub.f32 %v848, %v2337
        %v2780 = vsub.f32 %v853, %v2342
        %v2781 = vsub.f32 %v858, %v2347
        %v2782 = vsub.f32 %v863, %v2352
        %v2783 = vsub.f32 %v868, %v2357
        %v2784 = vsub.f32 %v873, %v2362
        %v2785 = vsub.f32 %v878, %v2367
        %v2786 = vsub.f32 %v883, %v2372
        %v2787 = vsub.f32 %v888, %v2377
        %v2788 = vsub.f32 %v893, %v2382
        %v2789 = vsub.f32 %v898, %v2387
        %v2790 = vsub.f32 %v903, %v2392
        %v2791 = vsub.f32 %v908, %v2397
        %v2792 = vsub.f32 %v913, %v2402
        %v2793 = vsub.f32 %v918, %v2407
        %v2794 = vsub.f32 %v923, %v2412
        %v2795 = vsub.f32 %v928, %v2417
        %v2796 = vsub.f32 %v933, %v2422
        %v2797 = vsub.f32 %v938, %v2427
        %v2798 = vsub.f32 %v943, %v2432
        %v2799 = vsub.f32 %v948, %v2437
        %v2800 = vsub.f32 %v953, %v2442
        %v2801 = vsub.f32 %v958, %v2447
        %v2802 = vsub.f32 %v963, %v2452
        %v2803 = vsub.f32 %v968, %v2457
        %v2804 = vsub.f32 %v973, %v2462
        %v2805 = vsub.f32 %v978, %v2467
        %v2806 = vsub.f32 %v983, %v2472
        %v2807 = vsub.f32 %v988, %v2477
        %v2808 = vsub.f32 %v993, %v2482
        %v2809 = vsub.f32 %v998, %v2487
        %v2810 = vsub.f32 %v1003, %v2492
        %v2811 = vsub.f32 %v1008, %v2497
        %v2812 = vsub.f32 %v1013, %v2502
        %v2813 = vsub.f32 %v1018, %v2507
        %v2814 = vsub.f32 %v1023, %v2512
        %v2815 = vsub.f32 %v1028, %v2517
        %v2816 = vsub.f32 %v1033, %v2522
        %v2817 = vsub.f32 %v1038, %v2527
        %v2818 = vsub.f32 %v1043, %v2532
        %v2819 = vsub.f32 %v1048, %v2537
        %v2820 = vsub.f32 %v1053, %v2542
        %v2821 = vsub.f32 %v1058, %v2547
        %v2822 = vsub.f32 %v1063, %v2552
        %v2823 = vsub.f32 %v1068, %v2557
        %v2824 = vsub.f32 %v1073, %v2562
        %v2825 = vsub.f32 %v1078, %v2567
        %v2826 = vsub.f32 %v1083, %v2572
        %v2827 = vsub.f32 %v1088, %v2577
        %v2828 = vsub.f32 %v1093, %v2582
        %v2829 = vsub.f32 %v1098, %v2587
        %v2830 = vsub.f32 %v1103, %v2592
        %v2831 = vsub.f32 %v1108, %v2597
        %v2832 = vsub.f32 %v1113, %v2602
        %v2833 = vsub.f32 %v1118, %v2607
        %v2834 = vsub.f32 %v1123, %v2612
        %v2835 = vsub.f32 %v1128, %v2617
        %v2836 = vsub.f32 %v1133, %v2622
        %v2837 = vsub.f32 %v1138, %v2627
        %v2838 = vsub.f32 %v1143, %v2632
        %v2839 = vsub.f32 %v1148, %v2637
        %v2840 = vsub.f32 %v1153, %v2642
        %v2841 = vsub.f32 %v1158, %v2647
        %v2842 = vsub.f32 %v1163, %v2652
        %v2843 = vsub.f32 %v1168, %v2657
        %v2844 = vsub.f32 %v1173, %v2662
        %v2845 = vsub.f32 %v1178, %v2667
        %v2846 = vsub.f32 %v1183, %v2672
        %v2847 = vsub.f32 %v1188, %v2677
        %v2848 = vsub.f32 %v1193, %v2682
        %v2849 = vsub.f32 %v1198, %v2687
        %v2850 = vsub.f32 %v1203, %v2692
        %v2851 = vsub.f32 %v1208, %v2697
        %v2852 = vsub.f32 %v1213, %v2702
        %v2853 = vsub.f32 %v1218, %v2707
        %v2854 = vsub.f32 %v1223, %v2712
        %v2855 = vsub.f32 %v1228, %v2717
        %v2856 = vsub.f32 %v1233, %v2722
        %v2857 = vsub.f32 %v1238, %v2727
        %v2858 = vmul.f32 %v2730, 1.442695
        %v2859 = vpow.pop %v2858
        %v2860 = vmul.f32 %v2731, 1.442695
        %v2861 = vpow.pop %v2860
        %v2862 = vmul.f32 %v2732, 1.442695
        %v2863 = vpow.pop %v2862
        %v2864 = vmul.f32 %v2733, 1.442695
        %v2865 = vpow.pop %v2864
        %v2866 = vmul.f32 %v2734, 1.442695
        %v2867 = vpow.pop %v2866
        %v2868 = vmul.f32 %v2735, 1.442695
        %v2869 = vpow.pop %v2868
        %v2870 = vmul.f32 %v2736, 1.442695
        %v2871 = vpow.pop %v2870
        %v2872 = vmul.f32 %v2737, 1.442695
        %v2873 = vpow.pop %v2872
        %v2874 = vmul.f32 %v2738, 1.442695
        %v2875 = vpow.pop %v2874
        %v2876 = vmul.f32 %v2739, 1.442695
        %v2877 = vpow.pop %v2876
        %v2878 = vmul.f32 %v2740, 1.442695
        %v2879 = vpow.pop %v2878
        %v2880 = vmul.f32 %v2741, 1.442695
        %v2881 = vpow.pop %v2880
        %v2882 = vmul.f32 %v2742, 1.442695
        %v2883 = vpow.pop %v2882
        %v2884 = vmul.f32 %v2743, 1.442695
        %v2885 = vpow.pop %v2884
        %v2886 = vmul.f32 %v2744, 1.442695
        %v2887 = vpow.pop %v2886
        %v2888 = vmul.f32 %v2745, 1.442695
        %v2889 = vpow.pop %v2888
        %v2890 = vmul.f32 %v2746, 1.442695
        %v2891 = vpow.pop %v2890
        %v2892 = vmul.f32 %v2747, 1.442695
        %v2893 = vpow.pop %v2892
        %v2894 = vmul.f32 %v2748, 1.442695
        %v2895 = vpow.pop %v2894
        %v2896 = vmul.f32 %v2749, 1.442695
        %v2897 = vpow.pop %v2896
        %v2898 = vmul.f32 %v2750, 1.442695
        %v2899 = vpow.pop %v2898
        %v2900 = vmul.f32 %v2751, 1.442695
        %v2901 = vpow.pop %v2900
        %v2902 = vmul.f32 %v2752, 1.442695
        %v2903 = vpow.pop %v2902
        %v2904 = vmul.f32 %v2753, 1.442695
        %v2905 = vpow.pop %v2904
        %v2906 = vmul.f32 %v2754, 1.442695
        %v2907 = vpow.pop %v2906
        %v2908 = vmul.f32 %v2755, 1.442695
        %v2909 = vpow.pop %v2908
        %v2910 = vmul.f32 %v2756, 1.442695
        %v2911 = vpow.pop %v2910
        %v2912 = vmul.f32 %v2757, 1.442695
        %v2913 = vpow.pop %v2912
        %v2914 = vmul.f32 %v2758, 1.442695
        %v2915 = vpow.pop %v2914
        %v2916 = vmul.f32 %v2759, 1.442695
        %v2917 = vpow.pop %v2916
        %v2918 = vmul.f32 %v2760, 1.442695
        %v2919 = vpow.pop %v2918
        %v2920 = vmul.f32 %v2761, 1.442695
        %v2921 = vpow.pop %v2920
        %v2922 = vmul.f32 %v2762, 1.442695
        %v2923 = vpow.pop %v2922
        %v2924 = vmul.f32 %v2763, 1.442695
        %v2925 = vpow.pop %v2924
        %v2926 = vmul.f32 %v2764, 1.442695
        %v2927 = vpow.pop %v2926
        %v2928 = vmul.f32 %v2765, 1.442695
        %v2929 = vpow.pop %v2928
        %v2930 = vmul.f32 %v2766, 1.442695
        %v2931 = vpow.pop %v2930
        %v2932 = vmul.f32 %v2767, 1.442695
        %v2933 = vpow.pop %v2932
        %v2934 = vmul.f32 %v2768, 1.442695
        %v2935 = vpow.pop %v2934
        %v2936 = vmul.f32 %v2769, 1.442695
        %v2937 = vpow.pop %v2936
        %v2938 = vmul.f32 %v2770, 1.442695
        %v2939 = vpow.pop %v2938
        %v2940 = vmul.f32 %v2771, 1.442695
        %v2941 = vpow.pop %v2940
        %v2942 = vmul.f32 %v2772, 1.442695
        %v2943 = vpow.pop %v2942
        %v2944 = vmul.f32 %v2773, 1.442695
        %v2945 = vpow.pop %v2944
        %v2946 = vmul.f32 %v2774, 1.442695
        %v2947 = vpow.pop %v2946
        %v2948 = vmul.f32 %v2775, 1.442695
        %v2949 = vpow.pop %v2948
        %v2950 = vmul.f32 %v2776, 1.442695
        %v2951 = vpow.pop %v2950
        %v2952 = vmul.f32 %v2777, 1.442695
        %v2953 = vpow.pop %v2952
        %v2954 = vmul.f32 %v2778, 1.442695
        %v2955 = vpow.pop %v2954
        %v2956 = vmul.f32 %v2779, 1.442695
        %v2957 = vpow.pop %v2956
        %v2958 = vmul.f32 %v2780, 1.442695
        %v2959 = vpow.pop %v2958
        %v2960 = vmul.f32 %v2781, 1.442695
        %v2961 = vpow.pop %v2960
        %v2962 = vmul.f32 %v2782, 1.442695
        %v2963 = vpow.pop %v2962
        %v2964 = vmul.f32 %v2783, 1.442695
        %v2965 = vpow.pop %v2964
        %v2966 = vmul.f32 %v2784, 1.442695
        %v2967 = vpow.pop %v2966
        %v2968 = vmul.f32 %v2785, 1.442695
        %v2969 = vpow.pop %v2968
        %v2970 = vmul.f32 %v2786, 1.442695
        %v2971 = vpow.pop %v2970
        %v2972 = vmul.f32 %v2787, 1.442695
        %v2973 = vpow.pop %v2972
        %v2974 = vmul.f32 %v2788, 1.442695
        %v2975 = vpow.pop %v2974
        %v2976 = vmul.f32 %v2789, 1.442695
        %v2977 = vpow.pop %v2976
        %v2978 = vmul.f32 %v2790, 1.442695
        %v2979 = vpow.pop %v2978
        %v2980 = vmul.f32 %v2791, 1.442695
        %v2981 = vpow.pop %v2980
        %v2982 = vmul.f32 %v2792, 1.442695
        %v2983 = vpow.pop %v2982
        %v2984 = vmul.f32 %v2793, 1.442695
        %v2985 = vpow.pop %v2984
        %v2986 = vmul.f32 %v2794, 1.442695
        %v2987 = vpow.pop %v2986
        %v2988 = vmul.f32 %v2795, 1.442695
        %v2989 = vpow.pop %v2988
        %v2990 = vmul.f32 %v2796, 1.442695
        %v2991 = vpow.pop %v2990
        %v2992 = vmul.f32 %v2797, 1.442695
        %v2993 = vpow.pop %v2992
        %v2994 = vmul.f32 %v2798, 1.442695
        %v2995 = vpow.pop %v2994
        %v2996 = vmul.f32 %v2799, 1.442695
        %v2997 = vpow.pop %v2996
        %v2998 = vmul.f32 %v2800, 1.442695
        %v2999 = vpow.pop %v2998
        %v3000 = vmul.f32 %v2801, 1.442695
        %v3001 = vpow.pop %v3000
        %v3002 = vmul.f32 %v2802, 1.442695
        %v3003 = vpow.pop %v3002
        %v3004 = vmul.f32 %v2803, 1.442695
        %v3005 = vpow.pop %v3004
        %v3006 = vmul.f32 %v2804, 1.442695
        %v3007 = vpow.pop %v3006
        %v3008 = vmul.f32 %v2805, 1.442695
        %v3009 = vpow.pop %v3008
        %v3010 = vmul.f32 %v2806, 1.442695
        %v3011 = vpow.pop %v3010
        %v3012 = vmul.f32 %v2807, 1.442695
        %v3013 = vpow.pop %v3012
        %v3014 = vmul.f32 %v2808, 1.442695
        %v3015 = vpow.pop %v3014
        %v3016 = vmul.f32 %v2809, 1.442695
        %v3017 = vpow.pop %v3016
        %v3018 = vmul.f32 %v2810, 1.442695
        %v3019 = vpow.pop %v3018
        %v3020 = vmul.f32 %v2811, 1.442695
        %v3021 = vpow.pop %v3020
        %v3022 = vmul.f32 %v2812, 1.442695
        %v3023 = vpow.pop %v3022
        %v3024 = vmul.f32 %v2813, 1.442695
        %v3025 = vpow.pop %v3024
        %v3026 = vmul.f32 %v2814, 1.442695
        %v3027 = vpow.pop %v3026
        %v3028 = vmul.f32 %v2815, 1.442695
        %v3029 = vpow.pop %v3028
        %v3030 = vmul.f32 %v2816, 1.442695
        %v3031 = vpow.pop %v3030
        %v3032 = vmul.f32 %v2817, 1.442695
        %v3033 = vpow.pop %v3032
        %v3034 = vmul.f32 %v2818, 1.442695
        %v3035 = vpow.pop %v3034
        %v3036 = vmul.f32 %v2819, 1.442695
        %v3037 = vpow.pop %v3036
        %v3038 = vmul.f32 %v2820, 1.442695
        %v3039 = vpow.pop %v3038
        %v3040 = vmul.f32 %v2821, 1.442695
        %v3041 = vpow.pop %v3040
        %v3042 = vmul.f32 %v2822, 1.442695
        %v3043 = vpow.pop %v3042
        %v3044 = vmul.f32 %v2823, 1.442695
        %v3045 = vpow.pop %v3044
        %v3046 = vmul.f32 %v2824, 1.442695
        %v3047 = vpow.pop %v3046
        %v3048 = vmul.f32 %v2825, 1.442695
        %v3049 = vpow.pop %v3048
        %v3050 = vmul.f32 %v2826, 1.442695
        %v3051 = vpow.pop %v3050
        %v3052 = vmul.f32 %v2827, 1.442695
        %v3053 = vpow.pop %v3052
        %v3054 = vmul.f32 %v2828, 1.442695
        %v3055 = vpow.pop %v3054
        %v3056 = vmul.f32 %v2829, 1.442695
        %v3057 = vpow.pop %v3056
        %v3058 = vmul.f32 %v2830, 1.442695
        %v3059 = vpow.pop %v3058
        %v3060 = vmul.f32 %v2831, 1.442695
        %v3061 = vpow.pop %v3060
        %v3062 = vmul.f32 %v2832, 1.442695
        %v3063 = vpow.pop %v3062
        %v3064 = vmul.f32 %v2833, 1.442695
        %v3065 = vpow.pop %v3064
        %v3066 = vmul.f32 %v2834, 1.442695
        %v3067 = vpow.pop %v3066
        %v3068 = vmul.f32 %v2835, 1.442695
        %v3069 = vpow.pop %v3068
        %v3070 = vmul.f32 %v2836, 1.442695
        %v3071 = vpow.pop %v3070
        %v3072 = vmul.f32 %v2837, 1.442695
        %v3073 = vpow.pop %v3072
        %v3074 = vmul.f32 %v2838, 1.442695
        %v3075 = vpow.pop %v3074
        %v3076 = vmul.f32 %v2839, 1.442695
        %v3077 = vpow.pop %v3076
        %v3078 = vmul.f32 %v2840, 1.442695
        %v3079 = vpow.pop %v3078
        %v3080 = vmul.f32 %v2841, 1.442695
        %v3081 = vpow.pop %v3080
        %v3082 = vmul.f32 %v2842, 1.442695
        %v3083 = vpow.pop %v3082
        %v3084 = vmul.f32 %v2843, 1.442695
        %v3085 = vpow.pop %v3084
        %v3086 = vmul.f32 %v2844, 1.442695
        %v3087 = vpow.pop %v3086
        %v3088 = vmul.f32 %v2845, 1.442695
        %v3089 = vpow.pop %v3088
        %v3090 = vmul.f32 %v2846, 1.442695
        %v3091 = vpow.pop %v3090
        %v3092 = vmul.f32 %v2847, 1.442695
        %v3093 = vpow.pop %v3092
        %v3094 = vmul.f32 %v2848, 1.442695
        %v3095 = vpow.pop %v3094
        %v3096 = vmul.f32 %v2849, 1.442695
        %v3097 = vpow.pop %v3096
        %v3098 = vmul.f32 %v2850, 1.442695
        %v3099 = vpow.pop %v3098
        %v3100 = vmul.f32 %v2851, 1.442695
        %v3101 = vpow.pop %v3100
        %v3102 = vmul.f32 %v2852, 1.442695
        %v3103 = vpow.pop %v3102
        %v3104 = vmul.f32 %v2853, 1.442695
        %v3105 = vpow.pop %v3104
        %v3106 = vmul.f32 %v2854, 1.442695
        %v3107 = vpow.pop %v3106
        %v3108 = vmul.f32 %v2855, 1.442695
        %v3109 = vpow.pop %v3108
        %v3110 = vmul.f32 %v2856, 1.442695
        %v3111 = vpow.pop %v3110
        %v3112 = vmul.f32 %v2857, 1.442695
        %v3113 = vpow.pop %v3112
        %v3114 = vld [vmem:[%s6] sm:$0xff]
        %v3115 = vld [vmem:[%s6 + $0x8] sm:$0xff]
        %v3116 = vld [vmem:[%s6 + $0x10] sm:$0xff]
        %v3117 = vld [vmem:[%s6 + $0x18] sm:$0xff]
        %v3118 = vld [vmem:[%s6 + $0x20] sm:$0xff]
        %v3119 = vld [vmem:[%s6 + $0x28] sm:$0xff]
        %v3120 = vld [vmem:[%s6 + $0x30] sm:$0xff]
        %v3121 = vld [vmem:[%s6 + $0x38] sm:$0xff]
        %v3122 = vld [vmem:[%s6 + $0x40] sm:$0xff]
        %v3123 = vld [vmem:[%s6 + $0x48] sm:$0xff]
        %v3124 = vld [vmem:[%s6 + $0x50] sm:$0xff]
        %v3125 = vld [vmem:[%s6 + $0x58] sm:$0xff]
        %v3126 = vld [vmem:[%s6 + $0x60] sm:$0xff]
        %v3127 = vld [vmem:[%s6 + $0x68] sm:$0xff]
        %v3128 = vld [vmem:[%s6 + $0x70] sm:$0xff]
        %v3129 = vld [vmem:[%s6 + $0x78] sm:$0xff]
        %3130 = vmatprep.subr.mxu0 0.0
        %3131 = vmatpush1.msra.mxu0 %v3129
        %3132 = vmatprep.subr.mxu0 0.0
        %3133 = vmatpush1.msra.mxu0 %v3128
        %3134 = vmatprep.subr.mxu0 0.0
        %3135 = vmatpush1.msra.mxu0 %v3127
        %3136 = vmatprep.subr.mxu0 0.0
        %3137 = vmatpush1.msra.mxu0 %v3126
        %3138 = vmatprep.subr.mxu0 0.0
        %3139 = vmatpush1.msra.mxu0 %v3125
        %3140 = vmatprep.subr.mxu0 0.0
        %3141 = vmatpush1.msra.mxu0 %v3124
        %3142 = vmatprep.subr.mxu0 0.0
        %3143 = vmatpush1.msra.mxu0 %v3123
        %3144 = vmatprep.subr.mxu0 0.0
        %3145 = vmatpush1.msra.mxu0 %v3122
        %3146 = vmatprep.subr.mxu0 0.0
        %3147 = vmatpush1.msra.mxu0 %v3121
        %3148 = vmatprep.subr.mxu0 0.0
        %3149 = vmatpush1.msra.mxu0 %v3120
        %3150 = vmatprep.subr.mxu0 0.0
        %3151 = vmatpush1.msra.mxu0 %v3119
        %3152 = vmatprep.subr.mxu0 0.0
        %3153 = vmatpush1.msra.mxu0 %v3118
        %3154 = vmatprep.subr.mxu0 0.0
        %3155 = vmatpush1.msra.mxu0 %v3117
        %3156 = vmatprep.subr.mxu0 0.0
        %3157 = vmatpush1.msra.mxu0 %v3116
        %3158 = vmatprep.subr.mxu0 0.0
        %3159 = vmatpush1.msra.mxu0 %v3115
        %3160 = vmatprep.subr.mxu0 0.0
        %3161 = vmatpush1.msra.mxu0 %v3114
        %3162 = vmatprep.subr.mxu0 0.0
        %3163 = vmatpush2.msra.mxu0 0.0
        %3164 = vmatprep.subr.mxu0 0.0
        %3165 = vmatpush2.msra.mxu0 0.0
        %3166 = vmatprep.subr.mxu0 0.0
        %3167 = vmatpush2.msra.mxu0 0.0
        %3168 = vmatprep.subr.mxu0 0.0
        %3169 = vmatpush2.msra.mxu0 0.0
        %3170 = vmatprep.subr.mxu0 0.0
        %3171 = vmatpush2.msra.mxu0 0.0
        %3172 = vmatprep.subr.mxu0 0.0
        %3173 = vmatpush2.msra.mxu0 0.0
        %3174 = vmatprep.subr.mxu0 0.0
        %3175 = vmatpush2.msra.mxu0 0.0
        %3176 = vmatprep.subr.mxu0 0.0
        %3177 = vmatpush2.msra.mxu0 0.0
        %3178 = vmatprep.subr.mxu0 0.0
        %3179 = vmatpush2.msra.mxu0 0.0
        %3180 = vmatprep.subr.mxu0 0.0
        %3181 = vmatpush2.msra.mxu0 0.0
        %3182 = vmatprep.subr.mxu0 0.0
        %3183 = vmatpush2.msra.mxu0 0.0
        %3184 = vmatprep.subr.mxu0 0.0
        %3185 = vmatpush2.msra.mxu0 0.0
        %3186 = vmatprep.subr.mxu0 0.0
        %3187 = vmatpush2.msra.mxu0 0.0
        %3188 = vmatprep.subr.mxu0 0.0
        %3189 = vmatpush2.msra.mxu0 0.0
        %3190 = vmatprep.subr.mxu0 0.0
        %3191 = vmatpush2.msra.mxu0 0.0
        %3192 = vmatprep.subr.mxu0 0.0
        %3193 = vmatpush2.msra.mxu0 0.0
        %3194 = vmatprep.mubr.f32.mxu0 0.0
        %3195 = vmatmul.mubr.f32.gmra.mxu0 %v2859
        %v3196 = vpop.f32.mrf.mxu0
        %v3197 = vadd.f32 0.0, %v3196
        %v3198 = vpop.f32.mrf.mxu0
        %3199 = vmatprep.mubr.f32.mxu0 0.0
        %3200 = vmatmul.mubr.f32.gmra.mxu0 %v2861
        %v3201 = vpop.f32.mrf.mxu0
        %v3202 = vadd.f32 0.0, %v3201
        %v3203 = vpop.f32.mrf.mxu0
        %3204 = vmatprep.mubr.f32.mxu0 0.0
        %3205 = vmatmul.mubr.f32.gmra.mxu0 %v2863
        %v3206 = vpop.f32.mrf.mxu0
        %v3207 = vadd.f32 0.0, %v3206
        %v3208 = vpop.f32.mrf.mxu0
        %3209 = vmatprep.mubr.f32.mxu0 0.0
        %3210 = vmatmul.mubr.f32.gmra.mxu0 %v2865
        %v3211 = vpop.f32.mrf.mxu0
        %v3212 = vadd.f32 0.0, %v3211
        %v3213 = vpop.f32.mrf.mxu0
        %3214 = vmatprep.mubr.f32.mxu0 0.0
        %3215 = vmatmul.mubr.f32.gmra.mxu0 %v2867
        %v3216 = vpop.f32.mrf.mxu0
        %v3217 = vadd.f32 0.0, %v3216
        %v3218 = vpop.f32.mrf.mxu0
        %3219 = vmatprep.mubr.f32.mxu0 0.0
        %3220 = vmatmul.mubr.f32.gmra.mxu0 %v2869
        %v3221 = vpop.f32.mrf.mxu0
        %v3222 = vadd.f32 0.0, %v3221
        %v3223 = vpop.f32.mrf.mxu0
        %3224 = vmatprep.mubr.f32.mxu0 0.0
        %3225 = vmatmul.mubr.f32.gmra.mxu0 %v2871
        %v3226 = vpop.f32.mrf.mxu0
        %v3227 = vadd.f32 0.0, %v3226
        %v3228 = vpop.f32.mrf.mxu0
        %3229 = vmatprep.mubr.f32.mxu0 0.0
        %3230 = vmatmul.mubr.f32.gmra.mxu0 %v2873
        %v3231 = vpop.f32.mrf.mxu0
        %v3232 = vadd.f32 0.0, %v3231
        %v3233 = vpop.f32.mrf.mxu0
        %3234 = vmatprep.mubr.f32.mxu0 0.0
        %3235 = vmatmul.mubr.f32.gmra.mxu0 %v2875
        %v3236 = vpop.f32.mrf.mxu0
        %v3237 = vadd.f32 0.0, %v3236
        %v3238 = vpop.f32.mrf.mxu0
        %3239 = vmatprep.mubr.f32.mxu0 0.0
        %3240 = vmatmul.mubr.f32.gmra.mxu0 %v2877
        %v3241 = vpop.f32.mrf.mxu0
        %v3242 = vadd.f32 0.0, %v3241
        %v3243 = vpop.f32.mrf.mxu0
        %3244 = vmatprep.mubr.f32.mxu0 0.0
        %3245 = vmatmul.mubr.f32.gmra.mxu0 %v2879
        %v3246 = vpop.f32.mrf.mxu0
        %v3247 = vadd.f32 0.0, %v3246
        %v3248 = vpop.f32.mrf.mxu0
        %3249 = vmatprep.mubr.f32.mxu0 0.0
        %3250 = vmatmul.mubr.f32.gmra.mxu0 %v2881
        %v3251 = vpop.f32.mrf.mxu0
        %v3252 = vadd.f32 0.0, %v3251
        %v3253 = vpop.f32.mrf.mxu0
        %3254 = vmatprep.mubr.f32.mxu0 0.0
        %3255 = vmatmul.mubr.f32.gmra.mxu0 %v2883
        %v3256 = vpop.f32.mrf.mxu0
        %v3257 = vadd.f32 0.0, %v3256
        %v3258 = vpop.f32.mrf.mxu0
        %3259 = vmatprep.mubr.f32.mxu0 0.0
        %3260 = vmatmul.mubr.f32.gmra.mxu0 %v2885
        %v3261 = vpop.f32.mrf.mxu0
        %v3262 = vadd.f32 0.0, %v3261
        %v3263 = vpop.f32.mrf.mxu0
        %3264 = vmatprep.mubr.f32.mxu0 0.0
        %3265 = vmatmul.mubr.f32.gmra.mxu0 %v2887
        %v3266 = vpop.f32.mrf.mxu0
        %v3267 = vadd.f32 0.0, %v3266
        %v3268 = vpop.f32.mrf.mxu0
        %3269 = vmatprep.mubr.f32.mxu0 0.0
        %3270 = vmatmul.mubr.f32.gmra.mxu0 %v2889
        %v3271 = vpop.f32.mrf.mxu0
        %v3272 = vadd.f32 0.0, %v3271
        %v3273 = vpop.f32.mrf.mxu0
        %3274 = vmatprep.mubr.f32.mxu0 0.0
        %3275 = vmatmul.mubr.f32.gmra.mxu0 %v2891
        %v3276 = vpop.f32.mrf.mxu0
        %v3277 = vadd.f32 0.0, %v3276
        %v3278 = vpop.f32.mrf.mxu0
        %3279 = vmatprep.mubr.f32.mxu0 0.0
        %3280 = vmatmul.mubr.f32.gmra.mxu0 %v2893
        %v3281 = vpop.f32.mrf.mxu0
        %v3282 = vadd.f32 0.0, %v3281
        %v3283 = vpop.f32.mrf.mxu0
        %3284 = vmatprep.mubr.f32.mxu0 0.0
        %3285 = vmatmul.mubr.f32.gmra.mxu0 %v2895
        %v3286 = vpop.f32.mrf.mxu0
        %v3287 = vadd.f32 0.0, %v3286
        %v3288 = vpop.f32.mrf.mxu0
        %3289 = vmatprep.mubr.f32.mxu0 0.0
        %3290 = vmatmul.mubr.f32.gmra.mxu0 %v2897
        %v3291 = vpop.f32.mrf.mxu0
        %v3292 = vadd.f32 0.0, %v3291
        %v3293 = vpop.f32.mrf.mxu0
        %3294 = vmatprep.mubr.f32.mxu0 0.0
        %3295 = vmatmul.mubr.f32.gmra.mxu0 %v2899
        %v3296 = vpop.f32.mrf.mxu0
        %v3297 = vadd.f32 0.0, %v3296
        %v3298 = vpop.f32.mrf.mxu0
        %3299 = vmatprep.mubr.f32.mxu0 0.0
        %3300 = vmatmul.mubr.f32.gmra.mxu0 %v2901
        %v3301 = vpop.f32.mrf.mxu0
        %v3302 = vadd.f32 0.0, %v3301
        %v3303 = vpop.f32.mrf.mxu0
        %3304 = vmatprep.mubr.f32.mxu0 0.0
        %3305 = vmatmul.mubr.f32.gmra.mxu0 %v2903
        %v3306 = vpop.f32.mrf.mxu0
        %v3307 = vadd.f32 0.0, %v3306
        %v3308 = vpop.f32.mrf.mxu0
        %3309 = vmatprep.mubr.f32.mxu0 0.0
        %3310 = vmatmul.mubr.f32.gmra.mxu0 %v2905
        %v3311 = vpop.f32.mrf.mxu0
        %v3312 = vadd.f32 0.0, %v3311
        %v3313 = vpop.f32.mrf.mxu0
        %3314 = vmatprep.mubr.f32.mxu0 0.0
        %3315 = vmatmul.mubr.f32.gmra.mxu0 %v2907
        %v3316 = vpop.f32.mrf.mxu0
        %v3317 = vadd.f32 0.0, %v3316
        %v3318 = vpop.f32.mrf.mxu0
        %3319 = vmatprep.mubr.f32.mxu0 0.0
        %3320 = vmatmul.mubr.f32.gmra.mxu0 %v2909
        %v3321 = vpop.f32.mrf.mxu0
        %v3322 = vadd.f32 0.0, %v3321
        %v3323 = vpop.f32.mrf.mxu0
        %3324 = vmatprep.mubr.f32.mxu0 0.0
        %3325 = vmatmul.mubr.f32.gmra.mxu0 %v2911
        %v3326 = vpop.f32.mrf.mxu0
        %v3327 = vadd.f32 0.0, %v3326
        %v3328 = vpop.f32.mrf.mxu0
        %3329 = vmatprep.mubr.f32.mxu0 0.0
        %3330 = vmatmul.mubr.f32.gmra.mxu0 %v2913
        %v3331 = vpop.f32.mrf.mxu0
        %v3332 = vadd.f32 0.0, %v3331
        %v3333 = vpop.f32.mrf.mxu0
        %3334 = vmatprep.mubr.f32.mxu0 0.0
        %3335 = vmatmul.mubr.f32.gmra.mxu0 %v2915
        %v3336 = vpop.f32.mrf.mxu0
        %v3337 = vadd.f32 0.0, %v3336
        %v3338 = vpop.f32.mrf.mxu0
        %3339 = vmatprep.mubr.f32.mxu0 0.0
        %3340 = vmatmul.mubr.f32.gmra.mxu0 %v2917
        %v3341 = vpop.f32.mrf.mxu0
        %v3342 = vadd.f32 0.0, %v3341
        %v3343 = vpop.f32.mrf.mxu0
        %3344 = vmatprep.mubr.f32.mxu0 0.0
        %3345 = vmatmul.mubr.f32.gmra.mxu0 %v2919
        %v3346 = vpop.f32.mrf.mxu0
        %v3347 = vadd.f32 0.0, %v3346
        %v3348 = vpop.f32.mrf.mxu0
        %3349 = vmatprep.mubr.f32.mxu0 0.0
        %3350 = vmatmul.mubr.f32.gmra.mxu0 %v2921
        %v3351 = vpop.f32.mrf.mxu0
        %v3352 = vadd.f32 0.0, %v3351
        %v3353 = vpop.f32.mrf.mxu0
        %3354 = vmatprep.mubr.f32.mxu0 0.0
        %3355 = vmatmul.mubr.f32.gmra.mxu0 %v2923
        %v3356 = vpop.f32.mrf.mxu0
        %v3357 = vadd.f32 0.0, %v3356
        %v3358 = vpop.f32.mrf.mxu0
        %3359 = vmatprep.mubr.f32.mxu0 0.0
        %3360 = vmatmul.mubr.f32.gmra.mxu0 %v2925
        %v3361 = vpop.f32.mrf.mxu0
        %v3362 = vadd.f32 0.0, %v3361
        %v3363 = vpop.f32.mrf.mxu0
        %3364 = vmatprep.mubr.f32.mxu0 0.0
        %3365 = vmatmul.mubr.f32.gmra.mxu0 %v2927
        %v3366 = vpop.f32.mrf.mxu0
        %v3367 = vadd.f32 0.0, %v3366
        %v3368 = vpop.f32.mrf.mxu0
        %3369 = vmatprep.mubr.f32.mxu0 0.0
        %3370 = vmatmul.mubr.f32.gmra.mxu0 %v2929
        %v3371 = vpop.f32.mrf.mxu0
        %v3372 = vadd.f32 0.0, %v3371
        %v3373 = vpop.f32.mrf.mxu0
        %3374 = vmatprep.mubr.f32.mxu0 0.0
        %3375 = vmatmul.mubr.f32.gmra.mxu0 %v2931
        %v3376 = vpop.f32.mrf.mxu0
        %v3377 = vadd.f32 0.0, %v3376
        %v3378 = vpop.f32.mrf.mxu0
        %3379 = vmatprep.mubr.f32.mxu0 0.0
        %3380 = vmatmul.mubr.f32.gmra.mxu0 %v2933
        %v3381 = vpop.f32.mrf.mxu0
        %v3382 = vadd.f32 0.0, %v3381
        %v3383 = vpop.f32.mrf.mxu0
        %3384 = vmatprep.mubr.f32.mxu0 0.0
        %3385 = vmatmul.mubr.f32.gmra.mxu0 %v2935
        %v3386 = vpop.f32.mrf.mxu0
        %v3387 = vadd.f32 0.0, %v3386
        %v3388 = vpop.f32.mrf.mxu0
        %3389 = vmatprep.mubr.f32.mxu0 0.0
        %3390 = vmatmul.mubr.f32.gmra.mxu0 %v2937
        %v3391 = vpop.f32.mrf.mxu0
        %v3392 = vadd.f32 0.0, %v3391
        %v3393 = vpop.f32.mrf.mxu0
        %3394 = vmatprep.mubr.f32.mxu0 0.0
        %3395 = vmatmul.mubr.f32.gmra.mxu0 %v2939
        %v3396 = vpop.f32.mrf.mxu0
        %v3397 = vadd.f32 0.0, %v3396
        %v3398 = vpop.f32.mrf.mxu0
        %3399 = vmatprep.mubr.f32.mxu0 0.0
        %3400 = vmatmul.mubr.f32.gmra.mxu0 %v2941
        %v3401 = vpop.f32.mrf.mxu0
        %v3402 = vadd.f32 0.0, %v3401
        %v3403 = vpop.f32.mrf.mxu0
        %3404 = vmatprep.mubr.f32.mxu0 0.0
        %3405 = vmatmul.mubr.f32.gmra.mxu0 %v2943
        %v3406 = vpop.f32.mrf.mxu0
        %v3407 = vadd.f32 0.0, %v3406
        %v3408 = vpop.f32.mrf.mxu0
        %3409 = vmatprep.mubr.f32.mxu0 0.0
        %3410 = vmatmul.mubr.f32.gmra.mxu0 %v2945
        %v3411 = vpop.f32.mrf.mxu0
        %v3412 = vadd.f32 0.0, %v3411
        %v3413 = vpop.f32.mrf.mxu0
        %3414 = vmatprep.mubr.f32.mxu0 0.0
        %3415 = vmatmul.mubr.f32.gmra.mxu0 %v2947
        %v3416 = vpop.f32.mrf.mxu0
        %v3417 = vadd.f32 0.0, %v3416
        %v3418 = vpop.f32.mrf.mxu0
        %3419 = vmatprep.mubr.f32.mxu0 0.0
        %3420 = vmatmul.mubr.f32.gmra.mxu0 %v2949
        %v3421 = vpop.f32.mrf.mxu0
        %v3422 = vadd.f32 0.0, %v3421
        %v3423 = vpop.f32.mrf.mxu0
        %3424 = vmatprep.mubr.f32.mxu0 0.0
        %3425 = vmatmul.mubr.f32.gmra.mxu0 %v2951
        %v3426 = vpop.f32.mrf.mxu0
        %v3427 = vadd.f32 0.0, %v3426
        %v3428 = vpop.f32.mrf.mxu0
        %3429 = vmatprep.mubr.f32.mxu0 0.0
        %3430 = vmatmul.mubr.f32.gmra.mxu0 %v2953
        %v3431 = vpop.f32.mrf.mxu0
        %v3432 = vadd.f32 0.0, %v3431
        %v3433 = vpop.f32.mrf.mxu0
        %3434 = vmatprep.mubr.f32.mxu0 0.0
        %3435 = vmatmul.mubr.f32.gmra.mxu0 %v2955
        %v3436 = vpop.f32.mrf.mxu0
        %v3437 = vadd.f32 0.0, %v3436
        %v3438 = vpop.f32.mrf.mxu0
        %3439 = vmatprep.mubr.f32.mxu0 0.0
        %3440 = vmatmul.mubr.f32.gmra.mxu0 %v2957
        %v3441 = vpop.f32.mrf.mxu0
        %v3442 = vadd.f32 0.0, %v3441
        %v3443 = vpop.f32.mrf.mxu0
        %3444 = vmatprep.mubr.f32.mxu0 0.0
        %3445 = vmatmul.mubr.f32.gmra.mxu0 %v2959
        %v3446 = vpop.f32.mrf.mxu0
        %v3447 = vadd.f32 0.0, %v3446
        %v3448 = vpop.f32.mrf.mxu0
        %3449 = vmatprep.mubr.f32.mxu0 0.0
        %3450 = vmatmul.mubr.f32.gmra.mxu0 %v2961
        %v3451 = vpop.f32.mrf.mxu0
        %v3452 = vadd.f32 0.0, %v3451
        %v3453 = vpop.f32.mrf.mxu0
        %3454 = vmatprep.mubr.f32.mxu0 0.0
        %3455 = vmatmul.mubr.f32.gmra.mxu0 %v2963
        %v3456 = vpop.f32.mrf.mxu0
        %v3457 = vadd.f32 0.0, %v3456
        %v3458 = vpop.f32.mrf.mxu0
        %3459 = vmatprep.mubr.f32.mxu0 0.0
        %3460 = vmatmul.mubr.f32.gmra.mxu0 %v2965
        %v3461 = vpop.f32.mrf.mxu0
        %v3462 = vadd.f32 0.0, %v3461
        %v3463 = vpop.f32.mrf.mxu0
        %3464 = vmatprep.mubr.f32.mxu0 0.0
        %3465 = vmatmul.mubr.f32.gmra.mxu0 %v2967
        %v3466 = vpop.f32.mrf.mxu0
        %v3467 = vadd.f32 0.0, %v3466
        %v3468 = vpop.f32.mrf.mxu0
        %3469 = vmatprep.mubr.f32.mxu0 0.0
        %3470 = vmatmul.mubr.f32.gmra.mxu0 %v2969
        %v3471 = vpop.f32.mrf.mxu0
        %v3472 = vadd.f32 0.0, %v3471
        %v3473 = vpop.f32.mrf.mxu0
        %3474 = vmatprep.mubr.f32.mxu0 0.0
        %3475 = vmatmul.mubr.f32.gmra.mxu0 %v2971
        %v3476 = vpop.f32.mrf.mxu0
        %v3477 = vadd.f32 0.0, %v3476
        %v3478 = vpop.f32.mrf.mxu0
        %3479 = vmatprep.mubr.f32.mxu0 0.0
        %3480 = vmatmul.mubr.f32.gmra.mxu0 %v2973
        %v3481 = vpop.f32.mrf.mxu0
        %v3482 = vadd.f32 0.0, %v3481
        %v3483 = vpop.f32.mrf.mxu0
        %3484 = vmatprep.mubr.f32.mxu0 0.0
        %3485 = vmatmul.mubr.f32.gmra.mxu0 %v2975
        %v3486 = vpop.f32.mrf.mxu0
        %v3487 = vadd.f32 0.0, %v3486
        %v3488 = vpop.f32.mrf.mxu0
        %3489 = vmatprep.mubr.f32.mxu0 0.0
        %3490 = vmatmul.mubr.f32.gmra.mxu0 %v2977
        %v3491 = vpop.f32.mrf.mxu0
        %v3492 = vadd.f32 0.0, %v3491
        %v3493 = vpop.f32.mrf.mxu0
        %3494 = vmatprep.mubr.f32.mxu0 0.0
        %3495 = vmatmul.mubr.f32.gmra.mxu0 %v2979
        %v3496 = vpop.f32.mrf.mxu0
        %v3497 = vadd.f32 0.0, %v3496
        %v3498 = vpop.f32.mrf.mxu0
        %3499 = vmatprep.mubr.f32.mxu0 0.0
        %3500 = vmatmul.mubr.f32.gmra.mxu0 %v2981
        %v3501 = vpop.f32.mrf.mxu0
        %v3502 = vadd.f32 0.0, %v3501
        %v3503 = vpop.f32.mrf.mxu0
        %3504 = vmatprep.mubr.f32.mxu0 0.0
        %3505 = vmatmul.mubr.f32.gmra.mxu0 %v2983
        %v3506 = vpop.f32.mrf.mxu0
        %v3507 = vadd.f32 0.0, %v3506
        %v3508 = vpop.f32.mrf.mxu0
        %3509 = vmatprep.mubr.f32.mxu0 0.0
        %3510 = vmatmul.mubr.f32.gmra.mxu0 %v2985
        %v3511 = vpop.f32.mrf.mxu0
        %v3512 = vadd.f32 0.0, %v3511
        %v3513 = vpop.f32.mrf.mxu0
        %3514 = vmatprep.mubr.f32.mxu0 0.0
        %3515 = vmatmul.mubr.f32.gmra.mxu0 %v2987
        %v3516 = vpop.f32.mrf.mxu0
        %v3517 = vadd.f32 0.0, %v3516
        %v3518 = vpop.f32.mrf.mxu0
        %3519 = vmatprep.mubr.f32.mxu0 0.0
        %3520 = vmatmul.mubr.f32.gmra.mxu0 %v2989
        %v3521 = vpop.f32.mrf.mxu0
        %v3522 = vadd.f32 0.0, %v3521
        %v3523 = vpop.f32.mrf.mxu0
        %3524 = vmatprep.mubr.f32.mxu0 0.0
        %3525 = vmatmul.mubr.f32.gmra.mxu0 %v2991
        %v3526 = vpop.f32.mrf.mxu0
        %v3527 = vadd.f32 0.0, %v3526
        %v3528 = vpop.f32.mrf.mxu0
        %3529 = vmatprep.mubr.f32.mxu0 0.0
        %3530 = vmatmul.mubr.f32.gmra.mxu0 %v2993
        %v3531 = vpop.f32.mrf.mxu0
        %v3532 = vadd.f32 0.0, %v3531
        %v3533 = vpop.f32.mrf.mxu0
        %3534 = vmatprep.mubr.f32.mxu0 0.0
        %3535 = vmatmul.mubr.f32.gmra.mxu0 %v2995
        %v3536 = vpop.f32.mrf.mxu0
        %v3537 = vadd.f32 0.0, %v3536
        %v3538 = vpop.f32.mrf.mxu0
        %3539 = vmatprep.mubr.f32.mxu0 0.0
        %3540 = vmatmul.mubr.f32.gmra.mxu0 %v2997
        %v3541 = vpop.f32.mrf.mxu0
        %v3542 = vadd.f32 0.0, %v3541
        %v3543 = vpop.f32.mrf.mxu0
        %3544 = vmatprep.mubr.f32.mxu0 0.0
        %3545 = vmatmul.mubr.f32.gmra.mxu0 %v2999
        %v3546 = vpop.f32.mrf.mxu0
        %v3547 = vadd.f32 0.0, %v3546
        %v3548 = vpop.f32.mrf.mxu0
        %3549 = vmatprep.mubr.f32.mxu0 0.0
        %3550 = vmatmul.mubr.f32.gmra.mxu0 %v3001
        %v3551 = vpop.f32.mrf.mxu0
        %v3552 = vadd.f32 0.0, %v3551
        %v3553 = vpop.f32.mrf.mxu0
        %3554 = vmatprep.mubr.f32.mxu0 0.0
        %3555 = vmatmul.mubr.f32.gmra.mxu0 %v3003
        %v3556 = vpop.f32.mrf.mxu0
        %v3557 = vadd.f32 0.0, %v3556
        %v3558 = vpop.f32.mrf.mxu0
        %3559 = vmatprep.mubr.f32.mxu0 0.0
        %3560 = vmatmul.mubr.f32.gmra.mxu0 %v3005
        %v3561 = vpop.f32.mrf.mxu0
        %v3562 = vadd.f32 0.0, %v3561
        %v3563 = vpop.f32.mrf.mxu0
        %3564 = vmatprep.mubr.f32.mxu0 0.0
        %3565 = vmatmul.mubr.f32.gmra.mxu0 %v3007
        %v3566 = vpop.f32.mrf.mxu0
        %v3567 = vadd.f32 0.0, %v3566
        %v3568 = vpop.f32.mrf.mxu0
        %3569 = vmatprep.mubr.f32.mxu0 0.0
        %3570 = vmatmul.mubr.f32.gmra.mxu0 %v3009
        %v3571 = vpop.f32.mrf.mxu0
        %v3572 = vadd.f32 0.0, %v3571
        %v3573 = vpop.f32.mrf.mxu0
        %3574 = vmatprep.mubr.f32.mxu0 0.0
        %3575 = vmatmul.mubr.f32.gmra.mxu0 %v3011
        %v3576 = vpop.f32.mrf.mxu0
        %v3577 = vadd.f32 0.0, %v3576
        %v3578 = vpop.f32.mrf.mxu0
        %3579 = vmatprep.mubr.f32.mxu0 0.0
        %3580 = vmatmul.mubr.f32.gmra.mxu0 %v3013
        %v3581 = vpop.f32.mrf.mxu0
        %v3582 = vadd.f32 0.0, %v3581
        %v3583 = vpop.f32.mrf.mxu0
        %3584 = vmatprep.mubr.f32.mxu0 0.0
        %3585 = vmatmul.mubr.f32.gmra.mxu0 %v3015
        %v3586 = vpop.f32.mrf.mxu0
        %v3587 = vadd.f32 0.0, %v3586
        %v3588 = vpop.f32.mrf.mxu0
        %3589 = vmatprep.mubr.f32.mxu0 0.0
        %3590 = vmatmul.mubr.f32.gmra.mxu0 %v3017
        %v3591 = vpop.f32.mrf.mxu0
        %v3592 = vadd.f32 0.0, %v3591
        %v3593 = vpop.f32.mrf.mxu0
        %3594 = vmatprep.mubr.f32.mxu0 0.0
        %3595 = vmatmul.mubr.f32.gmra.mxu0 %v3019
        %v3596 = vpop.f32.mrf.mxu0
        %v3597 = vadd.f32 0.0, %v3596
        %v3598 = vpop.f32.mrf.mxu0
        %3599 = vmatprep.mubr.f32.mxu0 0.0
        %3600 = vmatmul.mubr.f32.gmra.mxu0 %v3021
        %v3601 = vpop.f32.mrf.mxu0
        %v3602 = vadd.f32 0.0, %v3601
        %v3603 = vpop.f32.mrf.mxu0
        %3604 = vmatprep.mubr.f32.mxu0 0.0
        %3605 = vmatmul.mubr.f32.gmra.mxu0 %v3023
        %v3606 = vpop.f32.mrf.mxu0
        %v3607 = vadd.f32 0.0, %v3606
        %v3608 = vpop.f32.mrf.mxu0
        %3609 = vmatprep.mubr.f32.mxu0 0.0
        %3610 = vmatmul.mubr.f32.gmra.mxu0 %v3025
        %v3611 = vpop.f32.mrf.mxu0
        %v3612 = vadd.f32 0.0, %v3611
        %v3613 = vpop.f32.mrf.mxu0
        %3614 = vmatprep.mubr.f32.mxu0 0.0
        %3615 = vmatmul.mubr.f32.gmra.mxu0 %v3027
        %v3616 = vpop.f32.mrf.mxu0
        %v3617 = vadd.f32 0.0, %v3616
        %v3618 = vpop.f32.mrf.mxu0
        %3619 = vmatprep.mubr.f32.mxu0 0.0
        %3620 = vmatmul.mubr.f32.gmra.mxu0 %v3029
        %v3621 = vpop.f32.mrf.mxu0
        %v3622 = vadd.f32 0.0, %v3621
        %v3623 = vpop.f32.mrf.mxu0
        %3624 = vmatprep.mubr.f32.mxu0 0.0
        %3625 = vmatmul.mubr.f32.gmra.mxu0 %v3031
        %v3626 = vpop.f32.mrf.mxu0
        %v3627 = vadd.f32 0.0, %v3626
        %v3628 = vpop.f32.mrf.mxu0
        %3629 = vmatprep.mubr.f32.mxu0 0.0
        %3630 = vmatmul.mubr.f32.gmra.mxu0 %v3033
        %v3631 = vpop.f32.mrf.mxu0
        %v3632 = vadd.f32 0.0, %v3631
        %v3633 = vpop.f32.mrf.mxu0
        %3634 = vmatprep.mubr.f32.mxu0 0.0
        %3635 = vmatmul.mubr.f32.gmra.mxu0 %v3035
        %v3636 = vpop.f32.mrf.mxu0
        %v3637 = vadd.f32 0.0, %v3636
        %v3638 = vpop.f32.mrf.mxu0
        %3639 = vmatprep.mubr.f32.mxu0 0.0
        %3640 = vmatmul.mubr.f32.gmra.mxu0 %v3037
        %v3641 = vpop.f32.mrf.mxu0
        %v3642 = vadd.f32 0.0, %v3641
        %v3643 = vpop.f32.mrf.mxu0
        %3644 = vmatprep.mubr.f32.mxu0 0.0
        %3645 = vmatmul.mubr.f32.gmra.mxu0 %v3039
        %v3646 = vpop.f32.mrf.mxu0
        %v3647 = vadd.f32 0.0, %v3646
        %v3648 = vpop.f32.mrf.mxu0
        %3649 = vmatprep.mubr.f32.mxu0 0.0
        %3650 = vmatmul.mubr.f32.gmra.mxu0 %v3041
        %v3651 = vpop.f32.mrf.mxu0
        %v3652 = vadd.f32 0.0, %v3651
        %v3653 = vpop.f32.mrf.mxu0
        %3654 = vmatprep.mubr.f32.mxu0 0.0
        %3655 = vmatmul.mubr.f32.gmra.mxu0 %v3043
        %v3656 = vpop.f32.mrf.mxu0
        %v3657 = vadd.f32 0.0, %v3656
        %v3658 = vpop.f32.mrf.mxu0
        %3659 = vmatprep.mubr.f32.mxu0 0.0
        %3660 = vmatmul.mubr.f32.gmra.mxu0 %v3045
        %v3661 = vpop.f32.mrf.mxu0
        %v3662 = vadd.f32 0.0, %v3661
        %v3663 = vpop.f32.mrf.mxu0
        %3664 = vmatprep.mubr.f32.mxu0 0.0
        %3665 = vmatmul.mubr.f32.gmra.mxu0 %v3047
        %v3666 = vpop.f32.mrf.mxu0
        %v3667 = vadd.f32 0.0, %v3666
        %v3668 = vpop.f32.mrf.mxu0
        %3669 = vmatprep.mubr.f32.mxu0 0.0
        %3670 = vmatmul.mubr.f32.gmra.mxu0 %v3049
        %v3671 = vpop.f32.mrf.mxu0
        %v3672 = vadd.f32 0.0, %v3671
        %v3673 = vpop.f32.mrf.mxu0
        %3674 = vmatprep.mubr.f32.mxu0 0.0
        %3675 = vmatmul.mubr.f32.gmra.mxu0 %v3051
        %v3676 = vpop.f32.mrf.mxu0
        %v3677 = vadd.f32 0.0, %v3676
        %v3678 = vpop.f32.mrf.mxu0
        %3679 = vmatprep.mubr.f32.mxu0 0.0
        %3680 = vmatmul.mubr.f32.gmra.mxu0 %v3053
        %v3681 = vpop.f32.mrf.mxu0
        %v3682 = vadd.f32 0.0, %v3681
        %v3683 = vpop.f32.mrf.mxu0
        %3684 = vmatprep.mubr.f32.mxu0 0.0
        %3685 = vmatmul.mubr.f32.gmra.mxu0 %v3055
        %v3686 = vpop.f32.mrf.mxu0
        %v3687 = vadd.f32 0.0, %v3686
        %v3688 = vpop.f32.mrf.mxu0
        %3689 = vmatprep.mubr.f32.mxu0 0.0
        %3690 = vmatmul.mubr.f32.gmra.mxu0 %v3057
        %v3691 = vpop.f32.mrf.mxu0
        %v3692 = vadd.f32 0.0, %v3691
        %v3693 = vpop.f32.mrf.mxu0
        %3694 = vmatprep.mubr.f32.mxu0 0.0
        %3695 = vmatmul.mubr.f32.gmra.mxu0 %v3059
        %v3696 = vpop.f32.mrf.mxu0
        %v3697 = vadd.f32 0.0, %v3696
        %v3698 = vpop.f32.mrf.mxu0
        %3699 = vmatprep.mubr.f32.mxu0 0.0
        %3700 = vmatmul.mubr.f32.gmra.mxu0 %v3061
        %v3701 = vpop.f32.mrf.mxu0
        %v3702 = vadd.f32 0.0, %v3701
        %v3703 = vpop.f32.mrf.mxu0
        %3704 = vmatprep.mubr.f32.mxu0 0.0
        %3705 = vmatmul.mubr.f32.gmra.mxu0 %v3063
        %v3706 = vpop.f32.mrf.mxu0
        %v3707 = vadd.f32 0.0, %v3706
        %v3708 = vpop.f32.mrf.mxu0
        %3709 = vmatprep.mubr.f32.mxu0 0.0
        %3710 = vmatmul.mubr.f32.gmra.mxu0 %v3065
        %v3711 = vpop.f32.mrf.mxu0
        %v3712 = vadd.f32 0.0, %v3711
        %v3713 = vpop.f32.mrf.mxu0
        %3714 = vmatprep.mubr.f32.mxu0 0.0
        %3715 = vmatmul.mubr.f32.gmra.mxu0 %v3067
        %v3716 = vpop.f32.mrf.mxu0
        %v3717 = vadd.f32 0.0, %v3716
        %v3718 = vpop.f32.mrf.mxu0
        %3719 = vmatprep.mubr.f32.mxu0 0.0
        %3720 = vmatmul.mubr.f32.gmra.mxu0 %v3069
        %v3721 = vpop.f32.mrf.mxu0
        %v3722 = vadd.f32 0.0, %v3721
        %v3723 = vpop.f32.mrf.mxu0
        %3724 = vmatprep.mubr.f32.mxu0 0.0
        %3725 = vmatmul.mubr.f32.gmra.mxu0 %v3071
        %v3726 = vpop.f32.mrf.mxu0
        %v3727 = vadd.f32 0.0, %v3726
        %v3728 = vpop.f32.mrf.mxu0
        %3729 = vmatprep.mubr.f32.mxu0 0.0
        %3730 = vmatmul.mubr.f32.gmra.mxu0 %v3073
        %v3731 = vpop.f32.mrf.mxu0
        %v3732 = vadd.f32 0.0, %v3731
        %v3733 = vpop.f32.mrf.mxu0
        %3734 = vmatprep.mubr.f32.mxu0 0.0
        %3735 = vmatmul.mubr.f32.gmra.mxu0 %v3075
        %v3736 = vpop.f32.mrf.mxu0
        %v3737 = vadd.f32 0.0, %v3736
        %v3738 = vpop.f32.mrf.mxu0
        %3739 = vmatprep.mubr.f32.mxu0 0.0
        %3740 = vmatmul.mubr.f32.gmra.mxu0 %v3077
        %v3741 = vpop.f32.mrf.mxu0
        %v3742 = vadd.f32 0.0, %v3741
        %v3743 = vpop.f32.mrf.mxu0
        %3744 = vmatprep.mubr.f32.mxu0 0.0
        %3745 = vmatmul.mubr.f32.gmra.mxu0 %v3079
        %v3746 = vpop.f32.mrf.mxu0
        %v3747 = vadd.f32 0.0, %v3746
        %v3748 = vpop.f32.mrf.mxu0
        %3749 = vmatprep.mubr.f32.mxu0 0.0
        %3750 = vmatmul.mubr.f32.gmra.mxu0 %v3081
        %v3751 = vpop.f32.mrf.mxu0
        %v3752 = vadd.f32 0.0, %v3751
        %v3753 = vpop.f32.mrf.mxu0
        %3754 = vmatprep.mubr.f32.mxu0 0.0
        %3755 = vmatmul.mubr.f32.gmra.mxu0 %v3083
        %v3756 = vpop.f32.mrf.mxu0
        %v3757 = vadd.f32 0.0, %v3756
        %v3758 = vpop.f32.mrf.mxu0
        %3759 = vmatprep.mubr.f32.mxu0 0.0
        %3760 = vmatmul.mubr.f32.gmra.mxu0 %v3085
        %v3761 = vpop.f32.mrf.mxu0
        %v3762 = vadd.f32 0.0, %v3761
        %v3763 = vpop.f32.mrf.mxu0
        %3764 = vmatprep.mubr.f32.mxu0 0.0
        %3765 = vmatmul.mubr.f32.gmra.mxu0 %v3087
        %v3766 = vpop.f32.mrf.mxu0
        %v3767 = vadd.f32 0.0, %v3766
        %v3768 = vpop.f32.mrf.mxu0
        %3769 = vmatprep.mubr.f32.mxu0 0.0
        %3770 = vmatmul.mubr.f32.gmra.mxu0 %v3089
        %v3771 = vpop.f32.mrf.mxu0
        %v3772 = vadd.f32 0.0, %v3771
        %v3773 = vpop.f32.mrf.mxu0
        %3774 = vmatprep.mubr.f32.mxu0 0.0
        %3775 = vmatmul.mubr.f32.gmra.mxu0 %v3091
        %v3776 = vpop.f32.mrf.mxu0
        %v3777 = vadd.f32 0.0, %v3776
        %v3778 = vpop.f32.mrf.mxu0
        %3779 = vmatprep.mubr.f32.mxu0 0.0
        %3780 = vmatmul.mubr.f32.gmra.mxu0 %v3093
        %v3781 = vpop.f32.mrf.mxu0
        %v3782 = vadd.f32 0.0, %v3781
        %v3783 = vpop.f32.mrf.mxu0
        %3784 = vmatprep.mubr.f32.mxu0 0.0
        %3785 = vmatmul.mubr.f32.gmra.mxu0 %v3095
        %v3786 = vpop.f32.mrf.mxu0
        %v3787 = vadd.f32 0.0, %v3786
        %v3788 = vpop.f32.mrf.mxu0
        %3789 = vmatprep.mubr.f32.mxu0 0.0
        %3790 = vmatmul.mubr.f32.gmra.mxu0 %v3097
        %v3791 = vpop.f32.mrf.mxu0
        %v3792 = vadd.f32 0.0, %v3791
        %v3793 = vpop.f32.mrf.mxu0
        %3794 = vmatprep.mubr.f32.mxu0 0.0
        %3795 = vmatmul.mubr.f32.gmra.mxu0 %v3099
        %v3796 = vpop.f32.mrf.mxu0
        %v3797 = vadd.f32 0.0, %v3796
        %v3798 = vpop.f32.mrf.mxu0
        %3799 = vmatprep.mubr.f32.mxu0 0.0
        %3800 = vmatmul.mubr.f32.gmra.mxu0 %v3101
        %v3801 = vpop.f32.mrf.mxu0
        %v3802 = vadd.f32 0.0, %v3801
        %v3803 = vpop.f32.mrf.mxu0
        %3804 = vmatprep.mubr.f32.mxu0 0.0
        %3805 = vmatmul.mubr.f32.gmra.mxu0 %v3103
        %v3806 = vpop.f32.mrf.mxu0
        %v3807 = vadd.f32 0.0, %v3806
        %v3808 = vpop.f32.mrf.mxu0
        %3809 = vmatprep.mubr.f32.mxu0 0.0
        %3810 = vmatmul.mubr.f32.gmra.mxu0 %v3105
        %v3811 = vpop.f32.mrf.mxu0
        %v3812 = vadd.f32 0.0, %v3811
        %v3813 = vpop.f32.mrf.mxu0
        %3814 = vmatprep.mubr.f32.mxu0 0.0
        %3815 = vmatmul.mubr.f32.gmra.mxu0 %v3107
        %v3816 = vpop.f32.mrf.mxu0
        %v3817 = vadd.f32 0.0, %v3816
        %v3818 = vpop.f32.mrf.mxu0
        %3819 = vmatprep.mubr.f32.mxu0 0.0
        %3820 = vmatmul.mubr.f32.gmra.mxu0 %v3109
        %v3821 = vpop.f32.mrf.mxu0
        %v3822 = vadd.f32 0.0, %v3821
        %v3823 = vpop.f32.mrf.mxu0
        %3824 = vmatprep.mubr.f32.mxu0 0.0
        %3825 = vmatmul.mubr.f32.gmra.mxu0 %v3111
        %v3826 = vpop.f32.mrf.mxu0
        %v3827 = vadd.f32 0.0, %v3826
        %v3828 = vpop.f32.mrf.mxu0
        %3829 = vmatprep.mubr.f32.mxu0 0.0
        %3830 = vmatmul.mubr.f32.gmra.mxu0 %v3113
        %v3831 = vpop.f32.mrf.mxu0
        %v3832 = vadd.f32 0.0, %v3831
        %v3833 = vpop.f32.mrf.mxu0
        %3834 = vdwg.mxu0
        %v3835 = vrcp.pop %v3197
        %v3836 = vmul.f32 %v2859, %v3835
        %v3837 = vrcp.pop %v3202
        %v3838 = vmul.f32 %v2861, %v3837
        %v3839 = vrcp.pop %v3207
        %v3840 = vmul.f32 %v2863, %v3839
        %v3841 = vrcp.pop %v3212
        %v3842 = vmul.f32 %v2865, %v3841
        %v3843 = vrcp.pop %v3217
        %v3844 = vmul.f32 %v2867, %v3843
        %v3845 = vrcp.pop %v3222
        %v3846 = vmul.f32 %v2869, %v3845
        %v3847 = vrcp.pop %v3227
        %v3848 = vmul.f32 %v2871, %v3847
        %v3849 = vrcp.pop %v3232
        %v3850 = vmul.f32 %v2873, %v3849
        %v3851 = vrcp.pop %v3237
        %v3852 = vmul.f32 %v2875, %v3851
        %v3853 = vrcp.pop %v3242
        %v3854 = vmul.f32 %v2877, %v3853
        %v3855 = vrcp.pop %v3247
        %v3856 = vmul.f32 %v2879, %v3855
        %v3857 = vrcp.pop %v3252
        %v3858 = vmul.f32 %v2881, %v3857
        %v3859 = vrcp.pop %v3257
        %v3860 = vmul.f32 %v2883, %v3859
        %v3861 = vrcp.pop %v3262
        %v3862 = vmul.f32 %v2885, %v3861
        %v3863 = vrcp.pop %v3267
        %v3864 = vmul.f32 %v2887, %v3863
        %v3865 = vrcp.pop %v3272
        %v3866 = vmul.f32 %v2889, %v3865
        %v3867 = vrcp.pop %v3277
        %v3868 = vmul.f32 %v2891, %v3867
        %v3869 = vrcp.pop %v3282
        %v3870 = vmul.f32 %v2893, %v3869
        %v3871 = vrcp.pop %v3287
        %v3872 = vmul.f32 %v2895, %v3871
        %v3873 = vrcp.pop %v3292
        %v3874 = vmul.f32 %v2897, %v3873
        %v3875 = vrcp.pop %v3297
        %v3876 = vmul.f32 %v2899, %v3875
        %v3877 = vrcp.pop %v3302
        %v3878 = vmul.f32 %v2901, %v3877
        %v3879 = vrcp.pop %v3307
        %v3880 = vmul.f32 %v2903, %v3879
        %v3881 = vrcp.pop %v3312
        %v3882 = vmul.f32 %v2905, %v3881
        %v3883 = vrcp.pop %v3317
        %v3884 = vmul.f32 %v2907, %v3883
        %v3885 = vrcp.pop %v3322
        %v3886 = vmul.f32 %v2909, %v3885
        %v3887 = vrcp.pop %v3327
        %v3888 = vmul.f32 %v2911, %v3887
        %v3889 = vrcp.pop %v3332
        %v3890 = vmul.f32 %v2913, %v3889
        %v3891 = vrcp.pop %v3337
        %v3892 = vmul.f32 %v2915, %v3891
        %v3893 = vrcp.pop %v3342
        %v3894 = vmul.f32 %v2917, %v3893
        %v3895 = vrcp.pop %v3347
        %v3896 = vmul.f32 %v2919, %v3895
        %v3897 = vrcp.pop %v3352
        %v3898 = vmul.f32 %v2921, %v3897
        %v3899 = vrcp.pop %v3357
        %v3900 = vmul.f32 %v2923, %v3899
        %v3901 = vrcp.pop %v3362
        %v3902 = vmul.f32 %v2925, %v3901
        %v3903 = vrcp.pop %v3367
        %v3904 = vmul.f32 %v2927, %v3903
        %v3905 = vrcp.pop %v3372
        %v3906 = vmul.f32 %v2929, %v3905
        %v3907 = vrcp.pop %v3377
        %v3908 = vmul.f32 %v2931, %v3907
        %v3909 = vrcp.pop %v3382
        %v3910 = vmul.f32 %v2933, %v3909
        %v3911 = vrcp.pop %v3387
        %v3912 = vmul.f32 %v2935, %v3911
        %v3913 = vrcp.pop %v3392
        %v3914 = vmul.f32 %v2937, %v3913
        %v3915 = vrcp.pop %v3397
        %v3916 = vmul.f32 %v2939, %v3915
        %v3917 = vrcp.pop %v3402
        %v3918 = vmul.f32 %v2941, %v3917
        %v3919 = vrcp.pop %v3407
        %v3920 = vmul.f32 %v2943, %v3919
        %v3921 = vrcp.pop %v3412
        %v3922 = vmul.f32 %v2945, %v3921
        %v3923 = vrcp.pop %v3417
        %v3924 = vmul.f32 %v2947, %v3923
        %v3925 = vrcp.pop %v3422
        %v3926 = vmul.f32 %v2949, %v3925
        %v3927 = vrcp.pop %v3427
        %v3928 = vmul.f32 %v2951, %v3927
        %v3929 = vrcp.pop %v3432
        %v3930 = vmul.f32 %v2953, %v3929
        %v3931 = vrcp.pop %v3437
        %v3932 = vmul.f32 %v2955, %v3931
        %v3933 = vrcp.pop %v3442
        %v3934 = vmul.f32 %v2957, %v3933
        %v3935 = vrcp.pop %v3447
        %v3936 = vmul.f32 %v2959, %v3935
        %v3937 = vrcp.pop %v3452
        %v3938 = vmul.f32 %v2961, %v3937
        %v3939 = vrcp.pop %v3457
        %v3940 = vmul.f32 %v2963, %v3939
        %v3941 = vrcp.pop %v3462
        %v3942 = vmul.f32 %v2965, %v3941
        %v3943 = vrcp.pop %v3467
        %v3944 = vmul.f32 %v2967, %v3943
        %v3945 = vrcp.pop %v3472
        %v3946 = vmul.f32 %v2969, %v3945
        %v3947 = vrcp.pop %v3477
        %v3948 = vmul.f32 %v2971, %v3947
        %v3949 = vrcp.pop %v3482
        %v3950 = vmul.f32 %v2973, %v3949
        %v3951 = vrcp.pop %v3487
        %v3952 = vmul.f32 %v2975, %v3951
        %v3953 = vrcp.pop %v3492
        %v3954 = vmul.f32 %v2977, %v3953
        %v3955 = vrcp.pop %v3497
        %v3956 = vmul.f32 %v2979, %v3955
        %v3957 = vrcp.pop %v3502
        %v3958 = vmul.f32 %v2981, %v3957
        %v3959 = vrcp.pop %v3507
        %v3960 = vmul.f32 %v2983, %v3959
        %v3961 = vrcp.pop %v3512
        %v3962 = vmul.f32 %v2985, %v3961
        %v3963 = vrcp.pop %v3517
        %v3964 = vmul.f32 %v2987, %v3963
        %v3965 = vrcp.pop %v3522
        %v3966 = vmul.f32 %v2989, %v3965
        %v3967 = vrcp.pop %v3527
        %v3968 = vmul.f32 %v2991, %v3967
        %v3969 = vrcp.pop %v3532
        %v3970 = vmul.f32 %v2993, %v3969
        %v3971 = vrcp.pop %v3537
        %v3972 = vmul.f32 %v2995, %v3971
        %v3973 = vrcp.pop %v3542
        %v3974 = vmul.f32 %v2997, %v3973
        %v3975 = vrcp.pop %v3547
        %v3976 = vmul.f32 %v2999, %v3975
        %v3977 = vrcp.pop %v3552
        %v3978 = vmul.f32 %v3001, %v3977
        %v3979 = vrcp.pop %v3557
        %v3980 = vmul.f32 %v3003, %v3979
        %v3981 = vrcp.pop %v3562
        %v3982 = vmul.f32 %v3005, %v3981
        %v3983 = vrcp.pop %v3567
        %v3984 = vmul.f32 %v3007, %v3983
        %v3985 = vrcp.pop %v3572
        %v3986 = vmul.f32 %v3009, %v3985
        %v3987 = vrcp.pop %v3577
        %v3988 = vmul.f32 %v3011, %v3987
        %v3989 = vrcp.pop %v3582
        %v3990 = vmul.f32 %v3013, %v3989
        %v3991 = vrcp.pop %v3587
        %v3992 = vmul.f32 %v3015, %v3991
        %v3993 = vrcp.pop %v3592
        %v3994 = vmul.f32 %v3017, %v3993
        %v3995 = vrcp.pop %v3597
        %v3996 = vmul.f32 %v3019, %v3995
        %v3997 = vrcp.pop %v3602
        %v3998 = vmul.f32 %v3021, %v3997
        %v3999 = vrcp.pop %v3607
        %v4000 = vmul.f32 %v3023, %v3999
        %v4001 = vrcp.pop %v3612
        %v4002 = vmul.f32 %v3025, %v4001
        %v4003 = vrcp.pop %v3617
        %v4004 = vmul.f32 %v3027, %v4003
        %v4005 = vrcp.pop %v3622
        %v4006 = vmul.f32 %v3029, %v4005
        %v4007 = vrcp.pop %v3627
        %v4008 = vmul.f32 %v3031, %v4007
        %v4009 = vrcp.pop %v3632
        %v4010 = vmul.f32 %v3033, %v4009
        %v4011 = vrcp.pop %v3637
        %v4012 = vmul.f32 %v3035, %v4011
        %v4013 = vrcp.pop %v3642
        %v4014 = vmul.f32 %v3037, %v4013
        %v4015 = vrcp.pop %v3647
        %v4016 = vmul.f32 %v3039, %v4015
        %v4017 = vrcp.pop %v3652
        %v4018 = vmul.f32 %v3041, %v4017
        %v4019 = vrcp.pop %v3657
        %v4020 = vmul.f32 %v3043, %v4019
        %v4021 = vrcp.pop %v3662
        %v4022 = vmul.f32 %v3045, %v4021
        %v4023 = vrcp.pop %v3667
        %v4024 = vmul.f32 %v3047, %v4023
        %v4025 = vrcp.pop %v3672
        %v4026 = vmul.f32 %v3049, %v4025
        %v4027 = vrcp.pop %v3677
        %v4028 = vmul.f32 %v3051, %v4027
        %v4029 = vrcp.pop %v3682
        %v4030 = vmul.f32 %v3053, %v4029
        %v4031 = vrcp.pop %v3687
        %v4032 = vmul.f32 %v3055, %v4031
        %v4033 = vrcp.pop %v3692
        %v4034 = vmul.f32 %v3057, %v4033
        %v4035 = vrcp.pop %v3697
        %v4036 = vmul.f32 %v3059, %v4035
        %v4037 = vrcp.pop %v3702
        %v4038 = vmul.f32 %v3061, %v4037
        %v4039 = vrcp.pop %v3707
        %v4040 = vmul.f32 %v3063, %v4039
        %v4041 = vrcp.pop %v3712
        %v4042 = vmul.f32 %v3065, %v4041
        %v4043 = vrcp.pop %v3717
        %v4044 = vmul.f32 %v3067, %v4043
        %v4045 = vrcp.pop %v3722
        %v4046 = vmul.f32 %v3069, %v4045
        %v4047 = vrcp.pop %v3727
        %v4048 = vmul.f32 %v3071, %v4047
        %v4049 = vrcp.pop %v3732
        %v4050 = vmul.f32 %v3073, %v4049
        %v4051 = vrcp.pop %v3737
        %v4052 = vmul.f32 %v3075, %v4051
        %v4053 = vrcp.pop %v3742
        %v4054 = vmul.f32 %v3077, %v4053
        %v4055 = vrcp.pop %v3747
        %v4056 = vmul.f32 %v3079, %v4055
        %v4057 = vrcp.pop %v3752
        %v4058 = vmul.f32 %v3081, %v4057
        %v4059 = vrcp.pop %v3757
        %v4060 = vmul.f32 %v3083, %v4059
        %v4061 = vrcp.pop %v3762
        %v4062 = vmul.f32 %v3085, %v4061
        %v4063 = vrcp.pop %v3767
        %v4064 = vmul.f32 %v3087, %v4063
        %v4065 = vrcp.pop %v3772
        %v4066 = vmul.f32 %v3089, %v4065
        %v4067 = vrcp.pop %v3777
        %v4068 = vmul.f32 %v3091, %v4067
        %v4069 = vrcp.pop %v3782
        %v4070 = vmul.f32 %v3093, %v4069
        %v4071 = vrcp.pop %v3787
        %v4072 = vmul.f32 %v3095, %v4071
        %v4073 = vrcp.pop %v3792
        %v4074 = vmul.f32 %v3097, %v4073
        %v4075 = vrcp.pop %v3797
        %v4076 = vmul.f32 %v3099, %v4075
        %v4077 = vrcp.pop %v3802
        %v4078 = vmul.f32 %v3101, %v4077
        %v4079 = vrcp.pop %v3807
        %v4080 = vmul.f32 %v3103, %v4079
        %v4081 = vrcp.pop %v3812
        %v4082 = vmul.f32 %v3105, %v4081
        %v4083 = vrcp.pop %v3817
        %v4084 = vmul.f32 %v3107, %v4083
        %v4085 = vrcp.pop %v3822
        %v4086 = vmul.f32 %v3109, %v4085
        %v4087 = vrcp.pop %v3827
        %v4088 = vmul.f32 %v3111, %v4087
        %v4089 = vrcp.pop %v3832
        %v4090 = vmul.f32 %v3113, %v4089
        %v4091 = vld [vmem:[%s384] sm:$0xff]
        %v4092 = vld [vmem:[%s384 + $0x8] sm:$0xff]
        %v4093 = vld [vmem:[%s384 + $0x10] sm:$0xff]
        %v4094 = vld [vmem:[%s384 + $0x18] sm:$0xff]
        %v4095 = vld [vmem:[%s384 + $0x20] sm:$0xff]
        %v4096 = vld [vmem:[%s384 + $0x28] sm:$0xff]
        %v4097 = vld [vmem:[%s384 + $0x30] sm:$0xff]
        %v4098 = vld [vmem:[%s384 + $0x38] sm:$0xff]
        %v4099 = vld [vmem:[%s384 + $0x40] sm:$0xff]
        %v4100 = vld [vmem:[%s384 + $0x48] sm:$0xff]
        %v4101 = vld [vmem:[%s384 + $0x50] sm:$0xff]
        %v4102 = vld [vmem:[%s384 + $0x58] sm:$0xff]
        %v4103 = vld [vmem:[%s384 + $0x60] sm:$0xff]
        %v4104 = vld [vmem:[%s384 + $0x68] sm:$0xff]
        %v4105 = vld [vmem:[%s384 + $0x70] sm:$0xff]
        %v4106 = vld [vmem:[%s384 + $0x78] sm:$0xff]
        %v4107 = vld [vmem:[%s4] sm:$0x1]
        %v4109 = vlaneseq
        %v4110 = vshrl.u32 %v4109, 7
        %v4111 = vsub.s32 0, %v4110
        %v4112 = vrot.slane %v4107, %v4111
        %4114 = vmatprep.subr.mxu0 0.0
        %4115 = vmatpush1.msra.mxu0 %v4106
        %4116 = vmatprep.subr.mxu0 0.0
        %4117 = vmatpush1.msra.mxu0 %v4105
        %4118 = vmatprep.subr.mxu0 0.0
        %4119 = vmatpush1.msra.mxu0 %v4104
        %4120 = vmatprep.subr.mxu0 0.0
        %4121 = vmatpush1.msra.mxu0 %v4103
        %4122 = vmatprep.subr.mxu0 0.0
        %4123 = vmatpush1.msra.mxu0 %v4102
        %4124 = vmatprep.subr.mxu0 0.0
        %4125 = vmatpush1.msra.mxu0 %v4101
        %4126 = vmatprep.subr.mxu0 0.0
        %4127 = vmatpush1.msra.mxu0 %v4100
        %4128 = vmatprep.subr.mxu0 0.0
        %4129 = vmatpush1.msra.mxu0 %v4099
        %4130 = vmatprep.subr.mxu0 0.0
        %4131 = vmatpush1.msra.mxu0 %v4098
        %4132 = vmatprep.subr.mxu0 0.0
        %4133 = vmatpush1.msra.mxu0 %v4097
        %4134 = vmatprep.subr.mxu0 0.0
        %4135 = vmatpush1.msra.mxu0 %v4096
        %4136 = vmatprep.subr.mxu0 0.0
        %4137 = vmatpush1.msra.mxu0 %v4095
        %4138 = vmatprep.subr.mxu0 0.0
        %4139 = vmatpush1.msra.mxu0 %v4094
        %4140 = vmatprep.subr.mxu0 0.0
        %4141 = vmatpush1.msra.mxu0 %v4093
        %4142 = vmatprep.subr.mxu0 0.0
        %4143 = vmatpush1.msra.mxu0 %v4092
        %4144 = vmatprep.subr.mxu0 0.0
        %4145 = vmatpush1.msra.mxu0 %v4091
        %4146 = vmatprep.subr.mxu0 0.0
        %4147 = vmatpush2.msra.mxu0 0.0
        %4148 = vmatprep.subr.mxu0 0.0
        %4149 = vmatpush2.msra.mxu0 0.0
        %4150 = vmatprep.subr.mxu0 0.0
        %4151 = vmatpush2.msra.mxu0 0.0
        %4152 = vmatprep.subr.mxu0 0.0
        %4153 = vmatpush2.msra.mxu0 0.0
        %4154 = vmatprep.subr.mxu0 0.0
        %4155 = vmatpush2.msra.mxu0 0.0
        %4156 = vmatprep.subr.mxu0 0.0
        %4157 = vmatpush2.msra.mxu0 0.0
        %4158 = vmatprep.subr.mxu0 0.0
        %4159 = vmatpush2.msra.mxu0 0.0
        %4160 = vmatprep.subr.mxu0 0.0
        %4161 = vmatpush2.msra.mxu0 0.0
        %4162 = vmatprep.subr.mxu0 0.0
        %4163 = vmatpush2.msra.mxu0 0.0
        %4164 = vmatprep.subr.mxu0 0.0
        %4165 = vmatpush2.msra.mxu0 0.0
        %4166 = vmatprep.subr.mxu0 0.0
        %4167 = vmatpush2.msra.mxu0 0.0
        %4168 = vmatprep.subr.mxu0 0.0
        %4169 = vmatpush2.msra.mxu0 0.0
        %4170 = vmatprep.subr.mxu0 0.0
        %4171 = vmatpush2.msra.mxu0 0.0
        %4172 = vmatprep.subr.mxu0 0.0
        %4173 = vmatpush2.msra.mxu0 0.0
        %4174 = vmatprep.subr.mxu0 0.0
        %4175 = vmatpush2.msra.mxu0 0.0
        %4176 = vmatprep.subr.mxu0 0.0
        %4177 = vmatpush2.msra.mxu0 0.0
        %4178 = vmatprep.mubr.f32.mxu0 0.0
        %4179 = vmatmul.mubr.f32.gmra.mxu0 %v3836
        %v4180 = vpop.f32.mrf.mxu0
        %v4181 = vadd.f32 %v4112, %v4180
        %v4182 = vpop.f32.mrf.mxu0
        %4183 = vmatprep.mubr.f32.mxu0 0.0
        %4184 = vmatmul.mubr.f32.gmra.mxu0 %v3838
        %v4185 = vpop.f32.mrf.mxu0
        %v4186 = vadd.f32 %v4112, %v4185
        %v4187 = vpop.f32.mrf.mxu0
        %4188 = vmatprep.mubr.f32.mxu0 0.0
        %4189 = vmatmul.mubr.f32.gmra.mxu0 %v3840
        %v4190 = vpop.f32.mrf.mxu0
        %v4191 = vadd.f32 %v4112, %v4190
        %v4192 = vpop.f32.mrf.mxu0
        %4193 = vmatprep.mubr.f32.mxu0 0.0
        %4194 = vmatmul.mubr.f32.gmra.mxu0 %v3842
        %v4195 = vpop.f32.mrf.mxu0
        %v4196 = vadd.f32 %v4112, %v4195
        %v4197 = vpop.f32.mrf.mxu0
        %4198 = vmatprep.mubr.f32.mxu0 0.0
        %4199 = vmatmul.mubr.f32.gmra.mxu0 %v3844
        %v4200 = vpop.f32.mrf.mxu0
        %v4201 = vadd.f32 %v4112, %v4200
        %v4202 = vpop.f32.mrf.mxu0
        %4203 = vmatprep.mubr.f32.mxu0 0.0
        %4204 = vmatmul.mubr.f32.gmra.mxu0 %v3846
        %v4205 = vpop.f32.mrf.mxu0
        %v4206 = vadd.f32 %v4112, %v4205
        %v4207 = vpop.f32.mrf.mxu0
        %4208 = vmatprep.mubr.f32.mxu0 0.0
        %4209 = vmatmul.mubr.f32.gmra.mxu0 %v3848
        %v4210 = vpop.f32.mrf.mxu0
        %v4211 = vadd.f32 %v4112, %v4210
        %v4212 = vpop.f32.mrf.mxu0
        %4213 = vmatprep.mubr.f32.mxu0 0.0
        %4214 = vmatmul.mubr.f32.gmra.mxu0 %v3850
        %v4215 = vpop.f32.mrf.mxu0
        %v4216 = vadd.f32 %v4112, %v4215
        %v4217 = vpop.f32.mrf.mxu0
        %4218 = vmatprep.mubr.f32.mxu0 0.0
        %4219 = vmatmul.mubr.f32.gmra.mxu0 %v3852
        %v4220 = vpop.f32.mrf.mxu0
        %v4221 = vadd.f32 %v4112, %v4220
        %v4222 = vpop.f32.mrf.mxu0
        %4223 = vmatprep.mubr.f32.mxu0 0.0
        %4224 = vmatmul.mubr.f32.gmra.mxu0 %v3854
        %v4225 = vpop.f32.mrf.mxu0
        %v4226 = vadd.f32 %v4112, %v4225
        %v4227 = vpop.f32.mrf.mxu0
        %4228 = vmatprep.mubr.f32.mxu0 0.0
        %4229 = vmatmul.mubr.f32.gmra.mxu0 %v3856
        %v4230 = vpop.f32.mrf.mxu0
        %v4231 = vadd.f32 %v4112, %v4230
        %v4232 = vpop.f32.mrf.mxu0
        %4233 = vmatprep.mubr.f32.mxu0 0.0
        %4234 = vmatmul.mubr.f32.gmra.mxu0 %v3858
        %v4235 = vpop.f32.mrf.mxu0
        %v4236 = vadd.f32 %v4112, %v4235
        %v4237 = vpop.f32.mrf.mxu0
        %4238 = vmatprep.mubr.f32.mxu0 0.0
        %4239 = vmatmul.mubr.f32.gmra.mxu0 %v3860
        %v4240 = vpop.f32.mrf.mxu0
        %v4241 = vadd.f32 %v4112, %v4240
        %v4242 = vpop.f32.mrf.mxu0
        %4243 = vmatprep.mubr.f32.mxu0 0.0
        %4244 = vmatmul.mubr.f32.gmra.mxu0 %v3862
        %v4245 = vpop.f32.mrf.mxu0
        %v4246 = vadd.f32 %v4112, %v4245
        %v4247 = vpop.f32.mrf.mxu0
        %4248 = vmatprep.mubr.f32.mxu0 0.0
        %4249 = vmatmul.mubr.f32.gmra.mxu0 %v3864
        %v4250 = vpop.f32.mrf.mxu0
        %v4251 = vadd.f32 %v4112, %v4250
        %v4252 = vpop.f32.mrf.mxu0
        %4253 = vmatprep.mubr.f32.mxu0 0.0
        %4254 = vmatmul.mubr.f32.gmra.mxu0 %v3866
        %v4255 = vpop.f32.mrf.mxu0
        %v4256 = vadd.f32 %v4112, %v4255
        %v4257 = vpop.f32.mrf.mxu0
        %4258 = vmatprep.mubr.f32.mxu0 0.0
        %4259 = vmatmul.mubr.f32.gmra.mxu0 %v3868
        %v4260 = vpop.f32.mrf.mxu0
        %v4261 = vadd.f32 %v4112, %v4260
        %v4262 = vpop.f32.mrf.mxu0
        %4263 = vmatprep.mubr.f32.mxu0 0.0
        %4264 = vmatmul.mubr.f32.gmra.mxu0 %v3870
        %v4265 = vpop.f32.mrf.mxu0
        %v4266 = vadd.f32 %v4112, %v4265
        %v4267 = vpop.f32.mrf.mxu0
        %4268 = vmatprep.mubr.f32.mxu0 0.0
        %4269 = vmatmul.mubr.f32.gmra.mxu0 %v3872
        %v4270 = vpop.f32.mrf.mxu0
        %v4271 = vadd.f32 %v4112, %v4270
        %v4272 = vpop.f32.mrf.mxu0
        %4273 = vmatprep.mubr.f32.mxu0 0.0
        %4274 = vmatmul.mubr.f32.gmra.mxu0 %v3874
        %v4275 = vpop.f32.mrf.mxu0
        %v4276 = vadd.f32 %v4112, %v4275
        %v4277 = vpop.f32.mrf.mxu0
        %4278 = vmatprep.mubr.f32.mxu0 0.0
        %4279 = vmatmul.mubr.f32.gmra.mxu0 %v3876
        %v4280 = vpop.f32.mrf.mxu0
        %v4281 = vadd.f32 %v4112, %v4280
        %v4282 = vpop.f32.mrf.mxu0
        %4283 = vmatprep.mubr.f32.mxu0 0.0
        %4284 = vmatmul.mubr.f32.gmra.mxu0 %v3878
        %v4285 = vpop.f32.mrf.mxu0
        %v4286 = vadd.f32 %v4112, %v4285
        %v4287 = vpop.f32.mrf.mxu0
        %4288 = vmatprep.mubr.f32.mxu0 0.0
        %4289 = vmatmul.mubr.f32.gmra.mxu0 %v3880
        %v4290 = vpop.f32.mrf.mxu0
        %v4291 = vadd.f32 %v4112, %v4290
        %v4292 = vpop.f32.mrf.mxu0
        %4293 = vmatprep.mubr.f32.mxu0 0.0
        %4294 = vmatmul.mubr.f32.gmra.mxu0 %v3882
        %v4295 = vpop.f32.mrf.mxu0
        %v4296 = vadd.f32 %v4112, %v4295
        %v4297 = vpop.f32.mrf.mxu0
        %4298 = vmatprep.mubr.f32.mxu0 0.0
        %4299 = vmatmul.mubr.f32.gmra.mxu0 %v3884
        %v4300 = vpop.f32.mrf.mxu0
        %v4301 = vadd.f32 %v4112, %v4300
        %v4302 = vpop.f32.mrf.mxu0
        %4303 = vmatprep.mubr.f32.mxu0 0.0
        %4304 = vmatmul.mubr.f32.gmra.mxu0 %v3886
        %v4305 = vpop.f32.mrf.mxu0
        %v4306 = vadd.f32 %v4112, %v4305
        %v4307 = vpop.f32.mrf.mxu0
        %4308 = vmatprep.mubr.f32.mxu0 0.0
        %4309 = vmatmul.mubr.f32.gmra.mxu0 %v3888
        %v4310 = vpop.f32.mrf.mxu0
        %v4311 = vadd.f32 %v4112, %v4310
        %v4312 = vpop.f32.mrf.mxu0
        %4313 = vmatprep.mubr.f32.mxu0 0.0
        %4314 = vmatmul.mubr.f32.gmra.mxu0 %v3890
        %v4315 = vpop.f32.mrf.mxu0
        %v4316 = vadd.f32 %v4112, %v4315
        %v4317 = vpop.f32.mrf.mxu0
        %4318 = vmatprep.mubr.f32.mxu0 0.0
        %4319 = vmatmul.mubr.f32.gmra.mxu0 %v3892
        %v4320 = vpop.f32.mrf.mxu0
        %v4321 = vadd.f32 %v4112, %v4320
        %v4322 = vpop.f32.mrf.mxu0
        %4323 = vmatprep.mubr.f32.mxu0 0.0
        %4324 = vmatmul.mubr.f32.gmra.mxu0 %v3894
        %v4325 = vpop.f32.mrf.mxu0
        %v4326 = vadd.f32 %v4112, %v4325
        %v4327 = vpop.f32.mrf.mxu0
        %4328 = vmatprep.mubr.f32.mxu0 0.0
        %4329 = vmatmul.mubr.f32.gmra.mxu0 %v3896
        %v4330 = vpop.f32.mrf.mxu0
        %v4331 = vadd.f32 %v4112, %v4330
        %v4332 = vpop.f32.mrf.mxu0
        %4333 = vmatprep.mubr.f32.mxu0 0.0
        %4334 = vmatmul.mubr.f32.gmra.mxu0 %v3898
        %v4335 = vpop.f32.mrf.mxu0
        %v4336 = vadd.f32 %v4112, %v4335
        %v4337 = vpop.f32.mrf.mxu0
        %4338 = vmatprep.mubr.f32.mxu0 0.0
        %4339 = vmatmul.mubr.f32.gmra.mxu0 %v3900
        %v4340 = vpop.f32.mrf.mxu0
        %v4341 = vadd.f32 %v4112, %v4340
        %v4342 = vpop.f32.mrf.mxu0
        %4343 = vmatprep.mubr.f32.mxu0 0.0
        %4344 = vmatmul.mubr.f32.gmra.mxu0 %v3902
        %v4345 = vpop.f32.mrf.mxu0
        %v4346 = vadd.f32 %v4112, %v4345
        %v4347 = vpop.f32.mrf.mxu0
        %4348 = vmatprep.mubr.f32.mxu0 0.0
        %4349 = vmatmul.mubr.f32.gmra.mxu0 %v3904
        %v4350 = vpop.f32.mrf.mxu0
        %v4351 = vadd.f32 %v4112, %v4350
        %v4352 = vpop.f32.mrf.mxu0
        %4353 = vmatprep.mubr.f32.mxu0 0.0
        %4354 = vmatmul.mubr.f32.gmra.mxu0 %v3906
        %v4355 = vpop.f32.mrf.mxu0
        %v4356 = vadd.f32 %v4112, %v4355
        %v4357 = vpop.f32.mrf.mxu0
        %4358 = vmatprep.mubr.f32.mxu0 0.0
        %4359 = vmatmul.mubr.f32.gmra.mxu0 %v3908
        %v4360 = vpop.f32.mrf.mxu0
        %v4361 = vadd.f32 %v4112, %v4360
        %v4362 = vpop.f32.mrf.mxu0
        %4363 = vmatprep.mubr.f32.mxu0 0.0
        %4364 = vmatmul.mubr.f32.gmra.mxu0 %v3910
        %v4365 = vpop.f32.mrf.mxu0
        %v4366 = vadd.f32 %v4112, %v4365
        %v4367 = vpop.f32.mrf.mxu0
        %4368 = vmatprep.mubr.f32.mxu0 0.0
        %4369 = vmatmul.mubr.f32.gmra.mxu0 %v3912
        %v4370 = vpop.f32.mrf.mxu0
        %v4371 = vadd.f32 %v4112, %v4370
        %v4372 = vpop.f32.mrf.mxu0
        %4373 = vmatprep.mubr.f32.mxu0 0.0
        %4374 = vmatmul.mubr.f32.gmra.mxu0 %v3914
        %v4375 = vpop.f32.mrf.mxu0
        %v4376 = vadd.f32 %v4112, %v4375
        %v4377 = vpop.f32.mrf.mxu0
        %4378 = vmatprep.mubr.f32.mxu0 0.0
        %4379 = vmatmul.mubr.f32.gmra.mxu0 %v3916
        %v4380 = vpop.f32.mrf.mxu0
        %v4381 = vadd.f32 %v4112, %v4380
        %v4382 = vpop.f32.mrf.mxu0
        %4383 = vmatprep.mubr.f32.mxu0 0.0
        %4384 = vmatmul.mubr.f32.gmra.mxu0 %v3918
        %v4385 = vpop.f32.mrf.mxu0
        %v4386 = vadd.f32 %v4112, %v4385
        %v4387 = vpop.f32.mrf.mxu0
        %4388 = vmatprep.mubr.f32.mxu0 0.0
        %4389 = vmatmul.mubr.f32.gmra.mxu0 %v3920
        %v4390 = vpop.f32.mrf.mxu0
        %v4391 = vadd.f32 %v4112, %v4390
        %v4392 = vpop.f32.mrf.mxu0
        %4393 = vmatprep.mubr.f32.mxu0 0.0
        %4394 = vmatmul.mubr.f32.gmra.mxu0 %v3922
        %v4395 = vpop.f32.mrf.mxu0
        %v4396 = vadd.f32 %v4112, %v4395
        %v4397 = vpop.f32.mrf.mxu0
        %4398 = vmatprep.mubr.f32.mxu0 0.0
        %4399 = vmatmul.mubr.f32.gmra.mxu0 %v3924
        %v4400 = vpop.f32.mrf.mxu0
        %v4401 = vadd.f32 %v4112, %v4400
        %v4402 = vpop.f32.mrf.mxu0
        %4403 = vmatprep.mubr.f32.mxu0 0.0
        %4404 = vmatmul.mubr.f32.gmra.mxu0 %v3926
        %v4405 = vpop.f32.mrf.mxu0
        %v4406 = vadd.f32 %v4112, %v4405
        %v4407 = vpop.f32.mrf.mxu0
        %4408 = vmatprep.mubr.f32.mxu0 0.0
        %4409 = vmatmul.mubr.f32.gmra.mxu0 %v3928
        %v4410 = vpop.f32.mrf.mxu0
        %v4411 = vadd.f32 %v4112, %v4410
        %v4412 = vpop.f32.mrf.mxu0
        %4413 = vmatprep.mubr.f32.mxu0 0.0
        %4414 = vmatmul.mubr.f32.gmra.mxu0 %v3930
        %v4415 = vpop.f32.mrf.mxu0
        %v4416 = vadd.f32 %v4112, %v4415
        %v4417 = vpop.f32.mrf.mxu0
        %4418 = vmatprep.mubr.f32.mxu0 0.0
        %4419 = vmatmul.mubr.f32.gmra.mxu0 %v3932
        %v4420 = vpop.f32.mrf.mxu0
        %v4421 = vadd.f32 %v4112, %v4420
        %v4422 = vpop.f32.mrf.mxu0
        %4423 = vmatprep.mubr.f32.mxu0 0.0
        %4424 = vmatmul.mubr.f32.gmra.mxu0 %v3934
        %v4425 = vpop.f32.mrf.mxu0
        %v4426 = vadd.f32 %v4112, %v4425
        %v4427 = vpop.f32.mrf.mxu0
        %4428 = vmatprep.mubr.f32.mxu0 0.0
        %4429 = vmatmul.mubr.f32.gmra.mxu0 %v3936
        %v4430 = vpop.f32.mrf.mxu0
        %v4431 = vadd.f32 %v4112, %v4430
        %v4432 = vpop.f32.mrf.mxu0
        %4433 = vmatprep.mubr.f32.mxu0 0.0
        %4434 = vmatmul.mubr.f32.gmra.mxu0 %v3938
        %v4435 = vpop.f32.mrf.mxu0
        %v4436 = vadd.f32 %v4112, %v4435
        %v4437 = vpop.f32.mrf.mxu0
        %4438 = vmatprep.mubr.f32.mxu0 0.0
        %4439 = vmatmul.mubr.f32.gmra.mxu0 %v3940
        %v4440 = vpop.f32.mrf.mxu0
        %v4441 = vadd.f32 %v4112, %v4440
        %v4442 = vpop.f32.mrf.mxu0
        %4443 = vmatprep.mubr.f32.mxu0 0.0
        %4444 = vmatmul.mubr.f32.gmra.mxu0 %v3942
        %v4445 = vpop.f32.mrf.mxu0
        %v4446 = vadd.f32 %v4112, %v4445
        %v4447 = vpop.f32.mrf.mxu0
        %4448 = vmatprep.mubr.f32.mxu0 0.0
        %4449 = vmatmul.mubr.f32.gmra.mxu0 %v3944
        %v4450 = vpop.f32.mrf.mxu0
        %v4451 = vadd.f32 %v4112, %v4450
        %v4452 = vpop.f32.mrf.mxu0
        %4453 = vmatprep.mubr.f32.mxu0 0.0
        %4454 = vmatmul.mubr.f32.gmra.mxu0 %v3946
        %v4455 = vpop.f32.mrf.mxu0
        %v4456 = vadd.f32 %v4112, %v4455
        %v4457 = vpop.f32.mrf.mxu0
        %4458 = vmatprep.mubr.f32.mxu0 0.0
        %4459 = vmatmul.mubr.f32.gmra.mxu0 %v3948
        %v4460 = vpop.f32.mrf.mxu0
        %v4461 = vadd.f32 %v4112, %v4460
        %v4462 = vpop.f32.mrf.mxu0
        %4463 = vmatprep.mubr.f32.mxu0 0.0
        %4464 = vmatmul.mubr.f32.gmra.mxu0 %v3950
        %v4465 = vpop.f32.mrf.mxu0
        %v4466 = vadd.f32 %v4112, %v4465
        %v4467 = vpop.f32.mrf.mxu0
        %4468 = vmatprep.mubr.f32.mxu0 0.0
        %4469 = vmatmul.mubr.f32.gmra.mxu0 %v3952
        %v4470 = vpop.f32.mrf.mxu0
        %v4471 = vadd.f32 %v4112, %v4470
        %v4472 = vpop.f32.mrf.mxu0
        %4473 = vmatprep.mubr.f32.mxu0 0.0
        %4474 = vmatmul.mubr.f32.gmra.mxu0 %v3954
        %v4475 = vpop.f32.mrf.mxu0
        %v4476 = vadd.f32 %v4112, %v4475
        %v4477 = vpop.f32.mrf.mxu0
        %4478 = vmatprep.mubr.f32.mxu0 0.0
        %4479 = vmatmul.mubr.f32.gmra.mxu0 %v3956
        %v4480 = vpop.f32.mrf.mxu0
        %v4481 = vadd.f32 %v4112, %v4480
        %v4482 = vpop.f32.mrf.mxu0
        %4483 = vmatprep.mubr.f32.mxu0 0.0
        %4484 = vmatmul.mubr.f32.gmra.mxu0 %v3958
        %v4485 = vpop.f32.mrf.mxu0
        %v4486 = vadd.f32 %v4112, %v4485
        %v4487 = vpop.f32.mrf.mxu0
        %4488 = vmatprep.mubr.f32.mxu0 0.0
        %4489 = vmatmul.mubr.f32.gmra.mxu0 %v3960
        %v4490 = vpop.f32.mrf.mxu0
        %v4491 = vadd.f32 %v4112, %v4490
        %v4492 = vpop.f32.mrf.mxu0
        %4493 = vmatprep.mubr.f32.mxu0 0.0
        %4494 = vmatmul.mubr.f32.gmra.mxu0 %v3962
        %v4495 = vpop.f32.mrf.mxu0
        %v4496 = vadd.f32 %v4112, %v4495
        %v4497 = vpop.f32.mrf.mxu0
        %4498 = vmatprep.mubr.f32.mxu0 0.0
        %4499 = vmatmul.mubr.f32.gmra.mxu0 %v3964
        %v4500 = vpop.f32.mrf.mxu0
        %v4501 = vadd.f32 %v4112, %v4500
        %v4502 = vpop.f32.mrf.mxu0
        %4503 = vmatprep.mubr.f32.mxu0 0.0
        %4504 = vmatmul.mubr.f32.gmra.mxu0 %v3966
        %v4505 = vpop.f32.mrf.mxu0
        %v4506 = vadd.f32 %v4112, %v4505
        %v4507 = vpop.f32.mrf.mxu0
        %4508 = vmatprep.mubr.f32.mxu0 0.0
        %4509 = vmatmul.mubr.f32.gmra.mxu0 %v3968
        %v4510 = vpop.f32.mrf.mxu0
        %v4511 = vadd.f32 %v4112, %v4510
        %v4512 = vpop.f32.mrf.mxu0
        %4513 = vmatprep.mubr.f32.mxu0 0.0
        %4514 = vmatmul.mubr.f32.gmra.mxu0 %v3970
        %v4515 = vpop.f32.mrf.mxu0
        %v4516 = vadd.f32 %v4112, %v4515
        %v4517 = vpop.f32.mrf.mxu0
        %4518 = vmatprep.mubr.f32.mxu0 0.0
        %4519 = vmatmul.mubr.f32.gmra.mxu0 %v3972
        %v4520 = vpop.f32.mrf.mxu0
        %v4521 = vadd.f32 %v4112, %v4520
        %v4522 = vpop.f32.mrf.mxu0
        %4523 = vmatprep.mubr.f32.mxu0 0.0
        %4524 = vmatmul.mubr.f32.gmra.mxu0 %v3974
        %v4525 = vpop.f32.mrf.mxu0
        %v4526 = vadd.f32 %v4112, %v4525
        %v4527 = vpop.f32.mrf.mxu0
        %4528 = vmatprep.mubr.f32.mxu0 0.0
        %4529 = vmatmul.mubr.f32.gmra.mxu0 %v3976
        %v4530 = vpop.f32.mrf.mxu0
        %v4531 = vadd.f32 %v4112, %v4530
        %v4532 = vpop.f32.mrf.mxu0
        %4533 = vmatprep.mubr.f32.mxu0 0.0
        %4534 = vmatmul.mubr.f32.gmra.mxu0 %v3978
        %v4535 = vpop.f32.mrf.mxu0
        %v4536 = vadd.f32 %v4112, %v4535
        %v4537 = vpop.f32.mrf.mxu0
        %4538 = vmatprep.mubr.f32.mxu0 0.0
        %4539 = vmatmul.mubr.f32.gmra.mxu0 %v3980
        %v4540 = vpop.f32.mrf.mxu0
        %v4541 = vadd.f32 %v4112, %v4540
        %v4542 = vpop.f32.mrf.mxu0
        %4543 = vmatprep.mubr.f32.mxu0 0.0
        %4544 = vmatmul.mubr.f32.gmra.mxu0 %v3982
        %v4545 = vpop.f32.mrf.mxu0
        %v4546 = vadd.f32 %v4112, %v4545
        %v4547 = vpop.f32.mrf.mxu0
        %4548 = vmatprep.mubr.f32.mxu0 0.0
        %4549 = vmatmul.mubr.f32.gmra.mxu0 %v3984
        %v4550 = vpop.f32.mrf.mxu0
        %v4551 = vadd.f32 %v4112, %v4550
        %v4552 = vpop.f32.mrf.mxu0
        %4553 = vmatprep.mubr.f32.mxu0 0.0
        %4554 = vmatmul.mubr.f32.gmra.mxu0 %v3986
        %v4555 = vpop.f32.mrf.mxu0
        %v4556 = vadd.f32 %v4112, %v4555
        %v4557 = vpop.f32.mrf.mxu0
        %4558 = vmatprep.mubr.f32.mxu0 0.0
        %4559 = vmatmul.mubr.f32.gmra.mxu0 %v3988
        %v4560 = vpop.f32.mrf.mxu0
        %v4561 = vadd.f32 %v4112, %v4560
        %v4562 = vpop.f32.mrf.mxu0
        %4563 = vmatprep.mubr.f32.mxu0 0.0
        %4564 = vmatmul.mubr.f32.gmra.mxu0 %v3990
        %v4565 = vpop.f32.mrf.mxu0
        %v4566 = vadd.f32 %v4112, %v4565
        %v4567 = vpop.f32.mrf.mxu0
        %4568 = vmatprep.mubr.f32.mxu0 0.0
        %4569 = vmatmul.mubr.f32.gmra.mxu0 %v3992
        %v4570 = vpop.f32.mrf.mxu0
        %v4571 = vadd.f32 %v4112, %v4570
        %v4572 = vpop.f32.mrf.mxu0
        %4573 = vmatprep.mubr.f32.mxu0 0.0
        %4574 = vmatmul.mubr.f32.gmra.mxu0 %v3994
        %v4575 = vpop.f32.mrf.mxu0
        %v4576 = vadd.f32 %v4112, %v4575
        %v4577 = vpop.f32.mrf.mxu0
        %4578 = vmatprep.mubr.f32.mxu0 0.0
        %4579 = vmatmul.mubr.f32.gmra.mxu0 %v3996
        %v4580 = vpop.f32.mrf.mxu0
        %v4581 = vadd.f32 %v4112, %v4580
        %v4582 = vpop.f32.mrf.mxu0
        %4583 = vmatprep.mubr.f32.mxu0 0.0
        %4584 = vmatmul.mubr.f32.gmra.mxu0 %v3998
        %v4585 = vpop.f32.mrf.mxu0
        %v4586 = vadd.f32 %v4112, %v4585
        %v4587 = vpop.f32.mrf.mxu0
        %4588 = vmatprep.mubr.f32.mxu0 0.0
        %4589 = vmatmul.mubr.f32.gmra.mxu0 %v4000
        %v4590 = vpop.f32.mrf.mxu0
        %v4591 = vadd.f32 %v4112, %v4590
        %v4592 = vpop.f32.mrf.mxu0
        %4593 = vmatprep.mubr.f32.mxu0 0.0
        %4594 = vmatmul.mubr.f32.gmra.mxu0 %v4002
        %v4595 = vpop.f32.mrf.mxu0
        %v4596 = vadd.f32 %v4112, %v4595
        %v4597 = vpop.f32.mrf.mxu0
        %4598 = vmatprep.mubr.f32.mxu0 0.0
        %4599 = vmatmul.mubr.f32.gmra.mxu0 %v4004
        %v4600 = vpop.f32.mrf.mxu0
        %v4601 = vadd.f32 %v4112, %v4600
        %v4602 = vpop.f32.mrf.mxu0
        %4603 = vmatprep.mubr.f32.mxu0 0.0
        %4604 = vmatmul.mubr.f32.gmra.mxu0 %v4006
        %v4605 = vpop.f32.mrf.mxu0
        %v4606 = vadd.f32 %v4112, %v4605
        %v4607 = vpop.f32.mrf.mxu0
        %4608 = vmatprep.mubr.f32.mxu0 0.0
        %4609 = vmatmul.mubr.f32.gmra.mxu0 %v4008
        %v4610 = vpop.f32.mrf.mxu0
        %v4611 = vadd.f32 %v4112, %v4610
        %v4612 = vpop.f32.mrf.mxu0
        %4613 = vmatprep.mubr.f32.mxu0 0.0
        %4614 = vmatmul.mubr.f32.gmra.mxu0 %v4010
        %v4615 = vpop.f32.mrf.mxu0
        %v4616 = vadd.f32 %v4112, %v4615
        %v4617 = vpop.f32.mrf.mxu0
        %4618 = vmatprep.mubr.f32.mxu0 0.0
        %4619 = vmatmul.mubr.f32.gmra.mxu0 %v4012
        %v4620 = vpop.f32.mrf.mxu0
        %v4621 = vadd.f32 %v4112, %v4620
        %v4622 = vpop.f32.mrf.mxu0
        %4623 = vmatprep.mubr.f32.mxu0 0.0
        %4624 = vmatmul.mubr.f32.gmra.mxu0 %v4014
        %v4625 = vpop.f32.mrf.mxu0
        %v4626 = vadd.f32 %v4112, %v4625
        %v4627 = vpop.f32.mrf.mxu0
        %4628 = vmatprep.mubr.f32.mxu0 0.0
        %4629 = vmatmul.mubr.f32.gmra.mxu0 %v4016
        %v4630 = vpop.f32.mrf.mxu0
        %v4631 = vadd.f32 %v4112, %v4630
        %v4632 = vpop.f32.mrf.mxu0
        %4633 = vmatprep.mubr.f32.mxu0 0.0
        %4634 = vmatmul.mubr.f32.gmra.mxu0 %v4018
        %v4635 = vpop.f32.mrf.mxu0
        %v4636 = vadd.f32 %v4112, %v4635
        %v4637 = vpop.f32.mrf.mxu0
        %4638 = vmatprep.mubr.f32.mxu0 0.0
        %4639 = vmatmul.mubr.f32.gmra.mxu0 %v4020
        %v4640 = vpop.f32.mrf.mxu0
        %v4641 = vadd.f32 %v4112, %v4640
        %v4642 = vpop.f32.mrf.mxu0
        %4643 = vmatprep.mubr.f32.mxu0 0.0
        %4644 = vmatmul.mubr.f32.gmra.mxu0 %v4022
        %v4645 = vpop.f32.mrf.mxu0
        %v4646 = vadd.f32 %v4112, %v4645
        %v4647 = vpop.f32.mrf.mxu0
        %4648 = vmatprep.mubr.f32.mxu0 0.0
        %4649 = vmatmul.mubr.f32.gmra.mxu0 %v4024
        %v4650 = vpop.f32.mrf.mxu0
        %v4651 = vadd.f32 %v4112, %v4650
        %v4652 = vpop.f32.mrf.mxu0
        %4653 = vmatprep.mubr.f32.mxu0 0.0
        %4654 = vmatmul.mubr.f32.gmra.mxu0 %v4026
        %v4655 = vpop.f32.mrf.mxu0
        %v4656 = vadd.f32 %v4112, %v4655
        %v4657 = vpop.f32.mrf.mxu0
        %4658 = vmatprep.mubr.f32.mxu0 0.0
        %4659 = vmatmul.mubr.f32.gmra.mxu0 %v4028
        %v4660 = vpop.f32.mrf.mxu0
        %v4661 = vadd.f32 %v4112, %v4660
        %v4662 = vpop.f32.mrf.mxu0
        %4663 = vmatprep.mubr.f32.mxu0 0.0
        %4664 = vmatmul.mubr.f32.gmra.mxu0 %v4030
        %v4665 = vpop.f32.mrf.mxu0
        %v4666 = vadd.f32 %v4112, %v4665
        %v4667 = vpop.f32.mrf.mxu0
        %4668 = vmatprep.mubr.f32.mxu0 0.0
        %4669 = vmatmul.mubr.f32.gmra.mxu0 %v4032
        %v4670 = vpop.f32.mrf.mxu0
        %v4671 = vadd.f32 %v4112, %v4670
        %v4672 = vpop.f32.mrf.mxu0
        %4673 = vmatprep.mubr.f32.mxu0 0.0
        %4674 = vmatmul.mubr.f32.gmra.mxu0 %v4034
        %v4675 = vpop.f32.mrf.mxu0
        %v4676 = vadd.f32 %v4112, %v4675
        %v4677 = vpop.f32.mrf.mxu0
        %4678 = vmatprep.mubr.f32.mxu0 0.0
        %4679 = vmatmul.mubr.f32.gmra.mxu0 %v4036
        %v4680 = vpop.f32.mrf.mxu0
        %v4681 = vadd.f32 %v4112, %v4680
        %v4682 = vpop.f32.mrf.mxu0
        %4683 = vmatprep.mubr.f32.mxu0 0.0
        %4684 = vmatmul.mubr.f32.gmra.mxu0 %v4038
        %v4685 = vpop.f32.mrf.mxu0
        %v4686 = vadd.f32 %v4112, %v4685
        %v4687 = vpop.f32.mrf.mxu0
        %4688 = vmatprep.mubr.f32.mxu0 0.0
        %4689 = vmatmul.mubr.f32.gmra.mxu0 %v4040
        %v4690 = vpop.f32.mrf.mxu0
        %v4691 = vadd.f32 %v4112, %v4690
        %v4692 = vpop.f32.mrf.mxu0
        %4693 = vmatprep.mubr.f32.mxu0 0.0
        %4694 = vmatmul.mubr.f32.gmra.mxu0 %v4042
        %v4695 = vpop.f32.mrf.mxu0
        %v4696 = vadd.f32 %v4112, %v4695
        %v4697 = vpop.f32.mrf.mxu0
        %4698 = vmatprep.mubr.f32.mxu0 0.0
        %4699 = vmatmul.mubr.f32.gmra.mxu0 %v4044
        %v4700 = vpop.f32.mrf.mxu0
        %v4701 = vadd.f32 %v4112, %v4700
        %v4702 = vpop.f32.mrf.mxu0
        %4703 = vmatprep.mubr.f32.mxu0 0.0
        %4704 = vmatmul.mubr.f32.gmra.mxu0 %v4046
        %v4705 = vpop.f32.mrf.mxu0
        %v4706 = vadd.f32 %v4112, %v4705
        %v4707 = vpop.f32.mrf.mxu0
        %4708 = vmatprep.mubr.f32.mxu0 0.0
        %4709 = vmatmul.mubr.f32.gmra.mxu0 %v4048
        %v4710 = vpop.f32.mrf.mxu0
        %v4711 = vadd.f32 %v4112, %v4710
        %v4712 = vpop.f32.mrf.mxu0
        %4713 = vmatprep.mubr.f32.mxu0 0.0
        %4714 = vmatmul.mubr.f32.gmra.mxu0 %v4050
        %v4715 = vpop.f32.mrf.mxu0
        %v4716 = vadd.f32 %v4112, %v4715
        %v4717 = vpop.f32.mrf.mxu0
        %4718 = vmatprep.mubr.f32.mxu0 0.0
        %4719 = vmatmul.mubr.f32.gmra.mxu0 %v4052
        %v4720 = vpop.f32.mrf.mxu0
        %v4721 = vadd.f32 %v4112, %v4720
        %v4722 = vpop.f32.mrf.mxu0
        %4723 = vmatprep.mubr.f32.mxu0 0.0
        %4724 = vmatmul.mubr.f32.gmra.mxu0 %v4054
        %v4725 = vpop.f32.mrf.mxu0
        %v4726 = vadd.f32 %v4112, %v4725
        %v4727 = vpop.f32.mrf.mxu0
        %4728 = vmatprep.mubr.f32.mxu0 0.0
        %4729 = vmatmul.mubr.f32.gmra.mxu0 %v4056
        %v4730 = vpop.f32.mrf.mxu0
        %v4731 = vadd.f32 %v4112, %v4730
        %v4732 = vpop.f32.mrf.mxu0
        %4733 = vmatprep.mubr.f32.mxu0 0.0
        %4734 = vmatmul.mubr.f32.gmra.mxu0 %v4058
        %v4735 = vpop.f32.mrf.mxu0
        %v4736 = vadd.f32 %v4112, %v4735
        %v4737 = vpop.f32.mrf.mxu0
        %4738 = vmatprep.mubr.f32.mxu0 0.0
        %4739 = vmatmul.mubr.f32.gmra.mxu0 %v4060
        %v4740 = vpop.f32.mrf.mxu0
        %v4741 = vadd.f32 %v4112, %v4740
        %v4742 = vpop.f32.mrf.mxu0
        %4743 = vmatprep.mubr.f32.mxu0 0.0
        %4744 = vmatmul.mubr.f32.gmra.mxu0 %v4062
        %v4745 = vpop.f32.mrf.mxu0
        %v4746 = vadd.f32 %v4112, %v4745
        %v4747 = vpop.f32.mrf.mxu0
        %4748 = vmatprep.mubr.f32.mxu0 0.0
        %4749 = vmatmul.mubr.f32.gmra.mxu0 %v4064
        %v4750 = vpop.f32.mrf.mxu0
        %v4751 = vadd.f32 %v4112, %v4750
        %v4752 = vpop.f32.mrf.mxu0
        %4753 = vmatprep.mubr.f32.mxu0 0.0
        %4754 = vmatmul.mubr.f32.gmra.mxu0 %v4066
        %v4755 = vpop.f32.mrf.mxu0
        %v4756 = vadd.f32 %v4112, %v4755
        %v4757 = vpop.f32.mrf.mxu0
        %4758 = vmatprep.mubr.f32.mxu0 0.0
        %4759 = vmatmul.mubr.f32.gmra.mxu0 %v4068
        %v4760 = vpop.f32.mrf.mxu0
        %v4761 = vadd.f32 %v4112, %v4760
        %v4762 = vpop.f32.mrf.mxu0
        %4763 = vmatprep.mubr.f32.mxu0 0.0
        %4764 = vmatmul.mubr.f32.gmra.mxu0 %v4070
        %v4765 = vpop.f32.mrf.mxu0
        %v4766 = vadd.f32 %v4112, %v4765
        %v4767 = vpop.f32.mrf.mxu0
        %4768 = vmatprep.mubr.f32.mxu0 0.0
        %4769 = vmatmul.mubr.f32.gmra.mxu0 %v4072
        %v4770 = vpop.f32.mrf.mxu0
        %v4771 = vadd.f32 %v4112, %v4770
        %v4772 = vpop.f32.mrf.mxu0
        %4773 = vmatprep.mubr.f32.mxu0 0.0
        %4774 = vmatmul.mubr.f32.gmra.mxu0 %v4074
        %v4775 = vpop.f32.mrf.mxu0
        %v4776 = vadd.f32 %v4112, %v4775
        %v4777 = vpop.f32.mrf.mxu0
        %4778 = vmatprep.mubr.f32.mxu0 0.0
        %4779 = vmatmul.mubr.f32.gmra.mxu0 %v4076
        %v4780 = vpop.f32.mrf.mxu0
        %v4781 = vadd.f32 %v4112, %v4780
        %v4782 = vpop.f32.mrf.mxu0
        %4783 = vmatprep.mubr.f32.mxu0 0.0
        %4784 = vmatmul.mubr.f32.gmra.mxu0 %v4078
        %v4785 = vpop.f32.mrf.mxu0
        %v4786 = vadd.f32 %v4112, %v4785
        %v4787 = vpop.f32.mrf.mxu0
        %4788 = vmatprep.mubr.f32.mxu0 0.0
        %4789 = vmatmul.mubr.f32.gmra.mxu0 %v4080
        %v4790 = vpop.f32.mrf.mxu0
        %v4791 = vadd.f32 %v4112, %v4790
        %v4792 = vpop.f32.mrf.mxu0
        %4793 = vmatprep.mubr.f32.mxu0 0.0
        %4794 = vmatmul.mubr.f32.gmra.mxu0 %v4082
        %v4795 = vpop.f32.mrf.mxu0
        %v4796 = vadd.f32 %v4112, %v4795
        %v4797 = vpop.f32.mrf.mxu0
        %4798 = vmatprep.mubr.f32.mxu0 0.0
        %4799 = vmatmul.mubr.f32.gmra.mxu0 %v4084
        %v4800 = vpop.f32.mrf.mxu0
        %v4801 = vadd.f32 %v4112, %v4800
        %v4802 = vpop.f32.mrf.mxu0
        %4803 = vmatprep.mubr.f32.mxu0 0.0
        %4804 = vmatmul.mubr.f32.gmra.mxu0 %v4086
        %v4805 = vpop.f32.mrf.mxu0
        %v4806 = vadd.f32 %v4112, %v4805
        %v4807 = vpop.f32.mrf.mxu0
        %4808 = vmatprep.mubr.f32.mxu0 0.0
        %4809 = vmatmul.mubr.f32.gmra.mxu0 %v4088
        %v4810 = vpop.f32.mrf.mxu0
        %v4811 = vadd.f32 %v4112, %v4810
        %v4812 = vpop.f32.mrf.mxu0
        %4813 = vmatprep.mubr.f32.mxu0 0.0
        %4814 = vmatmul.mubr.f32.gmra.mxu0 %v4090
        %v4815 = vpop.f32.mrf.mxu0
        %v4816 = vadd.f32 %v4112, %v4815
        %v4817 = vpop.f32.mrf.mxu0
        %4818 = vdwg.mxu0
        %v4819 = vadd.f32 %v385, %v4181
        %v4820 = vadd.f32 %v386, %v4186
        %v4821 = vadd.f32 %v387, %v4191
        %v4822 = vadd.f32 %v388, %v4196
        %v4823 = vadd.f32 %v389, %v4201
        %v4824 = vadd.f32 %v390, %v4206
        %v4825 = vadd.f32 %v391, %v4211
        %v4826 = vadd.f32 %v392, %v4216
        %v4827 = vadd.f32 %v393, %v4221
        %v4828 = vadd.f32 %v394, %v4226
        %v4829 = vadd.f32 %v395, %v4231
        %v4830 = vadd.f32 %v396, %v4236
        %v4831 = vadd.f32 %v397, %v4241
        %v4832 = vadd.f32 %v398, %v4246
        %v4833 = vadd.f32 %v399, %v4251
        %v4834 = vadd.f32 %v400, %v4256
        %v4835 = vadd.f32 %v401, %v4261
        %v4836 = vadd.f32 %v402, %v4266
        %v4837 = vadd.f32 %v403, %v4271
        %v4838 = vadd.f32 %v404, %v4276
        %v4839 = vadd.f32 %v405, %v4281
        %v4840 = vadd.f32 %v406, %v4286
        %v4841 = vadd.f32 %v407, %v4291
        %v4842 = vadd.f32 %v408, %v4296
        %v4843 = vadd.f32 %v409, %v4301
        %v4844 = vadd.f32 %v410, %v4306
        %v4845 = vadd.f32 %v411, %v4311
        %v4846 = vadd.f32 %v412, %v4316
        %v4847 = vadd.f32 %v413, %v4321
        %v4848 = vadd.f32 %v414, %v4326
        %v4849 = vadd.f32 %v415, %v4331
        %v4850 = vadd.f32 %v416, %v4336
        %v4851 = vadd.f32 %v417, %v4341
        %v4852 = vadd.f32 %v418, %v4346
        %v4853 = vadd.f32 %v419, %v4351
        %v4854 = vadd.f32 %v420, %v4356
        %v4855 = vadd.f32 %v421, %v4361
        %v4856 = vadd.f32 %v422, %v4366
        %v4857 = vadd.f32 %v423, %v4371
        %v4858 = vadd.f32 %v424, %v4376
        %v4859 = vadd.f32 %v425, %v4381
        %v4860 = vadd.f32 %v426, %v4386
        %v4861 = vadd.f32 %v427, %v4391
        %v4862 = vadd.f32 %v428, %v4396
        %v4863 = vadd.f32 %v429, %v4401
        %v4864 = vadd.f32 %v430, %v4406
        %v4865 = vadd.f32 %v431, %v4411
        %v4866 = vadd.f32 %v432, %v4416
        %v4867 = vadd.f32 %v433, %v4421
        %v4868 = vadd.f32 %v434, %v4426
        %v4869 = vadd.f32 %v435, %v4431
        %v4870 = vadd.f32 %v436, %v4436
        %v4871 = vadd.f32 %v437, %v4441
        %v4872 = vadd.f32 %v438, %v4446
        %v4873 = vadd.f32 %v439, %v4451
        %v4874 = vadd.f32 %v440, %v4456
        %v4875 = vadd.f32 %v441, %v4461
        %v4876 = vadd.f32 %v442, %v4466
        %v4877 = vadd.f32 %v443, %v4471
        %v4878 = vadd.f32 %v444, %v4476
        %v4879 = vadd.f32 %v445, %v4481
        %v4880 = vadd.f32 %v446, %v4486
        %v4881 = vadd.f32 %v447, %v4491
        %v4882 = vadd.f32 %v448, %v4496
        %v4883 = vadd.f32 %v449, %v4501
        %v4884 = vadd.f32 %v450, %v4506
        %v4885 = vadd.f32 %v451, %v4511
        %v4886 = vadd.f32 %v452, %v4516
        %v4887 = vadd.f32 %v453, %v4521
        %v4888 = vadd.f32 %v454, %v4526
        %v4889 = vadd.f32 %v455, %v4531
        %v4890 = vadd.f32 %v456, %v4536
        %v4891 = vadd.f32 %v457, %v4541
        %v4892 = vadd.f32 %v458, %v4546
        %v4893 = vadd.f32 %v459, %v4551
        %v4894 = vadd.f32 %v460, %v4556
        %v4895 = vadd.f32 %v461, %v4561
        %v4896 = vadd.f32 %v462, %v4566
        %v4897 = vadd.f32 %v463, %v4571
        %v4898 = vadd.f32 %v464, %v4576
        %v4899 = vadd.f32 %v465, %v4581
        %v4900 = vadd.f32 %v466, %v4586
        %v4901 = vadd.f32 %v467, %v4591
        %v4902 = vadd.f32 %v468, %v4596
        %v4903 = vadd.f32 %v469, %v4601
        %v4904 = vadd.f32 %v470, %v4606
        %v4905 = vadd.f32 %v471, %v4611
        %v4906 = vadd.f32 %v472, %v4616
        %v4907 = vadd.f32 %v473, %v4621
        %v4908 = vadd.f32 %v474, %v4626
        %v4909 = vadd.f32 %v475, %v4631
        %v4910 = vadd.f32 %v476, %v4636
        %v4911 = vadd.f32 %v477, %v4641
        %v4912 = vadd.f32 %v478, %v4646
        %v4913 = vadd.f32 %v479, %v4651
        %v4914 = vadd.f32 %v480, %v4656
        %v4915 = vadd.f32 %v481, %v4661
        %v4916 = vadd.f32 %v482, %v4666
        %v4917 = vadd.f32 %v483, %v4671
        %v4918 = vadd.f32 %v484, %v4676
        %v4919 = vadd.f32 %v485, %v4681
        %v4920 = vadd.f32 %v486, %v4686
        %v4921 = vadd.f32 %v487, %v4691
        %v4922 = vadd.f32 %v488, %v4696
        %v4923 = vadd.f32 %v489, %v4701
        %v4924 = vadd.f32 %v490, %v4706
        %v4925 = vadd.f32 %v491, %v4711
        %v4926 = vadd.f32 %v492, %v4716
        %v4927 = vadd.f32 %v493, %v4721
        %v4928 = vadd.f32 %v494, %v4726
        %v4929 = vadd.f32 %v495, %v4731
        %v4930 = vadd.f32 %v496, %v4736
        %v4931 = vadd.f32 %v497, %v4741
        %v4932 = vadd.f32 %v498, %v4746
        %v4933 = vadd.f32 %v499, %v4751
        %v4934 = vadd.f32 %v500, %v4756
        %v4935 = vadd.f32 %v501, %v4761
        %v4936 = vadd.f32 %v502, %v4766
        %v4937 = vadd.f32 %v503, %v4771
        %v4938 = vadd.f32 %v504, %v4776
        %v4939 = vadd.f32 %v505, %v4781
        %v4940 = vadd.f32 %v506, %v4786
        %v4941 = vadd.f32 %v507, %v4791
        %v4942 = vadd.f32 %v508, %v4796
        %v4943 = vadd.f32 %v509, %v4801
        %v4944 = vadd.f32 %v510, %v4806
        %v4945 = vadd.f32 %v511, %v4811
        %v4946 = vadd.f32 %v512, %v4816
        %v4947 = vadd.f32 %v4819, %v4820
        %v4948 = vadd.f32 %v4947, %v4821
        %v4949 = vadd.f32 %v4948, %v4822
        %v4950 = vadd.f32 %v4949, %v4823
        %v4951 = vadd.f32 %v4950, %v4824
        %v4952 = vadd.f32 %v4951, %v4825
        %v4953 = vadd.f32 %v4952, %v4826
        %v4954 = vadd.f32 %v4953, %v4827
        %v4955 = vadd.f32 %v4954, %v4828
        %v4956 = vadd.f32 %v4955, %v4829
        %v4957 = vadd.f32 %v4956, %v4830
        %v4958 = vadd.f32 %v4957, %v4831
        %v4959 = vadd.f32 %v4958, %v4832
        %v4960 = vadd.f32 %v4959, %v4833
        %v4961 = vadd.f32 %v4960, %v4834
        %v4962 = vadd.f32 %v4961, %v4835
        %v4963 = vadd.f32 %v4962, %v4836
        %v4964 = vadd.f32 %v4963, %v4837
        %v4965 = vadd.f32 %v4964, %v4838
        %v4966 = vadd.f32 %v4965, %v4839
        %v4967 = vadd.f32 %v4966, %v4840
        %v4968 = vadd.f32 %v4967, %v4841
        %v4969 = vadd.f32 %v4968, %v4842
        %v4970 = vadd.f32 %v4969, %v4843
        %v4971 = vadd.f32 %v4970, %v4844
        %v4972 = vadd.f32 %v4971, %v4845
        %v4973 = vadd.f32 %v4972, %v4846
        %v4974 = vadd.f32 %v4973, %v4847
        %v4975 = vadd.f32 %v4974, %v4848
        %v4976 = vadd.f32 %v4975, %v4849
        %v4977 = vadd.f32 %v4976, %v4850
        %v4978 = vadd.f32 %v4977, %v4851
        %v4979 = vadd.f32 %v4978, %v4852
        %v4980 = vadd.f32 %v4979, %v4853
        %v4981 = vadd.f32 %v4980, %v4854
        %v4982 = vadd.f32 %v4981, %v4855
        %v4983 = vadd.f32 %v4982, %v4856
        %v4984 = vadd.f32 %v4983, %v4857
        %v4985 = vadd.f32 %v4984, %v4858
        %v4986 = vadd.f32 %v4985, %v4859
        %v4987 = vadd.f32 %v4986, %v4860
        %v4988 = vadd.f32 %v4987, %v4861
        %v4989 = vadd.f32 %v4988, %v4862
        %v4990 = vadd.f32 %v4989, %v4863
        %v4991 = vadd.f32 %v4990, %v4864
        %v4992 = vadd.f32 %v4991, %v4865
        %v4993 = vadd.f32 %v4992, %v4866
        %v4994 = vadd.f32 %v4993, %v4867
        %v4995 = vadd.f32 %v4994, %v4868
        %v4996 = vadd.f32 %v4995, %v4869
        %v4997 = vadd.f32 %v4996, %v4870
        %v4998 = vadd.f32 %v4997, %v4871
        %v4999 = vadd.f32 %v4998, %v4872
        %v5000 = vadd.f32 %v4999, %v4873
        %v5001 = vadd.f32 %v5000, %v4874
        %v5002 = vadd.f32 %v5001, %v4875
        %v5003 = vadd.f32 %v5002, %v4876
        %v5004 = vadd.f32 %v5003, %v4877
        %v5005 = vadd.f32 %v5004, %v4878
        %v5006 = vadd.f32 %v5005, %v4879
        %v5007 = vadd.f32 %v5006, %v4880
        %v5008 = vadd.f32 %v5007, %v4881
        %v5009 = vadd.f32 %v5008, %v4882
        %v5010 = vadd.f32 %v5009, %v4883
        %v5011 = vadd.f32 %v5010, %v4884
        %v5012 = vadd.f32 %v5011, %v4885
        %v5013 = vadd.f32 %v5012, %v4886
        %v5014 = vadd.f32 %v5013, %v4887
        %v5015 = vadd.f32 %v5014, %v4888
        %v5016 = vadd.f32 %v5015, %v4889
        %v5017 = vadd.f32 %v5016, %v4890
        %v5018 = vadd.f32 %v5017, %v4891
        %v5019 = vadd.f32 %v5018, %v4892
        %v5020 = vadd.f32 %v5019, %v4893
        %v5021 = vadd.f32 %v5020, %v4894
        %v5022 = vadd.f32 %v5021, %v4895
        %v5023 = vadd.f32 %v5022, %v4896
        %v5024 = vadd.f32 %v5023, %v4897
        %v5025 = vadd.f32 %v5024, %v4898
        %v5026 = vadd.f32 %v5025, %v4899
        %v5027 = vadd.f32 %v5026, %v4900
        %v5028 = vadd.f32 %v5027, %v4901
        %v5029 = vadd.f32 %v5028, %v4902
        %v5030 = vadd.f32 %v5029, %v4903
        %v5031 = vadd.f32 %v5030, %v4904
        %v5032 = vadd.f32 %v5031, %v4905
        %v5033 = vadd.f32 %v5032, %v4906
        %v5034 = vadd.f32 %v5033, %v4907
        %v5035 = vadd.f32 %v5034, %v4908
        %v5036 = vadd.f32 %v5035, %v4909
        %v5037 = vadd.f32 %v5036, %v4910
        %v5038 = vadd.f32 %v5037, %v4911
        %v5039 = vadd.f32 %v5038, %v4912
        %v5040 = vadd.f32 %v5039, %v4913
        %v5041 = vadd.f32 %v5040, %v4914
        %v5042 = vadd.f32 %v5041, %v4915
        %v5043 = vadd.f32 %v5042, %v4916
        %v5044 = vadd.f32 %v5043, %v4917
        %v5045 = vadd.f32 %v5044, %v4918
        %v5046 = vadd.f32 %v5045, %v4919
        %v5047 = vadd.f32 %v5046, %v4920
        %v5048 = vadd.f32 %v5047, %v4921
        %v5049 = vadd.f32 %v5048, %v4922
        %v5050 = vadd.f32 %v5049, %v4923
        %v5051 = vadd.f32 %v5050, %v4924
        %v5052 = vadd.f32 %v5051, %v4925
        %v5053 = vadd.f32 %v5052, %v4926
        %v5054 = vadd.f32 %v5053, %v4927
        %v5055 = vadd.f32 %v5054, %v4928
        %v5056 = vadd.f32 %v5055, %v4929
        %v5057 = vadd.f32 %v5056, %v4930
        %v5058 = vadd.f32 %v5057, %v4931
        %v5059 = vadd.f32 %v5058, %v4932
        %v5060 = vadd.f32 %v5059, %v4933
        %v5061 = vadd.f32 %v5060, %v4934
        %v5062 = vadd.f32 %v5061, %v4935
        %v5063 = vadd.f32 %v5062, %v4936
        %v5064 = vadd.f32 %v5063, %v4937
        %v5065 = vadd.f32 %v5064, %v4938
        %v5066 = vadd.f32 %v5065, %v4939
        %v5067 = vadd.f32 %v5066, %v4940
        %v5068 = vadd.f32 %v5067, %v4941
        %v5069 = vadd.f32 %v5068, %v4942
        %v5070 = vadd.f32 %v5069, %v4943
        %v5071 = vadd.f32 %v5070, %v4944
        %v5072 = vadd.f32 %v5071, %v4945
        %v5073 = vadd.f32 %v5072, %v4946
        %5074 = vadd.xlane.f32.xlu0 %v5073
        %v5075 = vpop.xlane.xlu0 %5074
        %v5076 = vrot.slane %v5075, 4
        %v5077 = vadd.f32 %v5075, %v5076
        %v5078 = vrot.slane %v5077, 2
        %v5079 = vadd.f32 %v5077, %v5078
        %v5080 = vrot.slane %v5079, 1
        %v5081 = vadd.f32 %v5079, %v5080
        %s5082 = vtos %v5081
        %v5083 = vrcp.pop 131072.0
        %s5084 = vtos %v5083
        %s5085 = smul.f32 %s5082, %s5084
        %v5086 = vstv %s5085
        %v5087 = vsub.f32 %v4819, %v5086
        %v5088 = vsub.f32 %v4820, %v5086
        %v5089 = vsub.f32 %v4821, %v5086
        %v5090 = vsub.f32 %v4822, %v5086
        %v5091 = vsub.f32 %v4823, %v5086
        %v5092 = vsub.f32 %v4824, %v5086
        %v5093 = vsub.f32 %v4825, %v5086
        %v5094 = vsub.f32 %v4826, %v5086
        %v5095 = vsub.f32 %v4827, %v5086
        %v5096 = vsub.f32 %v4828, %v5086
        %v5097 = vsub.f32 %v4829, %v5086
        %v5098 = vsub.f32 %v4830, %v5086
        %v5099 = vsub.f32 %v4831, %v5086
        %v5100 = vsub.f32 %v4832, %v5086
        %v5101 = vsub.f32 %v4833, %v5086
        %v5102 = vsub.f32 %v4834, %v5086
        %v5103 = vsub.f32 %v4835, %v5086
        %v5104 = vsub.f32 %v4836, %v5086
        %v5105 = vsub.f32 %v4837, %v5086
        %v5106 = vsub.f32 %v4838, %v5086
        %v5107 = vsub.f32 %v4839, %v5086
        %v5108 = vsub.f32 %v4840, %v5086
        %v5109 = vsub.f32 %v4841, %v5086
        %v5110 = vsub.f32 %v4842, %v5086
        %v5111 = vsub.f32 %v4843, %v5086
        %v5112 = vsub.f32 %v4844, %v5086
        %v5113 = vsub.f32 %v4845, %v5086
        %v5114 = vsub.f32 %v4846, %v5086
        %v5115 = vsub.f32 %v4847, %v5086
        %v5116 = vsub.f32 %v4848, %v5086
        %v5117 = vsub.f32 %v4849, %v5086
        %v5118 = vsub.f32 %v4850, %v5086
        %v5119 = vsub.f32 %v4851, %v5086
        %v5120 = vsub.f32 %v4852, %v5086
        %v5121 = vsub.f32 %v4853, %v5086
        %v5122 = vsub.f32 %v4854, %v5086
        %v5123 = vsub.f32 %v4855, %v5086
        %v5124 = vsub.f32 %v4856, %v5086
        %v5125 = vsub.f32 %v4857, %v5086
        %v5126 = vsub.f32 %v4858, %v5086
        %v5127 = vsub.f32 %v4859, %v5086
        %v5128 = vsub.f32 %v4860, %v5086
        %v5129 = vsub.f32 %v4861, %v5086
        %v5130 = vsub.f32 %v4862, %v5086
        %v5131 = vsub.f32 %v4863, %v5086
        %v5132 = vsub.f32 %v4864, %v5086
        %v5133 = vsub.f32 %v4865, %v5086
        %v5134 = vsub.f32 %v4866, %v5086
        %v5135 = vsub.f32 %v4867, %v5086
        %v5136 = vsub.f32 %v4868, %v5086
        %v5137 = vsub.f32 %v4869, %v5086
        %v5138 = vsub.f32 %v4870, %v5086
        %v5139 = vsub.f32 %v4871, %v5086
        %v5140 = vsub.f32 %v4872, %v5086
        %v5141 = vsub.f32 %v4873, %v5086
        %v5142 = vsub.f32 %v4874, %v5086
        %v5143 = vsub.f32 %v4875, %v5086
        %v5144 = vsub.f32 %v4876, %v5086
        %v5145 = vsub.f32 %v4877, %v5086
        %v5146 = vsub.f32 %v4878, %v5086
        %v5147 = vsub.f32 %v4879, %v5086
        %v5148 = vsub.f32 %v4880, %v5086
        %v5149 = vsub.f32 %v4881, %v5086
        %v5150 = vsub.f32 %v4882, %v5086
        %v5151 = vsub.f32 %v4883, %v5086
        %v5152 = vsub.f32 %v4884, %v5086
        %v5153 = vsub.f32 %v4885, %v5086
        %v5154 = vsub.f32 %v4886, %v5086
        %v5155 = vsub.f32 %v4887, %v5086
        %v5156 = vsub.f32 %v4888, %v5086
        %v5157 = vsub.f32 %v4889, %v5086
        %v5158 = vsub.f32 %v4890, %v5086
        %v5159 = vsub.f32 %v4891, %v5086
        %v5160 = vsub.f32 %v4892, %v5086
        %v5161 = vsub.f32 %v4893, %v5086
        %v5162 = vsub.f32 %v4894, %v5086
        %v5163 = vsub.f32 %v4895, %v5086
        %v5164 = vsub.f32 %v4896, %v5086
        %v5165 = vsub.f32 %v4897, %v5086
        %v5166 = vsub.f32 %v4898, %v5086
        %v5167 = vsub.f32 %v4899, %v5086
        %v5168 = vsub.f32 %v4900, %v5086
        %v5169 = vsub.f32 %v4901, %v5086
        %v5170 = vsub.f32 %v4902, %v5086
        %v5171 = vsub.f32 %v4903, %v5086
        %v5172 = vsub.f32 %v4904, %v5086
        %v5173 = vsub.f32 %v4905, %v5086
        %v5174 = vsub.f32 %v4906, %v5086
        %v5175 = vsub.f32 %v4907, %v5086
        %v5176 = vsub.f32 %v4908, %v5086
        %v5177 = vsub.f32 %v4909, %v5086
        %v5178 = vsub.f32 %v4910, %v5086
        %v5179 = vsub.f32 %v4911, %v5086
        %v5180 = vsub.f32 %v4912, %v5086
        %v5181 = vsub.f32 %v4913, %v5086
        %v5182 = vsub.f32 %v4914, %v5086
        %v5183 = vsub.f32 %v4915, %v5086
        %v5184 = vsub.f32 %v4916, %v5086
        %v5185 = vsub.f32 %v4917, %v5086
        %v5186 = vsub.f32 %v4918, %v5086
        %v5187 = vsub.f32 %v4919, %v5086
        %v5188 = vsub.f32 %v4920, %v5086
        %v5189 = vsub.f32 %v4921, %v5086
        %v5190 = vsub.f32 %v4922, %v5086
        %v5191 = vsub.f32 %v4923, %v5086
        %v5192 = vsub.f32 %v4924, %v5086
        %v5193 = vsub.f32 %v4925, %v5086
        %v5194 = vsub.f32 %v4926, %v5086
        %v5195 = vsub.f32 %v4927, %v5086
        %v5196 = vsub.f32 %v4928, %v5086
        %v5197 = vsub.f32 %v4929, %v5086
        %v5198 = vsub.f32 %v4930, %v5086
        %v5199 = vsub.f32 %v4931, %v5086
        %v5200 = vsub.f32 %v4932, %v5086
        %v5201 = vsub.f32 %v4933, %v5086
        %v5202 = vsub.f32 %v4934, %v5086
        %v5203 = vsub.f32 %v4935, %v5086
        %v5204 = vsub.f32 %v4936, %v5086
        %v5205 = vsub.f32 %v4937, %v5086
        %v5206 = vsub.f32 %v4938, %v5086
        %v5207 = vsub.f32 %v4939, %v5086
        %v5208 = vsub.f32 %v4940, %v5086
        %v5209 = vsub.f32 %v4941, %v5086
        %v5210 = vsub.f32 %v4942, %v5086
        %v5211 = vsub.f32 %v4943, %v5086
        %v5212 = vsub.f32 %v4944, %v5086
        %v5213 = vsub.f32 %v4945, %v5086
        %v5214 = vsub.f32 %v4946, %v5086
        %v5215 = vmul.f32 %v5087, %v5087
        %v5216 = vmul.f32 %v5088, %v5088
        %v5217 = vmul.f32 %v5089, %v5089
        %v5218 = vmul.f32 %v5090, %v5090
        %v5219 = vmul.f32 %v5091, %v5091
        %v5220 = vmul.f32 %v5092, %v5092
        %v5221 = vmul.f32 %v5093, %v5093
        %v5222 = vmul.f32 %v5094, %v5094
        %v5223 = vmul.f32 %v5095, %v5095
        %v5224 = vmul.f32 %v5096, %v5096
        %v5225 = vmul.f32 %v5097, %v5097
        %v5226 = vmul.f32 %v5098, %v5098
        %v5227 = vmul.f32 %v5099, %v5099
        %v5228 = vmul.f32 %v5100, %v5100
        %v5229 = vmul.f32 %v5101, %v5101
        %v5230 = vmul.f32 %v5102, %v5102
        %v5231 = vmul.f32 %v5103, %v5103
        %v5232 = vmul.f32 %v5104, %v5104
        %v5233 = vmul.f32 %v5105, %v5105
        %v5234 = vmul.f32 %v5106, %v5106
        %v5235 = vmul.f32 %v5107, %v5107
        %v5236 = vmul.f32 %v5108, %v5108
        %v5237 = vmul.f32 %v5109, %v5109
        %v5238 = vmul.f32 %v5110, %v5110
        %v5239 = vmul.f32 %v5111, %v5111
        %v5240 = vmul.f32 %v5112, %v5112
        %v5241 = vmul.f32 %v5113, %v5113
        %v5242 = vmul.f32 %v5114, %v5114
        %v5243 = vmul.f32 %v5115, %v5115
        %v5244 = vmul.f32 %v5116, %v5116
        %v5245 = vmul.f32 %v5117, %v5117
        %v5246 = vmul.f32 %v5118, %v5118
        %v5247 = vmul.f32 %v5119, %v5119
        %v5248 = vmul.f32 %v5120, %v5120
        %v5249 = vmul.f32 %v5121, %v5121
        %v5250 = vmul.f32 %v5122, %v5122
        %v5251 = vmul.f32 %v5123, %v5123
        %v5252 = vmul.f32 %v5124, %v5124
        %v5253 = vmul.f32 %v5125, %v5125
        %v5254 = vmul.f32 %v5126, %v5126
        %v5255 = vmul.f32 %v5127, %v5127
        %v5256 = vmul.f32 %v5128, %v5128
        %v5257 = vmul.f32 %v5129, %v5129
        %v5258 = vmul.f32 %v5130, %v5130
        %v5259 = vmul.f32 %v5131, %v5131
        %v5260 = vmul.f32 %v5132, %v5132
        %v5261 = vmul.f32 %v5133, %v5133
        %v5262 = vmul.f32 %v5134, %v5134
        %v5263 = vmul.f32 %v5135, %v5135
        %v5264 = vmul.f32 %v5136, %v5136
        %v5265 = vmul.f32 %v5137, %v5137
        %v5266 = vmul.f32 %v5138, %v5138
        %v5267 = vmul.f32 %v5139, %v5139
        %v5268 = vmul.f32 %v5140, %v5140
        %v5269 = vmul.f32 %v5141, %v5141
        %v5270 = vmul.f32 %v5142, %v5142
        %v5271 = vmul.f32 %v5143, %v5143
        %v5272 = vmul.f32 %v5144, %v5144
        %v5273 = vmul.f32 %v5145, %v5145
        %v5274 = vmul.f32 %v5146, %v5146
        %v5275 = vmul.f32 %v5147, %v5147
        %v5276 = vmul.f32 %v5148, %v5148
        %v5277 = vmul.f32 %v5149, %v5149
        %v5278 = vmul.f32 %v5150, %v5150
        %v5279 = vmul.f32 %v5151, %v5151
        %v5280 = vmul.f32 %v5152, %v5152
        %v5281 = vmul.f32 %v5153, %v5153
        %v5282 = vmul.f32 %v5154, %v5154
        %v5283 = vmul.f32 %v5155, %v5155
        %v5284 = vmul.f32 %v5156, %v5156
        %v5285 = vmul.f32 %v5157, %v5157
        %v5286 = vmul.f32 %v5158, %v5158
        %v5287 = vmul.f32 %v5159, %v5159
        %v5288 = vmul.f32 %v5160, %v5160
        %v5289 = vmul.f32 %v5161, %v5161
        %v5290 = vmul.f32 %v5162, %v5162
        %v5291 = vmul.f32 %v5163, %v5163
        %v5292 = vmul.f32 %v5164, %v5164
        %v5293 = vmul.f32 %v5165, %v5165
        %v5294 = vmul.f32 %v5166, %v5166
        %v5295 = vmul.f32 %v5167, %v5167
        %v5296 = vmul.f32 %v5168, %v5168
        %v5297 = vmul.f32 %v5169, %v5169
        %v5298 = vmul.f32 %v5170, %v5170
        %v5299 = vmul.f32 %v5171, %v5171
        %v5300 = vmul.f32 %v5172, %v5172
        %v5301 = vmul.f32 %v5173, %v5173
        %v5302 = vmul.f32 %v5174, %v5174
        %v5303 = vmul.f32 %v5175, %v5175
        %v5304 = vmul.f32 %v5176, %v5176
        %v5305 = vmul.f32 %v5177, %v5177
        %v5306 = vmul.f32 %v5178, %v5178
        %v5307 = vmul.f32 %v5179, %v5179
        %v5308 = vmul.f32 %v5180, %v5180
        %v5309 = vmul.f32 %v5181, %v5181
        %v5310 = vmul.f32 %v5182, %v5182
        %v5311 = vmul.f32 %v5183, %v5183
        %v5312 = vmul.f32 %v5184, %v5184
        %v5313 = vmul.f32 %v5185, %v5185
        %v5314 = vmul.f32 %v5186, %v5186
        %v5315 = vmul.f32 %v5187, %v5187
        %v5316 = vmul.f32 %v5188, %v5188
        %v5317 = vmul.f32 %v5189, %v5189
        %v5318 = vmul.f32 %v5190, %v5190
        %v5319 = vmul.f32 %v5191, %v5191
        %v5320 = vmul.f32 %v5192, %v5192
        %v5321 = vmul.f32 %v5193, %v5193
        %v5322 = vmul.f32 %v5194, %v5194
        %v5323 = vmul.f32 %v5195, %v5195
        %v5324 = vmul.f32 %v5196, %v5196
        %v5325 = vmul.f32 %v5197, %v5197
        %v5326 = vmul.f32 %v5198, %v5198
        %v5327 = vmul.f32 %v5199, %v5199
        %v5328 = vmul.f32 %v5200, %v5200
        %v5329 = vmul.f32 %v5201, %v5201
        %v5330 = vmul.f32 %v5202, %v5202
        %v5331 = vmul.f32 %v5203, %v5203
        %v5332 = vmul.f32 %v5204, %v5204
        %v5333 = vmul.f32 %v5205, %v5205
        %v5334 = vmul.f32 %v5206, %v5206
        %v5335 = vmul.f32 %v5207, %v5207
        %v5336 = vmul.f32 %v5208, %v5208
        %v5337 = vmul.f32 %v5209, %v5209
        %v5338 = vmul.f32 %v5210, %v5210
        %v5339 = vmul.f32 %v5211, %v5211
        %v5340 = vmul.f32 %v5212, %v5212
        %v5341 = vmul.f32 %v5213, %v5213
        %v5342 = vmul.f32 %v5214, %v5214
        %v5343 = vadd.f32 %v5215, %v5216
        %v5344 = vadd.f32 %v5343, %v5217
        %v5345 = vadd.f32 %v5344, %v5218
        %v5346 = vadd.f32 %v5345, %v5219
        %v5347 = vadd.f32 %v5346, %v5220
        %v5348 = vadd.f32 %v5347, %v5221
        %v5349 = vadd.f32 %v5348, %v5222
        %v5350 = vadd.f32 %v5349, %v5223
        %v5351 = vadd.f32 %v5350, %v5224
        %v5352 = vadd.f32 %v5351, %v5225
        %v5353 = vadd.f32 %v5352, %v5226
        %v5354 = vadd.f32 %v5353, %v5227
        %v5355 = vadd.f32 %v5354, %v5228
        %v5356 = vadd.f32 %v5355, %v5229
        %v5357 = vadd.f32 %v5356, %v5230
        %v5358 = vadd.f32 %v5357, %v5231
        %v5359 = vadd.f32 %v5358, %v5232
        %v5360 = vadd.f32 %v5359, %v5233
        %v5361 = vadd.f32 %v5360, %v5234
        %v5362 = vadd.f32 %v5361, %v5235
        %v5363 = vadd.f32 %v5362, %v5236
        %v5364 = vadd.f32 %v5363, %v5237
        %v5365 = vadd.f32 %v5364, %v5238
        %v5366 = vadd.f32 %v5365, %v5239
        %v5367 = vadd.f32 %v5366, %v5240
        %v5368 = vadd.f32 %v5367, %v5241
        %v5369 = vadd.f32 %v5368, %v5242
        %v5370 = vadd.f32 %v5369, %v5243
        %v5371 = vadd.f32 %v5370, %v5244
        %v5372 = vadd.f32 %v5371, %v5245
        %v5373 = vadd.f32 %v5372, %v5246
        %v5374 = vadd.f32 %v5373, %v5247
        %v5375 = vadd.f32 %v5374, %v5248
        %v5376 = vadd.f32 %v5375, %v5249
        %v5377 = vadd.f32 %v5376, %v5250
        %v5378 = vadd.f32 %v5377, %v5251
        %v5379 = vadd.f32 %v5378, %v5252
        %v5380 = vadd.f32 %v5379, %v5253
        %v5381 = vadd.f32 %v5380, %v5254
        %v5382 = vadd.f32 %v5381, %v5255
        %v5383 = vadd.f32 %v5382, %v5256
        %v5384 = vadd.f32 %v5383, %v5257
        %v5385 = vadd.f32 %v5384, %v5258
        %v5386 = vadd.f32 %v5385, %v5259
        %v5387 = vadd.f32 %v5386, %v5260
        %v5388 = vadd.f32 %v5387, %v5261
        %v5389 = vadd.f32 %v5388, %v5262
        %v5390 = vadd.f32 %v5389, %v5263
        %v5391 = vadd.f32 %v5390, %v5264
        %v5392 = vadd.f32 %v5391, %v5265
        %v5393 = vadd.f32 %v5392, %v5266
        %v5394 = vadd.f32 %v5393, %v5267
        %v5395 = vadd.f32 %v5394, %v5268
        %v5396 = vadd.f32 %v5395, %v5269
        %v5397 = vadd.f32 %v5396, %v5270
        %v5398 = vadd.f32 %v5397, %v5271
        %v5399 = vadd.f32 %v5398, %v5272
        %v5400 = vadd.f32 %v5399, %v5273
        %v5401 = vadd.f32 %v5400, %v5274
        %v5402 = vadd.f32 %v5401, %v5275
        %v5403 = vadd.f32 %v5402, %v5276
        %v5404 = vadd.f32 %v5403, %v5277
        %v5405 = vadd.f32 %v5404, %v5278
        %v5406 = vadd.f32 %v5405, %v5279
        %v5407 = vadd.f32 %v5406, %v5280
        %v5408 = vadd.f32 %v5407, %v5281
        %v5409 = vadd.f32 %v5408, %v5282
        %v5410 = vadd.f32 %v5409, %v5283
        %v5411 = vadd.f32 %v5410, %v5284
        %v5412 = vadd.f32 %v5411, %v5285
        %v5413 = vadd.f32 %v5412, %v5286
        %v5414 = vadd.f32 %v5413, %v5287
        %v5415 = vadd.f32 %v5414, %v5288
        %v5416 = vadd.f32 %v5415, %v5289
        %v5417 = vadd.f32 %v5416, %v5290
        %v5418 = vadd.f32 %v5417, %v5291
        %v5419 = vadd.f32 %v5418, %v5292
        %v5420 = vadd.f32 %v5419, %v5293
        %v5421 = vadd.f32 %v5420, %v5294
        %v5422 = vadd.f32 %v5421, %v5295
        %v5423 = vadd.f32 %v5422, %v5296
        %v5424 = vadd.f32 %v5423, %v5297
        %v5425 = vadd.f32 %v5424, %v5298
        %v5426 = vadd.f32 %v5425, %v5299
        %v5427 = vadd.f32 %v5426, %v5300
        %v5428 = vadd.f32 %v5427, %v5301
        %v5429 = vadd.f32 %v5428, %v5302
        %v5430 = vadd.f32 %v5429, %v5303
        %v5431 = vadd.f32 %v5430, %v5304
        %v5432 = vadd.f32 %v5431, %v5305
        %v5433 = vadd.f32 %v5432, %v5306
        %v5434 = vadd.f32 %v5433, %v5307
        %v5435 = vadd.f32 %v5434, %v5308
        %v5436 = vadd.f32 %v5435, %v5309
        %v5437 = vadd.f32 %v5436, %v5310
        %v5438 = vadd.f32 %v5437, %v5311
        %v5439 = vadd.f32 %v5438, %v5312
        %v5440 = vadd.f32 %v5439, %v5313
        %v5441 = vadd.f32 %v5440, %v5314
        %v5442 = vadd.f32 %v5441, %v5315
        %v5443 = vadd.f32 %v5442, %v5316
        %v5444 = vadd.f32 %v5443, %v5317
        %v5445 = vadd.f32 %v5444, %v5318
        %v5446 = vadd.f32 %v5445, %v5319
        %v5447 = vadd.f32 %v5446, %v5320
        %v5448 = vadd.f32 %v5447, %v5321
        %v5449 = vadd.f32 %v5448, %v5322
        %v5450 = vadd.f32 %v5449, %v5323
        %v5451 = vadd.f32 %v5450, %v5324
        %v5452 = vadd.f32 %v5451, %v5325
        %v5453 = vadd.f32 %v5452, %v5326
        %v5454 = vadd.f32 %v5453, %v5327
        %v5455 = vadd.f32 %v5454, %v5328
        %v5456 = vadd.f32 %v5455, %v5329
        %v5457 = vadd.f32 %v5456, %v5330
        %v5458 = vadd.f32 %v5457, %v5331
        %v5459 = vadd.f32 %v5458, %v5332
        %v5460 = vadd.f32 %v5459, %v5333
        %v5461 = vadd.f32 %v5460, %v5334
        %v5462 = vadd.f32 %v5461, %v5335
        %v5463 = vadd.f32 %v5462, %v5336
        %v5464 = vadd.f32 %v5463, %v5337
        %v5465 = vadd.f32 %v5464, %v5338
        %v5466 = vadd.f32 %v5465, %v5339
        %v5467 = vadd.f32 %v5466, %v5340
        %v5468 = vadd.f32 %v5467, %v5341
        %v5469 = vadd.f32 %v5468, %v5342
        %5470 = vadd.xlane.f32.xlu0 %v5469
        %v5471 = vpop.xlane.xlu0 %5470
        %v5472 = vrot.slane %v5471, 4
        %v5473 = vadd.f32 %v5471, %v5472
        %v5474 = vrot.slane %v5473, 2
        %v5475 = vadd.f32 %v5473, %v5474
        %v5476 = vrot.slane %v5475, 1
        %v5477 = vadd.f32 %v5475, %v5476
        %s5478 = vtos %v5477
        %v5479 = vrcp.pop 131072.0
        %s5480 = vtos %v5479
        %s5481 = smul.f32 %s5478, %s5480
        %s5482 = sadd.f32 %s5481, 1e-05
        %v5483 = vstv %s5482
        %v5484 = vrsqrt.pop %v5483
        %s5485 = vtos %v5484
        %v5486 = vstv %s5485
        %v5487 = vmul.f32 %v5087, %v5486
        %v5488 = vmul.f32 %v5088, %v5486
        %v5489 = vmul.f32 %v5089, %v5486
        %v5490 = vmul.f32 %v5090, %v5486
        %v5491 = vmul.f32 %v5091, %v5486
        %v5492 = vmul.f32 %v5092, %v5486
        %v5493 = vmul.f32 %v5093, %v5486
        %v5494 = vmul.f32 %v5094, %v5486
        %v5495 = vmul.f32 %v5095, %v5486
        %v5496 = vmul.f32 %v5096, %v5486
        %v5497 = vmul.f32 %v5097, %v5486
        %v5498 = vmul.f32 %v5098, %v5486
        %v5499 = vmul.f32 %v5099, %v5486
        %v5500 = vmul.f32 %v5100, %v5486
        %v5501 = vmul.f32 %v5101, %v5486
        %v5502 = vmul.f32 %v5102, %v5486
        %v5503 = vmul.f32 %v5103, %v5486
        %v5504 = vmul.f32 %v5104, %v5486
        %v5505 = vmul.f32 %v5105, %v5486
        %v5506 = vmul.f32 %v5106, %v5486
        %v5507 = vmul.f32 %v5107, %v5486
        %v5508 = vmul.f32 %v5108, %v5486
        %v5509 = vmul.f32 %v5109, %v5486
        %v5510 = vmul.f32 %v5110, %v5486
        %v5511 = vmul.f32 %v5111, %v5486
        %v5512 = vmul.f32 %v5112, %v5486
        %v5513 = vmul.f32 %v5113, %v5486
        %v5514 = vmul.f32 %v5114, %v5486
        %v5515 = vmul.f32 %v5115, %v5486
        %v5516 = vmul.f32 %v5116, %v5486
        %v5517 = vmul.f32 %v5117, %v5486
        %v5518 = vmul.f32 %v5118, %v5486
        %v5519 = vmul.f32 %v5119, %v5486
        %v5520 = vmul.f32 %v5120, %v5486
        %v5521 = vmul.f32 %v5121, %v5486
        %v5522 = vmul.f32 %v5122, %v5486
        %v5523 = vmul.f32 %v5123, %v5486
        %v5524 = vmul.f32 %v5124, %v5486
        %v5525 = vmul.f32 %v5125, %v5486
        %v5526 = vmul.f32 %v5126, %v5486
        %v5527 = vmul.f32 %v5127, %v5486
        %v5528 = vmul.f32 %v5128, %v5486
        %v5529 = vmul.f32 %v5129, %v5486
        %v5530 = vmul.f32 %v5130, %v5486
        %v5531 = vmul.f32 %v5131, %v5486
        %v5532 = vmul.f32 %v5132, %v5486
        %v5533 = vmul.f32 %v5133, %v5486
        %v5534 = vmul.f32 %v5134, %v5486
        %v5535 = vmul.f32 %v5135, %v5486
        %v5536 = vmul.f32 %v5136, %v5486
        %v5537 = vmul.f32 %v5137, %v5486
        %v5538 = vmul.f32 %v5138, %v5486
        %v5539 = vmul.f32 %v5139, %v5486
        %v5540 = vmul.f32 %v5140, %v5486
        %v5541 = vmul.f32 %v5141, %v5486
        %v5542 = vmul.f32 %v5142, %v5486
        %v5543 = vmul.f32 %v5143, %v5486
        %v5544 = vmul.f32 %v5144, %v5486
        %v5545 = vmul.f32 %v5145, %v5486
        %v5546 = vmul.f32 %v5146, %v5486
        %v5547 = vmul.f32 %v5147, %v5486
        %v5548 = vmul.f32 %v5148, %v5486
        %v5549 = vmul.f32 %v5149, %v5486
        %v5550 = vmul.f32 %v5150, %v5486
        %v5551 = vmul.f32 %v5151, %v5486
        %v5552 = vmul.f32 %v5152, %v5486
        %v5553 = vmul.f32 %v5153, %v5486
        %v5554 = vmul.f32 %v5154, %v5486
        %v5555 = vmul.f32 %v5155, %v5486
        %v5556 = vmul.f32 %v5156, %v5486
        %v5557 = vmul.f32 %v5157, %v5486
        %v5558 = vmul.f32 %v5158, %v5486
        %v5559 = vmul.f32 %v5159, %v5486
        %v5560 = vmul.f32 %v5160, %v5486
        %v5561 = vmul.f32 %v5161, %v5486
        %v5562 = vmul.f32 %v5162, %v5486
        %v5563 = vmul.f32 %v5163, %v5486
        %v5564 = vmul.f32 %v5164, %v5486
        %v5565 = vmul.f32 %v5165, %v5486
        %v5566 = vmul.f32 %v5166, %v5486
        %v5567 = vmul.f32 %v5167, %v5486
        %v5568 = vmul.f32 %v5168, %v5486
        %v5569 = vmul.f32 %v5169, %v5486
        %v5570 = vmul.f32 %v5170, %v5486
        %v5571 = vmul.f32 %v5171, %v5486
        %v5572 = vmul.f32 %v5172, %v5486
        %v5573 = vmul.f32 %v5173, %v5486
        %v5574 = vmul.f32 %v5174, %v5486
        %v5575 = vmul.f32 %v5175, %v5486
        %v5576 = vmul.f32 %v5176, %v5486
        %v5577 = vmul.f32 %v5177, %v5486
        %v5578 = vmul.f32 %v5178, %v5486
        %v5579 = vmul.f32 %v5179, %v5486
        %v5580 = vmul.f32 %v5180, %v5486
        %v5581 = vmul.f32 %v5181, %v5486
        %v5582 = vmul.f32 %v5182, %v5486
        %v5583 = vmul.f32 %v5183, %v5486
        %v5584 = vmul.f32 %v5184, %v5486
        %v5585 = vmul.f32 %v5185, %v5486
        %v5586 = vmul.f32 %v5186, %v5486
        %v5587 = vmul.f32 %v5187, %v5486
        %v5588 = vmul.f32 %v5188, %v5486
        %v5589 = vmul.f32 %v5189, %v5486
        %v5590 = vmul.f32 %v5190, %v5486
        %v5591 = vmul.f32 %v5191, %v5486
        %v5592 = vmul.f32 %v5192, %v5486
        %v5593 = vmul.f32 %v5193, %v5486
        %v5594 = vmul.f32 %v5194, %v5486
        %v5595 = vmul.f32 %v5195, %v5486
        %v5596 = vmul.f32 %v5196, %v5486
        %v5597 = vmul.f32 %v5197, %v5486
        %v5598 = vmul.f32 %v5198, %v5486
        %v5599 = vmul.f32 %v5199, %v5486
        %v5600 = vmul.f32 %v5200, %v5486
        %v5601 = vmul.f32 %v5201, %v5486
        %v5602 = vmul.f32 %v5202, %v5486
        %v5603 = vmul.f32 %v5203, %v5486
        %v5604 = vmul.f32 %v5204, %v5486
        %v5605 = vmul.f32 %v5205, %v5486
        %v5606 = vmul.f32 %v5206, %v5486
        %v5607 = vmul.f32 %v5207, %v5486
        %v5608 = vmul.f32 %v5208, %v5486
        %v5609 = vmul.f32 %v5209, %v5486
        %v5610 = vmul.f32 %v5210, %v5486
        %v5611 = vmul.f32 %v5211, %v5486
        %v5612 = vmul.f32 %v5212, %v5486
        %v5613 = vmul.f32 %v5213, %v5486
        %v5614 = vmul.f32 %v5214, %v5486
        %v5615 = vld [vmem:[%s7] sm:$0xff]
        %v5616 = vld [vmem:[%s7 + $0x8] sm:$0xff]
        %v5617 = vld [vmem:[%s7 + $0x10] sm:$0xff]
        %v5618 = vld [vmem:[%s7 + $0x18] sm:$0xff]
        %v5619 = vld [vmem:[%s7 + $0x20] sm:$0xff]
        %v5620 = vld [vmem:[%s7 + $0x28] sm:$0xff]
        %v5621 = vld [vmem:[%s7 + $0x30] sm:$0xff]
        %v5622 = vld [vmem:[%s7 + $0x38] sm:$0xff]
        %v5623 = vld [vmem:[%s7 + $0x40] sm:$0xff]
        %v5624 = vld [vmem:[%s7 + $0x48] sm:$0xff]
        %v5625 = vld [vmem:[%s7 + $0x50] sm:$0xff]
        %v5626 = vld [vmem:[%s7 + $0x58] sm:$0xff]
        %v5627 = vld [vmem:[%s7 + $0x60] sm:$0xff]
        %v5628 = vld [vmem:[%s7 + $0x68] sm:$0xff]
        %v5629 = vld [vmem:[%s7 + $0x70] sm:$0xff]
        %v5630 = vld [vmem:[%s7 + $0x78] sm:$0xff]
        %v5631 = vld [vmem:[%s7 + $0x80] sm:$0xff]
        %v5632 = vld [vmem:[%s7 + $0x88] sm:$0xff]
        %v5633 = vld [vmem:[%s7 + $0x90] sm:$0xff]
        %v5634 = vld [vmem:[%s7 + $0x98] sm:$0xff]
        %v5635 = vld [vmem:[%s7 + $0xa0] sm:$0xff]
        %v5636 = vld [vmem:[%s7 + $0xa8] sm:$0xff]
        %v5637 = vld [vmem:[%s7 + $0xb0] sm:$0xff]
        %v5638 = vld [vmem:[%s7 + $0xb8] sm:$0xff]
        %v5639 = vld [vmem:[%s7 + $0xc0] sm:$0xff]
        %v5640 = vld [vmem:[%s7 + $0xc8] sm:$0xff]
        %v5641 = vld [vmem:[%s7 + $0xd0] sm:$0xff]
        %v5642 = vld [vmem:[%s7 + $0xd8] sm:$0xff]
        %v5643 = vld [vmem:[%s7 + $0xe0] sm:$0xff]
        %v5644 = vld [vmem:[%s7 + $0xe8] sm:$0xff]
        %v5645 = vld [vmem:[%s7 + $0xf0] sm:$0xff]
        %v5646 = vld [vmem:[%s7 + $0xf8] sm:$0xff]
        %v5647 = vld [vmem:[%s7 + $0x100] sm:$0xff]
        %v5648 = vld [vmem:[%s7 + $0x108] sm:$0xff]
        %v5649 = vld [vmem:[%s7 + $0x110] sm:$0xff]
        %v5650 = vld [vmem:[%s7 + $0x118] sm:$0xff]
        %v5651 = vld [vmem:[%s7 + $0x120] sm:$0xff]
        %v5652 = vld [vmem:[%s7 + $0x128] sm:$0xff]
        %v5653 = vld [vmem:[%s7 + $0x130] sm:$0xff]
        %v5654 = vld [vmem:[%s7 + $0x138] sm:$0xff]
        %v5655 = vld [vmem:[%s7 + $0x140] sm:$0xff]
        %v5656 = vld [vmem:[%s7 + $0x148] sm:$0xff]
        %v5657 = vld [vmem:[%s7 + $0x150] sm:$0xff]
        %v5658 = vld [vmem:[%s7 + $0x158] sm:$0xff]
        %v5659 = vld [vmem:[%s7 + $0x160] sm:$0xff]
        %v5660 = vld [vmem:[%s7 + $0x168] sm:$0xff]
        %v5661 = vld [vmem:[%s7 + $0x170] sm:$0xff]
        %v5662 = vld [vmem:[%s7 + $0x178] sm:$0xff]
        %v5663 = vld [vmem:[%s7 + $0x180] sm:$0xff]
        %v5664 = vld [vmem:[%s7 + $0x188] sm:$0xff]
        %v5665 = vld [vmem:[%s7 + $0x190] sm:$0xff]
        %v5666 = vld [vmem:[%s7 + $0x198] sm:$0xff]
        %v5667 = vld [vmem:[%s7 + $0x1a0] sm:$0xff]
        %v5668 = vld [vmem:[%s7 + $0x1a8] sm:$0xff]
        %v5669 = vld [vmem:[%s7 + $0x1b0] sm:$0xff]
        %v5670 = vld [vmem:[%s7 + $0x1b8] sm:$0xff]
        %v5671 = vld [vmem:[%s7 + $0x1c0] sm:$0xff]
        %v5672 = vld [vmem:[%s7 + $0x1c8] sm:$0xff]
        %v5673 = vld [vmem:[%s7 + $0x1d0] sm:$0xff]
        %v5674 = vld [vmem:[%s7 + $0x1d8] sm:$0xff]
        %v5675 = vld [vmem:[%s7 + $0x1e0] sm:$0xff]
        %v5676 = vld [vmem:[%s7 + $0x1e8] sm:$0xff]
        %v5677 = vld [vmem:[%s7 + $0x1f0] sm:$0xff]
        %v5678 = vld [vmem:[%s7 + $0x1f8] sm:$0xff]
        %v5679 = vld [vmem:[%s7 + $0x200] sm:$0xff]
        %v5680 = vld [vmem:[%s7 + $0x208] sm:$0xff]
        %v5681 = vld [vmem:[%s7 + $0x210] sm:$0xff]
        %v5682 = vld [vmem:[%s7 + $0x218] sm:$0xff]
        %v5683 = vld [vmem:[%s7 + $0x220] sm:$0xff]
        %v5684 = vld [vmem:[%s7 + $0x228] sm:$0xff]
        %v5685 = vld [vmem:[%s7 + $0x230] sm:$0xff]
        %v5686 = vld [vmem:[%s7 + $0x238] sm:$0xff]
        %v5687 = vld [vmem:[%s7 + $0x240] sm:$0xff]
        %v5688 = vld [vmem:[%s7 + $0x248] sm:$0xff]
        %v5689 = vld [vmem:[%s7 + $0x250] sm:$0xff]
        %v5690 = vld [vmem:[%s7 + $0x258] sm:$0xff]
        %v5691 = vld [vmem:[%s7 + $0x260] sm:$0xff]
        %v5692 = vld [vmem:[%s7 + $0x268] sm:$0xff]
        %v5693 = vld [vmem:[%s7 + $0x270] sm:$0xff]
        %v5694 = vld [vmem:[%s7 + $0x278] sm:$0xff]
        %v5695 = vld [vmem:[%s7 + $0x280] sm:$0xff]
        %v5696 = vld [vmem:[%s7 + $0x288] sm:$0xff]
        %v5697 = vld [vmem:[%s7 + $0x290] sm:$0xff]
        %v5698 = vld [vmem:[%s7 + $0x298] sm:$0xff]
        %v5699 = vld [vmem:[%s7 + $0x2a0] sm:$0xff]
        %v5700 = vld [vmem:[%s7 + $0x2a8] sm:$0xff]
        %v5701 = vld [vmem:[%s7 + $0x2b0] sm:$0xff]
        %v5702 = vld [vmem:[%s7 + $0x2b8] sm:$0xff]
        %v5703 = vld [vmem:[%s7 + $0x2c0] sm:$0xff]
        %v5704 = vld [vmem:[%s7 + $0x2c8] sm:$0xff]
        %v5705 = vld [vmem:[%s7 + $0x2d0] sm:$0xff]
        %v5706 = vld [vmem:[%s7 + $0x2d8] sm:$0xff]
        %v5707 = vld [vmem:[%s7 + $0x2e0] sm:$0xff]
        %v5708 = vld [vmem:[%s7 + $0x2e8] sm:$0xff]
        %v5709 = vld [vmem:[%s7 + $0x2f0] sm:$0xff]
        %v5710 = vld [vmem:[%s7 + $0x2f8] sm:$0xff]
        %v5711 = vld [vmem:[%s7 + $0x300] sm:$0xff]
        %v5712 = vld [vmem:[%s7 + $0x308] sm:$0xff]
        %v5713 = vld [vmem:[%s7 + $0x310] sm:$0xff]
        %v5714 = vld [vmem:[%s7 + $0x318] sm:$0xff]
        %v5715 = vld [vmem:[%s7 + $0x320] sm:$0xff]
        %v5716 = vld [vmem:[%s7 + $0x328] sm:$0xff]
        %v5717 = vld [vmem:[%s7 + $0x330] sm:$0xff]
        %v5718 = vld [vmem:[%s7 + $0x338] sm:$0xff]
        %v5719 = vld [vmem:[%s7 + $0x340] sm:$0xff]
        %v5720 = vld [vmem:[%s7 + $0x348] sm:$0xff]
        %v5721 = vld [vmem:[%s7 + $0x350] sm:$0xff]
        %v5722 = vld [vmem:[%s7 + $0x358] sm:$0xff]
        %v5723 = vld [vmem:[%s7 + $0x360] sm:$0xff]
        %v5724 = vld [vmem:[%s7 + $0x368] sm:$0xff]
        %v5725 = vld [vmem:[%s7 + $0x370] sm:$0xff]
        %v5726 = vld [vmem:[%s7 + $0x378] sm:$0xff]
        %v5727 = vld [vmem:[%s7 + $0x380] sm:$0xff]
        %v5728 = vld [vmem:[%s7 + $0x388] sm:$0xff]
        %v5729 = vld [vmem:[%s7 + $0x390] sm:$0xff]
        %v5730 = vld [vmem:[%s7 + $0x398] sm:$0xff]
        %v5731 = vld [vmem:[%s7 + $0x3a0] sm:$0xff]
        %v5732 = vld [vmem:[%s7 + $0x3a8] sm:$0xff]
        %v5733 = vld [vmem:[%s7 + $0x3b0] sm:$0xff]
        %v5734 = vld [vmem:[%s7 + $0x3b8] sm:$0xff]
        %v5735 = vld [vmem:[%s7 + $0x3c0] sm:$0xff]
        %v5736 = vld [vmem:[%s7 + $0x3c8] sm:$0xff]
        %v5737 = vld [vmem:[%s7 + $0x3d0] sm:$0xff]
        %v5738 = vld [vmem:[%s7 + $0x3d8] sm:$0xff]
        %v5739 = vld [vmem:[%s7 + $0x3e0] sm:$0xff]
        %v5740 = vld [vmem:[%s7 + $0x3e8] sm:$0xff]
        %v5741 = vld [vmem:[%s7 + $0x3f0] sm:$0xff]
        %v5742 = vld [vmem:[%s7 + $0x3f8] sm:$0xff]
        %v5743 = vmul.f32 %v5487, %v5615
        %v5744 = vmul.f32 %v5488, %v5616
        %v5745 = vmul.f32 %v5489, %v5617
        %v5746 = vmul.f32 %v5490, %v5618
        %v5747 = vmul.f32 %v5491, %v5619
        %v5748 = vmul.f32 %v5492, %v5620
        %v5749 = vmul.f32 %v5493, %v5621
        %v5750 = vmul.f32 %v5494, %v5622
        %v5751 = vmul.f32 %v5495, %v5623
        %v5752 = vmul.f32 %v5496, %v5624
        %v5753 = vmul.f32 %v5497, %v5625
        %v5754 = vmul.f32 %v5498, %v5626
        %v5755 = vmul.f32 %v5499, %v5627
        %v5756 = vmul.f32 %v5500, %v5628
        %v5757 = vmul.f32 %v5501, %v5629
        %v5758 = vmul.f32 %v5502, %v5630
        %v5759 = vmul.f32 %v5503, %v5631
        %v5760 = vmul.f32 %v5504, %v5632
        %v5761 = vmul.f32 %v5505, %v5633
        %v5762 = vmul.f32 %v5506, %v5634
        %v5763 = vmul.f32 %v5507, %v5635
        %v5764 = vmul.f32 %v5508, %v5636
        %v5765 = vmul.f32 %v5509, %v5637
        %v5766 = vmul.f32 %v5510, %v5638
        %v5767 = vmul.f32 %v5511, %v5639
        %v5768 = vmul.f32 %v5512, %v5640
        %v5769 = vmul.f32 %v5513, %v5641
        %v5770 = vmul.f32 %v5514, %v5642
        %v5771 = vmul.f32 %v5515, %v5643
        %v5772 = vmul.f32 %v5516, %v5644
        %v5773 = vmul.f32 %v5517, %v5645
        %v5774 = vmul.f32 %v5518, %v5646
        %v5775 = vmul.f32 %v5519, %v5647
        %v5776 = vmul.f32 %v5520, %v5648
        %v5777 = vmul.f32 %v5521, %v5649
        %v5778 = vmul.f32 %v5522, %v5650
        %v5779 = vmul.f32 %v5523, %v5651
        %v5780 = vmul.f32 %v5524, %v5652
        %v5781 = vmul.f32 %v5525, %v5653
        %v5782 = vmul.f32 %v5526, %v5654
        %v5783 = vmul.f32 %v5527, %v5655
        %v5784 = vmul.f32 %v5528, %v5656
        %v5785 = vmul.f32 %v5529, %v5657
        %v5786 = vmul.f32 %v5530, %v5658
        %v5787 = vmul.f32 %v5531, %v5659
        %v5788 = vmul.f32 %v5532, %v5660
        %v5789 = vmul.f32 %v5533, %v5661
        %v5790 = vmul.f32 %v5534, %v5662
        %v5791 = vmul.f32 %v5535, %v5663
        %v5792 = vmul.f32 %v5536, %v5664
        %v5793 = vmul.f32 %v5537, %v5665
        %v5794 = vmul.f32 %v5538, %v5666
        %v5795 = vmul.f32 %v5539, %v5667
        %v5796 = vmul.f32 %v5540, %v5668
        %v5797 = vmul.f32 %v5541, %v5669
        %v5798 = vmul.f32 %v5542, %v5670
        %v5799 = vmul.f32 %v5543, %v5671
        %v5800 = vmul.f32 %v5544, %v5672
        %v5801 = vmul.f32 %v5545, %v5673
        %v5802 = vmul.f32 %v5546, %v5674
        %v5803 = vmul.f32 %v5547, %v5675
        %v5804 = vmul.f32 %v5548, %v5676
        %v5805 = vmul.f32 %v5549, %v5677
        %v5806 = vmul.f32 %v5550, %v5678
        %v5807 = vmul.f32 %v5551, %v5679
        %v5808 = vmul.f32 %v5552, %v5680
        %v5809 = vmul.f32 %v5553, %v5681
        %v5810 = vmul.f32 %v5554, %v5682
        %v5811 = vmul.f32 %v5555, %v5683
        %v5812 = vmul.f32 %v5556, %v5684
        %v5813 = vmul.f32 %v5557, %v5685
        %v5814 = vmul.f32 %v5558, %v5686
        %v5815 = vmul.f32 %v5559, %v5687
        %v5816 = vmul.f32 %v5560, %v5688
        %v5817 = vmul.f32 %v5561, %v5689
        %v5818 = vmul.f32 %v5562, %v5690
        %v5819 = vmul.f32 %v5563, %v5691
        %v5820 = vmul.f32 %v5564, %v5692
        %v5821 = vmul.f32 %v5565, %v5693
        %v5822 = vmul.f32 %v5566, %v5694
        %v5823 = vmul.f32 %v5567, %v5695
        %v5824 = vmul.f32 %v5568, %v5696
        %v5825 = vmul.f32 %v5569, %v5697
        %v5826 = vmul.f32 %v5570, %v5698
        %v5827 = vmul.f32 %v5571, %v5699
        %v5828 = vmul.f32 %v5572, %v5700
        %v5829 = vmul.f32 %v5573, %v5701
        %v5830 = vmul.f32 %v5574, %v5702
        %v5831 = vmul.f32 %v5575, %v5703
        %v5832 = vmul.f32 %v5576, %v5704
        %v5833 = vmul.f32 %v5577, %v5705
        %v5834 = vmul.f32 %v5578, %v5706
        %v5835 = vmul.f32 %v5579, %v5707
        %v5836 = vmul.f32 %v5580, %v5708
        %v5837 = vmul.f32 %v5581, %v5709
        %v5838 = vmul.f32 %v5582, %v5710
        %v5839 = vmul.f32 %v5583, %v5711
        %v5840 = vmul.f32 %v5584, %v5712
        %v5841 = vmul.f32 %v5585, %v5713
        %v5842 = vmul.f32 %v5586, %v5714
        %v5843 = vmul.f32 %v5587, %v5715
        %v5844 = vmul.f32 %v5588, %v5716
        %v5845 = vmul.f32 %v5589, %v5717
        %v5846 = vmul.f32 %v5590, %v5718
        %v5847 = vmul.f32 %v5591, %v5719
        %v5848 = vmul.f32 %v5592, %v5720
        %v5849 = vmul.f32 %v5593, %v5721
        %v5850 = vmul.f32 %v5594, %v5722
        %v5851 = vmul.f32 %v5595, %v5723
        %v5852 = vmul.f32 %v5596, %v5724
        %v5853 = vmul.f32 %v5597, %v5725
        %v5854 = vmul.f32 %v5598, %v5726
        %v5855 = vmul.f32 %v5599, %v5727
        %v5856 = vmul.f32 %v5600, %v5728
        %v5857 = vmul.f32 %v5601, %v5729
        %v5858 = vmul.f32 %v5602, %v5730
        %v5859 = vmul.f32 %v5603, %v5731
        %v5860 = vmul.f32 %v5604, %v5732
        %v5861 = vmul.f32 %v5605, %v5733
        %v5862 = vmul.f32 %v5606, %v5734
        %v5863 = vmul.f32 %v5607, %v5735
        %v5864 = vmul.f32 %v5608, %v5736
        %v5865 = vmul.f32 %v5609, %v5737
        %v5866 = vmul.f32 %v5610, %v5738
        %v5867 = vmul.f32 %v5611, %v5739
        %v5868 = vmul.f32 %v5612, %v5740
        %v5869 = vmul.f32 %v5613, %v5741
        %v5870 = vmul.f32 %v5614, %v5742
        %v5871 = vld [vmem:[%s8] sm:$0xff]
        %v5872 = vld [vmem:[%s8 + $0x8] sm:$0xff]
        %v5873 = vld [vmem:[%s8 + $0x10] sm:$0xff]
        %v5874 = vld [vmem:[%s8 + $0x18] sm:$0xff]
        %v5875 = vld [vmem:[%s8 + $0x20] sm:$0xff]
        %v5876 = vld [vmem:[%s8 + $0x28] sm:$0xff]
        %v5877 = vld [vmem:[%s8 + $0x30] sm:$0xff]
        %v5878 = vld [vmem:[%s8 + $0x38] sm:$0xff]
        %v5879 = vld [vmem:[%s8 + $0x40] sm:$0xff]
        %v5880 = vld [vmem:[%s8 + $0x48] sm:$0xff]
        %v5881 = vld [vmem:[%s8 + $0x50] sm:$0xff]
        %v5882 = vld [vmem:[%s8 + $0x58] sm:$0xff]
        %v5883 = vld [vmem:[%s8 + $0x60] sm:$0xff]
        %v5884 = vld [vmem:[%s8 + $0x68] sm:$0xff]
        %v5885 = vld [vmem:[%s8 + $0x70] sm:$0xff]
        %v5886 = vld [vmem:[%s8 + $0x78] sm:$0xff]
        %v5887 = vld [vmem:[%s8 + $0x80] sm:$0xff]
        %v5888 = vld [vmem:[%s8 + $0x88] sm:$0xff]
        %v5889 = vld [vmem:[%s8 + $0x90] sm:$0xff]
        %v5890 = vld [vmem:[%s8 + $0x98] sm:$0xff]
        %v5891 = vld [vmem:[%s8 + $0xa0] sm:$0xff]
        %v5892 = vld [vmem:[%s8 + $0xa8] sm:$0xff]
        %v5893 = vld [vmem:[%s8 + $0xb0] sm:$0xff]
        %v5894 = vld [vmem:[%s8 + $0xb8] sm:$0xff]
        %v5895 = vld [vmem:[%s8 + $0xc0] sm:$0xff]
        %v5896 = vld [vmem:[%s8 + $0xc8] sm:$0xff]
        %v5897 = vld [vmem:[%s8 + $0xd0] sm:$0xff]
        %v5898 = vld [vmem:[%s8 + $0xd8] sm:$0xff]
        %v5899 = vld [vmem:[%s8 + $0xe0] sm:$0xff]
        %v5900 = vld [vmem:[%s8 + $0xe8] sm:$0xff]
        %v5901 = vld [vmem:[%s8 + $0xf0] sm:$0xff]
        %v5902 = vld [vmem:[%s8 + $0xf8] sm:$0xff]
        %v5903 = vld [vmem:[%s8 + $0x100] sm:$0xff]
        %v5904 = vld [vmem:[%s8 + $0x108] sm:$0xff]
        %v5905 = vld [vmem:[%s8 + $0x110] sm:$0xff]
        %v5906 = vld [vmem:[%s8 + $0x118] sm:$0xff]
        %v5907 = vld [vmem:[%s8 + $0x120] sm:$0xff]
        %v5908 = vld [vmem:[%s8 + $0x128] sm:$0xff]
        %v5909 = vld [vmem:[%s8 + $0x130] sm:$0xff]
        %v5910 = vld [vmem:[%s8 + $0x138] sm:$0xff]
        %v5911 = vld [vmem:[%s8 + $0x140] sm:$0xff]
        %v5912 = vld [vmem:[%s8 + $0x148] sm:$0xff]
        %v5913 = vld [vmem:[%s8 + $0x150] sm:$0xff]
        %v5914 = vld [vmem:[%s8 + $0x158] sm:$0xff]
        %v5915 = vld [vmem:[%s8 + $0x160] sm:$0xff]
        %v5916 = vld [vmem:[%s8 + $0x168] sm:$0xff]
        %v5917 = vld [vmem:[%s8 + $0x170] sm:$0xff]
        %v5918 = vld [vmem:[%s8 + $0x178] sm:$0xff]
        %v5919 = vld [vmem:[%s8 + $0x180] sm:$0xff]
        %v5920 = vld [vmem:[%s8 + $0x188] sm:$0xff]
        %v5921 = vld [vmem:[%s8 + $0x190] sm:$0xff]
        %v5922 = vld [vmem:[%s8 + $0x198] sm:$0xff]
        %v5923 = vld [vmem:[%s8 + $0x1a0] sm:$0xff]
        %v5924 = vld [vmem:[%s8 + $0x1a8] sm:$0xff]
        %v5925 = vld [vmem:[%s8 + $0x1b0] sm:$0xff]
        %v5926 = vld [vmem:[%s8 + $0x1b8] sm:$0xff]
        %v5927 = vld [vmem:[%s8 + $0x1c0] sm:$0xff]
        %v5928 = vld [vmem:[%s8 + $0x1c8] sm:$0xff]
        %v5929 = vld [vmem:[%s8 + $0x1d0] sm:$0xff]
        %v5930 = vld [vmem:[%s8 + $0x1d8] sm:$0xff]
        %v5931 = vld [vmem:[%s8 + $0x1e0] sm:$0xff]
        %v5932 = vld [vmem:[%s8 + $0x1e8] sm:$0xff]
        %v5933 = vld [vmem:[%s8 + $0x1f0] sm:$0xff]
        %v5934 = vld [vmem:[%s8 + $0x1f8] sm:$0xff]
        %v5935 = vld [vmem:[%s8 + $0x200] sm:$0xff]
        %v5936 = vld [vmem:[%s8 + $0x208] sm:$0xff]
        %v5937 = vld [vmem:[%s8 + $0x210] sm:$0xff]
        %v5938 = vld [vmem:[%s8 + $0x218] sm:$0xff]
        %v5939 = vld [vmem:[%s8 + $0x220] sm:$0xff]
        %v5940 = vld [vmem:[%s8 + $0x228] sm:$0xff]
        %v5941 = vld [vmem:[%s8 + $0x230] sm:$0xff]
        %v5942 = vld [vmem:[%s8 + $0x238] sm:$0xff]
        %v5943 = vld [vmem:[%s8 + $0x240] sm:$0xff]
        %v5944 = vld [vmem:[%s8 + $0x248] sm:$0xff]
        %v5945 = vld [vmem:[%s8 + $0x250] sm:$0xff]
        %v5946 = vld [vmem:[%s8 + $0x258] sm:$0xff]
        %v5947 = vld [vmem:[%s8 + $0x260] sm:$0xff]
        %v5948 = vld [vmem:[%s8 + $0x268] sm:$0xff]
        %v5949 = vld [vmem:[%s8 + $0x270] sm:$0xff]
        %v5950 = vld [vmem:[%s8 + $0x278] sm:$0xff]
        %v5951 = vld [vmem:[%s8 + $0x280] sm:$0xff]
        %v5952 = vld [vmem:[%s8 + $0x288] sm:$0xff]
        %v5953 = vld [vmem:[%s8 + $0x290] sm:$0xff]
        %v5954 = vld [vmem:[%s8 + $0x298] sm:$0xff]
        %v5955 = vld [vmem:[%s8 + $0x2a0] sm:$0xff]
        %v5956 = vld [vmem:[%s8 + $0x2a8] sm:$0xff]
        %v5957 = vld [vmem:[%s8 + $0x2b0] sm:$0xff]
        %v5958 = vld [vmem:[%s8 + $0x2b8] sm:$0xff]
        %v5959 = vld [vmem:[%s8 + $0x2c0] sm:$0xff]
        %v5960 = vld [vmem:[%s8 + $0x2c8] sm:$0xff]
        %v5961 = vld [vmem:[%s8 + $0x2d0] sm:$0xff]
        %v5962 = vld [vmem:[%s8 + $0x2d8] sm:$0xff]
        %v5963 = vld [vmem:[%s8 + $0x2e0] sm:$0xff]
        %v5964 = vld [vmem:[%s8 + $0x2e8] sm:$0xff]
        %v5965 = vld [vmem:[%s8 + $0x2f0] sm:$0xff]
        %v5966 = vld [vmem:[%s8 + $0x2f8] sm:$0xff]
        %v5967 = vld [vmem:[%s8 + $0x300] sm:$0xff]
        %v5968 = vld [vmem:[%s8 + $0x308] sm:$0xff]
        %v5969 = vld [vmem:[%s8 + $0x310] sm:$0xff]
        %v5970 = vld [vmem:[%s8 + $0x318] sm:$0xff]
        %v5971 = vld [vmem:[%s8 + $0x320] sm:$0xff]
        %v5972 = vld [vmem:[%s8 + $0x328] sm:$0xff]
        %v5973 = vld [vmem:[%s8 + $0x330] sm:$0xff]
        %v5974 = vld [vmem:[%s8 + $0x338] sm:$0xff]
        %v5975 = vld [vmem:[%s8 + $0x340] sm:$0xff]
        %v5976 = vld [vmem:[%s8 + $0x348] sm:$0xff]
        %v5977 = vld [vmem:[%s8 + $0x350] sm:$0xff]
        %v5978 = vld [vmem:[%s8 + $0x358] sm:$0xff]
        %v5979 = vld [vmem:[%s8 + $0x360] sm:$0xff]
        %v5980 = vld [vmem:[%s8 + $0x368] sm:$0xff]
        %v5981 = vld [vmem:[%s8 + $0x370] sm:$0xff]
        %v5982 = vld [vmem:[%s8 + $0x378] sm:$0xff]
        %v5983 = vld [vmem:[%s8 + $0x380] sm:$0xff]
        %v5984 = vld [vmem:[%s8 + $0x388] sm:$0xff]
        %v5985 = vld [vmem:[%s8 + $0x390] sm:$0xff]
        %v5986 = vld [vmem:[%s8 + $0x398] sm:$0xff]
        %v5987 = vld [vmem:[%s8 + $0x3a0] sm:$0xff]
        %v5988 = vld [vmem:[%s8 + $0x3a8] sm:$0xff]
        %v5989 = vld [vmem:[%s8 + $0x3b0] sm:$0xff]
        %v5990 = vld [vmem:[%s8 + $0x3b8] sm:$0xff]
        %v5991 = vld [vmem:[%s8 + $0x3c0] sm:$0xff]
        %v5992 = vld [vmem:[%s8 + $0x3c8] sm:$0xff]
        %v5993 = vld [vmem:[%s8 + $0x3d0] sm:$0xff]
        %v5994 = vld [vmem:[%s8 + $0x3d8] sm:$0xff]
        %v5995 = vld [vmem:[%s8 + $0x3e0] sm:$0xff]
        %v5996 = vld [vmem:[%s8 + $0x3e8] sm:$0xff]
        %v5997 = vld [vmem:[%s8 + $0x3f0] sm:$0xff]
        %v5998 = vld [vmem:[%s8 + $0x3f8] sm:$0xff]
        %v5999 = vadd.f32 %v5743, %v5871
        %v6000 = vadd.f32 %v5744, %v5872
        %v6001 = vadd.f32 %v5745, %v5873
        %v6002 = vadd.f32 %v5746, %v5874
        %v6003 = vadd.f32 %v5747, %v5875
        %v6004 = vadd.f32 %v5748, %v5876
        %v6005 = vadd.f32 %v5749, %v5877
        %v6006 = vadd.f32 %v5750, %v5878
        %v6007 = vadd.f32 %v5751, %v5879
        %v6008 = vadd.f32 %v5752, %v5880
        %v6009 = vadd.f32 %v5753, %v5881
        %v6010 = vadd.f32 %v5754, %v5882
        %v6011 = vadd.f32 %v5755, %v5883
        %v6012 = vadd.f32 %v5756, %v5884
        %v6013 = vadd.f32 %v5757, %v5885
        %v6014 = vadd.f32 %v5758, %v5886
        %v6015 = vadd.f32 %v5759, %v5887
        %v6016 = vadd.f32 %v5760, %v5888
        %v6017 = vadd.f32 %v5761, %v5889
        %v6018 = vadd.f32 %v5762, %v5890
        %v6019 = vadd.f32 %v5763, %v5891
        %v6020 = vadd.f32 %v5764, %v5892
        %v6021 = vadd.f32 %v5765, %v5893
        %v6022 = vadd.f32 %v5766, %v5894
        %v6023 = vadd.f32 %v5767, %v5895
        %v6024 = vadd.f32 %v5768, %v5896
        %v6025 = vadd.f32 %v5769, %v5897
        %v6026 = vadd.f32 %v5770, %v5898
        %v6027 = vadd.f32 %v5771, %v5899
        %v6028 = vadd.f32 %v5772, %v5900
        %v6029 = vadd.f32 %v5773, %v5901
        %v6030 = vadd.f32 %v5774, %v5902
        %v6031 = vadd.f32 %v5775, %v5903
        %v6032 = vadd.f32 %v5776, %v5904
        %v6033 = vadd.f32 %v5777, %v5905
        %v6034 = vadd.f32 %v5778, %v5906
        %v6035 = vadd.f32 %v5779, %v5907
        %v6036 = vadd.f32 %v5780, %v5908
        %v6037 = vadd.f32 %v5781, %v5909
        %v6038 = vadd.f32 %v5782, %v5910
        %v6039 = vadd.f32 %v5783, %v5911
        %v6040 = vadd.f32 %v5784, %v5912
        %v6041 = vadd.f32 %v5785, %v5913
        %v6042 = vadd.f32 %v5786, %v5914
        %v6043 = vadd.f32 %v5787, %v5915
        %v6044 = vadd.f32 %v5788, %v5916
        %v6045 = vadd.f32 %v5789, %v5917
        %v6046 = vadd.f32 %v5790, %v5918
        %v6047 = vadd.f32 %v5791, %v5919
        %v6048 = vadd.f32 %v5792, %v5920
        %v6049 = vadd.f32 %v5793, %v5921
        %v6050 = vadd.f32 %v5794, %v5922
        %v6051 = vadd.f32 %v5795, %v5923
        %v6052 = vadd.f32 %v5796, %v5924
        %v6053 = vadd.f32 %v5797, %v5925
        %v6054 = vadd.f32 %v5798, %v5926
        %v6055 = vadd.f32 %v5799, %v5927
        %v6056 = vadd.f32 %v5800, %v5928
        %v6057 = vadd.f32 %v5801, %v5929
        %v6058 = vadd.f32 %v5802, %v5930
        %v6059 = vadd.f32 %v5803, %v5931
        %v6060 = vadd.f32 %v5804, %v5932
        %v6061 = vadd.f32 %v5805, %v5933
        %v6062 = vadd.f32 %v5806, %v5934
        %v6063 = vadd.f32 %v5807, %v5935
        %v6064 = vadd.f32 %v5808, %v5936
        %v6065 = vadd.f32 %v5809, %v5937
        %v6066 = vadd.f32 %v5810, %v5938
        %v6067 = vadd.f32 %v5811, %v5939
        %v6068 = vadd.f32 %v5812, %v5940
        %v6069 = vadd.f32 %v5813, %v5941
        %v6070 = vadd.f32 %v5814, %v5942
        %v6071 = vadd.f32 %v5815, %v5943
        %v6072 = vadd.f32 %v5816, %v5944
        %v6073 = vadd.f32 %v5817, %v5945
        %v6074 = vadd.f32 %v5818, %v5946
        %v6075 = vadd.f32 %v5819, %v5947
        %v6076 = vadd.f32 %v5820, %v5948
        %v6077 = vadd.f32 %v5821, %v5949
        %v6078 = vadd.f32 %v5822, %v5950
        %v6079 = vadd.f32 %v5823, %v5951
        %v6080 = vadd.f32 %v5824, %v5952
        %v6081 = vadd.f32 %v5825, %v5953
        %v6082 = vadd.f32 %v5826, %v5954
        %v6083 = vadd.f32 %v5827, %v5955
        %v6084 = vadd.f32 %v5828, %v5956
        %v6085 = vadd.f32 %v5829, %v5957
        %v6086 = vadd.f32 %v5830, %v5958
        %v6087 = vadd.f32 %v5831, %v5959
        %v6088 = vadd.f32 %v5832, %v5960
        %v6089 = vadd.f32 %v5833, %v5961
        %v6090 = vadd.f32 %v5834, %v5962
        %v6091 = vadd.f32 %v5835, %v5963
        %v6092 = vadd.f32 %v5836, %v5964
        %v6093 = vadd.f32 %v5837, %v5965
        %v6094 = vadd.f32 %v5838, %v5966
        %v6095 = vadd.f32 %v5839, %v5967
        %v6096 = vadd.f32 %v5840, %v5968
        %v6097 = vadd.f32 %v5841, %v5969
        %v6098 = vadd.f32 %v5842, %v5970
        %v6099 = vadd.f32 %v5843, %v5971
        %v6100 = vadd.f32 %v5844, %v5972
        %v6101 = vadd.f32 %v5845, %v5973
        %v6102 = vadd.f32 %v5846, %v5974
        %v6103 = vadd.f32 %v5847, %v5975
        %v6104 = vadd.f32 %v5848, %v5976
        %v6105 = vadd.f32 %v5849, %v5977
        %v6106 = vadd.f32 %v5850, %v5978
        %v6107 = vadd.f32 %v5851, %v5979
        %v6108 = vadd.f32 %v5852, %v5980
        %v6109 = vadd.f32 %v5853, %v5981
        %v6110 = vadd.f32 %v5854, %v5982
        %v6111 = vadd.f32 %v5855, %v5983
        %v6112 = vadd.f32 %v5856, %v5984
        %v6113 = vadd.f32 %v5857, %v5985
        %v6114 = vadd.f32 %v5858, %v5986
        %v6115 = vadd.f32 %v5859, %v5987
        %v6116 = vadd.f32 %v5860, %v5988
        %v6117 = vadd.f32 %v5861, %v5989
        %v6118 = vadd.f32 %v5862, %v5990
        %v6119 = vadd.f32 %v5863, %v5991
        %v6120 = vadd.f32 %v5864, %v5992
        %v6121 = vadd.f32 %v5865, %v5993
        %v6122 = vadd.f32 %v5866, %v5994
        %v6123 = vadd.f32 %v5867, %v5995
        %v6124 = vadd.f32 %v5868, %v5996
        %v6125 = vadd.f32 %v5869, %v5997
        %v6126 = vadd.f32 %v5870, %v5998
        %6127 = vst [vmem:[%s366] sm:$0xff] %v5999
        %6128 = vst [vmem:[%s366 + $0x8] sm:$0xff] %v6000
        %6129 = vst [vmem:[%s366 + $0x10] sm:$0xff] %v6001
        %6130 = vst [vmem:[%s366 + $0x18] sm:$0xff] %v6002
        %6131 = vst [vmem:[%s366 + $0x20] sm:$0xff] %v6003
        %6132 = vst [vmem:[%s366 + $0x28] sm:$0xff] %v6004
        %6133 = vst [vmem:[%s366 + $0x30] sm:$0xff] %v6005
        %6134 = vst [vmem:[%s366 + $0x38] sm:$0xff] %v6006
        %6135 = vst [vmem:[%s366 + $0x40] sm:$0xff] %v6007
        %6136 = vst [vmem:[%s366 + $0x48] sm:$0xff] %v6008
        %6137 = vst [vmem:[%s366 + $0x50] sm:$0xff] %v6009
        %6138 = vst [vmem:[%s366 + $0x58] sm:$0xff] %v6010
        %6139 = vst [vmem:[%s366 + $0x60] sm:$0xff] %v6011
        %6140 = vst [vmem:[%s366 + $0x68] sm:$0xff] %v6012
        %6141 = vst [vmem:[%s366 + $0x70] sm:$0xff] %v6013
        %6142 = vst [vmem:[%s366 + $0x78] sm:$0xff] %v6014
        %6143 = vst [vmem:[%s366 + $0x80] sm:$0xff] %v6015
        %6144 = vst [vmem:[%s366 + $0x88] sm:$0xff] %v6016
        %6145 = vst [vmem:[%s366 + $0x90] sm:$0xff] %v6017
        %6146 = vst [vmem:[%s366 + $0x98] sm:$0xff] %v6018
        %6147 = vst [vmem:[%s366 + $0xa0] sm:$0xff] %v6019
        %6148 = vst [vmem:[%s366 + $0xa8] sm:$0xff] %v6020
        %6149 = vst [vmem:[%s366 + $0xb0] sm:$0xff] %v6021
        %6150 = vst [vmem:[%s366 + $0xb8] sm:$0xff] %v6022
        %6151 = vst [vmem:[%s366 + $0xc0] sm:$0xff] %v6023
        %6152 = vst [vmem:[%s366 + $0xc8] sm:$0xff] %v6024
        %6153 = vst [vmem:[%s366 + $0xd0] sm:$0xff] %v6025
        %6154 = vst [vmem:[%s366 + $0xd8] sm:$0xff] %v6026
        %6155 = vst [vmem:[%s366 + $0xe0] sm:$0xff] %v6027
        %6156 = vst [vmem:[%s366 + $0xe8] sm:$0xff] %v6028
        %6157 = vst [vmem:[%s366 + $0xf0] sm:$0xff] %v6029
        %6158 = vst [vmem:[%s366 + $0xf8] sm:$0xff] %v6030
        %6159 = vst [vmem:[%s366 + $0x100] sm:$0xff] %v6031
        %6160 = vst [vmem:[%s366 + $0x108] sm:$0xff] %v6032
        %6161 = vst [vmem:[%s366 + $0x110] sm:$0xff] %v6033
        %6162 = vst [vmem:[%s366 + $0x118] sm:$0xff] %v6034
        %6163 = vst [vmem:[%s366 + $0x120] sm:$0xff] %v6035
        %6164 = vst [vmem:[%s366 + $0x128] sm:$0xff] %v6036
        %6165 = vst [vmem:[%s366 + $0x130] sm:$0xff] %v6037
        %6166 = vst [vmem:[%s366 + $0x138] sm:$0xff] %v6038
        %6167 = vst [vmem:[%s366 + $0x140] sm:$0xff] %v6039
        %6168 = vst [vmem:[%s366 + $0x148] sm:$0xff] %v6040
        %6169 = vst [vmem:[%s366 + $0x150] sm:$0xff] %v6041
        %6170 = vst [vmem:[%s366 + $0x158] sm:$0xff] %v6042
        %6171 = vst [vmem:[%s366 + $0x160] sm:$0xff] %v6043
        %6172 = vst [vmem:[%s366 + $0x168] sm:$0xff] %v6044
        %6173 = vst [vmem:[%s366 + $0x170] sm:$0xff] %v6045
        %6174 = vst [vmem:[%s366 + $0x178] sm:$0xff] %v6046
        %6175 = vst [vmem:[%s366 + $0x180] sm:$0xff] %v6047
        %6176 = vst [vmem:[%s366 + $0x188] sm:$0xff] %v6048
        %6177 = vst [vmem:[%s366 + $0x190] sm:$0xff] %v6049
        %6178 = vst [vmem:[%s366 + $0x198] sm:$0xff] %v6050
        %6179 = vst [vmem:[%s366 + $0x1a0] sm:$0xff] %v6051
        %6180 = vst [vmem:[%s366 + $0x1a8] sm:$0xff] %v6052
        %6181 = vst [vmem:[%s366 + $0x1b0] sm:$0xff] %v6053
        %6182 = vst [vmem:[%s366 + $0x1b8] sm:$0xff] %v6054
        %6183 = vst [vmem:[%s366 + $0x1c0] sm:$0xff] %v6055
        %6184 = vst [vmem:[%s366 + $0x1c8] sm:$0xff] %v6056
        %6185 = vst [vmem:[%s366 + $0x1d0] sm:$0xff] %v6057
        %6186 = vst [vmem:[%s366 + $0x1d8] sm:$0xff] %v6058
        %6187 = vst [vmem:[%s366 + $0x1e0] sm:$0xff] %v6059
        %6188 = vst [vmem:[%s366 + $0x1e8] sm:$0xff] %v6060
        %6189 = vst [vmem:[%s366 + $0x1f0] sm:$0xff] %v6061
        %6190 = vst [vmem:[%s366 + $0x1f8] sm:$0xff] %v6062
        %6191 = vst [vmem:[%s366 + $0x200] sm:$0xff] %v6063
        %6192 = vst [vmem:[%s366 + $0x208] sm:$0xff] %v6064
        %6193 = vst [vmem:[%s366 + $0x210] sm:$0xff] %v6065
        %6194 = vst [vmem:[%s366 + $0x218] sm:$0xff] %v6066
        %6195 = vst [vmem:[%s366 + $0x220] sm:$0xff] %v6067
        %6196 = vst [vmem:[%s366 + $0x228] sm:$0xff] %v6068
        %6197 = vst [vmem:[%s366 + $0x230] sm:$0xff] %v6069
        %6198 = vst [vmem:[%s366 + $0x238] sm:$0xff] %v6070
        %6199 = vst [vmem:[%s366 + $0x240] sm:$0xff] %v6071
        %6200 = vst [vmem:[%s366 + $0x248] sm:$0xff] %v6072
        %6201 = vst [vmem:[%s366 + $0x250] sm:$0xff] %v6073
        %6202 = vst [vmem:[%s366 + $0x258] sm:$0xff] %v6074
        %6203 = vst [vmem:[%s366 + $0x260] sm:$0xff] %v6075
        %6204 = vst [vmem:[%s366 + $0x268] sm:$0xff] %v6076
        %6205 = vst [vmem:[%s366 + $0x270] sm:$0xff] %v6077
        %6206 = vst [vmem:[%s366 + $0x278] sm:$0xff] %v6078
        %6207 = vst [vmem:[%s366 + $0x280] sm:$0xff] %v6079
        %6208 = vst [vmem:[%s366 + $0x288] sm:$0xff] %v6080
        %6209 = vst [vmem:[%s366 + $0x290] sm:$0xff] %v6081
        %6210 = vst [vmem:[%s366 + $0x298] sm:$0xff] %v6082
        %6211 = vst [vmem:[%s366 + $0x2a0] sm:$0xff] %v6083
        %6212 = vst [vmem:[%s366 + $0x2a8] sm:$0xff] %v6084
        %6213 = vst [vmem:[%s366 + $0x2b0] sm:$0xff] %v6085
        %6214 = vst [vmem:[%s366 + $0x2b8] sm:$0xff] %v6086
        %6215 = vst [vmem:[%s366 + $0x2c0] sm:$0xff] %v6087
        %6216 = vst [vmem:[%s366 + $0x2c8] sm:$0xff] %v6088
        %6217 = vst [vmem:[%s366 + $0x2d0] sm:$0xff] %v6089
        %6218 = vst [vmem:[%s366 + $0x2d8] sm:$0xff] %v6090
        %6219 = vst [vmem:[%s366 + $0x2e0] sm:$0xff] %v6091
        %6220 = vst [vmem:[%s366 + $0x2e8] sm:$0xff] %v6092
        %6221 = vst [vmem:[%s366 + $0x2f0] sm:$0xff] %v6093
        %6222 = vst [vmem:[%s366 + $0x2f8] sm:$0xff] %v6094
        %6223 = vst [vmem:[%s366 + $0x300] sm:$0xff] %v6095
        %6224 = vst [vmem:[%s366 + $0x308] sm:$0xff] %v6096
        %6225 = vst [vmem:[%s366 + $0x310] sm:$0xff] %v6097
        %6226 = vst [vmem:[%s366 + $0x318] sm:$0xff] %v6098
        %6227 = vst [vmem:[%s366 + $0x320] sm:$0xff] %v6099
        %6228 = vst [vmem:[%s366 + $0x328] sm:$0xff] %v6100
        %6229 = vst [vmem:[%s366 + $0x330] sm:$0xff] %v6101
        %6230 = vst [vmem:[%s366 + $0x338] sm:$0xff] %v6102
        %6231 = vst [vmem:[%s366 + $0x340] sm:$0xff] %v6103
        %6232 = vst [vmem:[%s366 + $0x348] sm:$0xff] %v6104
        %6233 = vst [vmem:[%s366 + $0x350] sm:$0xff] %v6105
        %6234 = vst [vmem:[%s366 + $0x358] sm:$0xff] %v6106
        %6235 = vst [vmem:[%s366 + $0x360] sm:$0xff] %v6107
        %6236 = vst [vmem:[%s366 + $0x368] sm:$0xff] %v6108
        %6237 = vst [vmem:[%s366 + $0x370] sm:$0xff] %v6109
        %6238 = vst [vmem:[%s366 + $0x378] sm:$0xff] %v6110
        %6239 = vst [vmem:[%s366 + $0x380] sm:$0xff] %v6111
        %6240 = vst [vmem:[%s366 + $0x388] sm:$0xff] %v6112
        %6241 = vst [vmem:[%s366 + $0x390] sm:$0xff] %v6113
        %6242 = vst [vmem:[%s366 + $0x398] sm:$0xff] %v6114
        %6243 = vst [vmem:[%s366 + $0x3a0] sm:$0xff] %v6115
        %6244 = vst [vmem:[%s366 + $0x3a8] sm:$0xff] %v6116
        %6245 = vst [vmem:[%s366 + $0x3b0] sm:$0xff] %v6117
        %6246 = vst [vmem:[%s366 + $0x3b8] sm:$0xff] %v6118
        %6247 = vst [vmem:[%s366 + $0x3c0] sm:$0xff] %v6119
        %6248 = vst [vmem:[%s366 + $0x3c8] sm:$0xff] %v6120
        %6249 = vst [vmem:[%s366 + $0x3d0] sm:$0xff] %v6121
        %6250 = vst [vmem:[%s366 + $0x3d8] sm:$0xff] %v6122
        %6251 = vst [vmem:[%s366 + $0x3e0] sm:$0xff] %v6123
        %6252 = vst [vmem:[%s366 + $0x3e8] sm:$0xff] %v6124
        %6253 = vst [vmem:[%s366 + $0x3f0] sm:$0xff] %v6125
        %6254 = vst [vmem:[%s366 + $0x3f8] sm:$0xff] %v6126
        %s6255 = sand.u32 %s240, 1
        %s6256 = scalar_lea.sflag [#allocation3], %s6255
        %s6257 = sand.u32 %s240, 1
        %s6258 = smul.addr %s6257, 1024
        %s6259 = scalar_lea.vmem [#allocation2], %s6258
        // Predicated region
        $region57: #{attention_block_forward.1} parent=55 // pred_check
          %p6260 = pneg %p250
        $region58: #{attention_block_forward.1} parent=55 // pred_check_branch
          %6262 = sbr.rel (%p6260) target = $region60
        $region59: #{attention_block_forward.1} parent=55 // pred_region
          %s6264 = ssub.s32 16384, 16384
          %6265 = vsyncadd %s6256, %s6264
          %s6266 = smul.addr %s23, 128
          %s6267 = smul.addr %s6266, 128
          %s6268 = scalar_lea.hbm %s9, %s6267
          %s6269 = sshll.u32 %s6259, 4
          %s6270 = int_to_ptr.vmem [resolvable:$true] %s6269
          %6275 = dma.vmem_to_hbm [thread:$0]  %s6270, 16384, %s6268, %s6256, 128, 128, 8
        $region60: #{attention_block_forward.1} parent=55 // pred_fallthru
          _
      $region56: #{attention_block_forward.1} parent=5 // pred_fallthru
        _
      %p6276 = scmp.le.s32.totalorder 2, %s18
      // Predicated region
      $region61: #{attention_block_forward.1} parent=5 // pred_check
        %p6277 = pneg %p6276
      $region62: #{attention_block_forward.1} parent=5 // pred_check_branch
        %6279 = sbr.rel (%p6277) target = $region64
      $region63: #{attention_block_forward.1} parent=5 // pred_region
        %s6280 = ssub.s32 %s18, 2
        // Predicated region
        $region65: #{attention_block_forward.1} parent=63 // pred_check
          %p6281 = pneg %p256
        $region66: #{attention_block_forward.1} parent=63 // pred_check_branch
          %6283 = sbr.rel (%p6281) target = $region68
        $region67: #{attention_block_forward.1} parent=63 // pred_region
          %s6284 = sand.u32 %s241, 1
          %s6285 = scalar_lea.sflag [#allocation3], %s6284
          %s6286 = sand.u32 %s241, 1
          %s6287 = smul.addr %s6286, 1024
          %s6288 = scalar_lea.vmem [#allocation2], %s6287
          %6289 = dma.done %s6285, 16384
        $region68: #{attention_block_forward.1} parent=63 // pred_fallthru
          _
      $region64: #{attention_block_forward.1} parent=5 // pred_fallthru
        _
    $region6: #{attention_block_forward.1} parent=1 // loop_footer
      %s22 = sadd.s32 1, %s18
    $region7: #{attention_block_forward.1} parent=1 // loop_footer_branch
      %17 = sbr.rel target = $region3
    $region8: #{attention_block_forward.1} parent=1 // loop_exit
      _
    %6290 = vsyncpa [#allocation3], 1
    %s6291 = scalar_lea.sflag [#allocation3], 1
    %6292 = vsyncpa %s6291, 1

</llo_original>
